<compile_context>
chip_gen: v5e
topology: v5e:2x2
jax: 0.10.0
libtpu: 0.0.40
codegen_flags: <defaults>
</compile_context>

<pallas_src>
import functools

import numpy as np
import jax
import jax.numpy as jnp
from jax.experimental import pallas as pl
from jax.experimental.pallas import tpu as pltpu


# ----------------------------------------------------------------------------
# Helpers
# ----------------------------------------------------------------------------
def _round_up(x, m):
    return ((x + m - 1) // m) * m


def _pick_k_tile(K, max_tile=2048):
    """Largest multiple of 128 that divides K and is <= max_tile."""
    assert K % 128 == 0, K
    best = 128
    t = 128
    while t <= min(K, max_tile):
        if K % t == 0:
            best = t
        t += 128
    return best


# ----------------------------------------------------------------------------
# Small matmul: everything fits in one VMEM block (used by the convs).
# ----------------------------------------------------------------------------
def _mm_bias_relu_kernel(x_ref, w_ref, b_ref, o_ref, *, relu):
    r = jnp.dot(x_ref[...], w_ref[...], preferred_element_type=jnp.float32)
    r = r + b_ref[...]
    if relu:
        r = jnp.maximum(r, 0.0)
    o_ref[...] = r


def _single_block_linear(x, w, b, *, relu):
    """out = (relu)(x @ w + b), full-dim blocks, grid=(1,).  No K zero-pad."""
    M, K = x.shape
    Kw, N = w.shape
    assert K == Kw, (K, Kw)
    return pl.pallas_call(
        functools.partial(_mm_bias_relu_kernel, relu=relu),
        out_shape=jax.ShapeDtypeStruct((M, N), jnp.float32),
        grid=(1,),
        in_specs=[
            pl.BlockSpec((M, K), lambda i: (0, 0)),
            pl.BlockSpec((K, N), lambda i: (0, 0)),
            pl.BlockSpec((1, N), lambda i: (0, 0)),
        ],
        out_specs=pl.BlockSpec((M, N), lambda i: (0, 0)),
        compiler_params=pltpu.CompilerParams(
            dimension_semantics=("arbitrary",)),
    )(x, w, b.reshape(1, N))


# ----------------------------------------------------------------------------
# Big weight-streaming matmul (fc1): K-tiled + N split ("parallel" axis).
# Accumulates directly into the resident f32 output block.
# ----------------------------------------------------------------------------
def _ktiled_linear_kernel(x_ref, w_ref, b_ref, o_ref, *, relu):
    k = pl.program_id(1)

    @pl.when(k == 0)
    def _():
        o_ref[...] = jnp.zeros_like(o_ref)

    o_ref[...] += jnp.dot(x_ref[...], w_ref[...],
                          preferred_element_type=jnp.float32)

    @pl.when(k == pl.num_programs(1) - 1)
    def _():
        r = o_ref[...] + b_ref[...]
        if relu:
            r = jnp.maximum(r, 0.0)
        o_ref[...] = r


def pallas_linear_big(x, w, b, *, relu, n_split=2, max_k_tile=2048):
    """x: (M, K), w: (K, N) pre-transposed, b: (N,).  K streamed in big tiles;
    the N axis is split into `n_split` "parallel" blocks (megacore on v7x)."""
    M, K = x.shape
    Kw, N = w.shape
    assert K == Kw and K % 128 == 0 and N % n_split == 0
    tk = _pick_k_tile(K, max_k_tile)
    tn = N // n_split
    assert tn % 128 == 0
    grid = (n_split, K // tk)
    cost = pl.CostEstimate(
        flops=2 * M * K * N,
        transcendentals=0,
        bytes_accessed=4 * (K * N + M * K + M * N + N),
    )
    return pl.pallas_call(
        functools.partial(_ktiled_linear_kernel, relu=relu),
        out_shape=jax.ShapeDtypeStruct((M, N), jnp.float32),
        grid_spec=pltpu.PrefetchScalarGridSpec(
            num_scalar_prefetch=0,
            grid=grid,
            in_specs=[
                pl.BlockSpec((M, tk), lambda j, k: (0, k)),    # activations
                pl.BlockSpec((tk, tn), lambda j, k: (k, j)),   # weights (K, N)
                pl.BlockSpec((1, tn), lambda j, k: (0, j)),    # bias
            ],
            out_specs=pl.BlockSpec((M, tn), lambda j, k: (0, j)),
        ),
        compiler_params=pltpu.CompilerParams(
            dimension_semantics=("parallel", "arbitrary"),
            vmem_limit_bytes=48 * 1024 * 1024,
        ),
        cost_estimate=cost,
    )(x, w, b.reshape(1, N))


# ----------------------------------------------------------------------------
# Fused fc2 + fc3: out = relu(x @ w2 + b2) @ w3 + b3 (single pallas_call).
# ----------------------------------------------------------------------------
def _fc23_kernel(x_ref, w2_ref, b2_ref, w3_ref, b3_ref, o_ref, h_acc):
    k = pl.program_id(0)

    @pl.when(k == 0)
    def _():
        h_acc[...] = jnp.zeros_like(h_acc)

    h_acc[...] += jnp.dot(x_ref[...], w2_ref[...],
                          preferred_element_type=jnp.float32)

    @pl.when(k == pl.num_programs(0) - 1)
    def _():
        h2 = jnp.maximum(h_acc[...] + b2_ref[...], 0.0)
        o_ref[...] = (jnp.dot(h2, w3_ref[...],
                              preferred_element_type=jnp.float32)
                      + b3_ref[...])


def pallas_fc23(x, w2, b2, w3, b3, *, max_k_tile=2048):
    M, K = x.shape
    K2, N2 = w2.shape
    N2w, N3 = w3.shape
    assert K == K2 and N2 == N2w and K % 128 == 0 and N2 % 128 == 0
    tk = _pick_k_tile(K, max_k_tile)
    grid = (K // tk,)
    return pl.pallas_call(
        _fc23_kernel,
        out_shape=jax.ShapeDtypeStruct((M, N3), jnp.float32),
        grid_spec=pltpu.PrefetchScalarGridSpec(
            num_scalar_prefetch=0,
            grid=grid,
            in_specs=[
                pl.BlockSpec((M, tk), lambda k: (0, k)),     # fc1 output slab
                pl.BlockSpec((tk, N2), lambda k: (k, 0)),    # w2 (K-tiled)
                pl.BlockSpec((1, N2), lambda k: (0, 0)),     # b2 (resident)
                pl.BlockSpec((N2, N3), lambda k: (0, 0)),    # w3 (resident)
                pl.BlockSpec((1, N3), lambda k: (0, 0)),     # b3 (resident)
            ],
            out_specs=pl.BlockSpec((M, N3), lambda k: (0, 0)),
            scratch_shapes=[pltpu.VMEM((M, N2), jnp.float32)],
        ),
        compiler_params=pltpu.CompilerParams(
            dimension_semantics=("arbitrary",),
            vmem_limit_bytes=48 * 1024 * 1024,
        ),
    )(x, w2, b2.reshape(1, N2), w3, b3.reshape(1, N3))


# ----------------------------------------------------------------------------
# Conv2d (stride=1) in NHWC: slicing im2col (no transposes) + Pallas matmul.
# ----------------------------------------------------------------------------
def conv2d_relu_nhwc(x_nhwc, w_mat, b, *, kh_size, kw_size, pad):
    """w_mat is pre-reshaped to (KH*KW*Cin, Cout) matching the concat order."""
    B, H, W, C = x_nhwc.shape
    xp = jnp.pad(x_nhwc, ((0, 0), (pad, pad), (pad, pad), (0, 0)))
    Ho = H + 2 * pad - kh_size + 1
    Wo = W + 2 * pad - kw_size + 1
    if kh_size == 1 and kw_size == 1:
        patches = xp
    else:
        cols = [xp[:, kh:kh + Ho, kw:kw + Wo, :]
                for kh in range(kh_size) for kw in range(kw_size)]
        patches = jnp.concatenate(cols, axis=-1)        # (B, Ho, Wo, KH*KW*C)
    patches = patches.reshape(B * Ho * Wo, kh_size * kw_size * C)
    Cout = w_mat.shape[1]
    out = _single_block_linear(patches, w_mat, b, relu=True)
    return out.reshape(B, Ho, Wo, Cout)


# ----------------------------------------------------------------------------
# One-time parameter re-layout (done OUTSIDE the forward).
# ----------------------------------------------------------------------------
def prepare_params(params, conv_out_hw):
    """conv: (Cout,Cin,KH,KW) -> (KH*KW*Cin, Cout) for the NHWC im2col.
    fc:   (N,K) -> (K,N); fc1 rows permuted from NCHW-flatten to NHWC-flatten
    order; fc output dims padded to multiples of 128 with zero cols/bias."""
    H3, W3 = conv_out_hw
    kp = {}

    def conv_w(w):
        Cout, Cin, KH, KW = w.shape
        return jnp.transpose(w, (2, 3, 1, 0)).reshape(KH * KW * Cin, Cout)

    for i in (1, 2, 3):
        kp[f"conv{i}_w"] = conv_w(params[f"conv{i}_w"])
        kp[f"conv{i}_b"] = params[f"conv{i}_b"]

    # fc1: (2300, C*H*W) -> (H*W*C, 2304); rows match NHWC flatten order.
    fc1_w = params["fc1_w"]
    N1, KCHW = fc1_w.shape
    C3 = params["conv3_w"].shape[0]
    assert KCHW == C3 * H3 * W3, (KCHW, C3, H3, W3)
    N1p = _round_up(N1, 128)
    w1t = fc1_w.reshape(N1, C3, H3, W3).transpose(2, 3, 1, 0).reshape(
        H3 * W3 * C3, N1)
    kp["fc1_w"] = jnp.pad(w1t, ((0, 0), (0, N1p - N1)))
    kp["fc1_b"] = jnp.pad(params["fc1_b"], (0, N1p - N1))

    # fc2: (1150, 2300) -> (2304, 1152); padded rows hit zeroed fc1 columns.
    fc2_w = params["fc2_w"]
    N2, K2 = fc2_w.shape
    N2p = _round_up(N2, 128)
    kp["fc2_w"] = jnp.pad(fc2_w.T, ((0, N1p - K2), (0, N2p - N2)))
    kp["fc2_b"] = jnp.pad(params["fc2_b"], (0, N2p - N2))

    # fc3: (out, 1150) -> (1152, out).
    fc3_w = params["fc3_w"]
    N3, K3 = fc3_w.shape
    kp["fc3_w"] = jnp.pad(fc3_w.T, ((0, N2p - K3), (0, 0)))
    kp["fc3_b"] = params["fc3_b"]
    return kp


# ----------------------------------------------------------------------------
# Full peakloc_convnet forward (dropout = identity, eval mode).
# ----------------------------------------------------------------------------
def forward(x_nchw, kp):
    # TODO(synk): Dropout layers are identity in eval/inference; training-mode
    # stochastic masks are not implemented.
    h = jnp.transpose(x_nchw, (0, 2, 3, 1))                  # NCHW -> NHWC (tiny)
    h = conv2d_relu_nhwc(h, kp["conv1_w"], kp["conv1_b"],
                         kh_size=2, kw_size=2, pad=1)
    h = conv2d_relu_nhwc(h, kp["conv2_w"], kp["conv2_b"],
                         kh_size=2, kw_size=2, pad=1)
    h = conv2d_relu_nhwc(h, kp["conv3_w"], kp["conv3_b"],
                         kh_size=1, kw_size=1, pad=1)
    B, H3, W3, C3 = h.shape
    h = h.reshape(B, H3 * W3 * C3)        # NHWC flatten; fc1_w rows pre-permuted
    h = pallas_linear_big(h, kp["fc1_w"], kp["fc1_b"], relu=True)
    out = pallas_fc23(h, kp["fc2_w"], kp["fc2_b"], kp["fc3_w"], kp["fc3_b"])
    return out


# Pure-JAX reference (same math, XLA conv/matmul) for a correctness check.
def reference_forward(x, params):
    def conv(x, w, b):
        y = jax.lax.conv_general_dilated(
            x, w, window_strides=(1, 1), padding=((1, 1), (1, 1)),
            dimension_numbers=("NCHW", "OIHW", "NCHW"))
        return jax.nn.relu(y + b[None, :, None, None])

    h = conv(x, params["conv1_w"], params["conv1_b"])
    h = conv(h, params["conv2_w"], params["conv2_b"])
    h = conv(h, params["conv3_w"], params["conv3_b"])
    h = h.reshape(h.shape[0], -1)
    h = jax.nn.relu(h @ params["fc1_w"].T + params["fc1_b"])
    h = jax.nn.relu(h @ params["fc2_w"].T + params["fc2_b"])
    return h @ params["fc3_w"].T + params["fc3_b"]


def init_params(key, in_channels, in_dim, output_dim):
    # Deterministic synthetic parameters, shapes exactly as in the nn.Module.
    ks = jax.random.split(key, 12)
    s = 0.1
    # Spatial sizes after the three convs starting from H=2, W=in_dim:
    #   k=2,p=1 -> +1 ; k=2,p=1 -> +1 ; k=1,p=1 -> +2
    h_out, w_out = 2 + 1 + 1 + 2, in_dim + 1 + 1 + 2
    flattened = 80 * h_out * w_out
    p = dict(
        conv1_w=s * jax.random.normal(ks[0], (80, in_channels, 2, 2), jnp.float32),
        conv1_b=s * jax.random.normal(ks[1], (80,), jnp.float32),
        conv2_w=s * jax.random.normal(ks[2], (80, 80, 2, 2), jnp.float32),
        conv2_b=s * jax.random.normal(ks[3], (80,), jnp.float32),
        conv3_w=s * jax.random.normal(ks[4], (80, 80, 1, 1), jnp.float32),
        conv3_b=s * jax.random.normal(ks[5], (80,), jnp.float32),
        fc1_w=s * jax.random.normal(ks[6], (2300, flattened), jnp.float32),
        fc1_b=s * jax.random.normal(ks[7], (2300,), jnp.float32),
        fc2_w=s * jax.random.normal(ks[8], (1150, 2300), jnp.float32),
        fc2_b=s * jax.random.normal(ks[9], (1150,), jnp.float32),
        fc3_w=s * jax.random.normal(ks[10], (output_dim, 1150), jnp.float32),
        fc3_b=s * jax.random.normal(ks[11], (output_dim,), jnp.float32),
    )
    return p, flattened


if __name__ == "__main__":
    B, in_channels, in_dim, output_dim = 2, 4, 16, 8
    key = jax.random.PRNGKey(0)
    pkey, xkey = jax.random.split(key)
    params, flattened = init_params(pkey, in_channels, in_dim, output_dim)

    # Conv-stack output spatial dims for input (B, C, 2, in_dim).
    h3, w3 = 2 + 4, in_dim + 4
    kparams = prepare_params(params, (h3, w3))   # one-time weight re-layout

    # The module derives its MLP input size from input shape (1, C, 2, in_dim),
    # so the forward input must be (B, in_channels, 2, in_dim).
    x = jax.random.normal(xkey, (B, in_channels, 2, in_dim), jnp.float32)

    fwd = jax.jit(forward)
    out = jax.block_until_ready(fwd(x, kparams))
    assert out.shape == (B, output_dim), out.shape

    ref = jax.block_until_ready(jax.jit(reference_forward)(x, params))
    if not np.allclose(np.asarray(out), np.asarray(ref), rtol=2e-3, atol=2e-3):
        raise AssertionError("Pallas output does not match JAX reference")

    print("KERNEL_OK")
</pallas_src>

<mosaic_0001>
module attributes {stable_mosaic.version = 11 : i64} {
  func.func @_mm_bias_relu_kernel(%arg0: i32, %arg1: memref<102x16xf32, #tpu.memory_space<vmem>>, %arg2: memref<16x80xf32, #tpu.memory_space<vmem>>, %arg3: memref<1x80xf32, #tpu.memory_space<vmem>>, %arg4: memref<102x80xf32, #tpu.memory_space<vmem>>) attributes {dimension_semantics = [#tpu.dimension_semantics<arbitrary>], iteration_bounds = array<i64: 1>, scalar_prefetch = 0 : i64, scratch_operands = 0 : i64, tpu.core_type = #tpu.core_type<tc>, window_params = [{pipeline_mode = #tpu.pipeline_mode<synchronous>, transform_indices = @transform_0, window_bounds = array<i64: 102, 16>}, {pipeline_mode = #tpu.pipeline_mode<synchronous>, transform_indices = @transform_1, window_bounds = array<i64: 16, 80>}, {pipeline_mode = #tpu.pipeline_mode<synchronous>, transform_indices = @transform_2, window_bounds = array<i64: 1, 80>}, {pipeline_mode = #tpu.pipeline_mode<synchronous>, transform_indices = @transform_3, window_bounds = array<i64: 102, 80>}]} {
    %c0 = arith.constant 0 : index
    %c0_0 = arith.constant 0 : index
    %0 = vector.load %arg1[%c0, %c0_0] : memref<102x16xf32, #tpu.memory_space<vmem>>, vector<102x16xf32>
    %c0_1 = arith.constant 0 : index
    %c0_2 = arith.constant 0 : index
    %1 = vector.load %arg2[%c0_1, %c0_2] : memref<16x80xf32, #tpu.memory_space<vmem>>, vector<16x80xf32>
    %cst = arith.constant dense<0.000000e+00> : vector<102x80xf32>
    %2 = tpu.matmul %0, %1, %cst {dimension_numbers = #tpu.dot_dimension_numbers<[1], [0], [0], [1], [0, 0, 1, 1], [], []>} : vector<102x16xf32>, vector<16x80xf32>, vector<102x80xf32> -> vector<102x80xf32>
    %c0_3 = arith.constant 0 : index
    %c0_4 = arith.constant 0 : index
    %3 = vector.load %arg3[%c0_3, %c0_4] : memref<1x80xf32, #tpu.memory_space<vmem>>, vector<1x80xf32>
    %4 = vector.broadcast %3 : vector<1x80xf32> to vector<102x80xf32>
    %5 = arith.addf %2, %4 : vector<102x80xf32>
    %cst_5 = arith.constant 0.000000e+00 : f32
    %6 = vector.broadcast %cst_5 : f32 to vector<102x80xf32>
    %7 = arith.maximumf %5, %6 : vector<102x80xf32>
    %c0_6 = arith.constant 0 : index
    %c0_7 = arith.constant 0 : index
    %8 = vector.load %arg4[%c0_6, %c0_7] : memref<102x80xf32, #tpu.memory_space<vmem>>, vector<102x80xf32>
    tpu.vector_store %arg4[%c0_6, %c0_7], %7 {strides = array<i32>} : memref<102x80xf32, #tpu.memory_space<vmem>>, vector<102x80xf32>,
    return
  }
  func.func @transform_0(%arg0: i32) -> (i32, i32) {
    %c0_i32 = arith.constant 0 : i32
    %c0_i32_0 = arith.constant 0 : i32
    %c0_i32_1 = arith.constant 0 : i32
    return %c0_i32, %c0_i32_0 : i32, i32
  }
  func.func @transform_1(%arg0: i32) -> (i32, i32) {
    %c0_i32 = arith.constant 0 : i32
    %c0_i32_0 = arith.constant 0 : i32
    %c0_i32_1 = arith.constant 0 : i32
    return %c0_i32, %c0_i32_0 : i32, i32
  }
  func.func @transform_2(%arg0: i32) -> (i32, i32) {
    %c0_i32 = arith.constant 0 : i32
    %c0_i32_0 = arith.constant 0 : i32
    %c0_i32_1 = arith.constant 0 : i32
    return %c0_i32, %c0_i32_0 : i32, i32
  }
  func.func @transform_3(%arg0: i32) -> (i32, i32) {
    %c0_i32 = arith.constant 0 : i32
    %c0_i32_0 = arith.constant 0 : i32
    %c0_i32_1 = arith.constant 0 : i32
    return %c0_i32, %c0_i32_0 : i32, i32
  }
}

module attributes {stable_mosaic.version = 11 : i64} {
  func.func @_mm_bias_relu_kernel(%arg0: i32, %arg1: memref<144x320xf32, #tpu.memory_space<vmem>>, %arg2: memref<320x80xf32, #tpu.memory_space<vmem>>, %arg3: memref<1x80xf32, #tpu.memory_space<vmem>>, %arg4: memref<144x80xf32, #tpu.memory_space<vmem>>) attributes {dimension_semantics = [#tpu.dimension_semantics<arbitrary>], iteration_bounds = array<i64: 1>, scalar_prefetch = 0 : i64, scratch_operands = 0 : i64, tpu.core_type = #tpu.core_type<tc>, window_params = [{pipeline_mode = #tpu.pipeline_mode<synchronous>, transform_indices = @transform_0, window_bounds = array<i64: 144, 320>}, {pipeline_mode = #tpu.pipeline_mode<synchronous>, transform_indices = @transform_1, window_bounds = array<i64: 320, 80>}, {pipeline_mode = #tpu.pipeline_mode<synchronous>, transform_indices = @transform_2, window_bounds = array<i64: 1, 80>}, {pipeline_mode = #tpu.pipeline_mode<synchronous>, transform_indices = @transform_3, window_bounds = array<i64: 144, 80>}]} {
    %c0 = arith.constant 0 : index
    %c0_0 = arith.constant 0 : index
    %0 = vector.load %arg1[%c0, %c0_0] : memref<144x320xf32, #tpu.memory_space<vmem>>, vector<144x320xf32>
    %c0_1 = arith.constant 0 : index
    %c0_2 = arith.constant 0 : index
    %1 = vector.load %arg2[%c0_1, %c0_2] : memref<320x80xf32, #tpu.memory_space<vmem>>, vector<320x80xf32>
    %cst = arith.constant dense<0.000000e+00> : vector<144x80xf32>
    %2 = tpu.matmul %0, %1, %cst {dimension_numbers = #tpu.dot_dimension_numbers<[1], [0], [0], [1], [0, 0, 1, 1], [], []>} : vector<144x320xf32>, vector<320x80xf32>, vector<144x80xf32> -> vector<144x80xf32>
    %c0_3 = arith.constant 0 : index
    %c0_4 = arith.constant 0 : index
    %3 = vector.load %arg3[%c0_3, %c0_4] : memref<1x80xf32, #tpu.memory_space<vmem>>, vector<1x80xf32>
    %4 = vector.broadcast %3 : vector<1x80xf32> to vector<144x80xf32>
    %5 = arith.addf %2, %4 : vector<144x80xf32>
    %cst_5 = arith.constant 0.000000e+00 : f32
    %6 = vector.broadcast %cst_5 : f32 to vector<144x80xf32>
    %7 = arith.maximumf %5, %6 : vector<144x80xf32>
    %c0_6 = arith.constant 0 : index
    %c0_7 = arith.constant 0 : index
    %8 = vector.load %arg4[%c0_6, %c0_7] : memref<144x80xf32, #tpu.memory_space<vmem>>, vector<144x80xf32>
    tpu.vector_store %arg4[%c0_6, %c0_7], %7 {strides = array<i32>} : memref<144x80xf32, #tpu.memory_space<vmem>>, vector<144x80xf32>,
    return
  }
  func.func @transform_0(%arg0: i32) -> (i32, i32) {
    %c0_i32 = arith.constant 0 : i32
    %c0_i32_0 = arith.constant 0 : i32
    %c0_i32_1 = arith.constant 0 : i32
    return %c0_i32, %c0_i32_0 : i32, i32
  }
  func.func @transform_1(%arg0: i32) -> (i32, i32) {
    %c0_i32 = arith.constant 0 : i32
    %c0_i32_0 = arith.constant 0 : i32
    %c0_i32_1 = arith.constant 0 : i32
    return %c0_i32, %c0_i32_0 : i32, i32
  }
  func.func @transform_2(%arg0: i32) -> (i32, i32) {
    %c0_i32 = arith.constant 0 : i32
    %c0_i32_0 = arith.constant 0 : i32
    %c0_i32_1 = arith.constant 0 : i32
    return %c0_i32, %c0_i32_0 : i32, i32
  }
  func.func @transform_3(%arg0: i32) -> (i32, i32) {
    %c0_i32 = arith.constant 0 : i32
    %c0_i32_0 = arith.constant 0 : i32
    %c0_i32_1 = arith.constant 0 : i32
    return %c0_i32, %c0_i32_0 : i32, i32
  }
}

module attributes {stable_mosaic.version = 11 : i64} {
  func.func @_mm_bias_relu_kernel(%arg0: i32, %arg1: memref<240x80xf32, #tpu.memory_space<vmem>>, %arg2: memref<80x80xf32, #tpu.memory_space<vmem>>, %arg3: memref<1x80xf32, #tpu.memory_space<vmem>>, %arg4: memref<240x80xf32, #tpu.memory_space<vmem>>) attributes {dimension_semantics = [#tpu.dimension_semantics<arbitrary>], iteration_bounds = array<i64: 1>, scalar_prefetch = 0 : i64, scratch_operands = 0 : i64, tpu.core_type = #tpu.core_type<tc>, window_params = [{pipeline_mode = #tpu.pipeline_mode<synchronous>, transform_indices = @transform_0, window_bounds = array<i64: 240, 80>}, {pipeline_mode = #tpu.pipeline_mode<synchronous>, transform_indices = @transform_1, window_bounds = array<i64: 80, 80>}, {pipeline_mode = #tpu.pipeline_mode<synchronous>, transform_indices = @transform_2, window_bounds = array<i64: 1, 80>}, {pipeline_mode = #tpu.pipeline_mode<synchronous>, transform_indices = @transform_3, window_bounds = array<i64: 240, 80>}]} {
    %c0 = arith.constant 0 : index
    %c0_0 = arith.constant 0 : index
    %0 = vector.load %arg1[%c0, %c0_0] : memref<240x80xf32, #tpu.memory_space<vmem>>, vector<240x80xf32>
    %c0_1 = arith.constant 0 : index
    %c0_2 = arith.constant 0 : index
    %1 = vector.load %arg2[%c0_1, %c0_2] : memref<80x80xf32, #tpu.memory_space<vmem>>, vector<80x80xf32>
    %cst = arith.constant dense<0.000000e+00> : vector<240x80xf32>
    %2 = tpu.matmul %0, %1, %cst {dimension_numbers = #tpu.dot_dimension_numbers<[1], [0], [0], [1], [0, 0, 1, 1], [], []>} : vector<240x80xf32>, vector<80x80xf32>, vector<240x80xf32> -> vector<240x80xf32>
    %c0_3 = arith.constant 0 : index
    %c0_4 = arith.constant 0 : index
    %3 = vector.load %arg3[%c0_3, %c0_4] : memref<1x80xf32, #tpu.memory_space<vmem>>, vector<1x80xf32>
    %4 = vector.broadcast %3 : vector<1x80xf32> to vector<240x80xf32>
    %5 = arith.addf %2, %4 : vector<240x80xf32>
    %cst_5 = arith.constant 0.000000e+00 : f32
    %6 = vector.broadcast %cst_5 : f32 to vector<240x80xf32>
    %7 = arith.maximumf %5, %6 : vector<240x80xf32>
    %c0_6 = arith.constant 0 : index
    %c0_7 = arith.constant 0 : index
    %8 = vector.load %arg4[%c0_6, %c0_7] : memref<240x80xf32, #tpu.memory_space<vmem>>, vector<240x80xf32>
    tpu.vector_store %arg4[%c0_6, %c0_7], %7 {strides = array<i32>} : memref<240x80xf32, #tpu.memory_space<vmem>>, vector<240x80xf32>,
    return
  }
  func.func @transform_0(%arg0: i32) -> (i32, i32) {
    %c0_i32 = arith.constant 0 : i32
    %c0_i32_0 = arith.constant 0 : i32
    %c0_i32_1 = arith.constant 0 : i32
    return %c0_i32, %c0_i32_0 : i32, i32
  }
  func.func @transform_1(%arg0: i32) -> (i32, i32) {
    %c0_i32 = arith.constant 0 : i32
    %c0_i32_0 = arith.constant 0 : i32
    %c0_i32_1 = arith.constant 0 : i32
    return %c0_i32, %c0_i32_0 : i32, i32
  }
  func.func @transform_2(%arg0: i32) -> (i32, i32) {
    %c0_i32 = arith.constant 0 : i32
    %c0_i32_0 = arith.constant 0 : i32
    %c0_i32_1 = arith.constant 0 : i32
    return %c0_i32, %c0_i32_0 : i32, i32
  }
  func.func @transform_3(%arg0: i32) -> (i32, i32) {
    %c0_i32 = arith.constant 0 : i32
    %c0_i32_0 = arith.constant 0 : i32
    %c0_i32_1 = arith.constant 0 : i32
    return %c0_i32, %c0_i32_0 : i32, i32
  }
}

module attributes {stable_mosaic.version = 11 : i64} {
  func.func @_fc23_kernel(%arg0: i32, %arg1: memref<2x1152xf32, #tpu.memory_space<vmem>>, %arg2: memref<1152x1152xf32, #tpu.memory_space<vmem>>, %arg3: memref<1x1152xf32, #tpu.memory_space<vmem>>, %arg4: memref<1152x8xf32, #tpu.memory_space<vmem>>, %arg5: memref<1x8xf32, #tpu.memory_space<vmem>>, %arg6: memref<2x8xf32, #tpu.memory_space<vmem>>, %arg7: memref<2x1152xf32, #tpu.memory_space<vmem>>) attributes {dimension_semantics = [#tpu.dimension_semantics<arbitrary>], iteration_bounds = array<i64: 2>, scalar_prefetch = 0 : i64, scratch_operands = 1 : i64, tpu.core_type = #tpu.core_type<tc>, window_params = [{transform_indices = @transform_0, window_bounds = array<i64: 2, 1152>}, {transform_indices = @transform_1, window_bounds = array<i64: 1152, 1152>}, {pipeline_mode = #tpu.pipeline_mode<synchronous>, transform_indices = @transform_2, window_bounds = array<i64: 1, 1152>}, {pipeline_mode = #tpu.pipeline_mode<synchronous>, transform_indices = @transform_3, window_bounds = array<i64: 1152, 8>}, {pipeline_mode = #tpu.pipeline_mode<synchronous>, transform_indices = @transform_4, window_bounds = array<i64: 1, 8>}, {pipeline_mode = #tpu.pipeline_mode<synchronous>, transform_indices = @transform_5, window_bounds = array<i64: 2, 8>}]} {
    %c0_i32 = arith.constant 0 : i32
    %0 = arith.cmpi eq, %arg0, %c0_i32 : i32
    %1 = arith.extui %0 : i1 to i32
    %c0_i32_0 = arith.constant 0 : i32
    %2 = arith.cmpi ne, %1, %c0_i32_0 : i32
    scf.if %2 {
      %cst_9 = arith.constant 0.000000e+00 : f32
      %12 = vector.broadcast %cst_9 : f32 to vector<2x1152xf32>
      %c0_10 = arith.constant 0 : index
      %c0_11 = arith.constant 0 : index
      %13 = vector.load %arg7[%c0_10, %c0_11] : memref<2x1152xf32, #tpu.memory_space<vmem>>, vector<2x1152xf32>
      tpu.vector_store %arg7[%c0_10, %c0_11], %12 {strides = array<i32>} : memref<2x1152xf32, #tpu.memory_space<vmem>>, vector<2x1152xf32>,
    } else {
    }
    %c0 = arith.constant 0 : index
    %c0_1 = arith.constant 0 : index
    %3 = vector.load %arg7[%c0, %c0_1] : memref<2x1152xf32, #tpu.memory_space<vmem>>, vector<2x1152xf32>
    %c0_2 = arith.constant 0 : index
    %c0_3 = arith.constant 0 : index
    %4 = vector.load %arg1[%c0_2, %c0_3] : memref<2x1152xf32, #tpu.memory_space<vmem>>, vector<2x1152xf32>
    %c0_4 = arith.constant 0 : index
    %c0_5 = arith.constant 0 : index
    %5 = vector.load %arg2[%c0_4, %c0_5] : memref<1152x1152xf32, #tpu.memory_space<vmem>>, vector<1152x1152xf32>
    %cst = arith.constant dense<0.000000e+00> : vector<2x1152xf32>
    %6 = tpu.matmul %4, %5, %cst {dimension_numbers = #tpu.dot_dimension_numbers<[1], [0], [0], [1], [0, 0, 1, 1], [], []>} : vector<2x1152xf32>, vector<1152x1152xf32>, vector<2x1152xf32> -> vector<2x1152xf32>
    %7 = arith.addf %3, %6 : vector<2x1152xf32>
    %c0_6 = arith.constant 0 : index
    %c0_7 = arith.constant 0 : index
    %8 = vector.load %arg7[%c0_6, %c0_7] : memref<2x1152xf32, #tpu.memory_space<vmem>>, vector<2x1152xf32>
    tpu.vector_store %arg7[%c0_6, %c0_7], %7 {strides = array<i32>} : memref<2x1152xf32, #tpu.memory_space<vmem>>, vector<2x1152xf32>,
    %c1_i32 = arith.constant 1 : i32
    %9 = arith.cmpi eq, %arg0, %c1_i32 : i32
    %10 = arith.extui %9 : i1 to i32
    %c0_i32_8 = arith.constant 0 : i32
    %11 = arith.cmpi ne, %10, %c0_i32_8 : i32
    scf.if %11 {
      %c0_9 = arith.constant 0 : index
      %c0_10 = arith.constant 0 : index
      %12 = vector.load %arg7[%c0_9, %c0_10] : memref<2x1152xf32, #tpu.memory_space<vmem>>, vector<2x1152xf32>
      %c0_11 = arith.constant 0 : index
      %c0_12 = arith.constant 0 : index
      %13 = vector.load %arg3[%c0_11, %c0_12] : memref<1x1152xf32, #tpu.memory_space<vmem>>, vector<1x1152xf32>
      %14 = vector.broadcast %13 : vector<1x1152xf32> to vector<2x1152xf32>
      %15 = arith.addf %12, %14 : vector<2x1152xf32>
      %cst_13 = arith.constant 0.000000e+00 : f32
      %16 = vector.broadcast %cst_13 : f32 to vector<2x1152xf32>
      %17 = arith.maximumf %15, %16 : vector<2x1152xf32>
      %c0_14 = arith.constant 0 : index
      %c0_15 = arith.constant 0 : index
      %18 = vector.load %arg4[%c0_14, %c0_15] : memref<1152x8xf32, #tpu.memory_space<vmem>>, vector<1152x8xf32>
      %cst_16 = arith.constant dense<0.000000e+00> : vector<2x8xf32>
      %19 = tpu.matmul %17, %18, %cst_16 {dimension_numbers = #tpu.dot_dimension_numbers<[1], [0], [0], [1], [0, 0, 1, 1], [], []>} : vector<2x1152xf32>, vector<1152x8xf32>, vector<2x8xf32> -> vector<2x8xf32>
      %c0_17 = arith.constant 0 : index
      %c0_18 = arith.constant 0 : index
      %20 = vector.load %arg5[%c0_17, %c0_18] : memref<1x8xf32, #tpu.memory_space<vmem>>, vector<1x8xf32>
      %21 = vector.broadcast %20 : vector<1x8xf32> to vector<2x8xf32>
      %22 = arith.addf %19, %21 : vector<2x8xf32>
      %c0_19 = arith.constant 0 : index
      %c0_20 = arith.constant 0 : index
      %23 = vector.load %arg6[%c0_19, %c0_20] : memref<2x8xf32, #tpu.memory_space<vmem>>, vector<2x8xf32>
      tpu.vector_store %arg6[%c0_19, %c0_20], %22 {strides = array<i32>} : memref<2x8xf32, #tpu.memory_space<vmem>>, vector<2x8xf32>,
    } else {
    }
    return
  }
  func.func @transform_0(%arg0: i32) -> (i32, i32) {
    %c0_i32 = arith.constant 0 : i32
    %c0_i32_0 = arith.constant 0 : i32
    return %c0_i32, %arg0 : i32, i32
  }
  func.func @transform_1(%arg0: i32) -> (i32, i32) {
    %c0_i32 = arith.constant 0 : i32
    %c0_i32_0 = arith.constant 0 : i32
    return %arg0, %c0_i32 : i32, i32
  }
  func.func @transform_2(%arg0: i32) -> (i32, i32) {
    %c0_i32 = arith.constant 0 : i32
    %c0_i32_0 = arith.constant 0 : i32
    %c0_i32_1 = arith.constant 0 : i32
    return %c0_i32, %c0_i32_0 : i32, i32
  }
  func.func @transform_3(%arg0: i32) -> (i32, i32) {
    %c0_i32 = arith.constant 0 : i32
    %c0_i32_0 = arith.constant 0 : i32
    %c0_i32_1 = arith.constant 0 : i32
    return %c0_i32, %c0_i32_0 : i32, i32
  }
  func.func @transform_4(%arg0: i32) -> (i32, i32) {
    %c0_i32 = arith.constant 0 : i32
    %c0_i32_0 = arith.constant 0 : i32
    %c0_i32_1 = arith.constant 0 : i32
    return %c0_i32, %c0_i32_0 : i32, i32
  }
  func.func @transform_5(%arg0: i32) -> (i32, i32) {
    %c0_i32 = arith.constant 0 : i32
    %c0_i32_0 = arith.constant 0 : i32
    %c0_i32_1 = arith.constant 0 : i32
    return %c0_i32, %c0_i32_0 : i32, i32
  }
}

module attributes {stable_mosaic.version = 11 : i64} {
  func.func @_ktiled_linear_kernel(%arg0: i32, %arg1: i32, %arg2: memref<2x1920xf32, #tpu.memory_space<vmem>>, %arg3: memref<1920x1152xf32, #tpu.memory_space<vmem>>, %arg4: memref<1x1152xf32, #tpu.memory_space<vmem>>, %arg5: memref<2x1152xf32, #tpu.memory_space<vmem>>) attributes {dimension_semantics = [#tpu.dimension_semantics<parallel>, #tpu.dimension_semantics<arbitrary>], iteration_bounds = array<i64: 2, 5>, scalar_prefetch = 0 : i64, scratch_operands = 0 : i64, tpu.core_type = #tpu.core_type<tc>, window_params = [{transform_indices = @transform_0, window_bounds = array<i64: 2, 1920>}, {transform_indices = @transform_1, window_bounds = array<i64: 1920, 1152>}, {transform_indices = @transform_2, window_bounds = array<i64: 1, 1152>}, {transform_indices = @transform_3, window_bounds = array<i64: 2, 1152>}]} {
    %c0_i32 = arith.constant 0 : i32
    %0 = arith.cmpi eq, %arg1, %c0_i32 : i32
    %1 = arith.extui %0 : i1 to i32
    %c0_i32_0 = arith.constant 0 : i32
    %2 = arith.cmpi ne, %1, %c0_i32_0 : i32
    scf.if %2 {
      %cst_9 = arith.constant 0.000000e+00 : f32
      %12 = vector.broadcast %cst_9 : f32 to vector<2x1152xf32>
      %c0_10 = arith.constant 0 : index
      %c0_11 = arith.constant 0 : index
      %13 = vector.load %arg5[%c0_10, %c0_11] : memref<2x1152xf32, #tpu.memory_space<vmem>>, vector<2x1152xf32>
      tpu.vector_store %arg5[%c0_10, %c0_11], %12 {strides = array<i32>} : memref<2x1152xf32, #tpu.memory_space<vmem>>, vector<2x1152xf32>,
    } else {
    }
    %c0 = arith.constant 0 : index
    %c0_1 = arith.constant 0 : index
    %3 = vector.load %arg5[%c0, %c0_1] : memref<2x1152xf32, #tpu.memory_space<vmem>>, vector<2x1152xf32>
    %c0_2 = arith.constant 0 : index
    %c0_3 = arith.constant 0 : index
    %4 = vector.load %arg2[%c0_2, %c0_3] : memref<2x1920xf32, #tpu.memory_space<vmem>>, vector<2x1920xf32>
    %c0_4 = arith.constant 0 : index
    %c0_5 = arith.constant 0 : index
    %5 = vector.load %arg3[%c0_4, %c0_5] : memref<1920x1152xf32, #tpu.memory_space<vmem>>, vector<1920x1152xf32>
    %cst = arith.constant dense<0.000000e+00> : vector<2x1152xf32>
    %6 = tpu.matmul %4, %5, %cst {dimension_numbers = #tpu.dot_dimension_numbers<[1], [0], [0], [1], [0, 0, 1, 1], [], []>} : vector<2x1920xf32>, vector<1920x1152xf32>, vector<2x1152xf32> -> vector<2x1152xf32>
    %7 = arith.addf %3, %6 : vector<2x1152xf32>
    %c0_6 = arith.constant 0 : index
    %c0_7 = arith.constant 0 : index
    %8 = vector.load %arg5[%c0_6, %c0_7] : memref<2x1152xf32, #tpu.memory_space<vmem>>, vector<2x1152xf32>
    tpu.vector_store %arg5[%c0_6, %c0_7], %7 {strides = array<i32>} : memref<2x1152xf32, #tpu.memory_space<vmem>>, vector<2x1152xf32>,
    %c4_i32 = arith.constant 4 : i32
    %9 = arith.cmpi eq, %arg1, %c4_i32 : i32
    %10 = arith.extui %9 : i1 to i32
    %c0_i32_8 = arith.constant 0 : i32
    %11 = arith.cmpi ne, %10, %c0_i32_8 : i32
    scf.if %11 {
      %c0_9 = arith.constant 0 : index
      %c0_10 = arith.constant 0 : index
      %12 = vector.load %arg5[%c0_9, %c0_10] : memref<2x1152xf32, #tpu.memory_space<vmem>>, vector<2x1152xf32>
      %c0_11 = arith.constant 0 : index
      %c0_12 = arith.constant 0 : index
      %13 = vector.load %arg4[%c0_11, %c0_12] : memref<1x1152xf32, #tpu.memory_space<vmem>>, vector<1x1152xf32>
      %14 = vector.broadcast %13 : vector<1x1152xf32> to vector<2x1152xf32>
      %15 = arith.addf %12, %14 : vector<2x1152xf32>
      %cst_13 = arith.constant 0.000000e+00 : f32
      %16 = vector.broadcast %cst_13 : f32 to vector<2x1152xf32>
      %17 = arith.maximumf %15, %16 : vector<2x1152xf32>
      %c0_14 = arith.constant 0 : index
      %c0_15 = arith.constant 0 : index
      %18 = vector.load %arg5[%c0_14, %c0_15] : memref<2x1152xf32, #tpu.memory_space<vmem>>, vector<2x1152xf32>
      tpu.vector_store %arg5[%c0_14, %c0_15], %17 {strides = array<i32>} : memref<2x1152xf32, #tpu.memory_space<vmem>>, vector<2x1152xf32>,
    } else {
    }
    return
  }
  func.func @transform_0(%arg0: i32, %arg1: i32) -> (i32, i32) {
    %c0_i32 = arith.constant 0 : i32
    %c0_i32_0 = arith.constant 0 : i32
    return %c0_i32, %arg1 : i32, i32
  }
  func.func @transform_1(%arg0: i32, %arg1: i32) -> (i32, i32) {
    %c0_i32 = arith.constant 0 : i32
    return %arg1, %arg0 : i32, i32
  }
  func.func @transform_2(%arg0: i32, %arg1: i32) -> (i32, i32) {
    %c0_i32 = arith.constant 0 : i32
    %c0_i32_0 = arith.constant 0 : i32
    return %c0_i32, %arg0 : i32, i32
  }
  func.func @transform_3(%arg0: i32, %arg1: i32) -> (i32, i32) {
    %c0_i32 = arith.constant 0 : i32
    %c0_i32_0 = arith.constant 0 : i32
    return %c0_i32, %arg0 : i32, i32
  }
}

</mosaic_0001>

<llo_original>
// kernel: forward.5
$region0: #{forward.5}
  #allocation0 [shape = 'u32[]', space=smem, size = 0x4, offset = 0x4, fixed_abs, tag = 'smem constant byte address 0x4 - core index']
  #allocation1 [shape = 'u32[72,128]{1,0:T(1,128)}', space=vmem, size = 0x9000, scoped, tag = 'internal scratch']
  %s0 = inlined_call_operand.vmem [shape: f32[102,16], index: 0, kind: input, shape index: {}]
  %s1 = inlined_call_operand.hbm [shape: f32[16,80], index: 1, kind: input, shape index: {}]
  %s2 = inlined_call_operand.hbm [shape: f32[1,80], index: 2, kind: input, shape index: {}]
  %s3 = inlined_call_operand.vmem [shape: f32[102,80], index: 3, kind: output, shape index: {}]
  %s4 = sld [smem:[#allocation0]]
  $region30: #{forward.5} parent=0
    _
  %s6 = ssub.s32 1, %s4
  %s7 = scalar_select 0, %s6, %s4
  $region1: #{forward.5} parent=0
    #allocation2 [shape = 'u8[8192]{0}', space=vmem, size = 0x2000, scoped, tag = 'input window, operand 1, single buffered']
    #allocation3 [shape = 's32[1]{0}', space=sflag, size = 0x4, scoped, tag = 'scoped memory for forward.5']
    #allocation4 [shape = 'u8[512]{0}', space=vmem, size = 0x400, scoped, tag = 'input window, operand 2, single buffered']
    #allocation5 [shape = 's32[1]{0}', space=sflag, size = 0x4, scoped, tag = 'scoped memory for forward.5']
    %8 = vsyncpa [#allocation3], 0
    %9 = vsyncpa [#allocation5], 0
    // Predicated region
    $region2: #{forward.5} parent=1 // pred_check
      _
    $region3: #{forward.5} parent=1 // pred_check_branch
      %11 = sbr.rel (0) target = $region5
    $region4: #{forward.5} parent=1 // pred_region
      _
    $region5: #{forward.5} parent=1 // pred_fallthru
      _
    // Predicated region
    $region6: #{forward.5} parent=1 // pred_check
      _
    $region7: #{forward.5} parent=1 // pred_check_branch
      %13 = sbr.rel (0) target = $region9
    $region8: #{forward.5} parent=1 // pred_region
      %15 = vsyncadd [#allocation3], 0
      %s16 = sshll.u32 %s1, 4
      %s17 = int_to_ptr.hbm [resolvable:$true] %s16
      %s18 = sshll.u32 [#allocation2], 4
      %s19 = int_to_ptr.vmem [resolvable:$true] %s18
      %24 = dma.hbm_to_vmem [thread:$0]  %s17, 256, %s19, [#allocation3], 128, 128, 8
    $region9: #{forward.5} parent=1 // pred_fallthru
      _
    // Predicated region
    $region10: #{forward.5} parent=1 // pred_check
      _
    $region11: #{forward.5} parent=1 // pred_check_branch
      %26 = sbr.rel (0) target = $region13
    $region12: #{forward.5} parent=1 // pred_region
      %28 = vsyncadd [#allocation5], 0
      %s30 = sshll.u32 %s2, 4
      %s31 = int_to_ptr.hbm [resolvable:$true] %s30
      %s32 = sshll.u32 [#allocation4], 4
      %s33 = int_to_ptr.vmem [resolvable:$true] %s32
      %35 = dma.hbm_to_vmem [thread:$0]  %s31, 16, %s33, [#allocation5]
    $region13: #{forward.5} parent=1 // pred_fallthru
      _
    // Predicated region
    $region14: #{forward.5} parent=1 // pred_check
      _
    $region15: #{forward.5} parent=1 // pred_check_branch
      %37 = sbr.rel (0) target = $region17
    $region16: #{forward.5} parent=1 // pred_region
      %39 = dma.done [#allocation3], 256
    $region17: #{forward.5} parent=1 // pred_fallthru
      _
    // Predicated region
    $region18: #{forward.5} parent=1 // pred_check
      _
    $region19: #{forward.5} parent=1 // pred_check_branch
      %41 = sbr.rel (0) target = $region21
    $region20: #{forward.5} parent=1 // pred_region
      %43 = dma.done [#allocation5], 16
    $region21: #{forward.5} parent=1 // pred_fallthru
      _
    %v44 = vld [vmem:[%s0] sm:$0xff]
    %v45 = vld [vmem:[%s0 + $0x8] sm:$0xff]
    %v46 = vld [vmem:[%s0 + $0x10] sm:$0xff]
    %v47 = vld [vmem:[%s0 + $0x18] sm:$0xff]
    %v48 = vld [vmem:[%s0 + $0x20] sm:$0xff]
    %v49 = vld [vmem:[%s0 + $0x28] sm:$0xff]
    %v50 = vld [vmem:[%s0 + $0x30] sm:$0xff]
    %v51 = vld [vmem:[%s0 + $0x38] sm:$0xff]
    %v52 = vld [vmem:[%s0 + $0x40] sm:$0xff]
    %v53 = vld [vmem:[%s0 + $0x48] sm:$0xff]
    %v54 = vld [vmem:[%s0 + $0x50] sm:$0xff]
    %v55 = vld [vmem:[%s0 + $0x58] sm:$0xff]
    %v56 = vld [vmem:[%s0 + $0x60] sm:$0x3f]
    %v57 = vld [vmem:[#allocation2] sm:$0xff]
    %v58 = vld [vmem:[#allocation2 + $0x8] sm:$0xff]
    %v59 = vld [vmem:[#allocation4] sm:$0x1]
    %v61 = vperm.slane %v59, 0
    %vm63 = vcmask 130048
    %v65 = vsel %vm63, %v44, 0
    %v68 = vsel %vm63, %v45, 0
    %v71 = vsel %vm63, %v46, 0
    %v74 = vsel %vm63, %v47, 0
    %v77 = vsel %vm63, %v48, 0
    %v80 = vsel %vm63, %v49, 0
    %v83 = vsel %vm63, %v50, 0
    %v86 = vsel %vm63, %v51, 0
    %v89 = vsel %vm63, %v52, 0
    %v92 = vsel %vm63, %v53, 0
    %v95 = vsel %vm63, %v54, 0
    %v98 = vsel %vm63, %v55, 0
    %v101 = vsel %vm63, %v56, 0
    %103 = vmatpush.msra.mxu0 0.0
    %104 = vmatpush.msra.mxu0 0.0
    %105 = vmatpush.msra.mxu0 0.0
    %106 = vmatpush.msra.mxu0 0.0
    %107 = vmatpush.msra.mxu0 0.0
    %108 = vmatpush.msra.mxu0 0.0
    %109 = vmatpush.msra.mxu0 0.0
    %110 = vmatpush.msra.mxu0 0.0
    %111 = vmatpush.msra.mxu0 0.0
    %112 = vmatpush.msra.mxu0 0.0
    %113 = vmatpush.msra.mxu0 0.0
    %114 = vmatpush.msra.mxu0 0.0
    %115 = vmatpush.msra.mxu0 0.0
    %116 = vmatpush.msra.mxu0 0.0
    %117 = vmatpush.msra.mxu0 %v58
    %118 = vmatpush.msra.mxu0 %v57
    %119 = vmatmul.f32.gmra.mxu0 %v65
    %v120 = vpop.f32.mrf.mxu0
    %v121 = vadd.f32 %v61, %v120
    %122 = vmatmul.f32.gmra.mxu0 %v68
    %v123 = vpop.f32.mrf.mxu0
    %v124 = vadd.f32 %v61, %v123
    %125 = vmatmul.f32.gmra.mxu0 %v71
    %v126 = vpop.f32.mrf.mxu0
    %v127 = vadd.f32 %v61, %v126
    %128 = vmatmul.f32.gmra.mxu0 %v74
    %v129 = vpop.f32.mrf.mxu0
    %v130 = vadd.f32 %v61, %v129
    %131 = vmatmul.f32.gmra.mxu0 %v77
    %v132 = vpop.f32.mrf.mxu0
    %v133 = vadd.f32 %v61, %v132
    %134 = vmatmul.f32.gmra.mxu0 %v80
    %v135 = vpop.f32.mrf.mxu0
    %v136 = vadd.f32 %v61, %v135
    %137 = vmatmul.f32.gmra.mxu0 %v83
    %v138 = vpop.f32.mrf.mxu0
    %v139 = vadd.f32 %v61, %v138
    %140 = vmatmul.f32.gmra.mxu0 %v86
    %v141 = vpop.f32.mrf.mxu0
    %v142 = vadd.f32 %v61, %v141
    %143 = vmatmul.f32.gmra.mxu0 %v89
    %v144 = vpop.f32.mrf.mxu0
    %v145 = vadd.f32 %v61, %v144
    %146 = vmatmul.f32.gmra.mxu0 %v92
    %v147 = vpop.f32.mrf.mxu0
    %v148 = vadd.f32 %v61, %v147
    %149 = vmatmul.f32.gmra.mxu0 %v95
    %v150 = vpop.f32.mrf.mxu0
    %v151 = vadd.f32 %v61, %v150
    %152 = vmatmul.f32.gmra.mxu0 %v98
    %v153 = vpop.f32.mrf.mxu0
    %v154 = vadd.f32 %v61, %v153
    %155 = vmatmul.f32.gmra.mxu0 %v101
    %v156 = vpop.f32.mrf.mxu0
    %v157 = vadd.f32 %v61, %v156
    %158 = vdwg.mxu0
    %v159 = vmax.f32 %v121, 0.0
    %v160 = vmax.f32 %v124, 0.0
    %v161 = vmax.f32 %v127, 0.0
    %v162 = vmax.f32 %v130, 0.0
    %v163 = vmax.f32 %v133, 0.0
    %v164 = vmax.f32 %v136, 0.0
    %v165 = vmax.f32 %v139, 0.0
    %v166 = vmax.f32 %v142, 0.0
    %v167 = vmax.f32 %v145, 0.0
    %v168 = vmax.f32 %v148, 0.0
    %v169 = vmax.f32 %v151, 0.0
    %v170 = vmax.f32 %v154, 0.0
    %v171 = vmax.f32 %v157, 0.0
    %vm172 = vcmask 654336
    %173 = vst.msk [vmem:[%s3] sm:$0xff] %vm172, %v159
    %174 = vst.msk [vmem:[%s3 + $0x8] sm:$0xff] %vm172, %v160
    %175 = vst.msk [vmem:[%s3 + $0x10] sm:$0xff] %vm172, %v161
    %176 = vst.msk [vmem:[%s3 + $0x18] sm:$0xff] %vm172, %v162
    %177 = vst.msk [vmem:[%s3 + $0x20] sm:$0xff] %vm172, %v163
    %178 = vst.msk [vmem:[%s3 + $0x28] sm:$0xff] %vm172, %v164
    %179 = vst.msk [vmem:[%s3 + $0x30] sm:$0xff] %vm172, %v165
    %180 = vst.msk [vmem:[%s3 + $0x38] sm:$0xff] %vm172, %v166
    %181 = vst.msk [vmem:[%s3 + $0x40] sm:$0xff] %vm172, %v167
    %182 = vst.msk [vmem:[%s3 + $0x48] sm:$0xff] %vm172, %v168
    %183 = vst.msk [vmem:[%s3 + $0x50] sm:$0xff] %vm172, %v169
    %184 = vst.msk [vmem:[%s3 + $0x58] sm:$0xff] %vm172, %v170
    %vm185 = vcmask 652288
    %186 = vst.msk [vmem:[%s3 + $0x60] sm:$0x3f] %vm185, %v171
    // Predicated region
    $region22: #{forward.5} parent=1 // pred_check
      _
    $region23: #{forward.5} parent=1 // pred_check_branch
      %188 = sbr.rel (0) target = $region25
    $region24: #{forward.5} parent=1 // pred_region
      _
    $region25: #{forward.5} parent=1 // pred_fallthru
      _
    // Predicated region
    $region26: #{forward.5} parent=1 // pred_check
      _
    $region27: #{forward.5} parent=1 // pred_check_branch
      %190 = sbr.rel (0) target = $region29
    $region28: #{forward.5} parent=1 // pred_region
      _
    $region29: #{forward.5} parent=1 // pred_fallthru
      _
    %191 = vsyncpa [#allocation3], 1
    %192 = vsyncpa [#allocation5], 1

// kernel: forward.6
$region0: #{forward.6}
  #allocation0 [shape = 'u32[]', space=smem, size = 0x4, offset = 0x4, fixed_abs, tag = 'smem constant byte address 0x4 - core index']
  #allocation1 [shape = 'u32[72,128]{1,0:T(1,128)}', space=vmem, size = 0x9000, scoped, tag = 'internal scratch']
  %s0 = inlined_call_operand.vmem [shape: f32[144,320], index: 0, kind: input, shape index: {}]
  %s1 = inlined_call_operand.vmem [shape: f32[320,80], index: 1, kind: input, shape index: {}]
  %s2 = inlined_call_operand.hbm [shape: f32[1,80], index: 2, kind: input, shape index: {}]
  %s3 = inlined_call_operand.vmem [shape: f32[144,80], index: 3, kind: output, shape index: {}]
  %s4 = sld [smem:[#allocation0]]
  $region26: #{forward.6} parent=0
    _
  %s6 = ssub.s32 1, %s4
  %s7 = scalar_select 0, %s6, %s4
  $region1: #{forward.6} parent=0
    #allocation2 [shape = 'u8[512]{0}', space=vmem, size = 0x400, scoped, tag = 'input window, operand 2, single buffered']
    #allocation3 [shape = 's32[1]{0}', space=sflag, size = 0x4, scoped, tag = 'scoped memory for forward.6']
    %8 = vsyncpa [#allocation3], 0
    // Predicated region
    $region2: #{forward.6} parent=1 // pred_check
      _
    $region3: #{forward.6} parent=1 // pred_check_branch
      %10 = sbr.rel (0) target = $region5
    $region4: #{forward.6} parent=1 // pred_region
      _
    $region5: #{forward.6} parent=1 // pred_fallthru
      _
    // Predicated region
    $region6: #{forward.6} parent=1 // pred_check
      _
    $region7: #{forward.6} parent=1 // pred_check_branch
      %12 = sbr.rel (0) target = $region9
    $region8: #{forward.6} parent=1 // pred_region
      _
    $region9: #{forward.6} parent=1 // pred_fallthru
      _
    // Predicated region
    $region10: #{forward.6} parent=1 // pred_check
      _
    $region11: #{forward.6} parent=1 // pred_check_branch
      %14 = sbr.rel (0) target = $region13
    $region12: #{forward.6} parent=1 // pred_region
      %16 = vsyncadd [#allocation3], 0
      %s18 = sshll.u32 %s2, 4
      %s19 = int_to_ptr.hbm [resolvable:$true] %s18
      %s20 = sshll.u32 [#allocation2], 4
      %s21 = int_to_ptr.vmem [resolvable:$true] %s20
      %23 = dma.hbm_to_vmem [thread:$0]  %s19, 16, %s21, [#allocation3]
    $region13: #{forward.6} parent=1 // pred_fallthru
      _
    // Predicated region
    $region14: #{forward.6} parent=1 // pred_check
      _
    $region15: #{forward.6} parent=1 // pred_check_branch
      %25 = sbr.rel (0) target = $region17
    $region16: #{forward.6} parent=1 // pred_region
      %27 = dma.done [#allocation3], 16
    $region17: #{forward.6} parent=1 // pred_fallthru
      _
    %v28 = vld [vmem:[%s0] sm:$0xff]
    %v29 = vld [vmem:[%s0 + $0x8] sm:$0xff]
    %v30 = vld [vmem:[%s0 + $0x10] sm:$0xff]
    %v31 = vld [vmem:[%s0 + $0x18] sm:$0xff]
    %v32 = vld [vmem:[%s0 + $0x20] sm:$0xff]
    %v33 = vld [vmem:[%s0 + $0x28] sm:$0xff]
    %v34 = vld [vmem:[%s0 + $0x30] sm:$0xff]
    %v35 = vld [vmem:[%s0 + $0x38] sm:$0xff]
    %v36 = vld [vmem:[%s0 + $0x40] sm:$0xff]
    %v37 = vld [vmem:[%s0 + $0x48] sm:$0xff]
    %v38 = vld [vmem:[%s0 + $0x50] sm:$0xff]
    %v39 = vld [vmem:[%s0 + $0x58] sm:$0xff]
    %v40 = vld [vmem:[%s0 + $0x60] sm:$0xff]
    %v41 = vld [vmem:[%s0 + $0x68] sm:$0xff]
    %v42 = vld [vmem:[%s0 + $0x70] sm:$0xff]
    %v43 = vld [vmem:[%s0 + $0x78] sm:$0xff]
    %v44 = vld [vmem:[%s0 + $0x80] sm:$0xff]
    %v45 = vld [vmem:[%s0 + $0x88] sm:$0xff]
    %v46 = vld [vmem:[%s0 + $0x90] sm:$0xff]
    %v47 = vld [vmem:[%s0 + $0x98] sm:$0xff]
    %v48 = vld [vmem:[%s0 + $0xa0] sm:$0xff]
    %v49 = vld [vmem:[%s0 + $0xa8] sm:$0xff]
    %v50 = vld [vmem:[%s0 + $0xb0] sm:$0xff]
    %v51 = vld [vmem:[%s0 + $0xb8] sm:$0xff]
    %v52 = vld [vmem:[%s0 + $0xc0] sm:$0xff]
    %v53 = vld [vmem:[%s0 + $0xc8] sm:$0xff]
    %v54 = vld [vmem:[%s0 + $0xd0] sm:$0xff]
    %v55 = vld [vmem:[%s0 + $0xd8] sm:$0xff]
    %v56 = vld [vmem:[%s0 + $0xe0] sm:$0xff]
    %v57 = vld [vmem:[%s0 + $0xe8] sm:$0xff]
    %v58 = vld [vmem:[%s0 + $0xf0] sm:$0xff]
    %v59 = vld [vmem:[%s0 + $0xf8] sm:$0xff]
    %v60 = vld [vmem:[%s0 + $0x100] sm:$0xff]
    %v61 = vld [vmem:[%s0 + $0x108] sm:$0xff]
    %v62 = vld [vmem:[%s0 + $0x110] sm:$0xff]
    %v63 = vld [vmem:[%s0 + $0x118] sm:$0xff]
    %v64 = vld [vmem:[%s0 + $0x120] sm:$0xff]
    %v65 = vld [vmem:[%s0 + $0x128] sm:$0xff]
    %v66 = vld [vmem:[%s0 + $0x130] sm:$0xff]
    %v67 = vld [vmem:[%s0 + $0x138] sm:$0xff]
    %v68 = vld [vmem:[%s0 + $0x140] sm:$0xff]
    %v69 = vld [vmem:[%s0 + $0x148] sm:$0xff]
    %v70 = vld [vmem:[%s0 + $0x150] sm:$0xff]
    %v71 = vld [vmem:[%s0 + $0x158] sm:$0xff]
    %v72 = vld [vmem:[%s0 + $0x160] sm:$0xff]
    %v73 = vld [vmem:[%s0 + $0x168] sm:$0xff]
    %v74 = vld [vmem:[%s0 + $0x170] sm:$0xff]
    %v75 = vld [vmem:[%s0 + $0x178] sm:$0xff]
    %v76 = vld [vmem:[%s0 + $0x180] sm:$0xff]
    %v77 = vld [vmem:[%s0 + $0x188] sm:$0xff]
    %v78 = vld [vmem:[%s0 + $0x190] sm:$0xff]
    %v79 = vld [vmem:[%s0 + $0x198] sm:$0xff]
    %v80 = vld [vmem:[%s0 + $0x1a0] sm:$0xff]
    %v81 = vld [vmem:[%s0 + $0x1a8] sm:$0xff]
    %v82 = vld [vmem:[%s1] sm:$0xff]
    %v83 = vld [vmem:[%s1 + $0x8] sm:$0xff]
    %v84 = vld [vmem:[%s1 + $0x10] sm:$0xff]
    %v85 = vld [vmem:[%s1 + $0x18] sm:$0xff]
    %v86 = vld [vmem:[%s1 + $0x20] sm:$0xff]
    %v87 = vld [vmem:[%s1 + $0x28] sm:$0xff]
    %v88 = vld [vmem:[%s1 + $0x30] sm:$0xff]
    %v89 = vld [vmem:[%s1 + $0x38] sm:$0xff]
    %v90 = vld [vmem:[%s1 + $0x40] sm:$0xff]
    %v91 = vld [vmem:[%s1 + $0x48] sm:$0xff]
    %v92 = vld [vmem:[%s1 + $0x50] sm:$0xff]
    %v93 = vld [vmem:[%s1 + $0x58] sm:$0xff]
    %v94 = vld [vmem:[%s1 + $0x60] sm:$0xff]
    %v95 = vld [vmem:[%s1 + $0x68] sm:$0xff]
    %v96 = vld [vmem:[%s1 + $0x70] sm:$0xff]
    %v97 = vld [vmem:[%s1 + $0x78] sm:$0xff]
    %v98 = vld [vmem:[%s1 + $0x80] sm:$0xff]
    %v99 = vld [vmem:[%s1 + $0x88] sm:$0xff]
    %v100 = vld [vmem:[%s1 + $0x90] sm:$0xff]
    %v101 = vld [vmem:[%s1 + $0x98] sm:$0xff]
    %v102 = vld [vmem:[%s1 + $0xa0] sm:$0xff]
    %v103 = vld [vmem:[%s1 + $0xa8] sm:$0xff]
    %v104 = vld [vmem:[%s1 + $0xb0] sm:$0xff]
    %v105 = vld [vmem:[%s1 + $0xb8] sm:$0xff]
    %v106 = vld [vmem:[%s1 + $0xc0] sm:$0xff]
    %v107 = vld [vmem:[%s1 + $0xc8] sm:$0xff]
    %v108 = vld [vmem:[%s1 + $0xd0] sm:$0xff]
    %v109 = vld [vmem:[%s1 + $0xd8] sm:$0xff]
    %v110 = vld [vmem:[%s1 + $0xe0] sm:$0xff]
    %v111 = vld [vmem:[%s1 + $0xe8] sm:$0xff]
    %v112 = vld [vmem:[%s1 + $0xf0] sm:$0xff]
    %v113 = vld [vmem:[%s1 + $0xf8] sm:$0xff]
    %v114 = vld [vmem:[%s1 + $0x100] sm:$0xff]
    %v115 = vld [vmem:[%s1 + $0x108] sm:$0xff]
    %v116 = vld [vmem:[%s1 + $0x110] sm:$0xff]
    %v117 = vld [vmem:[%s1 + $0x118] sm:$0xff]
    %v118 = vld [vmem:[%s1 + $0x120] sm:$0xff]
    %v119 = vld [vmem:[%s1 + $0x128] sm:$0xff]
    %v120 = vld [vmem:[%s1 + $0x130] sm:$0xff]
    %v121 = vld [vmem:[%s1 + $0x138] sm:$0xff]
    %v122 = vld [vmem:[#allocation2] sm:$0x1]
    %v124 = vperm.slane %v122, 0
    %vm126 = vcmask 523264
    %v128 = vsel %vm126, %v30, 0
    %v131 = vsel %vm126, %v33, 0
    %v134 = vsel %vm126, %v36, 0
    %v137 = vsel %vm126, %v39, 0
    %v140 = vsel %vm126, %v42, 0
    %v143 = vsel %vm126, %v45, 0
    %v146 = vsel %vm126, %v48, 0
    %v149 = vsel %vm126, %v51, 0
    %v152 = vsel %vm126, %v54, 0
    %v155 = vsel %vm126, %v57, 0
    %v158 = vsel %vm126, %v60, 0
    %v161 = vsel %vm126, %v63, 0
    %v164 = vsel %vm126, %v66, 0
    %v167 = vsel %vm126, %v69, 0
    %v170 = vsel %vm126, %v72, 0
    %v173 = vsel %vm126, %v75, 0
    %v176 = vsel %vm126, %v78, 0
    %v179 = vsel %vm126, %v81, 0
    %181 = vmatpush.msra.mxu0 %v97
    %182 = vmatpush.msra.mxu0 %v96
    %183 = vmatpush.msra.mxu0 %v95
    %184 = vmatpush.msra.mxu0 %v94
    %185 = vmatpush.msra.mxu0 %v93
    %186 = vmatpush.msra.mxu0 %v92
    %187 = vmatpush.msra.mxu0 %v91
    %188 = vmatpush.msra.mxu0 %v90
    %189 = vmatpush.msra.mxu0 %v89
    %190 = vmatpush.msra.mxu0 %v88
    %191 = vmatpush.msra.mxu0 %v87
    %192 = vmatpush.msra.mxu0 %v86
    %193 = vmatpush.msra.mxu0 %v85
    %194 = vmatpush.msra.mxu0 %v84
    %195 = vmatpush.msra.mxu0 %v83
    %196 = vmatpush.msra.mxu0 %v82
    %197 = vmatmul.f32.gmra.mxu0 %v28
    %v198 = vpop.f32.mrf.mxu0
    %v199 = vadd.f32 %v124, %v198
    %200 = vmatmul.f32.gmra.mxu0 %v31
    %v201 = vpop.f32.mrf.mxu0
    %v202 = vadd.f32 %v124, %v201
    %203 = vmatmul.f32.gmra.mxu0 %v34
    %v204 = vpop.f32.mrf.mxu0
    %v205 = vadd.f32 %v124, %v204
    %206 = vmatmul.f32.gmra.mxu0 %v37
    %v207 = vpop.f32.mrf.mxu0
    %v208 = vadd.f32 %v124, %v207
    %209 = vmatmul.f32.gmra.mxu0 %v40
    %v210 = vpop.f32.mrf.mxu0
    %v211 = vadd.f32 %v124, %v210
    %212 = vmatmul.f32.gmra.mxu0 %v43
    %v213 = vpop.f32.mrf.mxu0
    %v214 = vadd.f32 %v124, %v213
    %215 = vmatmul.f32.gmra.mxu0 %v46
    %v216 = vpop.f32.mrf.mxu0
    %v217 = vadd.f32 %v124, %v216
    %218 = vmatmul.f32.gmra.mxu0 %v49
    %v219 = vpop.f32.mrf.mxu0
    %v220 = vadd.f32 %v124, %v219
    %221 = vmatmul.f32.gmra.mxu0 %v52
    %v222 = vpop.f32.mrf.mxu0
    %v223 = vadd.f32 %v124, %v222
    %224 = vmatmul.f32.gmra.mxu0 %v55
    %v225 = vpop.f32.mrf.mxu0
    %v226 = vadd.f32 %v124, %v225
    %227 = vmatmul.f32.gmra.mxu0 %v58
    %v228 = vpop.f32.mrf.mxu0
    %v229 = vadd.f32 %v124, %v228
    %230 = vmatmul.f32.gmra.mxu0 %v61
    %v231 = vpop.f32.mrf.mxu0
    %v232 = vadd.f32 %v124, %v231
    %233 = vmatmul.f32.gmra.mxu0 %v64
    %v234 = vpop.f32.mrf.mxu0
    %v235 = vadd.f32 %v124, %v234
    %236 = vmatmul.f32.gmra.mxu0 %v67
    %v237 = vpop.f32.mrf.mxu0
    %v238 = vadd.f32 %v124, %v237
    %239 = vmatmul.f32.gmra.mxu0 %v70
    %v240 = vpop.f32.mrf.mxu0
    %v241 = vadd.f32 %v124, %v240
    %242 = vmatmul.f32.gmra.mxu0 %v73
    %v243 = vpop.f32.mrf.mxu0
    %v244 = vadd.f32 %v124, %v243
    %245 = vmatmul.f32.gmra.mxu0 %v76
    %v246 = vpop.f32.mrf.mxu0
    %v247 = vadd.f32 %v124, %v246
    %248 = vmatmul.f32.gmra.mxu0 %v79
    %v249 = vpop.f32.mrf.mxu0
    %v250 = vadd.f32 %v124, %v249
    %251 = vdwg.mxu0
    %252 = vmatpush.msra.mxu0 %v113
    %253 = vmatpush.msra.mxu0 %v112
    %254 = vmatpush.msra.mxu0 %v111
    %255 = vmatpush.msra.mxu0 %v110
    %256 = vmatpush.msra.mxu0 %v109
    %257 = vmatpush.msra.mxu0 %v108
    %258 = vmatpush.msra.mxu0 %v107
    %259 = vmatpush.msra.mxu0 %v106
    %260 = vmatpush.msra.mxu0 %v105
    %261 = vmatpush.msra.mxu0 %v104
    %262 = vmatpush.msra.mxu0 %v103
    %263 = vmatpush.msra.mxu0 %v102
    %264 = vmatpush.msra.mxu0 %v101
    %265 = vmatpush.msra.mxu0 %v100
    %266 = vmatpush.msra.mxu0 %v99
    %267 = vmatpush.msra.mxu0 %v98
    %268 = vmatmul.f32.gmra.mxu0 %v29
    %v269 = vpop.f32.mrf.mxu0
    %v270 = vadd.f32 %v199, %v269
    %271 = vmatmul.f32.gmra.mxu0 %v32
    %v272 = vpop.f32.mrf.mxu0
    %v273 = vadd.f32 %v202, %v272
    %274 = vmatmul.f32.gmra.mxu0 %v35
    %v275 = vpop.f32.mrf.mxu0
    %v276 = vadd.f32 %v205, %v275
    %277 = vmatmul.f32.gmra.mxu0 %v38
    %v278 = vpop.f32.mrf.mxu0
    %v279 = vadd.f32 %v208, %v278
    %280 = vmatmul.f32.gmra.mxu0 %v41
    %v281 = vpop.f32.mrf.mxu0
    %v282 = vadd.f32 %v211, %v281
    %283 = vmatmul.f32.gmra.mxu0 %v44
    %v284 = vpop.f32.mrf.mxu0
    %v285 = vadd.f32 %v214, %v284
    %286 = vmatmul.f32.gmra.mxu0 %v47
    %v287 = vpop.f32.mrf.mxu0
    %v288 = vadd.f32 %v217, %v287
    %289 = vmatmul.f32.gmra.mxu0 %v50
    %v290 = vpop.f32.mrf.mxu0
    %v291 = vadd.f32 %v220, %v290
    %292 = vmatmul.f32.gmra.mxu0 %v53
    %v293 = vpop.f32.mrf.mxu0
    %v294 = vadd.f32 %v223, %v293
    %295 = vmatmul.f32.gmra.mxu0 %v56
    %v296 = vpop.f32.mrf.mxu0
    %v297 = vadd.f32 %v226, %v296
    %298 = vmatmul.f32.gmra.mxu0 %v59
    %v299 = vpop.f32.mrf.mxu0
    %v300 = vadd.f32 %v229, %v299
    %301 = vmatmul.f32.gmra.mxu0 %v62
    %v302 = vpop.f32.mrf.mxu0
    %v303 = vadd.f32 %v232, %v302
    %304 = vmatmul.f32.gmra.mxu0 %v65
    %v305 = vpop.f32.mrf.mxu0
    %v306 = vadd.f32 %v235, %v305
    %307 = vmatmul.f32.gmra.mxu0 %v68
    %v308 = vpop.f32.mrf.mxu0
    %v309 = vadd.f32 %v238, %v308
    %310 = vmatmul.f32.gmra.mxu0 %v71
    %v311 = vpop.f32.mrf.mxu0
    %v312 = vadd.f32 %v241, %v311
    %313 = vmatmul.f32.gmra.mxu0 %v74
    %v314 = vpop.f32.mrf.mxu0
    %v315 = vadd.f32 %v244, %v314
    %316 = vmatmul.f32.gmra.mxu0 %v77
    %v317 = vpop.f32.mrf.mxu0
    %v318 = vadd.f32 %v247, %v317
    %319 = vmatmul.f32.gmra.mxu0 %v80
    %v320 = vpop.f32.mrf.mxu0
    %v321 = vadd.f32 %v250, %v320
    %322 = vdwg.mxu0
    %323 = vmatpush.msra.mxu0 0.0
    %324 = vmatpush.msra.mxu0 0.0
    %325 = vmatpush.msra.mxu0 0.0
    %326 = vmatpush.msra.mxu0 0.0
    %327 = vmatpush.msra.mxu0 0.0
    %328 = vmatpush.msra.mxu0 0.0
    %329 = vmatpush.msra.mxu0 0.0
    %330 = vmatpush.msra.mxu0 0.0
    %331 = vmatpush.msra.mxu0 %v121
    %332 = vmatpush.msra.mxu0 %v120
    %333 = vmatpush.msra.mxu0 %v119
    %334 = vmatpush.msra.mxu0 %v118
    %335 = vmatpush.msra.mxu0 %v117
    %336 = vmatpush.msra.mxu0 %v116
    %337 = vmatpush.msra.mxu0 %v115
    %338 = vmatpush.msra.mxu0 %v114
    %339 = vmatmul.f32.gmra.mxu0 %v128
    %v340 = vpop.f32.mrf.mxu0
    %v341 = vadd.f32 %v270, %v340
    %342 = vmatmul.f32.gmra.mxu0 %v131
    %v343 = vpop.f32.mrf.mxu0
    %v344 = vadd.f32 %v273, %v343
    %345 = vmatmul.f32.gmra.mxu0 %v134
    %v346 = vpop.f32.mrf.mxu0
    %v347 = vadd.f32 %v276, %v346
    %348 = vmatmul.f32.gmra.mxu0 %v137
    %v349 = vpop.f32.mrf.mxu0
    %v350 = vadd.f32 %v279, %v349
    %351 = vmatmul.f32.gmra.mxu0 %v140
    %v352 = vpop.f32.mrf.mxu0
    %v353 = vadd.f32 %v282, %v352
    %354 = vmatmul.f32.gmra.mxu0 %v143
    %v355 = vpop.f32.mrf.mxu0
    %v356 = vadd.f32 %v285, %v355
    %357 = vmatmul.f32.gmra.mxu0 %v146
    %v358 = vpop.f32.mrf.mxu0
    %v359 = vadd.f32 %v288, %v358
    %360 = vmatmul.f32.gmra.mxu0 %v149
    %v361 = vpop.f32.mrf.mxu0
    %v362 = vadd.f32 %v291, %v361
    %363 = vmatmul.f32.gmra.mxu0 %v152
    %v364 = vpop.f32.mrf.mxu0
    %v365 = vadd.f32 %v294, %v364
    %366 = vmatmul.f32.gmra.mxu0 %v155
    %v367 = vpop.f32.mrf.mxu0
    %v368 = vadd.f32 %v297, %v367
    %369 = vmatmul.f32.gmra.mxu0 %v158
    %v370 = vpop.f32.mrf.mxu0
    %v371 = vadd.f32 %v300, %v370
    %372 = vmatmul.f32.gmra.mxu0 %v161
    %v373 = vpop.f32.mrf.mxu0
    %v374 = vadd.f32 %v303, %v373
    %375 = vmatmul.f32.gmra.mxu0 %v164
    %v376 = vpop.f32.mrf.mxu0
    %v377 = vadd.f32 %v306, %v376
    %378 = vmatmul.f32.gmra.mxu0 %v167
    %v379 = vpop.f32.mrf.mxu0
    %v380 = vadd.f32 %v309, %v379
    %381 = vmatmul.f32.gmra.mxu0 %v170
    %v382 = vpop.f32.mrf.mxu0
    %v383 = vadd.f32 %v312, %v382
    %384 = vmatmul.f32.gmra.mxu0 %v173
    %v385 = vpop.f32.mrf.mxu0
    %v386 = vadd.f32 %v315, %v385
    %387 = vmatmul.f32.gmra.mxu0 %v176
    %v388 = vpop.f32.mrf.mxu0
    %v389 = vadd.f32 %v318, %v388
    %390 = vmatmul.f32.gmra.mxu0 %v179
    %v391 = vpop.f32.mrf.mxu0
    %v392 = vadd.f32 %v321, %v391
    %393 = vdwg.mxu0
    %v394 = vmax.f32 %v341, 0.0
    %v395 = vmax.f32 %v344, 0.0
    %v396 = vmax.f32 %v347, 0.0
    %v397 = vmax.f32 %v350, 0.0
    %v398 = vmax.f32 %v353, 0.0
    %v399 = vmax.f32 %v356, 0.0
    %v400 = vmax.f32 %v359, 0.0
    %v401 = vmax.f32 %v362, 0.0
    %v402 = vmax.f32 %v365, 0.0
    %v403 = vmax.f32 %v368, 0.0
    %v404 = vmax.f32 %v371, 0.0
    %v405 = vmax.f32 %v374, 0.0
    %v406 = vmax.f32 %v377, 0.0
    %v407 = vmax.f32 %v380, 0.0
    %v408 = vmax.f32 %v383, 0.0
    %v409 = vmax.f32 %v386, 0.0
    %v410 = vmax.f32 %v389, 0.0
    %v411 = vmax.f32 %v392, 0.0
    %vm412 = vcmask 654336
    %413 = vst.msk [vmem:[%s3] sm:$0xff] %vm412, %v394
    %414 = vst.msk [vmem:[%s3 + $0x8] sm:$0xff] %vm412, %v395
    %415 = vst.msk [vmem:[%s3 + $0x10] sm:$0xff] %vm412, %v396
    %416 = vst.msk [vmem:[%s3 + $0x18] sm:$0xff] %vm412, %v397
    %417 = vst.msk [vmem:[%s3 + $0x20] sm:$0xff] %vm412, %v398
    %418 = vst.msk [vmem:[%s3 + $0x28] sm:$0xff] %vm412, %v399
    %419 = vst.msk [vmem:[%s3 + $0x30] sm:$0xff] %vm412, %v400
    %420 = vst.msk [vmem:[%s3 + $0x38] sm:$0xff] %vm412, %v401
    %421 = vst.msk [vmem:[%s3 + $0x40] sm:$0xff] %vm412, %v402
    %422 = vst.msk [vmem:[%s3 + $0x48] sm:$0xff] %vm412, %v403
    %423 = vst.msk [vmem:[%s3 + $0x50] sm:$0xff] %vm412, %v404
    %424 = vst.msk [vmem:[%s3 + $0x58] sm:$0xff] %vm412, %v405
    %425 = vst.msk [vmem:[%s3 + $0x60] sm:$0xff] %vm412, %v406
    %426 = vst.msk [vmem:[%s3 + $0x68] sm:$0xff] %vm412, %v407
    %427 = vst.msk [vmem:[%s3 + $0x70] sm:$0xff] %vm412, %v408
    %428 = vst.msk [vmem:[%s3 + $0x78] sm:$0xff] %vm412, %v409
    %429 = vst.msk [vmem:[%s3 + $0x80] sm:$0xff] %vm412, %v410
    %430 = vst.msk [vmem:[%s3 + $0x88] sm:$0xff] %vm412, %v411
    // Predicated region
    $region18: #{forward.6} parent=1 // pred_check
      _
    $region19: #{forward.6} parent=1 // pred_check_branch
      %432 = sbr.rel (0) target = $region21
    $region20: #{forward.6} parent=1 // pred_region
      _
    $region21: #{forward.6} parent=1 // pred_fallthru
      _
    // Predicated region
    $region22: #{forward.6} parent=1 // pred_check
      _
    $region23: #{forward.6} parent=1 // pred_check_branch
      %434 = sbr.rel (0) target = $region25
    $region24: #{forward.6} parent=1 // pred_region
      _
    $region25: #{forward.6} parent=1 // pred_fallthru
      _
    %435 = vsyncpa [#allocation3], 1

// kernel: forward.7
$region0: #{forward.7}
  #allocation0 [shape = 'u32[]', space=smem, size = 0x4, offset = 0x4, fixed_abs, tag = 'smem constant byte address 0x4 - core index']
  #allocation1 [shape = 'u32[72,128]{1,0:T(1,128)}', space=vmem, size = 0x9000, scoped, tag = 'internal scratch']
  %s0 = inlined_call_operand.vmem [shape: f32[240,80], index: 0, kind: input, shape index: {}]
  %s1 = inlined_call_operand.hbm [shape: f32[80,80], index: 1, kind: input, shape index: {}]
  %s2 = inlined_call_operand.hbm [shape: f32[1,80], index: 2, kind: input, shape index: {}]
  %s3 = inlined_call_operand.vmem [shape: f32[240,80], index: 3, kind: output, shape index: {}]
  %s4 = sld [smem:[#allocation0]]
  $region30: #{forward.7} parent=0
    _
  %s6 = ssub.s32 1, %s4
  %s7 = scalar_select 0, %s6, %s4
  $region1: #{forward.7} parent=0
    #allocation2 [shape = 'u8[40960]{0}', space=vmem, size = 0xa000, scoped, tag = 'input window, operand 1, single buffered']
    #allocation3 [shape = 's32[1]{0}', space=sflag, size = 0x4, scoped, tag = 'scoped memory for forward.7']
    #allocation4 [shape = 'u8[512]{0}', space=vmem, size = 0x400, scoped, tag = 'input window, operand 2, single buffered']
    #allocation5 [shape = 's32[1]{0}', space=sflag, size = 0x4, scoped, tag = 'scoped memory for forward.7']
    %8 = vsyncpa [#allocation3], 0
    %9 = vsyncpa [#allocation5], 0
    // Predicated region
    $region2: #{forward.7} parent=1 // pred_check
      _
    $region3: #{forward.7} parent=1 // pred_check_branch
      %11 = sbr.rel (0) target = $region5
    $region4: #{forward.7} parent=1 // pred_region
      _
    $region5: #{forward.7} parent=1 // pred_fallthru
      _
    // Predicated region
    $region6: #{forward.7} parent=1 // pred_check
      _
    $region7: #{forward.7} parent=1 // pred_check_branch
      %13 = sbr.rel (0) target = $region9
    $region8: #{forward.7} parent=1 // pred_region
      %15 = vsyncadd [#allocation3], 0
      %s16 = sshll.u32 %s1, 4
      %s17 = int_to_ptr.hbm [resolvable:$true] %s16
      %s18 = sshll.u32 [#allocation2], 4
      %s19 = int_to_ptr.vmem [resolvable:$true] %s18
      %24 = dma.hbm_to_vmem [thread:$0]  %s17, 1280, %s19, [#allocation3], 128, 128, 8
    $region9: #{forward.7} parent=1 // pred_fallthru
      _
    // Predicated region
    $region10: #{forward.7} parent=1 // pred_check
      _
    $region11: #{forward.7} parent=1 // pred_check_branch
      %26 = sbr.rel (0) target = $region13
    $region12: #{forward.7} parent=1 // pred_region
      %28 = vsyncadd [#allocation5], 0
      %s30 = sshll.u32 %s2, 4
      %s31 = int_to_ptr.hbm [resolvable:$true] %s30
      %s32 = sshll.u32 [#allocation4], 4
      %s33 = int_to_ptr.vmem [resolvable:$true] %s32
      %35 = dma.hbm_to_vmem [thread:$0]  %s31, 16, %s33, [#allocation5]
    $region13: #{forward.7} parent=1 // pred_fallthru
      _
    // Predicated region
    $region14: #{forward.7} parent=1 // pred_check
      _
    $region15: #{forward.7} parent=1 // pred_check_branch
      %37 = sbr.rel (0) target = $region17
    $region16: #{forward.7} parent=1 // pred_region
      %39 = dma.done [#allocation3], 1280
    $region17: #{forward.7} parent=1 // pred_fallthru
      _
    // Predicated region
    $region18: #{forward.7} parent=1 // pred_check
      _
    $region19: #{forward.7} parent=1 // pred_check_branch
      %41 = sbr.rel (0) target = $region21
    $region20: #{forward.7} parent=1 // pred_region
      %43 = dma.done [#allocation5], 16
    $region21: #{forward.7} parent=1 // pred_fallthru
      _
    %v44 = vld [vmem:[%s0] sm:$0xff]
    %v45 = vld [vmem:[%s0 + $0x8] sm:$0xff]
    %v46 = vld [vmem:[%s0 + $0x10] sm:$0xff]
    %v47 = vld [vmem:[%s0 + $0x18] sm:$0xff]
    %v48 = vld [vmem:[%s0 + $0x20] sm:$0xff]
    %v49 = vld [vmem:[%s0 + $0x28] sm:$0xff]
    %v50 = vld [vmem:[%s0 + $0x30] sm:$0xff]
    %v51 = vld [vmem:[%s0 + $0x38] sm:$0xff]
    %v52 = vld [vmem:[%s0 + $0x40] sm:$0xff]
    %v53 = vld [vmem:[%s0 + $0x48] sm:$0xff]
    %v54 = vld [vmem:[%s0 + $0x50] sm:$0xff]
    %v55 = vld [vmem:[%s0 + $0x58] sm:$0xff]
    %v56 = vld [vmem:[%s0 + $0x60] sm:$0xff]
    %v57 = vld [vmem:[%s0 + $0x68] sm:$0xff]
    %v58 = vld [vmem:[%s0 + $0x70] sm:$0xff]
    %v59 = vld [vmem:[%s0 + $0x78] sm:$0xff]
    %v60 = vld [vmem:[%s0 + $0x80] sm:$0xff]
    %v61 = vld [vmem:[%s0 + $0x88] sm:$0xff]
    %v62 = vld [vmem:[%s0 + $0x90] sm:$0xff]
    %v63 = vld [vmem:[%s0 + $0x98] sm:$0xff]
    %v64 = vld [vmem:[%s0 + $0xa0] sm:$0xff]
    %v65 = vld [vmem:[%s0 + $0xa8] sm:$0xff]
    %v66 = vld [vmem:[%s0 + $0xb0] sm:$0xff]
    %v67 = vld [vmem:[%s0 + $0xb8] sm:$0xff]
    %v68 = vld [vmem:[%s0 + $0xc0] sm:$0xff]
    %v69 = vld [vmem:[%s0 + $0xc8] sm:$0xff]
    %v70 = vld [vmem:[%s0 + $0xd0] sm:$0xff]
    %v71 = vld [vmem:[%s0 + $0xd8] sm:$0xff]
    %v72 = vld [vmem:[%s0 + $0xe0] sm:$0xff]
    %v73 = vld [vmem:[%s0 + $0xe8] sm:$0xff]
    %v74 = vld [vmem:[#allocation2] sm:$0xff]
    %v75 = vld [vmem:[#allocation2 + $0x8] sm:$0xff]
    %v76 = vld [vmem:[#allocation2 + $0x10] sm:$0xff]
    %v77 = vld [vmem:[#allocation2 + $0x18] sm:$0xff]
    %v78 = vld [vmem:[#allocation2 + $0x20] sm:$0xff]
    %v79 = vld [vmem:[#allocation2 + $0x28] sm:$0xff]
    %v80 = vld [vmem:[#allocation2 + $0x30] sm:$0xff]
    %v81 = vld [vmem:[#allocation2 + $0x38] sm:$0xff]
    %v82 = vld [vmem:[#allocation2 + $0x40] sm:$0xff]
    %v83 = vld [vmem:[#allocation2 + $0x48] sm:$0xff]
    %v84 = vld [vmem:[#allocation4] sm:$0x1]
    %v86 = vperm.slane %v84, 0
    %vm88 = vcmask 654336
    %v90 = vsel %vm88, %v44, 0
    %v93 = vsel %vm88, %v45, 0
    %v96 = vsel %vm88, %v46, 0
    %v99 = vsel %vm88, %v47, 0
    %v102 = vsel %vm88, %v48, 0
    %v105 = vsel %vm88, %v49, 0
    %v108 = vsel %vm88, %v50, 0
    %v111 = vsel %vm88, %v51, 0
    %v114 = vsel %vm88, %v52, 0
    %v117 = vsel %vm88, %v53, 0
    %v120 = vsel %vm88, %v54, 0
    %v123 = vsel %vm88, %v55, 0
    %v126 = vsel %vm88, %v56, 0
    %v129 = vsel %vm88, %v57, 0
    %v132 = vsel %vm88, %v58, 0
    %v135 = vsel %vm88, %v59, 0
    %v138 = vsel %vm88, %v60, 0
    %v141 = vsel %vm88, %v61, 0
    %v144 = vsel %vm88, %v62, 0
    %v147 = vsel %vm88, %v63, 0
    %v150 = vsel %vm88, %v64, 0
    %v153 = vsel %vm88, %v65, 0
    %v156 = vsel %vm88, %v66, 0
    %v159 = vsel %vm88, %v67, 0
    %v162 = vsel %vm88, %v68, 0
    %v165 = vsel %vm88, %v69, 0
    %v168 = vsel %vm88, %v70, 0
    %v171 = vsel %vm88, %v71, 0
    %v174 = vsel %vm88, %v72, 0
    %v177 = vsel %vm88, %v73, 0
    %179 = vmatpush.msra.mxu0 0.0
    %180 = vmatpush.msra.mxu0 0.0
    %181 = vmatpush.msra.mxu0 0.0
    %182 = vmatpush.msra.mxu0 0.0
    %183 = vmatpush.msra.mxu0 0.0
    %184 = vmatpush.msra.mxu0 0.0
    %185 = vmatpush.msra.mxu0 %v83
    %186 = vmatpush.msra.mxu0 %v82
    %187 = vmatpush.msra.mxu0 %v81
    %188 = vmatpush.msra.mxu0 %v80
    %189 = vmatpush.msra.mxu0 %v79
    %190 = vmatpush.msra.mxu0 %v78
    %191 = vmatpush.msra.mxu0 %v77
    %192 = vmatpush.msra.mxu0 %v76
    %193 = vmatpush.msra.mxu0 %v75
    %194 = vmatpush.msra.mxu0 %v74
    %195 = vmatmul.f32.gmra.mxu0 %v90
    %v196 = vpop.f32.mrf.mxu0
    %v197 = vadd.f32 %v86, %v196
    %198 = vmatmul.f32.gmra.mxu0 %v93
    %v199 = vpop.f32.mrf.mxu0
    %v200 = vadd.f32 %v86, %v199
    %201 = vmatmul.f32.gmra.mxu0 %v96
    %v202 = vpop.f32.mrf.mxu0
    %v203 = vadd.f32 %v86, %v202
    %204 = vmatmul.f32.gmra.mxu0 %v99
    %v205 = vpop.f32.mrf.mxu0
    %v206 = vadd.f32 %v86, %v205
    %207 = vmatmul.f32.gmra.mxu0 %v102
    %v208 = vpop.f32.mrf.mxu0
    %v209 = vadd.f32 %v86, %v208
    %210 = vmatmul.f32.gmra.mxu0 %v105
    %v211 = vpop.f32.mrf.mxu0
    %v212 = vadd.f32 %v86, %v211
    %213 = vmatmul.f32.gmra.mxu0 %v108
    %v214 = vpop.f32.mrf.mxu0
    %v215 = vadd.f32 %v86, %v214
    %216 = vmatmul.f32.gmra.mxu0 %v111
    %v217 = vpop.f32.mrf.mxu0
    %v218 = vadd.f32 %v86, %v217
    %219 = vmatmul.f32.gmra.mxu0 %v114
    %v220 = vpop.f32.mrf.mxu0
    %v221 = vadd.f32 %v86, %v220
    %222 = vmatmul.f32.gmra.mxu0 %v117
    %v223 = vpop.f32.mrf.mxu0
    %v224 = vadd.f32 %v86, %v223
    %225 = vmatmul.f32.gmra.mxu0 %v120
    %v226 = vpop.f32.mrf.mxu0
    %v227 = vadd.f32 %v86, %v226
    %228 = vmatmul.f32.gmra.mxu0 %v123
    %v229 = vpop.f32.mrf.mxu0
    %v230 = vadd.f32 %v86, %v229
    %231 = vmatmul.f32.gmra.mxu0 %v126
    %v232 = vpop.f32.mrf.mxu0
    %v233 = vadd.f32 %v86, %v232
    %234 = vmatmul.f32.gmra.mxu0 %v129
    %v235 = vpop.f32.mrf.mxu0
    %v236 = vadd.f32 %v86, %v235
    %237 = vmatmul.f32.gmra.mxu0 %v132
    %v238 = vpop.f32.mrf.mxu0
    %v239 = vadd.f32 %v86, %v238
    %240 = vmatmul.f32.gmra.mxu0 %v135
    %v241 = vpop.f32.mrf.mxu0
    %v242 = vadd.f32 %v86, %v241
    %243 = vmatmul.f32.gmra.mxu0 %v138
    %v244 = vpop.f32.mrf.mxu0
    %v245 = vadd.f32 %v86, %v244
    %246 = vmatmul.f32.gmra.mxu0 %v141
    %v247 = vpop.f32.mrf.mxu0
    %v248 = vadd.f32 %v86, %v247
    %249 = vmatmul.f32.gmra.mxu0 %v144
    %v250 = vpop.f32.mrf.mxu0
    %v251 = vadd.f32 %v86, %v250
    %252 = vmatmul.f32.gmra.mxu0 %v147
    %v253 = vpop.f32.mrf.mxu0
    %v254 = vadd.f32 %v86, %v253
    %255 = vmatmul.f32.gmra.mxu0 %v150
    %v256 = vpop.f32.mrf.mxu0
    %v257 = vadd.f32 %v86, %v256
    %258 = vmatmul.f32.gmra.mxu0 %v153
    %v259 = vpop.f32.mrf.mxu0
    %v260 = vadd.f32 %v86, %v259
    %261 = vmatmul.f32.gmra.mxu0 %v156
    %v262 = vpop.f32.mrf.mxu0
    %v263 = vadd.f32 %v86, %v262
    %264 = vmatmul.f32.gmra.mxu0 %v159
    %v265 = vpop.f32.mrf.mxu0
    %v266 = vadd.f32 %v86, %v265
    %267 = vmatmul.f32.gmra.mxu0 %v162
    %v268 = vpop.f32.mrf.mxu0
    %v269 = vadd.f32 %v86, %v268
    %270 = vmatmul.f32.gmra.mxu0 %v165
    %v271 = vpop.f32.mrf.mxu0
    %v272 = vadd.f32 %v86, %v271
    %273 = vmatmul.f32.gmra.mxu0 %v168
    %v274 = vpop.f32.mrf.mxu0
    %v275 = vadd.f32 %v86, %v274
    %276 = vmatmul.f32.gmra.mxu0 %v171
    %v277 = vpop.f32.mrf.mxu0
    %v278 = vadd.f32 %v86, %v277
    %279 = vmatmul.f32.gmra.mxu0 %v174
    %v280 = vpop.f32.mrf.mxu0
    %v281 = vadd.f32 %v86, %v280
    %282 = vmatmul.f32.gmra.mxu0 %v177
    %v283 = vpop.f32.mrf.mxu0
    %v284 = vadd.f32 %v86, %v283
    %285 = vdwg.mxu0
    %v286 = vmax.f32 %v197, 0.0
    %v287 = vmax.f32 %v200, 0.0
    %v288 = vmax.f32 %v203, 0.0
    %v289 = vmax.f32 %v206, 0.0
    %v290 = vmax.f32 %v209, 0.0
    %v291 = vmax.f32 %v212, 0.0
    %v292 = vmax.f32 %v215, 0.0
    %v293 = vmax.f32 %v218, 0.0
    %v294 = vmax.f32 %v221, 0.0
    %v295 = vmax.f32 %v224, 0.0
    %v296 = vmax.f32 %v227, 0.0
    %v297 = vmax.f32 %v230, 0.0
    %v298 = vmax.f32 %v233, 0.0
    %v299 = vmax.f32 %v236, 0.0
    %v300 = vmax.f32 %v239, 0.0
    %v301 = vmax.f32 %v242, 0.0
    %v302 = vmax.f32 %v245, 0.0
    %v303 = vmax.f32 %v248, 0.0
    %v304 = vmax.f32 %v251, 0.0
    %v305 = vmax.f32 %v254, 0.0
    %v306 = vmax.f32 %v257, 0.0
    %v307 = vmax.f32 %v260, 0.0
    %v308 = vmax.f32 %v263, 0.0
    %v309 = vmax.f32 %v266, 0.0
    %v310 = vmax.f32 %v269, 0.0
    %v311 = vmax.f32 %v272, 0.0
    %v312 = vmax.f32 %v275, 0.0
    %v313 = vmax.f32 %v278, 0.0
    %v314 = vmax.f32 %v281, 0.0
    %v315 = vmax.f32 %v284, 0.0
    %316 = vst.msk [vmem:[%s3] sm:$0xff] %vm88, %v286
    %317 = vst.msk [vmem:[%s3 + $0x8] sm:$0xff] %vm88, %v287
    %318 = vst.msk [vmem:[%s3 + $0x10] sm:$0xff] %vm88, %v288
    %319 = vst.msk [vmem:[%s3 + $0x18] sm:$0xff] %vm88, %v289
    %320 = vst.msk [vmem:[%s3 + $0x20] sm:$0xff] %vm88, %v290
    %321 = vst.msk [vmem:[%s3 + $0x28] sm:$0xff] %vm88, %v291
    %322 = vst.msk [vmem:[%s3 + $0x30] sm:$0xff] %vm88, %v292
    %323 = vst.msk [vmem:[%s3 + $0x38] sm:$0xff] %vm88, %v293
    %324 = vst.msk [vmem:[%s3 + $0x40] sm:$0xff] %vm88, %v294
    %325 = vst.msk [vmem:[%s3 + $0x48] sm:$0xff] %vm88, %v295
    %326 = vst.msk [vmem:[%s3 + $0x50] sm:$0xff] %vm88, %v296
    %327 = vst.msk [vmem:[%s3 + $0x58] sm:$0xff] %vm88, %v297
    %328 = vst.msk [vmem:[%s3 + $0x60] sm:$0xff] %vm88, %v298
    %329 = vst.msk [vmem:[%s3 + $0x68] sm:$0xff] %vm88, %v299
    %330 = vst.msk [vmem:[%s3 + $0x70] sm:$0xff] %vm88, %v300
    %331 = vst.msk [vmem:[%s3 + $0x78] sm:$0xff] %vm88, %v301
    %332 = vst.msk [vmem:[%s3 + $0x80] sm:$0xff] %vm88, %v302
    %333 = vst.msk [vmem:[%s3 + $0x88] sm:$0xff] %vm88, %v303
    %334 = vst.msk [vmem:[%s3 + $0x90] sm:$0xff] %vm88, %v304
    %335 = vst.msk [vmem:[%s3 + $0x98] sm:$0xff] %vm88, %v305
    %336 = vst.msk [vmem:[%s3 + $0xa0] sm:$0xff] %vm88, %v306
    %337 = vst.msk [vmem:[%s3 + $0xa8] sm:$0xff] %vm88, %v307
    %338 = vst.msk [vmem:[%s3 + $0xb0] sm:$0xff] %vm88, %v308
    %339 = vst.msk [vmem:[%s3 + $0xb8] sm:$0xff] %vm88, %v309
    %340 = vst.msk [vmem:[%s3 + $0xc0] sm:$0xff] %vm88, %v310
    %341 = vst.msk [vmem:[%s3 + $0xc8] sm:$0xff] %vm88, %v311
    %342 = vst.msk [vmem:[%s3 + $0xd0] sm:$0xff] %vm88, %v312
    %343 = vst.msk [vmem:[%s3 + $0xd8] sm:$0xff] %vm88, %v313
    %344 = vst.msk [vmem:[%s3 + $0xe0] sm:$0xff] %vm88, %v314
    %345 = vst.msk [vmem:[%s3 + $0xe8] sm:$0xff] %vm88, %v315
    // Predicated region
    $region22: #{forward.7} parent=1 // pred_check
      _
    $region23: #{forward.7} parent=1 // pred_check_branch
      %347 = sbr.rel (0) target = $region25
    $region24: #{forward.7} parent=1 // pred_region
      _
    $region25: #{forward.7} parent=1 // pred_fallthru
      _
    // Predicated region
    $region26: #{forward.7} parent=1 // pred_check
      _
    $region27: #{forward.7} parent=1 // pred_check_branch
      %349 = sbr.rel (0) target = $region29
    $region28: #{forward.7} parent=1 // pred_region
      _
    $region29: #{forward.7} parent=1 // pred_fallthru
      _
    %350 = vsyncpa [#allocation3], 1
    %351 = vsyncpa [#allocation5], 1

// kernel: forward.9
$region0: #{forward.9}
  #allocation0 [shape = 'u32[]', space=smem, size = 0x4, offset = 0x4, fixed_abs, tag = 'smem constant byte address 0x4 - core index']
  #allocation1 [shape = 'u32[72,128]{1,0:T(1,128)}', space=vmem, size = 0x9000, scoped, tag = 'internal scratch']
  #allocation2 [shape = 'f32[2,1152]{1,0:T(2,128)}', space=vmem, size = 0x2400, scoped, tag = 'scratch operand']
  %s0 = inlined_call_operand.vmem [shape: f32[2,2304], index: 0, kind: input, shape index: {}]
  %s1 = inlined_call_operand.vmem [shape: f32[2304,1152], index: 1, kind: input, shape index: {}]
  %s2 = inlined_call_operand.vmem [shape: f32[1,1152], index: 2, kind: input, shape index: {}]
  %s3 = inlined_call_operand.vmem [shape: f32[1152,8], index: 3, kind: input, shape index: {}]
  %s4 = inlined_call_operand.vmem [shape: f32[1,8], index: 4, kind: input, shape index: {}]
  %s5 = inlined_call_operand.hbm [shape: f32[2,8], index: 5, kind: output, shape index: {}]
  %s6 = sld [smem:[#allocation0]]
  $region61: #{forward.9} parent=0
    _
  %s8 = ssub.s32 1, %s6
  %s9 = scalar_select 0, %s8, %s6
  $region1: #{forward.9} parent=0
    #allocation3 [shape = 'u8[1024]{0}', space=vmem, size = 0x400, scoped, tag = 'output window, operand 0, single buffered']
    #allocation4 [shape = 's32[2]{0}', space=sflag, size = 0x8, scoped, tag = 'scoped memory for forward.9']
    %10 = vsyncpa [#allocation4], 0
    loop: start=0, step=1, limit=4
    $region2: #{forward.9} parent=1 // loop_pre_header
      _
    $region3: #{forward.9} parent=1 // loop_header
      %s12 = sphi 0, %s16
      %p13 = scmp.ge.s32.totalorder %s12, 4
      %s22 = sphi 0, %s24
      %s25 = sphi 0, %s22
      %s26 = sphi 0, %s25
      %s42 = sphi 0, %s26
      %s48 = sphi 0, %s50
      %s51 = sphi 0, %s48
      %s52 = sphi 0, %s51
      %s68 = sphi 0, %s52
      %s72 = sphi 0, %s72
      %s74 = sphi 0, %s72
      %s75 = sphi 0, %s74
      %s89 = sphi 0, %s75
      %s93 = sphi 0, %s93
      %s95 = sphi 0, %s93
      %s96 = sphi 0, %s95
      %s110 = sphi 0, %s96
      %s114 = sphi 0, %s114
      %s116 = sphi 0, %s114
      %s117 = sphi 0, %s116
      %s131 = sphi 0, %s117
      %s135 = sphi 0, %s135
      %s137 = sphi 0, %s135
      %s138 = sphi 0, %s137
      %s152 = sphi 0, %s138
    $region4: #{forward.9} parent=1 // loop_header_branch
      %15 = sbr.rel (%p13) target = $region8
    $region5: #{forward.9} parent=1 // loop_body
      %s17 = ssub.s32 %s12, 1
      %s18 = ssub.s32 %s12, 2
      %s19 = sadd.s32 %s12, 1
      %s20 = ssub.s32 %s12, %s19
      %p21 = scmp.eq.s32.totalorder %s20, 0
      %s23 = sadd.s32 %s22, 1
      %s24 = scalar_select %p21, %s22, %s23
      %p27 = pneg %p21
      %p28 = scmp.eq.s32.totalorder %s12, 1
      %p29 = por %p27, %p28
      %p30 = scmp.ne.s32.totalorder %s22, %s25
      %p31 = scmp.eq.s32.totalorder %s12, 0
      %p32 = por %p30, %p31
      %p33 = scmp.ne.s32.totalorder %s22, %s25
      %p34 = scmp.eq.s32.totalorder %s17, 1
      %p35 = por %p33, %p34
      %p36 = scmp.ne.s32.totalorder %s25, %s26
      %p37 = scmp.eq.s32.totalorder %s17, 0
      %p38 = por %p36, %p37
      %p39 = scmp.ne.s32.totalorder %s25, %s26
      %p40 = scmp.eq.s32.totalorder %s18, 1
      %p41 = por %p39, %p40
      %p43 = scmp.ne.s32.totalorder %s26, %s42
      %p44 = scmp.eq.s32.totalorder %s18, 0
      %p45 = por %p43, %p44
      %s46 = ssub.s32 %s12, %s19
      %p47 = scmp.eq.s32.totalorder %s46, 0
      %s49 = sadd.s32 %s48, 1
      %s50 = scalar_select %p47, %s48, %s49
      %p53 = pneg %p47
      %p54 = scmp.eq.s32.totalorder %s12, 1
      %p55 = por %p53, %p54
      %p56 = scmp.ne.s32.totalorder %s48, %s51
      %p57 = scmp.eq.s32.totalorder %s12, 0
      %p58 = por %p56, %p57
      %p59 = scmp.ne.s32.totalorder %s48, %s51
      %p60 = scmp.eq.s32.totalorder %s17, 1
      %p61 = por %p59, %p60
      %p62 = scmp.ne.s32.totalorder %s51, %s52
      %p63 = scmp.eq.s32.totalorder %s17, 0
      %p64 = por %p62, %p63
      %p65 = scmp.ne.s32.totalorder %s51, %s52
      %p66 = scmp.eq.s32.totalorder %s18, 1
      %p67 = por %p65, %p66
      %p69 = scmp.ne.s32.totalorder %s52, %s68
      %p70 = scmp.eq.s32.totalorder %s18, 0
      %p71 = por %p69, %p70
      %s73 = sadd.s32 %s72, 1
      %p76 = scmp.eq.s32.totalorder %s12, 1
      %p77 = scmp.ne.s32.totalorder %s72, %s74
      %p78 = scmp.eq.s32.totalorder %s12, 0
      %p79 = por %p77, %p78
      %p80 = scmp.ne.s32.totalorder %s72, %s74
      %p81 = scmp.eq.s32.totalorder %s17, 1
      %p82 = por %p80, %p81
      %p83 = scmp.ne.s32.totalorder %s74, %s75
      %p84 = scmp.eq.s32.totalorder %s17, 0
      %p85 = por %p83, %p84
      %p86 = scmp.ne.s32.totalorder %s74, %s75
      %p87 = scmp.eq.s32.totalorder %s18, 1
      %p88 = por %p86, %p87
      %p90 = scmp.ne.s32.totalorder %s75, %s89
      %p91 = scmp.eq.s32.totalorder %s18, 0
      %p92 = por %p90, %p91
      %s94 = sadd.s32 %s93, 1
      %p97 = scmp.eq.s32.totalorder %s12, 1
      %p98 = scmp.ne.s32.totalorder %s93, %s95
      %p99 = scmp.eq.s32.totalorder %s12, 0
      %p100 = por %p98, %p99
      %p101 = scmp.ne.s32.totalorder %s93, %s95
      %p102 = scmp.eq.s32.totalorder %s17, 1
      %p103 = por %p101, %p102
      %p104 = scmp.ne.s32.totalorder %s95, %s96
      %p105 = scmp.eq.s32.totalorder %s17, 0
      %p106 = por %p104, %p105
      %p107 = scmp.ne.s32.totalorder %s95, %s96
      %p108 = scmp.eq.s32.totalorder %s18, 1
      %p109 = por %p107, %p108
      %p111 = scmp.ne.s32.totalorder %s96, %s110
      %p112 = scmp.eq.s32.totalorder %s18, 0
      %p113 = por %p111, %p112
      %s115 = sadd.s32 %s114, 1
      %p118 = scmp.eq.s32.totalorder %s12, 1
      %p119 = scmp.ne.s32.totalorder %s114, %s116
      %p120 = scmp.eq.s32.totalorder %s12, 0
      %p121 = por %p119, %p120
      %p122 = scmp.ne.s32.totalorder %s114, %s116
      %p123 = scmp.eq.s32.totalorder %s17, 1
      %p124 = por %p122, %p123
      %p125 = scmp.ne.s32.totalorder %s116, %s117
      %p126 = scmp.eq.s32.totalorder %s17, 0
      %p127 = por %p125, %p126
      %p128 = scmp.ne.s32.totalorder %s116, %s117
      %p129 = scmp.eq.s32.totalorder %s18, 1
      %p130 = por %p128, %p129
      %p132 = scmp.ne.s32.totalorder %s117, %s131
      %p133 = scmp.eq.s32.totalorder %s18, 0
      %p134 = por %p132, %p133
      %s136 = sadd.s32 %s135, 1
      %p139 = scmp.eq.s32.totalorder %s12, 1
      %p140 = scmp.ne.s32.totalorder %s135, %s137
      %p141 = scmp.eq.s32.totalorder %s12, 0
      %p142 = por %p140, %p141
      %p143 = scmp.ne.s32.totalorder %s135, %s137
      %p144 = scmp.eq.s32.totalorder %s17, 1
      %p145 = por %p143, %p144
      %p146 = scmp.ne.s32.totalorder %s137, %s138
      %p147 = scmp.eq.s32.totalorder %s17, 0
      %p148 = por %p146, %p147
      %p149 = scmp.ne.s32.totalorder %s137, %s138
      %p150 = scmp.eq.s32.totalorder %s18, 1
      %p151 = por %p149, %p150
      %p153 = scmp.ne.s32.totalorder %s138, %s152
      %p154 = scmp.eq.s32.totalorder %s18, 0
      %p155 = por %p153, %p154
      %p156 = scmp.le.s32.totalorder 1, %s12
      %p157 = scmp.lt.s32.totalorder %s12, 3
      %p158 = pnand %p156, %p157
      %p159 = pneg %p158
      // Predicated region
      $region9: #{forward.9} parent=5 // pred_check
        _
      $region10: #{forward.9} parent=5 // pred_check_branch
        %161 = sbr.rel (%p158) target = $region12
      $region11: #{forward.9} parent=5 // pred_region
        %s162 = ssub.s32 %s12, 1
        // Predicated region
        $region13: #{forward.9} parent=11 // pred_check
          %p163 = pneg %p85
        $region14: #{forward.9} parent=11 // pred_check_branch
          %165 = sbr.rel (%p163) target = $region16
        $region15: #{forward.9} parent=11 // pred_region
          _
        $region16: #{forward.9} parent=11 // pred_fallthru
          _
        // Predicated region
        $region17: #{forward.9} parent=11 // pred_check
          %p166 = pneg %p106
        $region18: #{forward.9} parent=11 // pred_check_branch
          %168 = sbr.rel (%p166) target = $region20
        $region19: #{forward.9} parent=11 // pred_region
          _
        $region20: #{forward.9} parent=11 // pred_fallthru
          _
        // Predicated region
        $region21: #{forward.9} parent=11 // pred_check
          %p169 = pneg %p127
        $region22: #{forward.9} parent=11 // pred_check_branch
          %171 = sbr.rel (%p169) target = $region24
        $region23: #{forward.9} parent=11 // pred_region
          _
        $region24: #{forward.9} parent=11 // pred_fallthru
          _
      $region12: #{forward.9} parent=5 // pred_fallthru
        _
      %p172 = scmp.lt.s32.totalorder %s12, 2
      // Predicated region
      $region25: #{forward.9} parent=5 // pred_check
        %p173 = pneg %p172
      $region26: #{forward.9} parent=5 // pred_check_branch
        %175 = sbr.rel (%p173) target = $region28
      $region27: #{forward.9} parent=5 // pred_region
        // Predicated region
        $region29: #{forward.9} parent=27 // pred_check
          %p176 = pneg %p32
        $region30: #{forward.9} parent=27 // pred_check_branch
          %178 = sbr.rel (%p176) target = $region32
        $region31: #{forward.9} parent=27 // pred_region
          %s179 = smul.u32 9, %s12
          %p180 = scmp.lt.s32.totalorder %s179, 17
          %s181 = scalar_select %p180, %s179, 17
          %s182 = smul.addr %s181, 2
          %s183 = scalar_lea.vmem %s0, %s182
          %s184 = smul.u32 9, %s12
        $region32: #{forward.9} parent=27 // pred_fallthru
          _
        // Predicated region
        $region33: #{forward.9} parent=27 // pred_check
          %p185 = pneg %p58
        $region34: #{forward.9} parent=27 // pred_check_branch
          %187 = sbr.rel (%p185) target = $region36
        $region35: #{forward.9} parent=27 // pred_region
          %s188 = smul.u32 144, %s12
          %p189 = scmp.lt.s32.totalorder %s188, 287
          %s190 = scalar_select %p189, %s188, 287
          %s191 = smul.addr %s190, 9
          %s192 = smul.addr %s191, 8
          %s193 = scalar_lea.vmem %s1, %s192
          %s194 = smul.u32 144, %s12
        $region36: #{forward.9} parent=27 // pred_fallthru
          _
      $region28: #{forward.9} parent=5 // pred_fallthru
        _
      %p195 = scmp.le.s32.totalorder 1, %s12
      %p196 = scmp.lt.s32.totalorder %s12, 3
      %p197 = pnand %p195, %p196
      %p198 = pneg %p197
      // Predicated region
      $region37: #{forward.9} parent=5 // pred_check
        _
      $region38: #{forward.9} parent=5 // pred_check_branch
        %200 = sbr.rel (%p197) target = $region40
      $region39: #{forward.9} parent=5 // pred_region
        %s201 = ssub.s32 %s12, 1
        %s202 = smul.u32 9, %s17
        %p203 = scmp.lt.s32.totalorder %s202, 17
        %s204 = scalar_select %p203, %s202, 17
        %s205 = smul.addr %s204, 2
        %s206 = scalar_lea.vmem %s0, %s205
        %p207 = pneg %p38
        %p208 = pneg %p35
        %s209 = smul.u32 144, %s17
        %p210 = scmp.lt.s32.totalorder %s209, 287
        %s211 = scalar_select %p210, %s209, 287
        %s212 = smul.addr %s211, 9
        %s213 = smul.addr %s212, 8
        %s214 = scalar_lea.vmem %s1, %s213
        %p215 = pneg %p64
        %p216 = pneg %p61
        %p217 = pneg %p85
        %p218 = pneg %p82
        %p219 = pneg %p106
        %p220 = pneg %p103
        %p221 = pneg %p127
        %p222 = pneg %p124
        %p223 = pneg %p148
        %p224 = pneg %p145
        %s225 = smul.u32 9, %s17
        %p226 = scmp.lt.s32.totalorder %s225, 17
        %s227 = scalar_select %p226, %s225, 17
        %s228 = smul.addr %s227, 2
        %s229 = scalar_lea.vmem %s0, %s228
        %s230 = smul.u32 9, %s17
        %s231 = smul.u32 144, %s17
        %p232 = scmp.lt.s32.totalorder %s231, 287
        %s233 = scalar_select %p232, %s231, 287
        %s234 = smul.addr %s233, 9
        %s235 = smul.addr %s234, 8
        %s236 = scalar_lea.vmem %s1, %s235
        %s237 = smul.u32 144, %s17
        %p238 = scmp.eq.s32.totalorder %s17, 0
        // Predicated region
        $region41: #{forward.9} parent=39 // pred_check
          %p239 = pneg %p238
        $region42: #{forward.9} parent=39 // pred_check_branch
          %241 = sbr.rel (%p239) target = $region44
        $region43: #{forward.9} parent=39 // pred_region
          %242 = vst [vmem:[#allocation2] sm:$0xff] 0.0
          %243 = vst [vmem:[#allocation2 + $0x8] sm:$0xff] 0.0
          %244 = vst [vmem:[#allocation2 + $0x10] sm:$0x3] 0.0
        $region44: #{forward.9} parent=39 // pred_fallthru
          _
        %v245 = vld [vmem:[#allocation2] sm:$0xff]
        %v246 = vld [vmem:[#allocation2 + $0x8] sm:$0xff]
        %v247 = vld [vmem:[#allocation2 + $0x10] sm:$0x3]
        %v248 = vld [vmem:[%s229] sm:$0xff]
        %v249 = vld [vmem:[%s229 + $0x8] sm:$0xff]
        %v250 = vld [vmem:[%s229 + $0x10] sm:$0x3]
        %v251 = vld [vmem:[%s236] sm:$0xff]
        %v252 = vld [vmem:[%s236 + $0x8] sm:$0xff]
        %v253 = vld [vmem:[%s236 + $0x10] sm:$0xff]
        %v254 = vld [vmem:[%s236 + $0x18] sm:$0xff]
        %v255 = vld [vmem:[%s236 + $0x20] sm:$0xff]
        %v256 = vld [vmem:[%s236 + $0x28] sm:$0xff]
        %v257 = vld [vmem:[%s236 + $0x30] sm:$0xff]
        %v258 = vld [vmem:[%s236 + $0x38] sm:$0xff]
        %v259 = vld [vmem:[%s236 + $0x40] sm:$0xff]
        %v260 = vld [vmem:[%s236 + $0x48] sm:$0xff]
        %v261 = vld [vmem:[%s236 + $0x50] sm:$0xff]
        %v262 = vld [vmem:[%s236 + $0x58] sm:$0xff]
        %v263 = vld [vmem:[%s236 + $0x60] sm:$0xff]
        %v264 = vld [vmem:[%s236 + $0x68] sm:$0xff]
        %v265 = vld [vmem:[%s236 + $0x70] sm:$0xff]
        %v266 = vld [vmem:[%s236 + $0x78] sm:$0xff]
        %v267 = vld [vmem:[%s236 + $0x80] sm:$0xff]
        %v268 = vld [vmem:[%s236 + $0x88] sm:$0xff]
        %v269 = vld [vmem:[%s236 + $0x90] sm:$0xff]
        %v270 = vld [vmem:[%s236 + $0x98] sm:$0xff]
        %v271 = vld [vmem:[%s236 + $0xa0] sm:$0xff]
        %v272 = vld [vmem:[%s236 + $0xa8] sm:$0xff]
        %v273 = vld [vmem:[%s236 + $0xb0] sm:$0xff]
        %v274 = vld [vmem:[%s236 + $0xb8] sm:$0xff]
        %v275 = vld [vmem:[%s236 + $0xc0] sm:$0xff]
        %v276 = vld [vmem:[%s236 + $0xc8] sm:$0xff]
        %v277 = vld [vmem:[%s236 + $0xd0] sm:$0xff]
        %v278 = vld [vmem:[%s236 + $0xd8] sm:$0xff]
        %v279 = vld [vmem:[%s236 + $0xe0] sm:$0xff]
        %v280 = vld [vmem:[%s236 + $0xe8] sm:$0xff]
        %v281 = vld [vmem:[%s236 + $0xf0] sm:$0xff]
        %v282 = vld [vmem:[%s236 + $0xf8] sm:$0xff]
        %v283 = vld [vmem:[%s236 + $0x100] sm:$0xff]
        %v284 = vld [vmem:[%s236 + $0x108] sm:$0xff]
        %v285 = vld [vmem:[%s236 + $0x110] sm:$0xff]
        %v286 = vld [vmem:[%s236 + $0x118] sm:$0xff]
        %v287 = vld [vmem:[%s236 + $0x120] sm:$0xff]
        %v288 = vld [vmem:[%s236 + $0x128] sm:$0xff]
        %v289 = vld [vmem:[%s236 + $0x130] sm:$0xff]
        %v290 = vld [vmem:[%s236 + $0x138] sm:$0xff]
        %v291 = vld [vmem:[%s236 + $0x140] sm:$0xff]
        %v292 = vld [vmem:[%s236 + $0x148] sm:$0xff]
        %v293 = vld [vmem:[%s236 + $0x150] sm:$0xff]
        %v294 = vld [vmem:[%s236 + $0x158] sm:$0xff]
        %v295 = vld [vmem:[%s236 + $0x160] sm:$0xff]
        %v296 = vld [vmem:[%s236 + $0x168] sm:$0xff]
        %v297 = vld [vmem:[%s236 + $0x170] sm:$0xff]
        %v298 = vld [vmem:[%s236 + $0x178] sm:$0xff]
        %v299 = vld [vmem:[%s236 + $0x180] sm:$0xff]
        %v300 = vld [vmem:[%s236 + $0x188] sm:$0xff]
        %v301 = vld [vmem:[%s236 + $0x190] sm:$0xff]
        %v302 = vld [vmem:[%s236 + $0x198] sm:$0xff]
        %v303 = vld [vmem:[%s236 + $0x1a0] sm:$0xff]
        %v304 = vld [vmem:[%s236 + $0x1a8] sm:$0xff]
        %v305 = vld [vmem:[%s236 + $0x1b0] sm:$0xff]
        %v306 = vld [vmem:[%s236 + $0x1b8] sm:$0xff]
        %v307 = vld [vmem:[%s236 + $0x1c0] sm:$0xff]
        %v308 = vld [vmem:[%s236 + $0x1c8] sm:$0xff]
        %v309 = vld [vmem:[%s236 + $0x1d0] sm:$0xff]
        %v310 = vld [vmem:[%s236 + $0x1d8] sm:$0xff]
        %v311 = vld [vmem:[%s236 + $0x1e0] sm:$0xff]
        %v312 = vld [vmem:[%s236 + $0x1e8] sm:$0xff]
        %v313 = vld [vmem:[%s236 + $0x1f0] sm:$0xff]
        %v314 = vld [vmem:[%s236 + $0x1f8] sm:$0xff]
        %v315 = vld [vmem:[%s236 + $0x200] sm:$0xff]
        %v316 = vld [vmem:[%s236 + $0x208] sm:$0xff]
        %v317 = vld [vmem:[%s236 + $0x210] sm:$0xff]
        %v318 = vld [vmem:[%s236 + $0x218] sm:$0xff]
        %v319 = vld [vmem:[%s236 + $0x220] sm:$0xff]
        %v320 = vld [vmem:[%s236 + $0x228] sm:$0xff]
        %v321 = vld [vmem:[%s236 + $0x230] sm:$0xff]
        %v322 = vld [vmem:[%s236 + $0x238] sm:$0xff]
        %v323 = vld [vmem:[%s236 + $0x240] sm:$0xff]
        %v324 = vld [vmem:[%s236 + $0x248] sm:$0xff]
        %v325 = vld [vmem:[%s236 + $0x250] sm:$0xff]
        %v326 = vld [vmem:[%s236 + $0x258] sm:$0xff]
        %v327 = vld [vmem:[%s236 + $0x260] sm:$0xff]
        %v328 = vld [vmem:[%s236 + $0x268] sm:$0xff]
        %v329 = vld [vmem:[%s236 + $0x270] sm:$0xff]
        %v330 = vld [vmem:[%s236 + $0x278] sm:$0xff]
        %v331 = vld [vmem:[%s236 + $0x280] sm:$0xff]
        %v332 = vld [vmem:[%s236 + $0x288] sm:$0xff]
        %v333 = vld [vmem:[%s236 + $0x290] sm:$0xff]
        %v334 = vld [vmem:[%s236 + $0x298] sm:$0xff]
        %v335 = vld [vmem:[%s236 + $0x2a0] sm:$0xff]
        %v336 = vld [vmem:[%s236 + $0x2a8] sm:$0xff]
        %v337 = vld [vmem:[%s236 + $0x2b0] sm:$0xff]
        %v338 = vld [vmem:[%s236 + $0x2b8] sm:$0xff]
        %v339 = vld [vmem:[%s236 + $0x2c0] sm:$0xff]
        %v340 = vld [vmem:[%s236 + $0x2c8] sm:$0xff]
        %v341 = vld [vmem:[%s236 + $0x2d0] sm:$0xff]
        %v342 = vld [vmem:[%s236 + $0x2d8] sm:$0xff]
        %v343 = vld [vmem:[%s236 + $0x2e0] sm:$0xff]
        %v344 = vld [vmem:[%s236 + $0x2e8] sm:$0xff]
        %v345 = vld [vmem:[%s236 + $0x2f0] sm:$0xff]
        %v346 = vld [vmem:[%s236 + $0x2f8] sm:$0xff]
        %v347 = vld [vmem:[%s236 + $0x300] sm:$0xff]
        %v348 = vld [vmem:[%s236 + $0x308] sm:$0xff]
        %v349 = vld [vmem:[%s236 + $0x310] sm:$0xff]
        %v350 = vld [vmem:[%s236 + $0x318] sm:$0xff]
        %v351 = vld [vmem:[%s236 + $0x320] sm:$0xff]
        %v352 = vld [vmem:[%s236 + $0x328] sm:$0xff]
        %v353 = vld [vmem:[%s236 + $0x330] sm:$0xff]
        %v354 = vld [vmem:[%s236 + $0x338] sm:$0xff]
        %v355 = vld [vmem:[%s236 + $0x340] sm:$0xff]
        %v356 = vld [vmem:[%s236 + $0x348] sm:$0xff]
        %v357 = vld [vmem:[%s236 + $0x350] sm:$0xff]
        %v358 = vld [vmem:[%s236 + $0x358] sm:$0xff]
        %v359 = vld [vmem:[%s236 + $0x360] sm:$0xff]
        %v360 = vld [vmem:[%s236 + $0x368] sm:$0xff]
        %v361 = vld [vmem:[%s236 + $0x370] sm:$0xff]
        %v362 = vld [vmem:[%s236 + $0x378] sm:$0xff]
        %v363 = vld [vmem:[%s236 + $0x380] sm:$0xff]
        %v364 = vld [vmem:[%s236 + $0x388] sm:$0xff]
        %v365 = vld [vmem:[%s236 + $0x390] sm:$0xff]
        %v366 = vld [vmem:[%s236 + $0x398] sm:$0xff]
        %v367 = vld [vmem:[%s236 + $0x3a0] sm:$0xff]
        %v368 = vld [vmem:[%s236 + $0x3a8] sm:$0xff]
        %v369 = vld [vmem:[%s236 + $0x3b0] sm:$0xff]
        %v370 = vld [vmem:[%s236 + $0x3b8] sm:$0xff]
        %v371 = vld [vmem:[%s236 + $0x3c0] sm:$0xff]
        %v372 = vld [vmem:[%s236 + $0x3c8] sm:$0xff]
        %v373 = vld [vmem:[%s236 + $0x3d0] sm:$0xff]
        %v374 = vld [vmem:[%s236 + $0x3d8] sm:$0xff]
        %v375 = vld [vmem:[%s236 + $0x3e0] sm:$0xff]
        %v376 = vld [vmem:[%s236 + $0x3e8] sm:$0xff]
        %v377 = vld [vmem:[%s236 + $0x3f0] sm:$0xff]
        %v378 = vld [vmem:[%s236 + $0x3f8] sm:$0xff]
        %v379 = vld [vmem:[%s236 + $0x400] sm:$0xff]
        %v380 = vld [vmem:[%s236 + $0x408] sm:$0xff]
        %v381 = vld [vmem:[%s236 + $0x410] sm:$0xff]
        %v382 = vld [vmem:[%s236 + $0x418] sm:$0xff]
        %v383 = vld [vmem:[%s236 + $0x420] sm:$0xff]
        %v384 = vld [vmem:[%s236 + $0x428] sm:$0xff]
        %v385 = vld [vmem:[%s236 + $0x430] sm:$0xff]
        %v386 = vld [vmem:[%s236 + $0x438] sm:$0xff]
        %v387 = vld [vmem:[%s236 + $0x440] sm:$0xff]
        %v388 = vld [vmem:[%s236 + $0x448] sm:$0xff]
        %v389 = vld [vmem:[%s236 + $0x450] sm:$0xff]
        %v390 = vld [vmem:[%s236 + $0x458] sm:$0xff]
        %v391 = vld [vmem:[%s236 + $0x460] sm:$0xff]
        %v392 = vld [vmem:[%s236 + $0x468] sm:$0xff]
        %v393 = vld [vmem:[%s236 + $0x470] sm:$0xff]
        %v394 = vld [vmem:[%s236 + $0x478] sm:$0xff]
        %v395 = vld [vmem:[%s236 + $0x480] sm:$0xff]
        %v396 = vld [vmem:[%s236 + $0x488] sm:$0xff]
        %v397 = vld [vmem:[%s236 + $0x490] sm:$0xff]
        %v398 = vld [vmem:[%s236 + $0x498] sm:$0xff]
        %v399 = vld [vmem:[%s236 + $0x4a0] sm:$0xff]
        %v400 = vld [vmem:[%s236 + $0x4a8] sm:$0xff]
        %v401 = vld [vmem:[%s236 + $0x4b0] sm:$0xff]
        %v402 = vld [vmem:[%s236 + $0x4b8] sm:$0xff]
        %v403 = vld [vmem:[%s236 + $0x4c0] sm:$0xff]
        %v404 = vld [vmem:[%s236 + $0x4c8] sm:$0xff]
        %v405 = vld [vmem:[%s236 + $0x4d0] sm:$0xff]
        %v406 = vld [vmem:[%s236 + $0x4d8] sm:$0xff]
        %v407 = vld [vmem:[%s236 + $0x4e0] sm:$0xff]
        %v408 = vld [vmem:[%s236 + $0x4e8] sm:$0xff]
        %v409 = vld [vmem:[%s236 + $0x4f0] sm:$0xff]
        %v410 = vld [vmem:[%s236 + $0x4f8] sm:$0xff]
        %v411 = vld [vmem:[%s236 + $0x500] sm:$0xff]
        %v412 = vld [vmem:[%s236 + $0x508] sm:$0xff]
        %v413 = vld [vmem:[%s236 + $0x510] sm:$0xff]
        %v414 = vld [vmem:[%s236 + $0x518] sm:$0xff]
        %v415 = vld [vmem:[%s236 + $0x520] sm:$0xff]
        %v416 = vld [vmem:[%s236 + $0x528] sm:$0xff]
        %v417 = vld [vmem:[%s236 + $0x530] sm:$0xff]
        %v418 = vld [vmem:[%s236 + $0x538] sm:$0xff]
        %v419 = vld [vmem:[%s236 + $0x540] sm:$0xff]
        %v420 = vld [vmem:[%s236 + $0x548] sm:$0xff]
        %v421 = vld [vmem:[%s236 + $0x550] sm:$0xff]
        %v422 = vld [vmem:[%s236 + $0x558] sm:$0xff]
        %v423 = vld [vmem:[%s236 + $0x560] sm:$0xff]
        %v424 = vld [vmem:[%s236 + $0x568] sm:$0xff]
        %v425 = vld [vmem:[%s236 + $0x570] sm:$0xff]
        %v426 = vld [vmem:[%s236 + $0x578] sm:$0xff]
        %v427 = vld [vmem:[%s236 + $0x580] sm:$0xff]
        %v428 = vld [vmem:[%s236 + $0x588] sm:$0xff]
        %v429 = vld [vmem:[%s236 + $0x590] sm:$0xff]
        %v430 = vld [vmem:[%s236 + $0x598] sm:$0xff]
        %v431 = vld [vmem:[%s236 + $0x5a0] sm:$0xff]
        %v432 = vld [vmem:[%s236 + $0x5a8] sm:$0xff]
        %v433 = vld [vmem:[%s236 + $0x5b0] sm:$0xff]
        %v434 = vld [vmem:[%s236 + $0x5b8] sm:$0xff]
        %v435 = vld [vmem:[%s236 + $0x5c0] sm:$0xff]
        %v436 = vld [vmem:[%s236 + $0x5c8] sm:$0xff]
        %v437 = vld [vmem:[%s236 + $0x5d0] sm:$0xff]
        %v438 = vld [vmem:[%s236 + $0x5d8] sm:$0xff]
        %v439 = vld [vmem:[%s236 + $0x5e0] sm:$0xff]
        %v440 = vld [vmem:[%s236 + $0x5e8] sm:$0xff]
        %v441 = vld [vmem:[%s236 + $0x5f0] sm:$0xff]
        %v442 = vld [vmem:[%s236 + $0x5f8] sm:$0xff]
        %v443 = vld [vmem:[%s236 + $0x600] sm:$0xff]
        %v444 = vld [vmem:[%s236 + $0x608] sm:$0xff]
        %v445 = vld [vmem:[%s236 + $0x610] sm:$0xff]
        %v446 = vld [vmem:[%s236 + $0x618] sm:$0xff]
        %v447 = vld [vmem:[%s236 + $0x620] sm:$0xff]
        %v448 = vld [vmem:[%s236 + $0x628] sm:$0xff]
        %v449 = vld [vmem:[%s236 + $0x630] sm:$0xff]
        %v450 = vld [vmem:[%s236 + $0x638] sm:$0xff]
        %v451 = vld [vmem:[%s236 + $0x640] sm:$0xff]
        %v452 = vld [vmem:[%s236 + $0x648] sm:$0xff]
        %v453 = vld [vmem:[%s236 + $0x650] sm:$0xff]
        %v454 = vld [vmem:[%s236 + $0x658] sm:$0xff]
        %v455 = vld [vmem:[%s236 + $0x660] sm:$0xff]
        %v456 = vld [vmem:[%s236 + $0x668] sm:$0xff]
        %v457 = vld [vmem:[%s236 + $0x670] sm:$0xff]
        %v458 = vld [vmem:[%s236 + $0x678] sm:$0xff]
        %v459 = vld [vmem:[%s236 + $0x680] sm:$0xff]
        %v460 = vld [vmem:[%s236 + $0x688] sm:$0xff]
        %v461 = vld [vmem:[%s236 + $0x690] sm:$0xff]
        %v462 = vld [vmem:[%s236 + $0x698] sm:$0xff]
        %v463 = vld [vmem:[%s236 + $0x6a0] sm:$0xff]
        %v464 = vld [vmem:[%s236 + $0x6a8] sm:$0xff]
        %v465 = vld [vmem:[%s236 + $0x6b0] sm:$0xff]
        %v466 = vld [vmem:[%s236 + $0x6b8] sm:$0xff]
        %v467 = vld [vmem:[%s236 + $0x6c0] sm:$0xff]
        %v468 = vld [vmem:[%s236 + $0x6c8] sm:$0xff]
        %v469 = vld [vmem:[%s236 + $0x6d0] sm:$0xff]
        %v470 = vld [vmem:[%s236 + $0x6d8] sm:$0xff]
        %v471 = vld [vmem:[%s236 + $0x6e0] sm:$0xff]
        %v472 = vld [vmem:[%s236 + $0x6e8] sm:$0xff]
        %v473 = vld [vmem:[%s236 + $0x6f0] sm:$0xff]
        %v474 = vld [vmem:[%s236 + $0x6f8] sm:$0xff]
        %v475 = vld [vmem:[%s236 + $0x700] sm:$0xff]
        %v476 = vld [vmem:[%s236 + $0x708] sm:$0xff]
        %v477 = vld [vmem:[%s236 + $0x710] sm:$0xff]
        %v478 = vld [vmem:[%s236 + $0x718] sm:$0xff]
        %v479 = vld [vmem:[%s236 + $0x720] sm:$0xff]
        %v480 = vld [vmem:[%s236 + $0x728] sm:$0xff]
        %v481 = vld [vmem:[%s236 + $0x730] sm:$0xff]
        %v482 = vld [vmem:[%s236 + $0x738] sm:$0xff]
        %v483 = vld [vmem:[%s236 + $0x740] sm:$0xff]
        %v484 = vld [vmem:[%s236 + $0x748] sm:$0xff]
        %v485 = vld [vmem:[%s236 + $0x750] sm:$0xff]
        %v486 = vld [vmem:[%s236 + $0x758] sm:$0xff]
        %v487 = vld [vmem:[%s236 + $0x760] sm:$0xff]
        %v488 = vld [vmem:[%s236 + $0x768] sm:$0xff]
        %v489 = vld [vmem:[%s236 + $0x770] sm:$0xff]
        %v490 = vld [vmem:[%s236 + $0x778] sm:$0xff]
        %v491 = vld [vmem:[%s236 + $0x780] sm:$0xff]
        %v492 = vld [vmem:[%s236 + $0x788] sm:$0xff]
        %v493 = vld [vmem:[%s236 + $0x790] sm:$0xff]
        %v494 = vld [vmem:[%s236 + $0x798] sm:$0xff]
        %v495 = vld [vmem:[%s236 + $0x7a0] sm:$0xff]
        %v496 = vld [vmem:[%s236 + $0x7a8] sm:$0xff]
        %v497 = vld [vmem:[%s236 + $0x7b0] sm:$0xff]
        %v498 = vld [vmem:[%s236 + $0x7b8] sm:$0xff]
        %v499 = vld [vmem:[%s236 + $0x7c0] sm:$0xff]
        %v500 = vld [vmem:[%s236 + $0x7c8] sm:$0xff]
        %v501 = vld [vmem:[%s236 + $0x7d0] sm:$0xff]
        %v502 = vld [vmem:[%s236 + $0x7d8] sm:$0xff]
        %v503 = vld [vmem:[%s236 + $0x7e0] sm:$0xff]
        %v504 = vld [vmem:[%s236 + $0x7e8] sm:$0xff]
        %v505 = vld [vmem:[%s236 + $0x7f0] sm:$0xff]
        %v506 = vld [vmem:[%s236 + $0x7f8] sm:$0xff]
        %v507 = vld [vmem:[%s236 + $0x800] sm:$0xff]
        %v508 = vld [vmem:[%s236 + $0x808] sm:$0xff]
        %v509 = vld [vmem:[%s236 + $0x810] sm:$0xff]
        %v510 = vld [vmem:[%s236 + $0x818] sm:$0xff]
        %v511 = vld [vmem:[%s236 + $0x820] sm:$0xff]
        %v512 = vld [vmem:[%s236 + $0x828] sm:$0xff]
        %v513 = vld [vmem:[%s236 + $0x830] sm:$0xff]
        %v514 = vld [vmem:[%s236 + $0x838] sm:$0xff]
        %v515 = vld [vmem:[%s236 + $0x840] sm:$0xff]
        %v516 = vld [vmem:[%s236 + $0x848] sm:$0xff]
        %v517 = vld [vmem:[%s236 + $0x850] sm:$0xff]
        %v518 = vld [vmem:[%s236 + $0x858] sm:$0xff]
        %v519 = vld [vmem:[%s236 + $0x860] sm:$0xff]
        %v520 = vld [vmem:[%s236 + $0x868] sm:$0xff]
        %v521 = vld [vmem:[%s236 + $0x870] sm:$0xff]
        %v522 = vld [vmem:[%s236 + $0x878] sm:$0xff]
        %v523 = vld [vmem:[%s236 + $0x880] sm:$0xff]
        %v524 = vld [vmem:[%s236 + $0x888] sm:$0xff]
        %v525 = vld [vmem:[%s236 + $0x890] sm:$0xff]
        %v526 = vld [vmem:[%s236 + $0x898] sm:$0xff]
        %v527 = vld [vmem:[%s236 + $0x8a0] sm:$0xff]
        %v528 = vld [vmem:[%s236 + $0x8a8] sm:$0xff]
        %v529 = vld [vmem:[%s236 + $0x8b0] sm:$0xff]
        %v530 = vld [vmem:[%s236 + $0x8b8] sm:$0xff]
        %v531 = vld [vmem:[%s236 + $0x8c0] sm:$0xff]
        %v532 = vld [vmem:[%s236 + $0x8c8] sm:$0xff]
        %v533 = vld [vmem:[%s236 + $0x8d0] sm:$0xff]
        %v534 = vld [vmem:[%s236 + $0x8d8] sm:$0xff]
        %v535 = vld [vmem:[%s236 + $0x8e0] sm:$0xff]
        %v536 = vld [vmem:[%s236 + $0x8e8] sm:$0xff]
        %v537 = vld [vmem:[%s236 + $0x8f0] sm:$0xff]
        %v538 = vld [vmem:[%s236 + $0x8f8] sm:$0xff]
        %v539 = vld [vmem:[%s236 + $0x900] sm:$0xff]
        %v540 = vld [vmem:[%s236 + $0x908] sm:$0xff]
        %v541 = vld [vmem:[%s236 + $0x910] sm:$0xff]
        %v542 = vld [vmem:[%s236 + $0x918] sm:$0xff]
        %v543 = vld [vmem:[%s236 + $0x920] sm:$0xff]
        %v544 = vld [vmem:[%s236 + $0x928] sm:$0xff]
        %v545 = vld [vmem:[%s236 + $0x930] sm:$0xff]
        %v546 = vld [vmem:[%s236 + $0x938] sm:$0xff]
        %v547 = vld [vmem:[%s236 + $0x940] sm:$0xff]
        %v548 = vld [vmem:[%s236 + $0x948] sm:$0xff]
        %v549 = vld [vmem:[%s236 + $0x950] sm:$0xff]
        %v550 = vld [vmem:[%s236 + $0x958] sm:$0xff]
        %v551 = vld [vmem:[%s236 + $0x960] sm:$0xff]
        %v552 = vld [vmem:[%s236 + $0x968] sm:$0xff]
        %v553 = vld [vmem:[%s236 + $0x970] sm:$0xff]
        %v554 = vld [vmem:[%s236 + $0x978] sm:$0xff]
        %v555 = vld [vmem:[%s236 + $0x980] sm:$0xff]
        %v556 = vld [vmem:[%s236 + $0x988] sm:$0xff]
        %v557 = vld [vmem:[%s236 + $0x990] sm:$0xff]
        %v558 = vld [vmem:[%s236 + $0x998] sm:$0xff]
        %v559 = vld [vmem:[%s236 + $0x9a0] sm:$0xff]
        %v560 = vld [vmem:[%s236 + $0x9a8] sm:$0xff]
        %v561 = vld [vmem:[%s236 + $0x9b0] sm:$0xff]
        %v562 = vld [vmem:[%s236 + $0x9b8] sm:$0xff]
        %v563 = vld [vmem:[%s236 + $0x9c0] sm:$0xff]
        %v564 = vld [vmem:[%s236 + $0x9c8] sm:$0xff]
        %v565 = vld [vmem:[%s236 + $0x9d0] sm:$0xff]
        %v566 = vld [vmem:[%s236 + $0x9d8] sm:$0xff]
        %v567 = vld [vmem:[%s236 + $0x9e0] sm:$0xff]
        %v568 = vld [vmem:[%s236 + $0x9e8] sm:$0xff]
        %v569 = vld [vmem:[%s236 + $0x9f0] sm:$0xff]
        %v570 = vld [vmem:[%s236 + $0x9f8] sm:$0xff]
        %v571 = vld [vmem:[%s236 + $0xa00] sm:$0xff]
        %v572 = vld [vmem:[%s236 + $0xa08] sm:$0xff]
        %v573 = vld [vmem:[%s236 + $0xa10] sm:$0xff]
        %v574 = vld [vmem:[%s236 + $0xa18] sm:$0xff]
        %v575 = vld [vmem:[%s236 + $0xa20] sm:$0xff]
        %v576 = vld [vmem:[%s236 + $0xa28] sm:$0xff]
        %v577 = vld [vmem:[%s236 + $0xa30] sm:$0xff]
        %v578 = vld [vmem:[%s236 + $0xa38] sm:$0xff]
        %v579 = vld [vmem:[%s236 + $0xa40] sm:$0xff]
        %v580 = vld [vmem:[%s236 + $0xa48] sm:$0xff]
        %v581 = vld [vmem:[%s236 + $0xa50] sm:$0xff]
        %v582 = vld [vmem:[%s236 + $0xa58] sm:$0xff]
        %v583 = vld [vmem:[%s236 + $0xa60] sm:$0xff]
        %v584 = vld [vmem:[%s236 + $0xa68] sm:$0xff]
        %v585 = vld [vmem:[%s236 + $0xa70] sm:$0xff]
        %v586 = vld [vmem:[%s236 + $0xa78] sm:$0xff]
        %v587 = vld [vmem:[%s236 + $0xa80] sm:$0xff]
        %v588 = vld [vmem:[%s236 + $0xa88] sm:$0xff]
        %v589 = vld [vmem:[%s236 + $0xa90] sm:$0xff]
        %v590 = vld [vmem:[%s236 + $0xa98] sm:$0xff]
        %v591 = vld [vmem:[%s236 + $0xaa0] sm:$0xff]
        %v592 = vld [vmem:[%s236 + $0xaa8] sm:$0xff]
        %v593 = vld [vmem:[%s236 + $0xab0] sm:$0xff]
        %v594 = vld [vmem:[%s236 + $0xab8] sm:$0xff]
        %v595 = vld [vmem:[%s236 + $0xac0] sm:$0xff]
        %v596 = vld [vmem:[%s236 + $0xac8] sm:$0xff]
        %v597 = vld [vmem:[%s236 + $0xad0] sm:$0xff]
        %v598 = vld [vmem:[%s236 + $0xad8] sm:$0xff]
        %v599 = vld [vmem:[%s236 + $0xae0] sm:$0xff]
        %v600 = vld [vmem:[%s236 + $0xae8] sm:$0xff]
        %v601 = vld [vmem:[%s236 + $0xaf0] sm:$0xff]
        %v602 = vld [vmem:[%s236 + $0xaf8] sm:$0xff]
        %v603 = vld [vmem:[%s236 + $0xb00] sm:$0xff]
        %v604 = vld [vmem:[%s236 + $0xb08] sm:$0xff]
        %v605 = vld [vmem:[%s236 + $0xb10] sm:$0xff]
        %v606 = vld [vmem:[%s236 + $0xb18] sm:$0xff]
        %v607 = vld [vmem:[%s236 + $0xb20] sm:$0xff]
        %v608 = vld [vmem:[%s236 + $0xb28] sm:$0xff]
        %v609 = vld [vmem:[%s236 + $0xb30] sm:$0xff]
        %v610 = vld [vmem:[%s236 + $0xb38] sm:$0xff]
        %v611 = vld [vmem:[%s236 + $0xb40] sm:$0xff]
        %v612 = vld [vmem:[%s236 + $0xb48] sm:$0xff]
        %v613 = vld [vmem:[%s236 + $0xb50] sm:$0xff]
        %v614 = vld [vmem:[%s236 + $0xb58] sm:$0xff]
        %v615 = vld [vmem:[%s236 + $0xb60] sm:$0xff]
        %v616 = vld [vmem:[%s236 + $0xb68] sm:$0xff]
        %v617 = vld [vmem:[%s236 + $0xb70] sm:$0xff]
        %v618 = vld [vmem:[%s236 + $0xb78] sm:$0xff]
        %v619 = vld [vmem:[%s236 + $0xb80] sm:$0xff]
        %v620 = vld [vmem:[%s236 + $0xb88] sm:$0xff]
        %v621 = vld [vmem:[%s236 + $0xb90] sm:$0xff]
        %v622 = vld [vmem:[%s236 + $0xb98] sm:$0xff]
        %v623 = vld [vmem:[%s236 + $0xba0] sm:$0xff]
        %v624 = vld [vmem:[%s236 + $0xba8] sm:$0xff]
        %v625 = vld [vmem:[%s236 + $0xbb0] sm:$0xff]
        %v626 = vld [vmem:[%s236 + $0xbb8] sm:$0xff]
        %v627 = vld [vmem:[%s236 + $0xbc0] sm:$0xff]
        %v628 = vld [vmem:[%s236 + $0xbc8] sm:$0xff]
        %v629 = vld [vmem:[%s236 + $0xbd0] sm:$0xff]
        %v630 = vld [vmem:[%s236 + $0xbd8] sm:$0xff]
        %v631 = vld [vmem:[%s236 + $0xbe0] sm:$0xff]
        %v632 = vld [vmem:[%s236 + $0xbe8] sm:$0xff]
        %v633 = vld [vmem:[%s236 + $0xbf0] sm:$0xff]
        %v634 = vld [vmem:[%s236 + $0xbf8] sm:$0xff]
        %v635 = vld [vmem:[%s236 + $0xc00] sm:$0xff]
        %v636 = vld [vmem:[%s236 + $0xc08] sm:$0xff]
        %v637 = vld [vmem:[%s236 + $0xc10] sm:$0xff]
        %v638 = vld [vmem:[%s236 + $0xc18] sm:$0xff]
        %v639 = vld [vmem:[%s236 + $0xc20] sm:$0xff]
        %v640 = vld [vmem:[%s236 + $0xc28] sm:$0xff]
        %v641 = vld [vmem:[%s236 + $0xc30] sm:$0xff]
        %v642 = vld [vmem:[%s236 + $0xc38] sm:$0xff]
        %v643 = vld [vmem:[%s236 + $0xc40] sm:$0xff]
        %v644 = vld [vmem:[%s236 + $0xc48] sm:$0xff]
        %v645 = vld [vmem:[%s236 + $0xc50] sm:$0xff]
        %v646 = vld [vmem:[%s236 + $0xc58] sm:$0xff]
        %v647 = vld [vmem:[%s236 + $0xc60] sm:$0xff]
        %v648 = vld [vmem:[%s236 + $0xc68] sm:$0xff]
        %v649 = vld [vmem:[%s236 + $0xc70] sm:$0xff]
        %v650 = vld [vmem:[%s236 + $0xc78] sm:$0xff]
        %v651 = vld [vmem:[%s236 + $0xc80] sm:$0xff]
        %v652 = vld [vmem:[%s236 + $0xc88] sm:$0xff]
        %v653 = vld [vmem:[%s236 + $0xc90] sm:$0xff]
        %v654 = vld [vmem:[%s236 + $0xc98] sm:$0xff]
        %v655 = vld [vmem:[%s236 + $0xca0] sm:$0xff]
        %v656 = vld [vmem:[%s236 + $0xca8] sm:$0xff]
        %v657 = vld [vmem:[%s236 + $0xcb0] sm:$0xff]
        %v658 = vld [vmem:[%s236 + $0xcb8] sm:$0xff]
        %v659 = vld [vmem:[%s236 + $0xcc0] sm:$0xff]
        %v660 = vld [vmem:[%s236 + $0xcc8] sm:$0xff]
        %v661 = vld [vmem:[%s236 + $0xcd0] sm:$0xff]
        %v662 = vld [vmem:[%s236 + $0xcd8] sm:$0xff]
        %v663 = vld [vmem:[%s236 + $0xce0] sm:$0xff]
        %v664 = vld [vmem:[%s236 + $0xce8] sm:$0xff]
        %v665 = vld [vmem:[%s236 + $0xcf0] sm:$0xff]
        %v666 = vld [vmem:[%s236 + $0xcf8] sm:$0xff]
        %v667 = vld [vmem:[%s236 + $0xd00] sm:$0xff]
        %v668 = vld [vmem:[%s236 + $0xd08] sm:$0xff]
        %v669 = vld [vmem:[%s236 + $0xd10] sm:$0xff]
        %v670 = vld [vmem:[%s236 + $0xd18] sm:$0xff]
        %v671 = vld [vmem:[%s236 + $0xd20] sm:$0xff]
        %v672 = vld [vmem:[%s236 + $0xd28] sm:$0xff]
        %v673 = vld [vmem:[%s236 + $0xd30] sm:$0xff]
        %v674 = vld [vmem:[%s236 + $0xd38] sm:$0xff]
        %v675 = vld [vmem:[%s236 + $0xd40] sm:$0xff]
        %v676 = vld [vmem:[%s236 + $0xd48] sm:$0xff]
        %v677 = vld [vmem:[%s236 + $0xd50] sm:$0xff]
        %v678 = vld [vmem:[%s236 + $0xd58] sm:$0xff]
        %v679 = vld [vmem:[%s236 + $0xd60] sm:$0xff]
        %v680 = vld [vmem:[%s236 + $0xd68] sm:$0xff]
        %v681 = vld [vmem:[%s236 + $0xd70] sm:$0xff]
        %v682 = vld [vmem:[%s236 + $0xd78] sm:$0xff]
        %v683 = vld [vmem:[%s236 + $0xd80] sm:$0xff]
        %v684 = vld [vmem:[%s236 + $0xd88] sm:$0xff]
        %v685 = vld [vmem:[%s236 + $0xd90] sm:$0xff]
        %v686 = vld [vmem:[%s236 + $0xd98] sm:$0xff]
        %v687 = vld [vmem:[%s236 + $0xda0] sm:$0xff]
        %v688 = vld [vmem:[%s236 + $0xda8] sm:$0xff]
        %v689 = vld [vmem:[%s236 + $0xdb0] sm:$0xff]
        %v690 = vld [vmem:[%s236 + $0xdb8] sm:$0xff]
        %v691 = vld [vmem:[%s236 + $0xdc0] sm:$0xff]
        %v692 = vld [vmem:[%s236 + $0xdc8] sm:$0xff]
        %v693 = vld [vmem:[%s236 + $0xdd0] sm:$0xff]
        %v694 = vld [vmem:[%s236 + $0xdd8] sm:$0xff]
        %v695 = vld [vmem:[%s236 + $0xde0] sm:$0xff]
        %v696 = vld [vmem:[%s236 + $0xde8] sm:$0xff]
        %v697 = vld [vmem:[%s236 + $0xdf0] sm:$0xff]
        %v698 = vld [vmem:[%s236 + $0xdf8] sm:$0xff]
        %v699 = vld [vmem:[%s236 + $0xe00] sm:$0xff]
        %v700 = vld [vmem:[%s236 + $0xe08] sm:$0xff]
        %v701 = vld [vmem:[%s236 + $0xe10] sm:$0xff]
        %v702 = vld [vmem:[%s236 + $0xe18] sm:$0xff]
        %v703 = vld [vmem:[%s236 + $0xe20] sm:$0xff]
        %v704 = vld [vmem:[%s236 + $0xe28] sm:$0xff]
        %v705 = vld [vmem:[%s236 + $0xe30] sm:$0xff]
        %v706 = vld [vmem:[%s236 + $0xe38] sm:$0xff]
        %v707 = vld [vmem:[%s236 + $0xe40] sm:$0xff]
        %v708 = vld [vmem:[%s236 + $0xe48] sm:$0xff]
        %v709 = vld [vmem:[%s236 + $0xe50] sm:$0xff]
        %v710 = vld [vmem:[%s236 + $0xe58] sm:$0xff]
        %v711 = vld [vmem:[%s236 + $0xe60] sm:$0xff]
        %v712 = vld [vmem:[%s236 + $0xe68] sm:$0xff]
        %v713 = vld [vmem:[%s236 + $0xe70] sm:$0xff]
        %v714 = vld [vmem:[%s236 + $0xe78] sm:$0xff]
        %v715 = vld [vmem:[%s236 + $0xe80] sm:$0xff]
        %v716 = vld [vmem:[%s236 + $0xe88] sm:$0xff]
        %v717 = vld [vmem:[%s236 + $0xe90] sm:$0xff]
        %v718 = vld [vmem:[%s236 + $0xe98] sm:$0xff]
        %v719 = vld [vmem:[%s236 + $0xea0] sm:$0xff]
        %v720 = vld [vmem:[%s236 + $0xea8] sm:$0xff]
        %v721 = vld [vmem:[%s236 + $0xeb0] sm:$0xff]
        %v722 = vld [vmem:[%s236 + $0xeb8] sm:$0xff]
        %v723 = vld [vmem:[%s236 + $0xec0] sm:$0xff]
        %v724 = vld [vmem:[%s236 + $0xec8] sm:$0xff]
        %v725 = vld [vmem:[%s236 + $0xed0] sm:$0xff]
        %v726 = vld [vmem:[%s236 + $0xed8] sm:$0xff]
        %v727 = vld [vmem:[%s236 + $0xee0] sm:$0xff]
        %v728 = vld [vmem:[%s236 + $0xee8] sm:$0xff]
        %v729 = vld [vmem:[%s236 + $0xef0] sm:$0xff]
        %v730 = vld [vmem:[%s236 + $0xef8] sm:$0xff]
        %v731 = vld [vmem:[%s236 + $0xf00] sm:$0xff]
        %v732 = vld [vmem:[%s236 + $0xf08] sm:$0xff]
        %v733 = vld [vmem:[%s236 + $0xf10] sm:$0xff]
        %v734 = vld [vmem:[%s236 + $0xf18] sm:$0xff]
        %v735 = vld [vmem:[%s236 + $0xf20] sm:$0xff]
        %v736 = vld [vmem:[%s236 + $0xf28] sm:$0xff]
        %v737 = vld [vmem:[%s236 + $0xf30] sm:$0xff]
        %v738 = vld [vmem:[%s236 + $0xf38] sm:$0xff]
        %v739 = vld [vmem:[%s236 + $0xf40] sm:$0xff]
        %v740 = vld [vmem:[%s236 + $0xf48] sm:$0xff]
        %v741 = vld [vmem:[%s236 + $0xf50] sm:$0xff]
        %v742 = vld [vmem:[%s236 + $0xf58] sm:$0xff]
        %v743 = vld [vmem:[%s236 + $0xf60] sm:$0xff]
        %v744 = vld [vmem:[%s236 + $0xf68] sm:$0xff]
        %v745 = vld [vmem:[%s236 + $0xf70] sm:$0xff]
        %v746 = vld [vmem:[%s236 + $0xf78] sm:$0xff]
        %v747 = vld [vmem:[%s236 + $0xf80] sm:$0xff]
        %v748 = vld [vmem:[%s236 + $0xf88] sm:$0xff]
        %v749 = vld [vmem:[%s236 + $0xf90] sm:$0xff]
        %v750 = vld [vmem:[%s236 + $0xf98] sm:$0xff]
        %v751 = vld [vmem:[%s236 + $0xfa0] sm:$0xff]
        %v752 = vld [vmem:[%s236 + $0xfa8] sm:$0xff]
        %v753 = vld [vmem:[%s236 + $0xfb0] sm:$0xff]
        %v754 = vld [vmem:[%s236 + $0xfb8] sm:$0xff]
        %v755 = vld [vmem:[%s236 + $0xfc0] sm:$0xff]
        %v756 = vld [vmem:[%s236 + $0xfc8] sm:$0xff]
        %v757 = vld [vmem:[%s236 + $0xfd0] sm:$0xff]
        %v758 = vld [vmem:[%s236 + $0xfd8] sm:$0xff]
        %v759 = vld [vmem:[%s236 + $0xfe0] sm:$0xff]
        %v760 = vld [vmem:[%s236 + $0xfe8] sm:$0xff]
        %v761 = vld [vmem:[%s236 + $0xff0] sm:$0xff]
        %v762 = vld [vmem:[%s236 + $0xff8] sm:$0xff]
        %v763 = vld [vmem:[%s236 + $0x1000] sm:$0xff]
        %v764 = vld [vmem:[%s236 + $0x1008] sm:$0xff]
        %v765 = vld [vmem:[%s236 + $0x1010] sm:$0xff]
        %v766 = vld [vmem:[%s236 + $0x1018] sm:$0xff]
        %v767 = vld [vmem:[%s236 + $0x1020] sm:$0xff]
        %v768 = vld [vmem:[%s236 + $0x1028] sm:$0xff]
        %v769 = vld [vmem:[%s236 + $0x1030] sm:$0xff]
        %v770 = vld [vmem:[%s236 + $0x1038] sm:$0xff]
        %v771 = vld [vmem:[%s236 + $0x1040] sm:$0xff]
        %v772 = vld [vmem:[%s236 + $0x1048] sm:$0xff]
        %v773 = vld [vmem:[%s236 + $0x1050] sm:$0xff]
        %v774 = vld [vmem:[%s236 + $0x1058] sm:$0xff]
        %v775 = vld [vmem:[%s236 + $0x1060] sm:$0xff]
        %v776 = vld [vmem:[%s236 + $0x1068] sm:$0xff]
        %v777 = vld [vmem:[%s236 + $0x1070] sm:$0xff]
        %v778 = vld [vmem:[%s236 + $0x1078] sm:$0xff]
        %v779 = vld [vmem:[%s236 + $0x1080] sm:$0xff]
        %v780 = vld [vmem:[%s236 + $0x1088] sm:$0xff]
        %v781 = vld [vmem:[%s236 + $0x1090] sm:$0xff]
        %v782 = vld [vmem:[%s236 + $0x1098] sm:$0xff]
        %v783 = vld [vmem:[%s236 + $0x10a0] sm:$0xff]
        %v784 = vld [vmem:[%s236 + $0x10a8] sm:$0xff]
        %v785 = vld [vmem:[%s236 + $0x10b0] sm:$0xff]
        %v786 = vld [vmem:[%s236 + $0x10b8] sm:$0xff]
        %v787 = vld [vmem:[%s236 + $0x10c0] sm:$0xff]
        %v788 = vld [vmem:[%s236 + $0x10c8] sm:$0xff]
        %v789 = vld [vmem:[%s236 + $0x10d0] sm:$0xff]
        %v790 = vld [vmem:[%s236 + $0x10d8] sm:$0xff]
        %v791 = vld [vmem:[%s236 + $0x10e0] sm:$0xff]
        %v792 = vld [vmem:[%s236 + $0x10e8] sm:$0xff]
        %v793 = vld [vmem:[%s236 + $0x10f0] sm:$0xff]
        %v794 = vld [vmem:[%s236 + $0x10f8] sm:$0xff]
        %v795 = vld [vmem:[%s236 + $0x1100] sm:$0xff]
        %v796 = vld [vmem:[%s236 + $0x1108] sm:$0xff]
        %v797 = vld [vmem:[%s236 + $0x1110] sm:$0xff]
        %v798 = vld [vmem:[%s236 + $0x1118] sm:$0xff]
        %v799 = vld [vmem:[%s236 + $0x1120] sm:$0xff]
        %v800 = vld [vmem:[%s236 + $0x1128] sm:$0xff]
        %v801 = vld [vmem:[%s236 + $0x1130] sm:$0xff]
        %v802 = vld [vmem:[%s236 + $0x1138] sm:$0xff]
        %v803 = vld [vmem:[%s236 + $0x1140] sm:$0xff]
        %v804 = vld [vmem:[%s236 + $0x1148] sm:$0xff]
        %v805 = vld [vmem:[%s236 + $0x1150] sm:$0xff]
        %v806 = vld [vmem:[%s236 + $0x1158] sm:$0xff]
        %v807 = vld [vmem:[%s236 + $0x1160] sm:$0xff]
        %v808 = vld [vmem:[%s236 + $0x1168] sm:$0xff]
        %v809 = vld [vmem:[%s236 + $0x1170] sm:$0xff]
        %v810 = vld [vmem:[%s236 + $0x1178] sm:$0xff]
        %v811 = vld [vmem:[%s236 + $0x1180] sm:$0xff]
        %v812 = vld [vmem:[%s236 + $0x1188] sm:$0xff]
        %v813 = vld [vmem:[%s236 + $0x1190] sm:$0xff]
        %v814 = vld [vmem:[%s236 + $0x1198] sm:$0xff]
        %v815 = vld [vmem:[%s236 + $0x11a0] sm:$0xff]
        %v816 = vld [vmem:[%s236 + $0x11a8] sm:$0xff]
        %v817 = vld [vmem:[%s236 + $0x11b0] sm:$0xff]
        %v818 = vld [vmem:[%s236 + $0x11b8] sm:$0xff]
        %v819 = vld [vmem:[%s236 + $0x11c0] sm:$0xff]
        %v820 = vld [vmem:[%s236 + $0x11c8] sm:$0xff]
        %v821 = vld [vmem:[%s236 + $0x11d0] sm:$0xff]
        %v822 = vld [vmem:[%s236 + $0x11d8] sm:$0xff]
        %v823 = vld [vmem:[%s236 + $0x11e0] sm:$0xff]
        %v824 = vld [vmem:[%s236 + $0x11e8] sm:$0xff]
        %v825 = vld [vmem:[%s236 + $0x11f0] sm:$0xff]
        %v826 = vld [vmem:[%s236 + $0x11f8] sm:$0xff]
        %v827 = vld [vmem:[%s236 + $0x1200] sm:$0xff]
        %v828 = vld [vmem:[%s236 + $0x1208] sm:$0xff]
        %v829 = vld [vmem:[%s236 + $0x1210] sm:$0xff]
        %v830 = vld [vmem:[%s236 + $0x1218] sm:$0xff]
        %v831 = vld [vmem:[%s236 + $0x1220] sm:$0xff]
        %v832 = vld [vmem:[%s236 + $0x1228] sm:$0xff]
        %v833 = vld [vmem:[%s236 + $0x1230] sm:$0xff]
        %v834 = vld [vmem:[%s236 + $0x1238] sm:$0xff]
        %v835 = vld [vmem:[%s236 + $0x1240] sm:$0xff]
        %v836 = vld [vmem:[%s236 + $0x1248] sm:$0xff]
        %v837 = vld [vmem:[%s236 + $0x1250] sm:$0xff]
        %v838 = vld [vmem:[%s236 + $0x1258] sm:$0xff]
        %v839 = vld [vmem:[%s236 + $0x1260] sm:$0xff]
        %v840 = vld [vmem:[%s236 + $0x1268] sm:$0xff]
        %v841 = vld [vmem:[%s236 + $0x1270] sm:$0xff]
        %v842 = vld [vmem:[%s236 + $0x1278] sm:$0xff]
        %v843 = vld [vmem:[%s236 + $0x1280] sm:$0xff]
        %v844 = vld [vmem:[%s236 + $0x1288] sm:$0xff]
        %v845 = vld [vmem:[%s236 + $0x1290] sm:$0xff]
        %v846 = vld [vmem:[%s236 + $0x1298] sm:$0xff]
        %v847 = vld [vmem:[%s236 + $0x12a0] sm:$0xff]
        %v848 = vld [vmem:[%s236 + $0x12a8] sm:$0xff]
        %v849 = vld [vmem:[%s236 + $0x12b0] sm:$0xff]
        %v850 = vld [vmem:[%s236 + $0x12b8] sm:$0xff]
        %v851 = vld [vmem:[%s236 + $0x12c0] sm:$0xff]
        %v852 = vld [vmem:[%s236 + $0x12c8] sm:$0xff]
        %v853 = vld [vmem:[%s236 + $0x12d0] sm:$0xff]
        %v854 = vld [vmem:[%s236 + $0x12d8] sm:$0xff]
        %v855 = vld [vmem:[%s236 + $0x12e0] sm:$0xff]
        %v856 = vld [vmem:[%s236 + $0x12e8] sm:$0xff]
        %v857 = vld [vmem:[%s236 + $0x12f0] sm:$0xff]
        %v858 = vld [vmem:[%s236 + $0x12f8] sm:$0xff]
        %v859 = vld [vmem:[%s236 + $0x1300] sm:$0xff]
        %v860 = vld [vmem:[%s236 + $0x1308] sm:$0xff]
        %v861 = vld [vmem:[%s236 + $0x1310] sm:$0xff]
        %v862 = vld [vmem:[%s236 + $0x1318] sm:$0xff]
        %v863 = vld [vmem:[%s236 + $0x1320] sm:$0xff]
        %v864 = vld [vmem:[%s236 + $0x1328] sm:$0xff]
        %v865 = vld [vmem:[%s236 + $0x1330] sm:$0xff]
        %v866 = vld [vmem:[%s236 + $0x1338] sm:$0xff]
        %v867 = vld [vmem:[%s236 + $0x1340] sm:$0xff]
        %v868 = vld [vmem:[%s236 + $0x1348] sm:$0xff]
        %v869 = vld [vmem:[%s236 + $0x1350] sm:$0xff]
        %v870 = vld [vmem:[%s236 + $0x1358] sm:$0xff]
        %v871 = vld [vmem:[%s236 + $0x1360] sm:$0xff]
        %v872 = vld [vmem:[%s236 + $0x1368] sm:$0xff]
        %v873 = vld [vmem:[%s236 + $0x1370] sm:$0xff]
        %v874 = vld [vmem:[%s236 + $0x1378] sm:$0xff]
        %v875 = vld [vmem:[%s236 + $0x1380] sm:$0xff]
        %v876 = vld [vmem:[%s236 + $0x1388] sm:$0xff]
        %v877 = vld [vmem:[%s236 + $0x1390] sm:$0xff]
        %v878 = vld [vmem:[%s236 + $0x1398] sm:$0xff]
        %v879 = vld [vmem:[%s236 + $0x13a0] sm:$0xff]
        %v880 = vld [vmem:[%s236 + $0x13a8] sm:$0xff]
        %v881 = vld [vmem:[%s236 + $0x13b0] sm:$0xff]
        %v882 = vld [vmem:[%s236 + $0x13b8] sm:$0xff]
        %v883 = vld [vmem:[%s236 + $0x13c0] sm:$0xff]
        %v884 = vld [vmem:[%s236 + $0x13c8] sm:$0xff]
        %v885 = vld [vmem:[%s236 + $0x13d0] sm:$0xff]
        %v886 = vld [vmem:[%s236 + $0x13d8] sm:$0xff]
        %v887 = vld [vmem:[%s236 + $0x13e0] sm:$0xff]
        %v888 = vld [vmem:[%s236 + $0x13e8] sm:$0xff]
        %v889 = vld [vmem:[%s236 + $0x13f0] sm:$0xff]
        %v890 = vld [vmem:[%s236 + $0x13f8] sm:$0xff]
        %v891 = vld [vmem:[%s236 + $0x1400] sm:$0xff]
        %v892 = vld [vmem:[%s236 + $0x1408] sm:$0xff]
        %v893 = vld [vmem:[%s236 + $0x1410] sm:$0xff]
        %v894 = vld [vmem:[%s236 + $0x1418] sm:$0xff]
        %v895 = vld [vmem:[%s236 + $0x1420] sm:$0xff]
        %v896 = vld [vmem:[%s236 + $0x1428] sm:$0xff]
        %v897 = vld [vmem:[%s236 + $0x1430] sm:$0xff]
        %v898 = vld [vmem:[%s236 + $0x1438] sm:$0xff]
        %v899 = vld [vmem:[%s236 + $0x1440] sm:$0xff]
        %v900 = vld [vmem:[%s236 + $0x1448] sm:$0xff]
        %v901 = vld [vmem:[%s236 + $0x1450] sm:$0xff]
        %v902 = vld [vmem:[%s236 + $0x1458] sm:$0xff]
        %v903 = vld [vmem:[%s236 + $0x1460] sm:$0xff]
        %v904 = vld [vmem:[%s236 + $0x1468] sm:$0xff]
        %v905 = vld [vmem:[%s236 + $0x1470] sm:$0xff]
        %v906 = vld [vmem:[%s236 + $0x1478] sm:$0xff]
        %v907 = vld [vmem:[%s236 + $0x1480] sm:$0xff]
        %v908 = vld [vmem:[%s236 + $0x1488] sm:$0xff]
        %v909 = vld [vmem:[%s236 + $0x1490] sm:$0xff]
        %v910 = vld [vmem:[%s236 + $0x1498] sm:$0xff]
        %v911 = vld [vmem:[%s236 + $0x14a0] sm:$0xff]
        %v912 = vld [vmem:[%s236 + $0x14a8] sm:$0xff]
        %v913 = vld [vmem:[%s236 + $0x14b0] sm:$0xff]
        %v914 = vld [vmem:[%s236 + $0x14b8] sm:$0xff]
        %v915 = vld [vmem:[%s236 + $0x14c0] sm:$0xff]
        %v916 = vld [vmem:[%s236 + $0x14c8] sm:$0xff]
        %v917 = vld [vmem:[%s236 + $0x14d0] sm:$0xff]
        %v918 = vld [vmem:[%s236 + $0x14d8] sm:$0xff]
        %v919 = vld [vmem:[%s236 + $0x14e0] sm:$0xff]
        %v920 = vld [vmem:[%s236 + $0x14e8] sm:$0xff]
        %v921 = vld [vmem:[%s236 + $0x14f0] sm:$0xff]
        %v922 = vld [vmem:[%s236 + $0x14f8] sm:$0xff]
        %v923 = vld [vmem:[%s236 + $0x1500] sm:$0xff]
        %v924 = vld [vmem:[%s236 + $0x1508] sm:$0xff]
        %v925 = vld [vmem:[%s236 + $0x1510] sm:$0xff]
        %v926 = vld [vmem:[%s236 + $0x1518] sm:$0xff]
        %v927 = vld [vmem:[%s236 + $0x1520] sm:$0xff]
        %v928 = vld [vmem:[%s236 + $0x1528] sm:$0xff]
        %v929 = vld [vmem:[%s236 + $0x1530] sm:$0xff]
        %v930 = vld [vmem:[%s236 + $0x1538] sm:$0xff]
        %v931 = vld [vmem:[%s236 + $0x1540] sm:$0xff]
        %v932 = vld [vmem:[%s236 + $0x1548] sm:$0xff]
        %v933 = vld [vmem:[%s236 + $0x1550] sm:$0xff]
        %v934 = vld [vmem:[%s236 + $0x1558] sm:$0xff]
        %v935 = vld [vmem:[%s236 + $0x1560] sm:$0xff]
        %v936 = vld [vmem:[%s236 + $0x1568] sm:$0xff]
        %v937 = vld [vmem:[%s236 + $0x1570] sm:$0xff]
        %v938 = vld [vmem:[%s236 + $0x1578] sm:$0xff]
        %v939 = vld [vmem:[%s236 + $0x1580] sm:$0xff]
        %v940 = vld [vmem:[%s236 + $0x1588] sm:$0xff]
        %v941 = vld [vmem:[%s236 + $0x1590] sm:$0xff]
        %v942 = vld [vmem:[%s236 + $0x1598] sm:$0xff]
        %v943 = vld [vmem:[%s236 + $0x15a0] sm:$0xff]
        %v944 = vld [vmem:[%s236 + $0x15a8] sm:$0xff]
        %v945 = vld [vmem:[%s236 + $0x15b0] sm:$0xff]
        %v946 = vld [vmem:[%s236 + $0x15b8] sm:$0xff]
        %v947 = vld [vmem:[%s236 + $0x15c0] sm:$0xff]
        %v948 = vld [vmem:[%s236 + $0x15c8] sm:$0xff]
        %v949 = vld [vmem:[%s236 + $0x15d0] sm:$0xff]
        %v950 = vld [vmem:[%s236 + $0x15d8] sm:$0xff]
        %v951 = vld [vmem:[%s236 + $0x15e0] sm:$0xff]
        %v952 = vld [vmem:[%s236 + $0x15e8] sm:$0xff]
        %v953 = vld [vmem:[%s236 + $0x15f0] sm:$0xff]
        %v954 = vld [vmem:[%s236 + $0x15f8] sm:$0xff]
        %v955 = vld [vmem:[%s236 + $0x1600] sm:$0xff]
        %v956 = vld [vmem:[%s236 + $0x1608] sm:$0xff]
        %v957 = vld [vmem:[%s236 + $0x1610] sm:$0xff]
        %v958 = vld [vmem:[%s236 + $0x1618] sm:$0xff]
        %v959 = vld [vmem:[%s236 + $0x1620] sm:$0xff]
        %v960 = vld [vmem:[%s236 + $0x1628] sm:$0xff]
        %v961 = vld [vmem:[%s236 + $0x1630] sm:$0xff]
        %v962 = vld [vmem:[%s236 + $0x1638] sm:$0xff]
        %v963 = vld [vmem:[%s236 + $0x1640] sm:$0xff]
        %v964 = vld [vmem:[%s236 + $0x1648] sm:$0xff]
        %v965 = vld [vmem:[%s236 + $0x1650] sm:$0xff]
        %v966 = vld [vmem:[%s236 + $0x1658] sm:$0xff]
        %v967 = vld [vmem:[%s236 + $0x1660] sm:$0xff]
        %v968 = vld [vmem:[%s236 + $0x1668] sm:$0xff]
        %v969 = vld [vmem:[%s236 + $0x1670] sm:$0xff]
        %v970 = vld [vmem:[%s236 + $0x1678] sm:$0xff]
        %v971 = vld [vmem:[%s236 + $0x1680] sm:$0xff]
        %v972 = vld [vmem:[%s236 + $0x1688] sm:$0xff]
        %v973 = vld [vmem:[%s236 + $0x1690] sm:$0xff]
        %v974 = vld [vmem:[%s236 + $0x1698] sm:$0xff]
        %v975 = vld [vmem:[%s236 + $0x16a0] sm:$0xff]
        %v976 = vld [vmem:[%s236 + $0x16a8] sm:$0xff]
        %v977 = vld [vmem:[%s236 + $0x16b0] sm:$0xff]
        %v978 = vld [vmem:[%s236 + $0x16b8] sm:$0xff]
        %v979 = vld [vmem:[%s236 + $0x16c0] sm:$0xff]
        %v980 = vld [vmem:[%s236 + $0x16c8] sm:$0xff]
        %v981 = vld [vmem:[%s236 + $0x16d0] sm:$0xff]
        %v982 = vld [vmem:[%s236 + $0x16d8] sm:$0xff]
        %v983 = vld [vmem:[%s236 + $0x16e0] sm:$0xff]
        %v984 = vld [vmem:[%s236 + $0x16e8] sm:$0xff]
        %v985 = vld [vmem:[%s236 + $0x16f0] sm:$0xff]
        %v986 = vld [vmem:[%s236 + $0x16f8] sm:$0xff]
        %v987 = vld [vmem:[%s236 + $0x1700] sm:$0xff]
        %v988 = vld [vmem:[%s236 + $0x1708] sm:$0xff]
        %v989 = vld [vmem:[%s236 + $0x1710] sm:$0xff]
        %v990 = vld [vmem:[%s236 + $0x1718] sm:$0xff]
        %v991 = vld [vmem:[%s236 + $0x1720] sm:$0xff]
        %v992 = vld [vmem:[%s236 + $0x1728] sm:$0xff]
        %v993 = vld [vmem:[%s236 + $0x1730] sm:$0xff]
        %v994 = vld [vmem:[%s236 + $0x1738] sm:$0xff]
        %v995 = vld [vmem:[%s236 + $0x1740] sm:$0xff]
        %v996 = vld [vmem:[%s236 + $0x1748] sm:$0xff]
        %v997 = vld [vmem:[%s236 + $0x1750] sm:$0xff]
        %v998 = vld [vmem:[%s236 + $0x1758] sm:$0xff]
        %v999 = vld [vmem:[%s236 + $0x1760] sm:$0xff]
        %v1000 = vld [vmem:[%s236 + $0x1768] sm:$0xff]
        %v1001 = vld [vmem:[%s236 + $0x1770] sm:$0xff]
        %v1002 = vld [vmem:[%s236 + $0x1778] sm:$0xff]
        %v1003 = vld [vmem:[%s236 + $0x1780] sm:$0xff]
        %v1004 = vld [vmem:[%s236 + $0x1788] sm:$0xff]
        %v1005 = vld [vmem:[%s236 + $0x1790] sm:$0xff]
        %v1006 = vld [vmem:[%s236 + $0x1798] sm:$0xff]
        %v1007 = vld [vmem:[%s236 + $0x17a0] sm:$0xff]
        %v1008 = vld [vmem:[%s236 + $0x17a8] sm:$0xff]
        %v1009 = vld [vmem:[%s236 + $0x17b0] sm:$0xff]
        %v1010 = vld [vmem:[%s236 + $0x17b8] sm:$0xff]
        %v1011 = vld [vmem:[%s236 + $0x17c0] sm:$0xff]
        %v1012 = vld [vmem:[%s236 + $0x17c8] sm:$0xff]
        %v1013 = vld [vmem:[%s236 + $0x17d0] sm:$0xff]
        %v1014 = vld [vmem:[%s236 + $0x17d8] sm:$0xff]
        %v1015 = vld [vmem:[%s236 + $0x17e0] sm:$0xff]
        %v1016 = vld [vmem:[%s236 + $0x17e8] sm:$0xff]
        %v1017 = vld [vmem:[%s236 + $0x17f0] sm:$0xff]
        %v1018 = vld [vmem:[%s236 + $0x17f8] sm:$0xff]
        %v1019 = vld [vmem:[%s236 + $0x1800] sm:$0xff]
        %v1020 = vld [vmem:[%s236 + $0x1808] sm:$0xff]
        %v1021 = vld [vmem:[%s236 + $0x1810] sm:$0xff]
        %v1022 = vld [vmem:[%s236 + $0x1818] sm:$0xff]
        %v1023 = vld [vmem:[%s236 + $0x1820] sm:$0xff]
        %v1024 = vld [vmem:[%s236 + $0x1828] sm:$0xff]
        %v1025 = vld [vmem:[%s236 + $0x1830] sm:$0xff]
        %v1026 = vld [vmem:[%s236 + $0x1838] sm:$0xff]
        %v1027 = vld [vmem:[%s236 + $0x1840] sm:$0xff]
        %v1028 = vld [vmem:[%s236 + $0x1848] sm:$0xff]
        %v1029 = vld [vmem:[%s236 + $0x1850] sm:$0xff]
        %v1030 = vld [vmem:[%s236 + $0x1858] sm:$0xff]
        %v1031 = vld [vmem:[%s236 + $0x1860] sm:$0xff]
        %v1032 = vld [vmem:[%s236 + $0x1868] sm:$0xff]
        %v1033 = vld [vmem:[%s236 + $0x1870] sm:$0xff]
        %v1034 = vld [vmem:[%s236 + $0x1878] sm:$0xff]
        %v1035 = vld [vmem:[%s236 + $0x1880] sm:$0xff]
        %v1036 = vld [vmem:[%s236 + $0x1888] sm:$0xff]
        %v1037 = vld [vmem:[%s236 + $0x1890] sm:$0xff]
        %v1038 = vld [vmem:[%s236 + $0x1898] sm:$0xff]
        %v1039 = vld [vmem:[%s236 + $0x18a0] sm:$0xff]
        %v1040 = vld [vmem:[%s236 + $0x18a8] sm:$0xff]
        %v1041 = vld [vmem:[%s236 + $0x18b0] sm:$0xff]
        %v1042 = vld [vmem:[%s236 + $0x18b8] sm:$0xff]
        %v1043 = vld [vmem:[%s236 + $0x18c0] sm:$0xff]
        %v1044 = vld [vmem:[%s236 + $0x18c8] sm:$0xff]
        %v1045 = vld [vmem:[%s236 + $0x18d0] sm:$0xff]
        %v1046 = vld [vmem:[%s236 + $0x18d8] sm:$0xff]
        %v1047 = vld [vmem:[%s236 + $0x18e0] sm:$0xff]
        %v1048 = vld [vmem:[%s236 + $0x18e8] sm:$0xff]
        %v1049 = vld [vmem:[%s236 + $0x18f0] sm:$0xff]
        %v1050 = vld [vmem:[%s236 + $0x18f8] sm:$0xff]
        %v1051 = vld [vmem:[%s236 + $0x1900] sm:$0xff]
        %v1052 = vld [vmem:[%s236 + $0x1908] sm:$0xff]
        %v1053 = vld [vmem:[%s236 + $0x1910] sm:$0xff]
        %v1054 = vld [vmem:[%s236 + $0x1918] sm:$0xff]
        %v1055 = vld [vmem:[%s236 + $0x1920] sm:$0xff]
        %v1056 = vld [vmem:[%s236 + $0x1928] sm:$0xff]
        %v1057 = vld [vmem:[%s236 + $0x1930] sm:$0xff]
        %v1058 = vld [vmem:[%s236 + $0x1938] sm:$0xff]
        %v1059 = vld [vmem:[%s236 + $0x1940] sm:$0xff]
        %v1060 = vld [vmem:[%s236 + $0x1948] sm:$0xff]
        %v1061 = vld [vmem:[%s236 + $0x1950] sm:$0xff]
        %v1062 = vld [vmem:[%s236 + $0x1958] sm:$0xff]
        %v1063 = vld [vmem:[%s236 + $0x1960] sm:$0xff]
        %v1064 = vld [vmem:[%s236 + $0x1968] sm:$0xff]
        %v1065 = vld [vmem:[%s236 + $0x1970] sm:$0xff]
        %v1066 = vld [vmem:[%s236 + $0x1978] sm:$0xff]
        %v1067 = vld [vmem:[%s236 + $0x1980] sm:$0xff]
        %v1068 = vld [vmem:[%s236 + $0x1988] sm:$0xff]
        %v1069 = vld [vmem:[%s236 + $0x1990] sm:$0xff]
        %v1070 = vld [vmem:[%s236 + $0x1998] sm:$0xff]
        %v1071 = vld [vmem:[%s236 + $0x19a0] sm:$0xff]
        %v1072 = vld [vmem:[%s236 + $0x19a8] sm:$0xff]
        %v1073 = vld [vmem:[%s236 + $0x19b0] sm:$0xff]
        %v1074 = vld [vmem:[%s236 + $0x19b8] sm:$0xff]
        %v1075 = vld [vmem:[%s236 + $0x19c0] sm:$0xff]
        %v1076 = vld [vmem:[%s236 + $0x19c8] sm:$0xff]
        %v1077 = vld [vmem:[%s236 + $0x19d0] sm:$0xff]
        %v1078 = vld [vmem:[%s236 + $0x19d8] sm:$0xff]
        %v1079 = vld [vmem:[%s236 + $0x19e0] sm:$0xff]
        %v1080 = vld [vmem:[%s236 + $0x19e8] sm:$0xff]
        %v1081 = vld [vmem:[%s236 + $0x19f0] sm:$0xff]
        %v1082 = vld [vmem:[%s236 + $0x19f8] sm:$0xff]
        %v1083 = vld [vmem:[%s236 + $0x1a00] sm:$0xff]
        %v1084 = vld [vmem:[%s236 + $0x1a08] sm:$0xff]
        %v1085 = vld [vmem:[%s236 + $0x1a10] sm:$0xff]
        %v1086 = vld [vmem:[%s236 + $0x1a18] sm:$0xff]
        %v1087 = vld [vmem:[%s236 + $0x1a20] sm:$0xff]
        %v1088 = vld [vmem:[%s236 + $0x1a28] sm:$0xff]
        %v1089 = vld [vmem:[%s236 + $0x1a30] sm:$0xff]
        %v1090 = vld [vmem:[%s236 + $0x1a38] sm:$0xff]
        %v1091 = vld [vmem:[%s236 + $0x1a40] sm:$0xff]
        %v1092 = vld [vmem:[%s236 + $0x1a48] sm:$0xff]
        %v1093 = vld [vmem:[%s236 + $0x1a50] sm:$0xff]
        %v1094 = vld [vmem:[%s236 + $0x1a58] sm:$0xff]
        %v1095 = vld [vmem:[%s236 + $0x1a60] sm:$0xff]
        %v1096 = vld [vmem:[%s236 + $0x1a68] sm:$0xff]
        %v1097 = vld [vmem:[%s236 + $0x1a70] sm:$0xff]
        %v1098 = vld [vmem:[%s236 + $0x1a78] sm:$0xff]
        %v1099 = vld [vmem:[%s236 + $0x1a80] sm:$0xff]
        %v1100 = vld [vmem:[%s236 + $0x1a88] sm:$0xff]
        %v1101 = vld [vmem:[%s236 + $0x1a90] sm:$0xff]
        %v1102 = vld [vmem:[%s236 + $0x1a98] sm:$0xff]
        %v1103 = vld [vmem:[%s236 + $0x1aa0] sm:$0xff]
        %v1104 = vld [vmem:[%s236 + $0x1aa8] sm:$0xff]
        %v1105 = vld [vmem:[%s236 + $0x1ab0] sm:$0xff]
        %v1106 = vld [vmem:[%s236 + $0x1ab8] sm:$0xff]
        %v1107 = vld [vmem:[%s236 + $0x1ac0] sm:$0xff]
        %v1108 = vld [vmem:[%s236 + $0x1ac8] sm:$0xff]
        %v1109 = vld [vmem:[%s236 + $0x1ad0] sm:$0xff]
        %v1110 = vld [vmem:[%s236 + $0x1ad8] sm:$0xff]
        %v1111 = vld [vmem:[%s236 + $0x1ae0] sm:$0xff]
        %v1112 = vld [vmem:[%s236 + $0x1ae8] sm:$0xff]
        %v1113 = vld [vmem:[%s236 + $0x1af0] sm:$0xff]
        %v1114 = vld [vmem:[%s236 + $0x1af8] sm:$0xff]
        %v1115 = vld [vmem:[%s236 + $0x1b00] sm:$0xff]
        %v1116 = vld [vmem:[%s236 + $0x1b08] sm:$0xff]
        %v1117 = vld [vmem:[%s236 + $0x1b10] sm:$0xff]
        %v1118 = vld [vmem:[%s236 + $0x1b18] sm:$0xff]
        %v1119 = vld [vmem:[%s236 + $0x1b20] sm:$0xff]
        %v1120 = vld [vmem:[%s236 + $0x1b28] sm:$0xff]
        %v1121 = vld [vmem:[%s236 + $0x1b30] sm:$0xff]
        %v1122 = vld [vmem:[%s236 + $0x1b38] sm:$0xff]
        %v1123 = vld [vmem:[%s236 + $0x1b40] sm:$0xff]
        %v1124 = vld [vmem:[%s236 + $0x1b48] sm:$0xff]
        %v1125 = vld [vmem:[%s236 + $0x1b50] sm:$0xff]
        %v1126 = vld [vmem:[%s236 + $0x1b58] sm:$0xff]
        %v1127 = vld [vmem:[%s236 + $0x1b60] sm:$0xff]
        %v1128 = vld [vmem:[%s236 + $0x1b68] sm:$0xff]
        %v1129 = vld [vmem:[%s236 + $0x1b70] sm:$0xff]
        %v1130 = vld [vmem:[%s236 + $0x1b78] sm:$0xff]
        %v1131 = vld [vmem:[%s236 + $0x1b80] sm:$0xff]
        %v1132 = vld [vmem:[%s236 + $0x1b88] sm:$0xff]
        %v1133 = vld [vmem:[%s236 + $0x1b90] sm:$0xff]
        %v1134 = vld [vmem:[%s236 + $0x1b98] sm:$0xff]
        %v1135 = vld [vmem:[%s236 + $0x1ba0] sm:$0xff]
        %v1136 = vld [vmem:[%s236 + $0x1ba8] sm:$0xff]
        %v1137 = vld [vmem:[%s236 + $0x1bb0] sm:$0xff]
        %v1138 = vld [vmem:[%s236 + $0x1bb8] sm:$0xff]
        %v1139 = vld [vmem:[%s236 + $0x1bc0] sm:$0xff]
        %v1140 = vld [vmem:[%s236 + $0x1bc8] sm:$0xff]
        %v1141 = vld [vmem:[%s236 + $0x1bd0] sm:$0xff]
        %v1142 = vld [vmem:[%s236 + $0x1bd8] sm:$0xff]
        %v1143 = vld [vmem:[%s236 + $0x1be0] sm:$0xff]
        %v1144 = vld [vmem:[%s236 + $0x1be8] sm:$0xff]
        %v1145 = vld [vmem:[%s236 + $0x1bf0] sm:$0xff]
        %v1146 = vld [vmem:[%s236 + $0x1bf8] sm:$0xff]
        %v1147 = vld [vmem:[%s236 + $0x1c00] sm:$0xff]
        %v1148 = vld [vmem:[%s236 + $0x1c08] sm:$0xff]
        %v1149 = vld [vmem:[%s236 + $0x1c10] sm:$0xff]
        %v1150 = vld [vmem:[%s236 + $0x1c18] sm:$0xff]
        %v1151 = vld [vmem:[%s236 + $0x1c20] sm:$0xff]
        %v1152 = vld [vmem:[%s236 + $0x1c28] sm:$0xff]
        %v1153 = vld [vmem:[%s236 + $0x1c30] sm:$0xff]
        %v1154 = vld [vmem:[%s236 + $0x1c38] sm:$0xff]
        %v1155 = vld [vmem:[%s236 + $0x1c40] sm:$0xff]
        %v1156 = vld [vmem:[%s236 + $0x1c48] sm:$0xff]
        %v1157 = vld [vmem:[%s236 + $0x1c50] sm:$0xff]
        %v1158 = vld [vmem:[%s236 + $0x1c58] sm:$0xff]
        %v1159 = vld [vmem:[%s236 + $0x1c60] sm:$0xff]
        %v1160 = vld [vmem:[%s236 + $0x1c68] sm:$0xff]
        %v1161 = vld [vmem:[%s236 + $0x1c70] sm:$0xff]
        %v1162 = vld [vmem:[%s236 + $0x1c78] sm:$0xff]
        %v1163 = vld [vmem:[%s236 + $0x1c80] sm:$0xff]
        %v1164 = vld [vmem:[%s236 + $0x1c88] sm:$0xff]
        %v1165 = vld [vmem:[%s236 + $0x1c90] sm:$0xff]
        %v1166 = vld [vmem:[%s236 + $0x1c98] sm:$0xff]
        %v1167 = vld [vmem:[%s236 + $0x1ca0] sm:$0xff]
        %v1168 = vld [vmem:[%s236 + $0x1ca8] sm:$0xff]
        %v1169 = vld [vmem:[%s236 + $0x1cb0] sm:$0xff]
        %v1170 = vld [vmem:[%s236 + $0x1cb8] sm:$0xff]
        %v1171 = vld [vmem:[%s236 + $0x1cc0] sm:$0xff]
        %v1172 = vld [vmem:[%s236 + $0x1cc8] sm:$0xff]
        %v1173 = vld [vmem:[%s236 + $0x1cd0] sm:$0xff]
        %v1174 = vld [vmem:[%s236 + $0x1cd8] sm:$0xff]
        %v1175 = vld [vmem:[%s236 + $0x1ce0] sm:$0xff]
        %v1176 = vld [vmem:[%s236 + $0x1ce8] sm:$0xff]
        %v1177 = vld [vmem:[%s236 + $0x1cf0] sm:$0xff]
        %v1178 = vld [vmem:[%s236 + $0x1cf8] sm:$0xff]
        %v1179 = vld [vmem:[%s236 + $0x1d00] sm:$0xff]
        %v1180 = vld [vmem:[%s236 + $0x1d08] sm:$0xff]
        %v1181 = vld [vmem:[%s236 + $0x1d10] sm:$0xff]
        %v1182 = vld [vmem:[%s236 + $0x1d18] sm:$0xff]
        %v1183 = vld [vmem:[%s236 + $0x1d20] sm:$0xff]
        %v1184 = vld [vmem:[%s236 + $0x1d28] sm:$0xff]
        %v1185 = vld [vmem:[%s236 + $0x1d30] sm:$0xff]
        %v1186 = vld [vmem:[%s236 + $0x1d38] sm:$0xff]
        %v1187 = vld [vmem:[%s236 + $0x1d40] sm:$0xff]
        %v1188 = vld [vmem:[%s236 + $0x1d48] sm:$0xff]
        %v1189 = vld [vmem:[%s236 + $0x1d50] sm:$0xff]
        %v1190 = vld [vmem:[%s236 + $0x1d58] sm:$0xff]
        %v1191 = vld [vmem:[%s236 + $0x1d60] sm:$0xff]
        %v1192 = vld [vmem:[%s236 + $0x1d68] sm:$0xff]
        %v1193 = vld [vmem:[%s236 + $0x1d70] sm:$0xff]
        %v1194 = vld [vmem:[%s236 + $0x1d78] sm:$0xff]
        %v1195 = vld [vmem:[%s236 + $0x1d80] sm:$0xff]
        %v1196 = vld [vmem:[%s236 + $0x1d88] sm:$0xff]
        %v1197 = vld [vmem:[%s236 + $0x1d90] sm:$0xff]
        %v1198 = vld [vmem:[%s236 + $0x1d98] sm:$0xff]
        %v1199 = vld [vmem:[%s236 + $0x1da0] sm:$0xff]
        %v1200 = vld [vmem:[%s236 + $0x1da8] sm:$0xff]
        %v1201 = vld [vmem:[%s236 + $0x1db0] sm:$0xff]
        %v1202 = vld [vmem:[%s236 + $0x1db8] sm:$0xff]
        %v1203 = vld [vmem:[%s236 + $0x1dc0] sm:$0xff]
        %v1204 = vld [vmem:[%s236 + $0x1dc8] sm:$0xff]
        %v1205 = vld [vmem:[%s236 + $0x1dd0] sm:$0xff]
        %v1206 = vld [vmem:[%s236 + $0x1dd8] sm:$0xff]
        %v1207 = vld [vmem:[%s236 + $0x1de0] sm:$0xff]
        %v1208 = vld [vmem:[%s236 + $0x1de8] sm:$0xff]
        %v1209 = vld [vmem:[%s236 + $0x1df0] sm:$0xff]
        %v1210 = vld [vmem:[%s236 + $0x1df8] sm:$0xff]
        %v1211 = vld [vmem:[%s236 + $0x1e00] sm:$0xff]
        %v1212 = vld [vmem:[%s236 + $0x1e08] sm:$0xff]
        %v1213 = vld [vmem:[%s236 + $0x1e10] sm:$0xff]
        %v1214 = vld [vmem:[%s236 + $0x1e18] sm:$0xff]
        %v1215 = vld [vmem:[%s236 + $0x1e20] sm:$0xff]
        %v1216 = vld [vmem:[%s236 + $0x1e28] sm:$0xff]
        %v1217 = vld [vmem:[%s236 + $0x1e30] sm:$0xff]
        %v1218 = vld [vmem:[%s236 + $0x1e38] sm:$0xff]
        %v1219 = vld [vmem:[%s236 + $0x1e40] sm:$0xff]
        %v1220 = vld [vmem:[%s236 + $0x1e48] sm:$0xff]
        %v1221 = vld [vmem:[%s236 + $0x1e50] sm:$0xff]
        %v1222 = vld [vmem:[%s236 + $0x1e58] sm:$0xff]
        %v1223 = vld [vmem:[%s236 + $0x1e60] sm:$0xff]
        %v1224 = vld [vmem:[%s236 + $0x1e68] sm:$0xff]
        %v1225 = vld [vmem:[%s236 + $0x1e70] sm:$0xff]
        %v1226 = vld [vmem:[%s236 + $0x1e78] sm:$0xff]
        %v1227 = vld [vmem:[%s236 + $0x1e80] sm:$0xff]
        %v1228 = vld [vmem:[%s236 + $0x1e88] sm:$0xff]
        %v1229 = vld [vmem:[%s236 + $0x1e90] sm:$0xff]
        %v1230 = vld [vmem:[%s236 + $0x1e98] sm:$0xff]
        %v1231 = vld [vmem:[%s236 + $0x1ea0] sm:$0xff]
        %v1232 = vld [vmem:[%s236 + $0x1ea8] sm:$0xff]
        %v1233 = vld [vmem:[%s236 + $0x1eb0] sm:$0xff]
        %v1234 = vld [vmem:[%s236 + $0x1eb8] sm:$0xff]
        %v1235 = vld [vmem:[%s236 + $0x1ec0] sm:$0xff]
        %v1236 = vld [vmem:[%s236 + $0x1ec8] sm:$0xff]
        %v1237 = vld [vmem:[%s236 + $0x1ed0] sm:$0xff]
        %v1238 = vld [vmem:[%s236 + $0x1ed8] sm:$0xff]
        %v1239 = vld [vmem:[%s236 + $0x1ee0] sm:$0xff]
        %v1240 = vld [vmem:[%s236 + $0x1ee8] sm:$0xff]
        %v1241 = vld [vmem:[%s236 + $0x1ef0] sm:$0xff]
        %v1242 = vld [vmem:[%s236 + $0x1ef8] sm:$0xff]
        %v1243 = vld [vmem:[%s236 + $0x1f00] sm:$0xff]
        %v1244 = vld [vmem:[%s236 + $0x1f08] sm:$0xff]
        %v1245 = vld [vmem:[%s236 + $0x1f10] sm:$0xff]
        %v1246 = vld [vmem:[%s236 + $0x1f18] sm:$0xff]
        %v1247 = vld [vmem:[%s236 + $0x1f20] sm:$0xff]
        %v1248 = vld [vmem:[%s236 + $0x1f28] sm:$0xff]
        %v1249 = vld [vmem:[%s236 + $0x1f30] sm:$0xff]
        %v1250 = vld [vmem:[%s236 + $0x1f38] sm:$0xff]
        %v1251 = vld [vmem:[%s236 + $0x1f40] sm:$0xff]
        %v1252 = vld [vmem:[%s236 + $0x1f48] sm:$0xff]
        %v1253 = vld [vmem:[%s236 + $0x1f50] sm:$0xff]
        %v1254 = vld [vmem:[%s236 + $0x1f58] sm:$0xff]
        %v1255 = vld [vmem:[%s236 + $0x1f60] sm:$0xff]
        %v1256 = vld [vmem:[%s236 + $0x1f68] sm:$0xff]
        %v1257 = vld [vmem:[%s236 + $0x1f70] sm:$0xff]
        %v1258 = vld [vmem:[%s236 + $0x1f78] sm:$0xff]
        %v1259 = vld [vmem:[%s236 + $0x1f80] sm:$0xff]
        %v1260 = vld [vmem:[%s236 + $0x1f88] sm:$0xff]
        %v1261 = vld [vmem:[%s236 + $0x1f90] sm:$0xff]
        %v1262 = vld [vmem:[%s236 + $0x1f98] sm:$0xff]
        %v1263 = vld [vmem:[%s236 + $0x1fa0] sm:$0xff]
        %v1264 = vld [vmem:[%s236 + $0x1fa8] sm:$0xff]
        %v1265 = vld [vmem:[%s236 + $0x1fb0] sm:$0xff]
        %v1266 = vld [vmem:[%s236 + $0x1fb8] sm:$0xff]
        %v1267 = vld [vmem:[%s236 + $0x1fc0] sm:$0xff]
        %v1268 = vld [vmem:[%s236 + $0x1fc8] sm:$0xff]
        %v1269 = vld [vmem:[%s236 + $0x1fd0] sm:$0xff]
        %v1270 = vld [vmem:[%s236 + $0x1fd8] sm:$0xff]
        %v1271 = vld [vmem:[%s236 + $0x1fe0] sm:$0xff]
        %v1272 = vld [vmem:[%s236 + $0x1fe8] sm:$0xff]
        %v1273 = vld [vmem:[%s236 + $0x1ff0] sm:$0xff]
        %v1274 = vld [vmem:[%s236 + $0x1ff8] sm:$0xff]
        %v1275 = vld [vmem:[%s236 + $0x2000] sm:$0xff]
        %v1276 = vld [vmem:[%s236 + $0x2008] sm:$0xff]
        %v1277 = vld [vmem:[%s236 + $0x2010] sm:$0xff]
        %v1278 = vld [vmem:[%s236 + $0x2018] sm:$0xff]
        %v1279 = vld [vmem:[%s236 + $0x2020] sm:$0xff]
        %v1280 = vld [vmem:[%s236 + $0x2028] sm:$0xff]
        %v1281 = vld [vmem:[%s236 + $0x2030] sm:$0xff]
        %v1282 = vld [vmem:[%s236 + $0x2038] sm:$0xff]
        %v1283 = vld [vmem:[%s236 + $0x2040] sm:$0xff]
        %v1284 = vld [vmem:[%s236 + $0x2048] sm:$0xff]
        %v1285 = vld [vmem:[%s236 + $0x2050] sm:$0xff]
        %v1286 = vld [vmem:[%s236 + $0x2058] sm:$0xff]
        %v1287 = vld [vmem:[%s236 + $0x2060] sm:$0xff]
        %v1288 = vld [vmem:[%s236 + $0x2068] sm:$0xff]
        %v1289 = vld [vmem:[%s236 + $0x2070] sm:$0xff]
        %v1290 = vld [vmem:[%s236 + $0x2078] sm:$0xff]
        %v1291 = vld [vmem:[%s236 + $0x2080] sm:$0xff]
        %v1292 = vld [vmem:[%s236 + $0x2088] sm:$0xff]
        %v1293 = vld [vmem:[%s236 + $0x2090] sm:$0xff]
        %v1294 = vld [vmem:[%s236 + $0x2098] sm:$0xff]
        %v1295 = vld [vmem:[%s236 + $0x20a0] sm:$0xff]
        %v1296 = vld [vmem:[%s236 + $0x20a8] sm:$0xff]
        %v1297 = vld [vmem:[%s236 + $0x20b0] sm:$0xff]
        %v1298 = vld [vmem:[%s236 + $0x20b8] sm:$0xff]
        %v1299 = vld [vmem:[%s236 + $0x20c0] sm:$0xff]
        %v1300 = vld [vmem:[%s236 + $0x20c8] sm:$0xff]
        %v1301 = vld [vmem:[%s236 + $0x20d0] sm:$0xff]
        %v1302 = vld [vmem:[%s236 + $0x20d8] sm:$0xff]
        %v1303 = vld [vmem:[%s236 + $0x20e0] sm:$0xff]
        %v1304 = vld [vmem:[%s236 + $0x20e8] sm:$0xff]
        %v1305 = vld [vmem:[%s236 + $0x20f0] sm:$0xff]
        %v1306 = vld [vmem:[%s236 + $0x20f8] sm:$0xff]
        %v1307 = vld [vmem:[%s236 + $0x2100] sm:$0xff]
        %v1308 = vld [vmem:[%s236 + $0x2108] sm:$0xff]
        %v1309 = vld [vmem:[%s236 + $0x2110] sm:$0xff]
        %v1310 = vld [vmem:[%s236 + $0x2118] sm:$0xff]
        %v1311 = vld [vmem:[%s236 + $0x2120] sm:$0xff]
        %v1312 = vld [vmem:[%s236 + $0x2128] sm:$0xff]
        %v1313 = vld [vmem:[%s236 + $0x2130] sm:$0xff]
        %v1314 = vld [vmem:[%s236 + $0x2138] sm:$0xff]
        %v1315 = vld [vmem:[%s236 + $0x2140] sm:$0xff]
        %v1316 = vld [vmem:[%s236 + $0x2148] sm:$0xff]
        %v1317 = vld [vmem:[%s236 + $0x2150] sm:$0xff]
        %v1318 = vld [vmem:[%s236 + $0x2158] sm:$0xff]
        %v1319 = vld [vmem:[%s236 + $0x2160] sm:$0xff]
        %v1320 = vld [vmem:[%s236 + $0x2168] sm:$0xff]
        %v1321 = vld [vmem:[%s236 + $0x2170] sm:$0xff]
        %v1322 = vld [vmem:[%s236 + $0x2178] sm:$0xff]
        %v1323 = vld [vmem:[%s236 + $0x2180] sm:$0xff]
        %v1324 = vld [vmem:[%s236 + $0x2188] sm:$0xff]
        %v1325 = vld [vmem:[%s236 + $0x2190] sm:$0xff]
        %v1326 = vld [vmem:[%s236 + $0x2198] sm:$0xff]
        %v1327 = vld [vmem:[%s236 + $0x21a0] sm:$0xff]
        %v1328 = vld [vmem:[%s236 + $0x21a8] sm:$0xff]
        %v1329 = vld [vmem:[%s236 + $0x21b0] sm:$0xff]
        %v1330 = vld [vmem:[%s236 + $0x21b8] sm:$0xff]
        %v1331 = vld [vmem:[%s236 + $0x21c0] sm:$0xff]
        %v1332 = vld [vmem:[%s236 + $0x21c8] sm:$0xff]
        %v1333 = vld [vmem:[%s236 + $0x21d0] sm:$0xff]
        %v1334 = vld [vmem:[%s236 + $0x21d8] sm:$0xff]
        %v1335 = vld [vmem:[%s236 + $0x21e0] sm:$0xff]
        %v1336 = vld [vmem:[%s236 + $0x21e8] sm:$0xff]
        %v1337 = vld [vmem:[%s236 + $0x21f0] sm:$0xff]
        %v1338 = vld [vmem:[%s236 + $0x21f8] sm:$0xff]
        %v1339 = vld [vmem:[%s236 + $0x2200] sm:$0xff]
        %v1340 = vld [vmem:[%s236 + $0x2208] sm:$0xff]
        %v1341 = vld [vmem:[%s236 + $0x2210] sm:$0xff]
        %v1342 = vld [vmem:[%s236 + $0x2218] sm:$0xff]
        %v1343 = vld [vmem:[%s236 + $0x2220] sm:$0xff]
        %v1344 = vld [vmem:[%s236 + $0x2228] sm:$0xff]
        %v1345 = vld [vmem:[%s236 + $0x2230] sm:$0xff]
        %v1346 = vld [vmem:[%s236 + $0x2238] sm:$0xff]
        %v1347 = vld [vmem:[%s236 + $0x2240] sm:$0xff]
        %v1348 = vld [vmem:[%s236 + $0x2248] sm:$0xff]
        %v1349 = vld [vmem:[%s236 + $0x2250] sm:$0xff]
        %v1350 = vld [vmem:[%s236 + $0x2258] sm:$0xff]
        %v1351 = vld [vmem:[%s236 + $0x2260] sm:$0xff]
        %v1352 = vld [vmem:[%s236 + $0x2268] sm:$0xff]
        %v1353 = vld [vmem:[%s236 + $0x2270] sm:$0xff]
        %v1354 = vld [vmem:[%s236 + $0x2278] sm:$0xff]
        %v1355 = vld [vmem:[%s236 + $0x2280] sm:$0xff]
        %v1356 = vld [vmem:[%s236 + $0x2288] sm:$0xff]
        %v1357 = vld [vmem:[%s236 + $0x2290] sm:$0xff]
        %v1358 = vld [vmem:[%s236 + $0x2298] sm:$0xff]
        %v1359 = vld [vmem:[%s236 + $0x22a0] sm:$0xff]
        %v1360 = vld [vmem:[%s236 + $0x22a8] sm:$0xff]
        %v1361 = vld [vmem:[%s236 + $0x22b0] sm:$0xff]
        %v1362 = vld [vmem:[%s236 + $0x22b8] sm:$0xff]
        %v1363 = vld [vmem:[%s236 + $0x22c0] sm:$0xff]
        %v1364 = vld [vmem:[%s236 + $0x22c8] sm:$0xff]
        %v1365 = vld [vmem:[%s236 + $0x22d0] sm:$0xff]
        %v1366 = vld [vmem:[%s236 + $0x22d8] sm:$0xff]
        %v1367 = vld [vmem:[%s236 + $0x22e0] sm:$0xff]
        %v1368 = vld [vmem:[%s236 + $0x22e8] sm:$0xff]
        %v1369 = vld [vmem:[%s236 + $0x22f0] sm:$0xff]
        %v1370 = vld [vmem:[%s236 + $0x22f8] sm:$0xff]
        %v1371 = vld [vmem:[%s236 + $0x2300] sm:$0xff]
        %v1372 = vld [vmem:[%s236 + $0x2308] sm:$0xff]
        %v1373 = vld [vmem:[%s236 + $0x2310] sm:$0xff]
        %v1374 = vld [vmem:[%s236 + $0x2318] sm:$0xff]
        %v1375 = vld [vmem:[%s236 + $0x2320] sm:$0xff]
        %v1376 = vld [vmem:[%s236 + $0x2328] sm:$0xff]
        %v1377 = vld [vmem:[%s236 + $0x2330] sm:$0xff]
        %v1378 = vld [vmem:[%s236 + $0x2338] sm:$0xff]
        %v1379 = vld [vmem:[%s236 + $0x2340] sm:$0xff]
        %v1380 = vld [vmem:[%s236 + $0x2348] sm:$0xff]
        %v1381 = vld [vmem:[%s236 + $0x2350] sm:$0xff]
        %v1382 = vld [vmem:[%s236 + $0x2358] sm:$0xff]
        %v1383 = vld [vmem:[%s236 + $0x2360] sm:$0xff]
        %v1384 = vld [vmem:[%s236 + $0x2368] sm:$0xff]
        %v1385 = vld [vmem:[%s236 + $0x2370] sm:$0xff]
        %v1386 = vld [vmem:[%s236 + $0x2378] sm:$0xff]
        %v1387 = vld [vmem:[%s236 + $0x2380] sm:$0xff]
        %v1388 = vld [vmem:[%s236 + $0x2388] sm:$0xff]
        %v1389 = vld [vmem:[%s236 + $0x2390] sm:$0xff]
        %v1390 = vld [vmem:[%s236 + $0x2398] sm:$0xff]
        %v1391 = vld [vmem:[%s236 + $0x23a0] sm:$0xff]
        %v1392 = vld [vmem:[%s236 + $0x23a8] sm:$0xff]
        %v1393 = vld [vmem:[%s236 + $0x23b0] sm:$0xff]
        %v1394 = vld [vmem:[%s236 + $0x23b8] sm:$0xff]
        %v1395 = vld [vmem:[%s236 + $0x23c0] sm:$0xff]
        %v1396 = vld [vmem:[%s236 + $0x23c8] sm:$0xff]
        %v1397 = vld [vmem:[%s236 + $0x23d0] sm:$0xff]
        %v1398 = vld [vmem:[%s236 + $0x23d8] sm:$0xff]
        %v1399 = vld [vmem:[%s236 + $0x23e0] sm:$0xff]
        %v1400 = vld [vmem:[%s236 + $0x23e8] sm:$0xff]
        %v1401 = vld [vmem:[%s236 + $0x23f0] sm:$0xff]
        %v1402 = vld [vmem:[%s236 + $0x23f8] sm:$0xff]
        %v1403 = vld [vmem:[%s236 + $0x2400] sm:$0xff]
        %v1404 = vld [vmem:[%s236 + $0x2408] sm:$0xff]
        %v1405 = vld [vmem:[%s236 + $0x2410] sm:$0xff]
        %v1406 = vld [vmem:[%s236 + $0x2418] sm:$0xff]
        %v1407 = vld [vmem:[%s236 + $0x2420] sm:$0xff]
        %v1408 = vld [vmem:[%s236 + $0x2428] sm:$0xff]
        %v1409 = vld [vmem:[%s236 + $0x2430] sm:$0xff]
        %v1410 = vld [vmem:[%s236 + $0x2438] sm:$0xff]
        %v1411 = vld [vmem:[%s236 + $0x2440] sm:$0xff]
        %v1412 = vld [vmem:[%s236 + $0x2448] sm:$0xff]
        %v1413 = vld [vmem:[%s236 + $0x2450] sm:$0xff]
        %v1414 = vld [vmem:[%s236 + $0x2458] sm:$0xff]
        %v1415 = vld [vmem:[%s236 + $0x2460] sm:$0xff]
        %v1416 = vld [vmem:[%s236 + $0x2468] sm:$0xff]
        %v1417 = vld [vmem:[%s236 + $0x2470] sm:$0xff]
        %v1418 = vld [vmem:[%s236 + $0x2478] sm:$0xff]
        %v1419 = vld [vmem:[%s236 + $0x2480] sm:$0xff]
        %v1420 = vld [vmem:[%s236 + $0x2488] sm:$0xff]
        %v1421 = vld [vmem:[%s236 + $0x2490] sm:$0xff]
        %v1422 = vld [vmem:[%s236 + $0x2498] sm:$0xff]
        %v1423 = vld [vmem:[%s236 + $0x24a0] sm:$0xff]
        %v1424 = vld [vmem:[%s236 + $0x24a8] sm:$0xff]
        %v1425 = vld [vmem:[%s236 + $0x24b0] sm:$0xff]
        %v1426 = vld [vmem:[%s236 + $0x24b8] sm:$0xff]
        %v1427 = vld [vmem:[%s236 + $0x24c0] sm:$0xff]
        %v1428 = vld [vmem:[%s236 + $0x24c8] sm:$0xff]
        %v1429 = vld [vmem:[%s236 + $0x24d0] sm:$0xff]
        %v1430 = vld [vmem:[%s236 + $0x24d8] sm:$0xff]
        %v1431 = vld [vmem:[%s236 + $0x24e0] sm:$0xff]
        %v1432 = vld [vmem:[%s236 + $0x24e8] sm:$0xff]
        %v1433 = vld [vmem:[%s236 + $0x24f0] sm:$0xff]
        %v1434 = vld [vmem:[%s236 + $0x24f8] sm:$0xff]
        %v1435 = vld [vmem:[%s236 + $0x2500] sm:$0xff]
        %v1436 = vld [vmem:[%s236 + $0x2508] sm:$0xff]
        %v1437 = vld [vmem:[%s236 + $0x2510] sm:$0xff]
        %v1438 = vld [vmem:[%s236 + $0x2518] sm:$0xff]
        %v1439 = vld [vmem:[%s236 + $0x2520] sm:$0xff]
        %v1440 = vld [vmem:[%s236 + $0x2528] sm:$0xff]
        %v1441 = vld [vmem:[%s236 + $0x2530] sm:$0xff]
        %v1442 = vld [vmem:[%s236 + $0x2538] sm:$0xff]
        %v1443 = vld [vmem:[%s236 + $0x2540] sm:$0xff]
        %v1444 = vld [vmem:[%s236 + $0x2548] sm:$0xff]
        %v1445 = vld [vmem:[%s236 + $0x2550] sm:$0xff]
        %v1446 = vld [vmem:[%s236 + $0x2558] sm:$0xff]
        %v1447 = vld [vmem:[%s236 + $0x2560] sm:$0xff]
        %v1448 = vld [vmem:[%s236 + $0x2568] sm:$0xff]
        %v1449 = vld [vmem:[%s236 + $0x2570] sm:$0xff]
        %v1450 = vld [vmem:[%s236 + $0x2578] sm:$0xff]
        %v1451 = vld [vmem:[%s236 + $0x2580] sm:$0xff]
        %v1452 = vld [vmem:[%s236 + $0x2588] sm:$0xff]
        %v1453 = vld [vmem:[%s236 + $0x2590] sm:$0xff]
        %v1454 = vld [vmem:[%s236 + $0x2598] sm:$0xff]
        %v1455 = vld [vmem:[%s236 + $0x25a0] sm:$0xff]
        %v1456 = vld [vmem:[%s236 + $0x25a8] sm:$0xff]
        %v1457 = vld [vmem:[%s236 + $0x25b0] sm:$0xff]
        %v1458 = vld [vmem:[%s236 + $0x25b8] sm:$0xff]
        %v1459 = vld [vmem:[%s236 + $0x25c0] sm:$0xff]
        %v1460 = vld [vmem:[%s236 + $0x25c8] sm:$0xff]
        %v1461 = vld [vmem:[%s236 + $0x25d0] sm:$0xff]
        %v1462 = vld [vmem:[%s236 + $0x25d8] sm:$0xff]
        %v1463 = vld [vmem:[%s236 + $0x25e0] sm:$0xff]
        %v1464 = vld [vmem:[%s236 + $0x25e8] sm:$0xff]
        %v1465 = vld [vmem:[%s236 + $0x25f0] sm:$0xff]
        %v1466 = vld [vmem:[%s236 + $0x25f8] sm:$0xff]
        %v1467 = vld [vmem:[%s236 + $0x2600] sm:$0xff]
        %v1468 = vld [vmem:[%s236 + $0x2608] sm:$0xff]
        %v1469 = vld [vmem:[%s236 + $0x2610] sm:$0xff]
        %v1470 = vld [vmem:[%s236 + $0x2618] sm:$0xff]
        %v1471 = vld [vmem:[%s236 + $0x2620] sm:$0xff]
        %v1472 = vld [vmem:[%s236 + $0x2628] sm:$0xff]
        %v1473 = vld [vmem:[%s236 + $0x2630] sm:$0xff]
        %v1474 = vld [vmem:[%s236 + $0x2638] sm:$0xff]
        %v1475 = vld [vmem:[%s236 + $0x2640] sm:$0xff]
        %v1476 = vld [vmem:[%s236 + $0x2648] sm:$0xff]
        %v1477 = vld [vmem:[%s236 + $0x2650] sm:$0xff]
        %v1478 = vld [vmem:[%s236 + $0x2658] sm:$0xff]
        %v1479 = vld [vmem:[%s236 + $0x2660] sm:$0xff]
        %v1480 = vld [vmem:[%s236 + $0x2668] sm:$0xff]
        %v1481 = vld [vmem:[%s236 + $0x2670] sm:$0xff]
        %v1482 = vld [vmem:[%s236 + $0x2678] sm:$0xff]
        %v1483 = vld [vmem:[%s236 + $0x2680] sm:$0xff]
        %v1484 = vld [vmem:[%s236 + $0x2688] sm:$0xff]
        %v1485 = vld [vmem:[%s236 + $0x2690] sm:$0xff]
        %v1486 = vld [vmem:[%s236 + $0x2698] sm:$0xff]
        %v1487 = vld [vmem:[%s236 + $0x26a0] sm:$0xff]
        %v1488 = vld [vmem:[%s236 + $0x26a8] sm:$0xff]
        %v1489 = vld [vmem:[%s236 + $0x26b0] sm:$0xff]
        %v1490 = vld [vmem:[%s236 + $0x26b8] sm:$0xff]
        %v1491 = vld [vmem:[%s236 + $0x26c0] sm:$0xff]
        %v1492 = vld [vmem:[%s236 + $0x26c8] sm:$0xff]
        %v1493 = vld [vmem:[%s236 + $0x26d0] sm:$0xff]
        %v1494 = vld [vmem:[%s236 + $0x26d8] sm:$0xff]
        %v1495 = vld [vmem:[%s236 + $0x26e0] sm:$0xff]
        %v1496 = vld [vmem:[%s236 + $0x26e8] sm:$0xff]
        %v1497 = vld [vmem:[%s236 + $0x26f0] sm:$0xff]
        %v1498 = vld [vmem:[%s236 + $0x26f8] sm:$0xff]
        %v1499 = vld [vmem:[%s236 + $0x2700] sm:$0xff]
        %v1500 = vld [vmem:[%s236 + $0x2708] sm:$0xff]
        %v1501 = vld [vmem:[%s236 + $0x2710] sm:$0xff]
        %v1502 = vld [vmem:[%s236 + $0x2718] sm:$0xff]
        %v1503 = vld [vmem:[%s236 + $0x2720] sm:$0xff]
        %v1504 = vld [vmem:[%s236 + $0x2728] sm:$0xff]
        %v1505 = vld [vmem:[%s236 + $0x2730] sm:$0xff]
        %v1506 = vld [vmem:[%s236 + $0x2738] sm:$0xff]
        %v1507 = vld [vmem:[%s236 + $0x2740] sm:$0xff]
        %v1508 = vld [vmem:[%s236 + $0x2748] sm:$0xff]
        %v1509 = vld [vmem:[%s236 + $0x2750] sm:$0xff]
        %v1510 = vld [vmem:[%s236 + $0x2758] sm:$0xff]
        %v1511 = vld [vmem:[%s236 + $0x2760] sm:$0xff]
        %v1512 = vld [vmem:[%s236 + $0x2768] sm:$0xff]
        %v1513 = vld [vmem:[%s236 + $0x2770] sm:$0xff]
        %v1514 = vld [vmem:[%s236 + $0x2778] sm:$0xff]
        %v1515 = vld [vmem:[%s236 + $0x2780] sm:$0xff]
        %v1516 = vld [vmem:[%s236 + $0x2788] sm:$0xff]
        %v1517 = vld [vmem:[%s236 + $0x2790] sm:$0xff]
        %v1518 = vld [vmem:[%s236 + $0x2798] sm:$0xff]
        %v1519 = vld [vmem:[%s236 + $0x27a0] sm:$0xff]
        %v1520 = vld [vmem:[%s236 + $0x27a8] sm:$0xff]
        %v1521 = vld [vmem:[%s236 + $0x27b0] sm:$0xff]
        %v1522 = vld [vmem:[%s236 + $0x27b8] sm:$0xff]
        %v1523 = vld [vmem:[%s236 + $0x27c0] sm:$0xff]
        %v1524 = vld [vmem:[%s236 + $0x27c8] sm:$0xff]
        %v1525 = vld [vmem:[%s236 + $0x27d0] sm:$0xff]
        %v1526 = vld [vmem:[%s236 + $0x27d8] sm:$0xff]
        %v1527 = vld [vmem:[%s236 + $0x27e0] sm:$0xff]
        %v1528 = vld [vmem:[%s236 + $0x27e8] sm:$0xff]
        %v1529 = vld [vmem:[%s236 + $0x27f0] sm:$0xff]
        %v1530 = vld [vmem:[%s236 + $0x27f8] sm:$0xff]
        %v1531 = vld [vmem:[%s236 + $0x2800] sm:$0xff]
        %v1532 = vld [vmem:[%s236 + $0x2808] sm:$0xff]
        %v1533 = vld [vmem:[%s236 + $0x2810] sm:$0xff]
        %v1534 = vld [vmem:[%s236 + $0x2818] sm:$0xff]
        %v1535 = vld [vmem:[%s236 + $0x2820] sm:$0xff]
        %v1536 = vld [vmem:[%s236 + $0x2828] sm:$0xff]
        %v1537 = vld [vmem:[%s236 + $0x2830] sm:$0xff]
        %v1538 = vld [vmem:[%s236 + $0x2838] sm:$0xff]
        %v1539 = vld [vmem:[%s236 + $0x2840] sm:$0xff]
        %v1540 = vld [vmem:[%s236 + $0x2848] sm:$0xff]
        %v1541 = vld [vmem:[%s236 + $0x2850] sm:$0xff]
        %v1542 = vld [vmem:[%s236 + $0x2858] sm:$0xff]
        %v1543 = vld [vmem:[%s236 + $0x2860] sm:$0xff]
        %v1544 = vld [vmem:[%s236 + $0x2868] sm:$0xff]
        %v1545 = vld [vmem:[%s236 + $0x2870] sm:$0xff]
        %v1546 = vld [vmem:[%s236 + $0x2878] sm:$0xff]
        %1550 = vst [vmem:[#allocation1] ss:$4 sm:$0xff] %v248
        %s1551 = scalar_lea.vmem [#allocation1], 32
        %1552 = vst [vmem:[%s1551] ss:$4 sm:$0xff] %v249
        %v1553 = vld.sshfl [vmem:[#allocation1] sm:$0xff pattern:$0x73625140]
        %v1554 = vld.sshfl [vmem:[#allocation1 + $0x8] sm:$0xff pattern:$0x73625140]
        %v1555 = vld.sshfl [vmem:[#allocation1 + $0x10] sm:$0xff pattern:$0x73625140]
        %v1556 = vld.sshfl [vmem:[#allocation1 + $0x18] sm:$0xff pattern:$0x73625140]
        %v1557 = vld.sshfl [vmem:[#allocation1 + $0x20] sm:$0xff pattern:$0x73625140]
        %v1558 = vld.sshfl [vmem:[#allocation1 + $0x28] sm:$0xff pattern:$0x73625140]
        %v1559 = vld.sshfl [vmem:[#allocation1 + $0x30] sm:$0xff pattern:$0x73625140]
        %v1560 = vld.sshfl [vmem:[#allocation1 + $0x38] sm:$0xff pattern:$0x73625140]
        %1561 = vst [vmem:[#allocation1] ss:$4 sm:$0xff] %v250
        %v1562 = vld.sshfl [vmem:[#allocation1] sm:$0xff pattern:$0x73625140]
        %1572 = vmatpush.msra.mxu0 %v386
        %1573 = vmatpush.msra.mxu0 %v377
        %1574 = vmatpush.msra.mxu0 %v368
        %1575 = vmatpush.msra.mxu0 %v359
        %1576 = vmatpush.msra.mxu0 %v350
        %1577 = vmatpush.msra.mxu0 %v341
        %1578 = vmatpush.msra.mxu0 %v332
        %1579 = vmatpush.msra.mxu0 %v323
        %1580 = vmatpush.msra.mxu0 %v314
        %1581 = vmatpush.msra.mxu0 %v305
        %1582 = vmatpush.msra.mxu0 %v296
        %1583 = vmatpush.msra.mxu0 %v287
        %1584 = vmatpush.msra.mxu0 %v278
        %1585 = vmatpush.msra.mxu0 %v269
        %1586 = vmatpush.msra.mxu0 %v260
        %1587 = vmatpush.msra.mxu0 %v251
        %1588 = vmatmul.f32.gmra.mxu0 %v1553
        %v1589 = vpop.f32.mrf.mxu0
        %v1590 = vadd.f32 0.0, %v1589
        %1591 = vdwg.mxu0
        %1592 = vmatpush.msra.mxu0 %v530
        %1593 = vmatpush.msra.mxu0 %v521
        %1594 = vmatpush.msra.mxu0 %v512
        %1595 = vmatpush.msra.mxu0 %v503
        %1596 = vmatpush.msra.mxu0 %v494
        %1597 = vmatpush.msra.mxu0 %v485
        %1598 = vmatpush.msra.mxu0 %v476
        %1599 = vmatpush.msra.mxu0 %v467
        %1600 = vmatpush.msra.mxu0 %v458
        %1601 = vmatpush.msra.mxu0 %v449
        %1602 = vmatpush.msra.mxu0 %v440
        %1603 = vmatpush.msra.mxu0 %v431
        %1604 = vmatpush.msra.mxu0 %v422
        %1605 = vmatpush.msra.mxu0 %v413
        %1606 = vmatpush.msra.mxu0 %v404
        %1607 = vmatpush.msra.mxu0 %v395
        %1608 = vmatmul.f32.gmra.mxu0 %v1554
        %v1609 = vpop.f32.mrf.mxu0
        %v1610 = vadd.f32 %v1590, %v1609
        %1611 = vdwg.mxu0
        %1612 = vmatpush.msra.mxu0 %v674
        %1613 = vmatpush.msra.mxu0 %v665
        %1614 = vmatpush.msra.mxu0 %v656
        %1615 = vmatpush.msra.mxu0 %v647
        %1616 = vmatpush.msra.mxu0 %v638
        %1617 = vmatpush.msra.mxu0 %v629
        %1618 = vmatpush.msra.mxu0 %v620
        %1619 = vmatpush.msra.mxu0 %v611
        %1620 = vmatpush.msra.mxu0 %v602
        %1621 = vmatpush.msra.mxu0 %v593
        %1622 = vmatpush.msra.mxu0 %v584
        %1623 = vmatpush.msra.mxu0 %v575
        %1624 = vmatpush.msra.mxu0 %v566
        %1625 = vmatpush.msra.mxu0 %v557
        %1626 = vmatpush.msra.mxu0 %v548
        %1627 = vmatpush.msra.mxu0 %v539
        %1628 = vmatmul.f32.gmra.mxu0 %v1555
        %v1629 = vpop.f32.mrf.mxu0
        %v1630 = vadd.f32 %v1610, %v1629
        %1631 = vdwg.mxu0
        %1632 = vmatpush.msra.mxu0 %v818
        %1633 = vmatpush.msra.mxu0 %v809
        %1634 = vmatpush.msra.mxu0 %v800
        %1635 = vmatpush.msra.mxu0 %v791
        %1636 = vmatpush.msra.mxu0 %v782
        %1637 = vmatpush.msra.mxu0 %v773
        %1638 = vmatpush.msra.mxu0 %v764
        %1639 = vmatpush.msra.mxu0 %v755
        %1640 = vmatpush.msra.mxu0 %v746
        %1641 = vmatpush.msra.mxu0 %v737
        %1642 = vmatpush.msra.mxu0 %v728
        %1643 = vmatpush.msra.mxu0 %v719
        %1644 = vmatpush.msra.mxu0 %v710
        %1645 = vmatpush.msra.mxu0 %v701
        %1646 = vmatpush.msra.mxu0 %v692
        %1647 = vmatpush.msra.mxu0 %v683
        %1648 = vmatmul.f32.gmra.mxu0 %v1556
        %v1649 = vpop.f32.mrf.mxu0
        %v1650 = vadd.f32 %v1630, %v1649
        %1651 = vdwg.mxu0
        %1652 = vmatpush.msra.mxu0 %v962
        %1653 = vmatpush.msra.mxu0 %v953
        %1654 = vmatpush.msra.mxu0 %v944
        %1655 = vmatpush.msra.mxu0 %v935
        %1656 = vmatpush.msra.mxu0 %v926
        %1657 = vmatpush.msra.mxu0 %v917
        %1658 = vmatpush.msra.mxu0 %v908
        %1659 = vmatpush.msra.mxu0 %v899
        %1660 = vmatpush.msra.mxu0 %v890
        %1661 = vmatpush.msra.mxu0 %v881
        %1662 = vmatpush.msra.mxu0 %v872
        %1663 = vmatpush.msra.mxu0 %v863
        %1664 = vmatpush.msra.mxu0 %v854
        %1665 = vmatpush.msra.mxu0 %v845
        %1666 = vmatpush.msra.mxu0 %v836
        %1667 = vmatpush.msra.mxu0 %v827
        %1668 = vmatmul.f32.gmra.mxu0 %v1557
        %v1669 = vpop.f32.mrf.mxu0
        %v1670 = vadd.f32 %v1650, %v1669
        %1671 = vdwg.mxu0
        %1672 = vmatpush.msra.mxu0 %v1106
        %1673 = vmatpush.msra.mxu0 %v1097
        %1674 = vmatpush.msra.mxu0 %v1088
        %1675 = vmatpush.msra.mxu0 %v1079
        %1676 = vmatpush.msra.mxu0 %v1070
        %1677 = vmatpush.msra.mxu0 %v1061
        %1678 = vmatpush.msra.mxu0 %v1052
        %1679 = vmatpush.msra.mxu0 %v1043
        %1680 = vmatpush.msra.mxu0 %v1034
        %1681 = vmatpush.msra.mxu0 %v1025
        %1682 = vmatpush.msra.mxu0 %v1016
        %1683 = vmatpush.msra.mxu0 %v1007
        %1684 = vmatpush.msra.mxu0 %v998
        %1685 = vmatpush.msra.mxu0 %v989
        %1686 = vmatpush.msra.mxu0 %v980
        %1687 = vmatpush.msra.mxu0 %v971
        %1688 = vmatmul.f32.gmra.mxu0 %v1558
        %v1689 = vpop.f32.mrf.mxu0
        %v1690 = vadd.f32 %v1670, %v1689
        %1691 = vdwg.mxu0
        %1692 = vmatpush.msra.mxu0 %v1250
        %1693 = vmatpush.msra.mxu0 %v1241
        %1694 = vmatpush.msra.mxu0 %v1232
        %1695 = vmatpush.msra.mxu0 %v1223
        %1696 = vmatpush.msra.mxu0 %v1214
        %1697 = vmatpush.msra.mxu0 %v1205
        %1698 = vmatpush.msra.mxu0 %v1196
        %1699 = vmatpush.msra.mxu0 %v1187
        %1700 = vmatpush.msra.mxu0 %v1178
        %1701 = vmatpush.msra.mxu0 %v1169
        %1702 = vmatpush.msra.mxu0 %v1160
        %1703 = vmatpush.msra.mxu0 %v1151
        %1704 = vmatpush.msra.mxu0 %v1142
        %1705 = vmatpush.msra.mxu0 %v1133
        %1706 = vmatpush.msra.mxu0 %v1124
        %1707 = vmatpush.msra.mxu0 %v1115
        %1708 = vmatmul.f32.gmra.mxu0 %v1559
        %v1709 = vpop.f32.mrf.mxu0
        %v1710 = vadd.f32 %v1690, %v1709
        %1711 = vdwg.mxu0
        %1712 = vmatpush.msra.mxu0 %v1394
        %1713 = vmatpush.msra.mxu0 %v1385
        %1714 = vmatpush.msra.mxu0 %v1376
        %1715 = vmatpush.msra.mxu0 %v1367
        %1716 = vmatpush.msra.mxu0 %v1358
        %1717 = vmatpush.msra.mxu0 %v1349
        %1718 = vmatpush.msra.mxu0 %v1340
        %1719 = vmatpush.msra.mxu0 %v1331
        %1720 = vmatpush.msra.mxu0 %v1322
        %1721 = vmatpush.msra.mxu0 %v1313
        %1722 = vmatpush.msra.mxu0 %v1304
        %1723 = vmatpush.msra.mxu0 %v1295
        %1724 = vmatpush.msra.mxu0 %v1286
        %1725 = vmatpush.msra.mxu0 %v1277
        %1726 = vmatpush.msra.mxu0 %v1268
        %1727 = vmatpush.msra.mxu0 %v1259
        %1728 = vmatmul.f32.gmra.mxu0 %v1560
        %v1729 = vpop.f32.mrf.mxu0
        %v1730 = vadd.f32 %v1710, %v1729
        %1731 = vdwg.mxu0
        %1732 = vmatpush.msra.mxu0 %v1538
        %1733 = vmatpush.msra.mxu0 %v1529
        %1734 = vmatpush.msra.mxu0 %v1520
        %1735 = vmatpush.msra.mxu0 %v1511
        %1736 = vmatpush.msra.mxu0 %v1502
        %1737 = vmatpush.msra.mxu0 %v1493
        %1738 = vmatpush.msra.mxu0 %v1484
        %1739 = vmatpush.msra.mxu0 %v1475
        %1740 = vmatpush.msra.mxu0 %v1466
        %1741 = vmatpush.msra.mxu0 %v1457
        %1742 = vmatpush.msra.mxu0 %v1448
        %1743 = vmatpush.msra.mxu0 %v1439
        %1744 = vmatpush.msra.mxu0 %v1430
        %1745 = vmatpush.msra.mxu0 %v1421
        %1746 = vmatpush.msra.mxu0 %v1412
        %1747 = vmatpush.msra.mxu0 %v1403
        %1748 = vmatmul.f32.gmra.mxu0 %v1562
        %v1749 = vpop.f32.mrf.mxu0
        %v1750 = vadd.f32 %v1730, %v1749
        %1751 = vdwg.mxu0
        %1752 = vmatpush.msra.mxu0 %v387
        %1753 = vmatpush.msra.mxu0 %v378
        %1754 = vmatpush.msra.mxu0 %v369
        %1755 = vmatpush.msra.mxu0 %v360
        %1756 = vmatpush.msra.mxu0 %v351
        %1757 = vmatpush.msra.mxu0 %v342
        %1758 = vmatpush.msra.mxu0 %v333
        %1759 = vmatpush.msra.mxu0 %v324
        %1760 = vmatpush.msra.mxu0 %v315
        %1761 = vmatpush.msra.mxu0 %v306
        %1762 = vmatpush.msra.mxu0 %v297
        %1763 = vmatpush.msra.mxu0 %v288
        %1764 = vmatpush.msra.mxu0 %v279
        %1765 = vmatpush.msra.mxu0 %v270
        %1766 = vmatpush.msra.mxu0 %v261
        %1767 = vmatpush.msra.mxu0 %v252
        %1768 = vmatmul.f32.gmra.mxu0 %v1553
        %v1769 = vpop.f32.mrf.mxu0
        %v1770 = vadd.f32 0.0, %v1769
        %1771 = vdwg.mxu0
        %1772 = vmatpush.msra.mxu0 %v531
        %1773 = vmatpush.msra.mxu0 %v522
        %1774 = vmatpush.msra.mxu0 %v513
        %1775 = vmatpush.msra.mxu0 %v504
        %1776 = vmatpush.msra.mxu0 %v495
        %1777 = vmatpush.msra.mxu0 %v486
        %1778 = vmatpush.msra.mxu0 %v477
        %1779 = vmatpush.msra.mxu0 %v468
        %1780 = vmatpush.msra.mxu0 %v459
        %1781 = vmatpush.msra.mxu0 %v450
        %1782 = vmatpush.msra.mxu0 %v441
        %1783 = vmatpush.msra.mxu0 %v432
        %1784 = vmatpush.msra.mxu0 %v423
        %1785 = vmatpush.msra.mxu0 %v414
        %1786 = vmatpush.msra.mxu0 %v405
        %1787 = vmatpush.msra.mxu0 %v396
        %1788 = vmatmul.f32.gmra.mxu0 %v1554
        %v1789 = vpop.f32.mrf.mxu0
        %v1790 = vadd.f32 %v1770, %v1789
        %1791 = vdwg.mxu0
        %1792 = vmatpush.msra.mxu0 %v675
        %1793 = vmatpush.msra.mxu0 %v666
        %1794 = vmatpush.msra.mxu0 %v657
        %1795 = vmatpush.msra.mxu0 %v648
        %1796 = vmatpush.msra.mxu0 %v639
        %1797 = vmatpush.msra.mxu0 %v630
        %1798 = vmatpush.msra.mxu0 %v621
        %1799 = vmatpush.msra.mxu0 %v612
        %1800 = vmatpush.msra.mxu0 %v603
        %1801 = vmatpush.msra.mxu0 %v594
        %1802 = vmatpush.msra.mxu0 %v585
        %1803 = vmatpush.msra.mxu0 %v576
        %1804 = vmatpush.msra.mxu0 %v567
        %1805 = vmatpush.msra.mxu0 %v558
        %1806 = vmatpush.msra.mxu0 %v549
        %1807 = vmatpush.msra.mxu0 %v540
        %1808 = vmatmul.f32.gmra.mxu0 %v1555
        %v1809 = vpop.f32.mrf.mxu0
        %v1810 = vadd.f32 %v1790, %v1809
        %1811 = vdwg.mxu0
        %1812 = vmatpush.msra.mxu0 %v819
        %1813 = vmatpush.msra.mxu0 %v810
        %1814 = vmatpush.msra.mxu0 %v801
        %1815 = vmatpush.msra.mxu0 %v792
        %1816 = vmatpush.msra.mxu0 %v783
        %1817 = vmatpush.msra.mxu0 %v774
        %1818 = vmatpush.msra.mxu0 %v765
        %1819 = vmatpush.msra.mxu0 %v756
        %1820 = vmatpush.msra.mxu0 %v747
        %1821 = vmatpush.msra.mxu0 %v738
        %1822 = vmatpush.msra.mxu0 %v729
        %1823 = vmatpush.msra.mxu0 %v720
        %1824 = vmatpush.msra.mxu0 %v711
        %1825 = vmatpush.msra.mxu0 %v702
        %1826 = vmatpush.msra.mxu0 %v693
        %1827 = vmatpush.msra.mxu0 %v684
        %1828 = vmatmul.f32.gmra.mxu0 %v1556
        %v1829 = vpop.f32.mrf.mxu0
        %v1830 = vadd.f32 %v1810, %v1829
        %1831 = vdwg.mxu0
        %1832 = vmatpush.msra.mxu0 %v963
        %1833 = vmatpush.msra.mxu0 %v954
        %1834 = vmatpush.msra.mxu0 %v945
        %1835 = vmatpush.msra.mxu0 %v936
        %1836 = vmatpush.msra.mxu0 %v927
        %1837 = vmatpush.msra.mxu0 %v918
        %1838 = vmatpush.msra.mxu0 %v909
        %1839 = vmatpush.msra.mxu0 %v900
        %1840 = vmatpush.msra.mxu0 %v891
        %1841 = vmatpush.msra.mxu0 %v882
        %1842 = vmatpush.msra.mxu0 %v873
        %1843 = vmatpush.msra.mxu0 %v864
        %1844 = vmatpush.msra.mxu0 %v855
        %1845 = vmatpush.msra.mxu0 %v846
        %1846 = vmatpush.msra.mxu0 %v837
        %1847 = vmatpush.msra.mxu0 %v828
        %1848 = vmatmul.f32.gmra.mxu0 %v1557
        %v1849 = vpop.f32.mrf.mxu0
        %v1850 = vadd.f32 %v1830, %v1849
        %1851 = vdwg.mxu0
        %1852 = vmatpush.msra.mxu0 %v1107
        %1853 = vmatpush.msra.mxu0 %v1098
        %1854 = vmatpush.msra.mxu0 %v1089
        %1855 = vmatpush.msra.mxu0 %v1080
        %1856 = vmatpush.msra.mxu0 %v1071
        %1857 = vmatpush.msra.mxu0 %v1062
        %1858 = vmatpush.msra.mxu0 %v1053
        %1859 = vmatpush.msra.mxu0 %v1044
        %1860 = vmatpush.msra.mxu0 %v1035
        %1861 = vmatpush.msra.mxu0 %v1026
        %1862 = vmatpush.msra.mxu0 %v1017
        %1863 = vmatpush.msra.mxu0 %v1008
        %1864 = vmatpush.msra.mxu0 %v999
        %1865 = vmatpush.msra.mxu0 %v990
        %1866 = vmatpush.msra.mxu0 %v981
        %1867 = vmatpush.msra.mxu0 %v972
        %1868 = vmatmul.f32.gmra.mxu0 %v1558
        %v1869 = vpop.f32.mrf.mxu0
        %v1870 = vadd.f32 %v1850, %v1869
        %1871 = vdwg.mxu0
        %1872 = vmatpush.msra.mxu0 %v1251
        %1873 = vmatpush.msra.mxu0 %v1242
        %1874 = vmatpush.msra.mxu0 %v1233
        %1875 = vmatpush.msra.mxu0 %v1224
        %1876 = vmatpush.msra.mxu0 %v1215
        %1877 = vmatpush.msra.mxu0 %v1206
        %1878 = vmatpush.msra.mxu0 %v1197
        %1879 = vmatpush.msra.mxu0 %v1188
        %1880 = vmatpush.msra.mxu0 %v1179
        %1881 = vmatpush.msra.mxu0 %v1170
        %1882 = vmatpush.msra.mxu0 %v1161
        %1883 = vmatpush.msra.mxu0 %v1152
        %1884 = vmatpush.msra.mxu0 %v1143
        %1885 = vmatpush.msra.mxu0 %v1134
        %1886 = vmatpush.msra.mxu0 %v1125
        %1887 = vmatpush.msra.mxu0 %v1116
        %1888 = vmatmul.f32.gmra.mxu0 %v1559
        %v1889 = vpop.f32.mrf.mxu0
        %v1890 = vadd.f32 %v1870, %v1889
        %1891 = vdwg.mxu0
        %1892 = vmatpush.msra.mxu0 %v1395
        %1893 = vmatpush.msra.mxu0 %v1386
        %1894 = vmatpush.msra.mxu0 %v1377
        %1895 = vmatpush.msra.mxu0 %v1368
        %1896 = vmatpush.msra.mxu0 %v1359
        %1897 = vmatpush.msra.mxu0 %v1350
        %1898 = vmatpush.msra.mxu0 %v1341
        %1899 = vmatpush.msra.mxu0 %v1332
        %1900 = vmatpush.msra.mxu0 %v1323
        %1901 = vmatpush.msra.mxu0 %v1314
        %1902 = vmatpush.msra.mxu0 %v1305
        %1903 = vmatpush.msra.mxu0 %v1296
        %1904 = vmatpush.msra.mxu0 %v1287
        %1905 = vmatpush.msra.mxu0 %v1278
        %1906 = vmatpush.msra.mxu0 %v1269
        %1907 = vmatpush.msra.mxu0 %v1260
        %1908 = vmatmul.f32.gmra.mxu0 %v1560
        %v1909 = vpop.f32.mrf.mxu0
        %v1910 = vadd.f32 %v1890, %v1909
        %1911 = vdwg.mxu0
        %1912 = vmatpush.msra.mxu0 %v1539
        %1913 = vmatpush.msra.mxu0 %v1530
        %1914 = vmatpush.msra.mxu0 %v1521
        %1915 = vmatpush.msra.mxu0 %v1512
        %1916 = vmatpush.msra.mxu0 %v1503
        %1917 = vmatpush.msra.mxu0 %v1494
        %1918 = vmatpush.msra.mxu0 %v1485
        %1919 = vmatpush.msra.mxu0 %v1476
        %1920 = vmatpush.msra.mxu0 %v1467
        %1921 = vmatpush.msra.mxu0 %v1458
        %1922 = vmatpush.msra.mxu0 %v1449
        %1923 = vmatpush.msra.mxu0 %v1440
        %1924 = vmatpush.msra.mxu0 %v1431
        %1925 = vmatpush.msra.mxu0 %v1422
        %1926 = vmatpush.msra.mxu0 %v1413
        %1927 = vmatpush.msra.mxu0 %v1404
        %1928 = vmatmul.f32.gmra.mxu0 %v1562
        %v1929 = vpop.f32.mrf.mxu0
        %v1930 = vadd.f32 %v1910, %v1929
        %1931 = vdwg.mxu0
        %1932 = vmatpush.msra.mxu0 %v388
        %1933 = vmatpush.msra.mxu0 %v379
        %1934 = vmatpush.msra.mxu0 %v370
        %1935 = vmatpush.msra.mxu0 %v361
        %1936 = vmatpush.msra.mxu0 %v352
        %1937 = vmatpush.msra.mxu0 %v343
        %1938 = vmatpush.msra.mxu0 %v334
        %1939 = vmatpush.msra.mxu0 %v325
        %1940 = vmatpush.msra.mxu0 %v316
        %1941 = vmatpush.msra.mxu0 %v307
        %1942 = vmatpush.msra.mxu0 %v298
        %1943 = vmatpush.msra.mxu0 %v289
        %1944 = vmatpush.msra.mxu0 %v280
        %1945 = vmatpush.msra.mxu0 %v271
        %1946 = vmatpush.msra.mxu0 %v262
        %1947 = vmatpush.msra.mxu0 %v253
        %1948 = vmatmul.f32.gmra.mxu0 %v1553
        %v1949 = vpop.f32.mrf.mxu0
        %v1950 = vadd.f32 0.0, %v1949
        %1951 = vdwg.mxu0
        %1952 = vmatpush.msra.mxu0 %v532
        %1953 = vmatpush.msra.mxu0 %v523
        %1954 = vmatpush.msra.mxu0 %v514
        %1955 = vmatpush.msra.mxu0 %v505
        %1956 = vmatpush.msra.mxu0 %v496
        %1957 = vmatpush.msra.mxu0 %v487
        %1958 = vmatpush.msra.mxu0 %v478
        %1959 = vmatpush.msra.mxu0 %v469
        %1960 = vmatpush.msra.mxu0 %v460
        %1961 = vmatpush.msra.mxu0 %v451
        %1962 = vmatpush.msra.mxu0 %v442
        %1963 = vmatpush.msra.mxu0 %v433
        %1964 = vmatpush.msra.mxu0 %v424
        %1965 = vmatpush.msra.mxu0 %v415
        %1966 = vmatpush.msra.mxu0 %v406
        %1967 = vmatpush.msra.mxu0 %v397
        %1968 = vmatmul.f32.gmra.mxu0 %v1554
        %v1969 = vpop.f32.mrf.mxu0
        %v1970 = vadd.f32 %v1950, %v1969
        %1971 = vdwg.mxu0
        %1972 = vmatpush.msra.mxu0 %v676
        %1973 = vmatpush.msra.mxu0 %v667
        %1974 = vmatpush.msra.mxu0 %v658
        %1975 = vmatpush.msra.mxu0 %v649
        %1976 = vmatpush.msra.mxu0 %v640
        %1977 = vmatpush.msra.mxu0 %v631
        %1978 = vmatpush.msra.mxu0 %v622
        %1979 = vmatpush.msra.mxu0 %v613
        %1980 = vmatpush.msra.mxu0 %v604
        %1981 = vmatpush.msra.mxu0 %v595
        %1982 = vmatpush.msra.mxu0 %v586
        %1983 = vmatpush.msra.mxu0 %v577
        %1984 = vmatpush.msra.mxu0 %v568
        %1985 = vmatpush.msra.mxu0 %v559
        %1986 = vmatpush.msra.mxu0 %v550
        %1987 = vmatpush.msra.mxu0 %v541
        %1988 = vmatmul.f32.gmra.mxu0 %v1555
        %v1989 = vpop.f32.mrf.mxu0
        %v1990 = vadd.f32 %v1970, %v1989
        %1991 = vdwg.mxu0
        %1992 = vmatpush.msra.mxu0 %v820
        %1993 = vmatpush.msra.mxu0 %v811
        %1994 = vmatpush.msra.mxu0 %v802
        %1995 = vmatpush.msra.mxu0 %v793
        %1996 = vmatpush.msra.mxu0 %v784
        %1997 = vmatpush.msra.mxu0 %v775
        %1998 = vmatpush.msra.mxu0 %v766
        %1999 = vmatpush.msra.mxu0 %v757
        %2000 = vmatpush.msra.mxu0 %v748
        %2001 = vmatpush.msra.mxu0 %v739
        %2002 = vmatpush.msra.mxu0 %v730
        %2003 = vmatpush.msra.mxu0 %v721
        %2004 = vmatpush.msra.mxu0 %v712
        %2005 = vmatpush.msra.mxu0 %v703
        %2006 = vmatpush.msra.mxu0 %v694
        %2007 = vmatpush.msra.mxu0 %v685
        %2008 = vmatmul.f32.gmra.mxu0 %v1556
        %v2009 = vpop.f32.mrf.mxu0
        %v2010 = vadd.f32 %v1990, %v2009
        %2011 = vdwg.mxu0
        %2012 = vmatpush.msra.mxu0 %v964
        %2013 = vmatpush.msra.mxu0 %v955
        %2014 = vmatpush.msra.mxu0 %v946
        %2015 = vmatpush.msra.mxu0 %v937
        %2016 = vmatpush.msra.mxu0 %v928
        %2017 = vmatpush.msra.mxu0 %v919
        %2018 = vmatpush.msra.mxu0 %v910
        %2019 = vmatpush.msra.mxu0 %v901
        %2020 = vmatpush.msra.mxu0 %v892
        %2021 = vmatpush.msra.mxu0 %v883
        %2022 = vmatpush.msra.mxu0 %v874
        %2023 = vmatpush.msra.mxu0 %v865
        %2024 = vmatpush.msra.mxu0 %v856
        %2025 = vmatpush.msra.mxu0 %v847
        %2026 = vmatpush.msra.mxu0 %v838
        %2027 = vmatpush.msra.mxu0 %v829
        %2028 = vmatmul.f32.gmra.mxu0 %v1557
        %v2029 = vpop.f32.mrf.mxu0
        %v2030 = vadd.f32 %v2010, %v2029
        %2031 = vdwg.mxu0
        %2032 = vmatpush.msra.mxu0 %v1108
        %2033 = vmatpush.msra.mxu0 %v1099
        %2034 = vmatpush.msra.mxu0 %v1090
        %2035 = vmatpush.msra.mxu0 %v1081
        %2036 = vmatpush.msra.mxu0 %v1072
        %2037 = vmatpush.msra.mxu0 %v1063
        %2038 = vmatpush.msra.mxu0 %v1054
        %2039 = vmatpush.msra.mxu0 %v1045
        %2040 = vmatpush.msra.mxu0 %v1036
        %2041 = vmatpush.msra.mxu0 %v1027
        %2042 = vmatpush.msra.mxu0 %v1018
        %2043 = vmatpush.msra.mxu0 %v1009
        %2044 = vmatpush.msra.mxu0 %v1000
        %2045 = vmatpush.msra.mxu0 %v991
        %2046 = vmatpush.msra.mxu0 %v982
        %2047 = vmatpush.msra.mxu0 %v973
        %2048 = vmatmul.f32.gmra.mxu0 %v1558
        %v2049 = vpop.f32.mrf.mxu0
        %v2050 = vadd.f32 %v2030, %v2049
        %2051 = vdwg.mxu0
        %2052 = vmatpush.msra.mxu0 %v1252
        %2053 = vmatpush.msra.mxu0 %v1243
        %2054 = vmatpush.msra.mxu0 %v1234
        %2055 = vmatpush.msra.mxu0 %v1225
        %2056 = vmatpush.msra.mxu0 %v1216
        %2057 = vmatpush.msra.mxu0 %v1207
        %2058 = vmatpush.msra.mxu0 %v1198
        %2059 = vmatpush.msra.mxu0 %v1189
        %2060 = vmatpush.msra.mxu0 %v1180
        %2061 = vmatpush.msra.mxu0 %v1171
        %2062 = vmatpush.msra.mxu0 %v1162
        %2063 = vmatpush.msra.mxu0 %v1153
        %2064 = vmatpush.msra.mxu0 %v1144
        %2065 = vmatpush.msra.mxu0 %v1135
        %2066 = vmatpush.msra.mxu0 %v1126
        %2067 = vmatpush.msra.mxu0 %v1117
        %2068 = vmatmul.f32.gmra.mxu0 %v1559
        %v2069 = vpop.f32.mrf.mxu0
        %v2070 = vadd.f32 %v2050, %v2069
        %2071 = vdwg.mxu0
        %2072 = vmatpush.msra.mxu0 %v1396
        %2073 = vmatpush.msra.mxu0 %v1387
        %2074 = vmatpush.msra.mxu0 %v1378
        %2075 = vmatpush.msra.mxu0 %v1369
        %2076 = vmatpush.msra.mxu0 %v1360
        %2077 = vmatpush.msra.mxu0 %v1351
        %2078 = vmatpush.msra.mxu0 %v1342
        %2079 = vmatpush.msra.mxu0 %v1333
        %2080 = vmatpush.msra.mxu0 %v1324
        %2081 = vmatpush.msra.mxu0 %v1315
        %2082 = vmatpush.msra.mxu0 %v1306
        %2083 = vmatpush.msra.mxu0 %v1297
        %2084 = vmatpush.msra.mxu0 %v1288
        %2085 = vmatpush.msra.mxu0 %v1279
        %2086 = vmatpush.msra.mxu0 %v1270
        %2087 = vmatpush.msra.mxu0 %v1261
        %2088 = vmatmul.f32.gmra.mxu0 %v1560
        %v2089 = vpop.f32.mrf.mxu0
        %v2090 = vadd.f32 %v2070, %v2089
        %2091 = vdwg.mxu0
        %2092 = vmatpush.msra.mxu0 %v1540
        %2093 = vmatpush.msra.mxu0 %v1531
        %2094 = vmatpush.msra.mxu0 %v1522
        %2095 = vmatpush.msra.mxu0 %v1513
        %2096 = vmatpush.msra.mxu0 %v1504
        %2097 = vmatpush.msra.mxu0 %v1495
        %2098 = vmatpush.msra.mxu0 %v1486
        %2099 = vmatpush.msra.mxu0 %v1477
        %2100 = vmatpush.msra.mxu0 %v1468
        %2101 = vmatpush.msra.mxu0 %v1459
        %2102 = vmatpush.msra.mxu0 %v1450
        %2103 = vmatpush.msra.mxu0 %v1441
        %2104 = vmatpush.msra.mxu0 %v1432
        %2105 = vmatpush.msra.mxu0 %v1423
        %2106 = vmatpush.msra.mxu0 %v1414
        %2107 = vmatpush.msra.mxu0 %v1405
        %2108 = vmatmul.f32.gmra.mxu0 %v1562
        %v2109 = vpop.f32.mrf.mxu0
        %v2110 = vadd.f32 %v2090, %v2109
        %2111 = vdwg.mxu0
        %2112 = vmatpush.msra.mxu0 %v389
        %2113 = vmatpush.msra.mxu0 %v380
        %2114 = vmatpush.msra.mxu0 %v371
        %2115 = vmatpush.msra.mxu0 %v362
        %2116 = vmatpush.msra.mxu0 %v353
        %2117 = vmatpush.msra.mxu0 %v344
        %2118 = vmatpush.msra.mxu0 %v335
        %2119 = vmatpush.msra.mxu0 %v326
        %2120 = vmatpush.msra.mxu0 %v317
        %2121 = vmatpush.msra.mxu0 %v308
        %2122 = vmatpush.msra.mxu0 %v299
        %2123 = vmatpush.msra.mxu0 %v290
        %2124 = vmatpush.msra.mxu0 %v281
        %2125 = vmatpush.msra.mxu0 %v272
        %2126 = vmatpush.msra.mxu0 %v263
        %2127 = vmatpush.msra.mxu0 %v254
        %2128 = vmatmul.f32.gmra.mxu0 %v1553
        %v2129 = vpop.f32.mrf.mxu0
        %v2130 = vadd.f32 0.0, %v2129
        %2131 = vdwg.mxu0
        %2132 = vmatpush.msra.mxu0 %v533
        %2133 = vmatpush.msra.mxu0 %v524
        %2134 = vmatpush.msra.mxu0 %v515
        %2135 = vmatpush.msra.mxu0 %v506
        %2136 = vmatpush.msra.mxu0 %v497
        %2137 = vmatpush.msra.mxu0 %v488
        %2138 = vmatpush.msra.mxu0 %v479
        %2139 = vmatpush.msra.mxu0 %v470
        %2140 = vmatpush.msra.mxu0 %v461
        %2141 = vmatpush.msra.mxu0 %v452
        %2142 = vmatpush.msra.mxu0 %v443
        %2143 = vmatpush.msra.mxu0 %v434
        %2144 = vmatpush.msra.mxu0 %v425
        %2145 = vmatpush.msra.mxu0 %v416
        %2146 = vmatpush.msra.mxu0 %v407
        %2147 = vmatpush.msra.mxu0 %v398
        %2148 = vmatmul.f32.gmra.mxu0 %v1554
        %v2149 = vpop.f32.mrf.mxu0
        %v2150 = vadd.f32 %v2130, %v2149
        %2151 = vdwg.mxu0
        %2152 = vmatpush.msra.mxu0 %v677
        %2153 = vmatpush.msra.mxu0 %v668
        %2154 = vmatpush.msra.mxu0 %v659
        %2155 = vmatpush.msra.mxu0 %v650
        %2156 = vmatpush.msra.mxu0 %v641
        %2157 = vmatpush.msra.mxu0 %v632
        %2158 = vmatpush.msra.mxu0 %v623
        %2159 = vmatpush.msra.mxu0 %v614
        %2160 = vmatpush.msra.mxu0 %v605
        %2161 = vmatpush.msra.mxu0 %v596
        %2162 = vmatpush.msra.mxu0 %v587
        %2163 = vmatpush.msra.mxu0 %v578
        %2164 = vmatpush.msra.mxu0 %v569
        %2165 = vmatpush.msra.mxu0 %v560
        %2166 = vmatpush.msra.mxu0 %v551
        %2167 = vmatpush.msra.mxu0 %v542
        %2168 = vmatmul.f32.gmra.mxu0 %v1555
        %v2169 = vpop.f32.mrf.mxu0
        %v2170 = vadd.f32 %v2150, %v2169
        %2171 = vdwg.mxu0
        %2172 = vmatpush.msra.mxu0 %v821
        %2173 = vmatpush.msra.mxu0 %v812
        %2174 = vmatpush.msra.mxu0 %v803
        %2175 = vmatpush.msra.mxu0 %v794
        %2176 = vmatpush.msra.mxu0 %v785
        %2177 = vmatpush.msra.mxu0 %v776
        %2178 = vmatpush.msra.mxu0 %v767
        %2179 = vmatpush.msra.mxu0 %v758
        %2180 = vmatpush.msra.mxu0 %v749
        %2181 = vmatpush.msra.mxu0 %v740
        %2182 = vmatpush.msra.mxu0 %v731
        %2183 = vmatpush.msra.mxu0 %v722
        %2184 = vmatpush.msra.mxu0 %v713
        %2185 = vmatpush.msra.mxu0 %v704
        %2186 = vmatpush.msra.mxu0 %v695
        %2187 = vmatpush.msra.mxu0 %v686
        %2188 = vmatmul.f32.gmra.mxu0 %v1556
        %v2189 = vpop.f32.mrf.mxu0
        %v2190 = vadd.f32 %v2170, %v2189
        %2191 = vdwg.mxu0
        %2192 = vmatpush.msra.mxu0 %v965
        %2193 = vmatpush.msra.mxu0 %v956
        %2194 = vmatpush.msra.mxu0 %v947
        %2195 = vmatpush.msra.mxu0 %v938
        %2196 = vmatpush.msra.mxu0 %v929
        %2197 = vmatpush.msra.mxu0 %v920
        %2198 = vmatpush.msra.mxu0 %v911
        %2199 = vmatpush.msra.mxu0 %v902
        %2200 = vmatpush.msra.mxu0 %v893
        %2201 = vmatpush.msra.mxu0 %v884
        %2202 = vmatpush.msra.mxu0 %v875
        %2203 = vmatpush.msra.mxu0 %v866
        %2204 = vmatpush.msra.mxu0 %v857
        %2205 = vmatpush.msra.mxu0 %v848
        %2206 = vmatpush.msra.mxu0 %v839
        %2207 = vmatpush.msra.mxu0 %v830
        %2208 = vmatmul.f32.gmra.mxu0 %v1557
        %v2209 = vpop.f32.mrf.mxu0
        %v2210 = vadd.f32 %v2190, %v2209
        %2211 = vdwg.mxu0
        %2212 = vmatpush.msra.mxu0 %v1109
        %2213 = vmatpush.msra.mxu0 %v1100
        %2214 = vmatpush.msra.mxu0 %v1091
        %2215 = vmatpush.msra.mxu0 %v1082
        %2216 = vmatpush.msra.mxu0 %v1073
        %2217 = vmatpush.msra.mxu0 %v1064
        %2218 = vmatpush.msra.mxu0 %v1055
        %2219 = vmatpush.msra.mxu0 %v1046
        %2220 = vmatpush.msra.mxu0 %v1037
        %2221 = vmatpush.msra.mxu0 %v1028
        %2222 = vmatpush.msra.mxu0 %v1019
        %2223 = vmatpush.msra.mxu0 %v1010
        %2224 = vmatpush.msra.mxu0 %v1001
        %2225 = vmatpush.msra.mxu0 %v992
        %2226 = vmatpush.msra.mxu0 %v983
        %2227 = vmatpush.msra.mxu0 %v974
        %2228 = vmatmul.f32.gmra.mxu0 %v1558
        %v2229 = vpop.f32.mrf.mxu0
        %v2230 = vadd.f32 %v2210, %v2229
        %2231 = vdwg.mxu0
        %2232 = vmatpush.msra.mxu0 %v1253
        %2233 = vmatpush.msra.mxu0 %v1244
        %2234 = vmatpush.msra.mxu0 %v1235
        %2235 = vmatpush.msra.mxu0 %v1226
        %2236 = vmatpush.msra.mxu0 %v1217
        %2237 = vmatpush.msra.mxu0 %v1208
        %2238 = vmatpush.msra.mxu0 %v1199
        %2239 = vmatpush.msra.mxu0 %v1190
        %2240 = vmatpush.msra.mxu0 %v1181
        %2241 = vmatpush.msra.mxu0 %v1172
        %2242 = vmatpush.msra.mxu0 %v1163
        %2243 = vmatpush.msra.mxu0 %v1154
        %2244 = vmatpush.msra.mxu0 %v1145
        %2245 = vmatpush.msra.mxu0 %v1136
        %2246 = vmatpush.msra.mxu0 %v1127
        %2247 = vmatpush.msra.mxu0 %v1118
        %2248 = vmatmul.f32.gmra.mxu0 %v1559
        %v2249 = vpop.f32.mrf.mxu0
        %v2250 = vadd.f32 %v2230, %v2249
        %2251 = vdwg.mxu0
        %2252 = vmatpush.msra.mxu0 %v1397
        %2253 = vmatpush.msra.mxu0 %v1388
        %2254 = vmatpush.msra.mxu0 %v1379
        %2255 = vmatpush.msra.mxu0 %v1370
        %2256 = vmatpush.msra.mxu0 %v1361
        %2257 = vmatpush.msra.mxu0 %v1352
        %2258 = vmatpush.msra.mxu0 %v1343
        %2259 = vmatpush.msra.mxu0 %v1334
        %2260 = vmatpush.msra.mxu0 %v1325
        %2261 = vmatpush.msra.mxu0 %v1316
        %2262 = vmatpush.msra.mxu0 %v1307
        %2263 = vmatpush.msra.mxu0 %v1298
        %2264 = vmatpush.msra.mxu0 %v1289
        %2265 = vmatpush.msra.mxu0 %v1280
        %2266 = vmatpush.msra.mxu0 %v1271
        %2267 = vmatpush.msra.mxu0 %v1262
        %2268 = vmatmul.f32.gmra.mxu0 %v1560
        %v2269 = vpop.f32.mrf.mxu0
        %v2270 = vadd.f32 %v2250, %v2269
        %2271 = vdwg.mxu0
        %2272 = vmatpush.msra.mxu0 %v1541
        %2273 = vmatpush.msra.mxu0 %v1532
        %2274 = vmatpush.msra.mxu0 %v1523
        %2275 = vmatpush.msra.mxu0 %v1514
        %2276 = vmatpush.msra.mxu0 %v1505
        %2277 = vmatpush.msra.mxu0 %v1496
        %2278 = vmatpush.msra.mxu0 %v1487
        %2279 = vmatpush.msra.mxu0 %v1478
        %2280 = vmatpush.msra.mxu0 %v1469
        %2281 = vmatpush.msra.mxu0 %v1460
        %2282 = vmatpush.msra.mxu0 %v1451
        %2283 = vmatpush.msra.mxu0 %v1442
        %2284 = vmatpush.msra.mxu0 %v1433
        %2285 = vmatpush.msra.mxu0 %v1424
        %2286 = vmatpush.msra.mxu0 %v1415
        %2287 = vmatpush.msra.mxu0 %v1406
        %2288 = vmatmul.f32.gmra.mxu0 %v1562
        %v2289 = vpop.f32.mrf.mxu0
        %v2290 = vadd.f32 %v2270, %v2289
        %2291 = vdwg.mxu0
        %2292 = vmatpush.msra.mxu0 %v390
        %2293 = vmatpush.msra.mxu0 %v381
        %2294 = vmatpush.msra.mxu0 %v372
        %2295 = vmatpush.msra.mxu0 %v363
        %2296 = vmatpush.msra.mxu0 %v354
        %2297 = vmatpush.msra.mxu0 %v345
        %2298 = vmatpush.msra.mxu0 %v336
        %2299 = vmatpush.msra.mxu0 %v327
        %2300 = vmatpush.msra.mxu0 %v318
        %2301 = vmatpush.msra.mxu0 %v309
        %2302 = vmatpush.msra.mxu0 %v300
        %2303 = vmatpush.msra.mxu0 %v291
        %2304 = vmatpush.msra.mxu0 %v282
        %2305 = vmatpush.msra.mxu0 %v273
        %2306 = vmatpush.msra.mxu0 %v264
        %2307 = vmatpush.msra.mxu0 %v255
        %2308 = vmatmul.f32.gmra.mxu0 %v1553
        %v2309 = vpop.f32.mrf.mxu0
        %v2310 = vadd.f32 0.0, %v2309
        %2311 = vdwg.mxu0
        %2312 = vmatpush.msra.mxu0 %v534
        %2313 = vmatpush.msra.mxu0 %v525
        %2314 = vmatpush.msra.mxu0 %v516
        %2315 = vmatpush.msra.mxu0 %v507
        %2316 = vmatpush.msra.mxu0 %v498
        %2317 = vmatpush.msra.mxu0 %v489
        %2318 = vmatpush.msra.mxu0 %v480
        %2319 = vmatpush.msra.mxu0 %v471
        %2320 = vmatpush.msra.mxu0 %v462
        %2321 = vmatpush.msra.mxu0 %v453
        %2322 = vmatpush.msra.mxu0 %v444
        %2323 = vmatpush.msra.mxu0 %v435
        %2324 = vmatpush.msra.mxu0 %v426
        %2325 = vmatpush.msra.mxu0 %v417
        %2326 = vmatpush.msra.mxu0 %v408
        %2327 = vmatpush.msra.mxu0 %v399
        %2328 = vmatmul.f32.gmra.mxu0 %v1554
        %v2329 = vpop.f32.mrf.mxu0
        %v2330 = vadd.f32 %v2310, %v2329
        %2331 = vdwg.mxu0
        %2332 = vmatpush.msra.mxu0 %v678
        %2333 = vmatpush.msra.mxu0 %v669
        %2334 = vmatpush.msra.mxu0 %v660
        %2335 = vmatpush.msra.mxu0 %v651
        %2336 = vmatpush.msra.mxu0 %v642
        %2337 = vmatpush.msra.mxu0 %v633
        %2338 = vmatpush.msra.mxu0 %v624
        %2339 = vmatpush.msra.mxu0 %v615
        %2340 = vmatpush.msra.mxu0 %v606
        %2341 = vmatpush.msra.mxu0 %v597
        %2342 = vmatpush.msra.mxu0 %v588
        %2343 = vmatpush.msra.mxu0 %v579
        %2344 = vmatpush.msra.mxu0 %v570
        %2345 = vmatpush.msra.mxu0 %v561
        %2346 = vmatpush.msra.mxu0 %v552
        %2347 = vmatpush.msra.mxu0 %v543
        %2348 = vmatmul.f32.gmra.mxu0 %v1555
        %v2349 = vpop.f32.mrf.mxu0
        %v2350 = vadd.f32 %v2330, %v2349
        %2351 = vdwg.mxu0
        %2352 = vmatpush.msra.mxu0 %v822
        %2353 = vmatpush.msra.mxu0 %v813
        %2354 = vmatpush.msra.mxu0 %v804
        %2355 = vmatpush.msra.mxu0 %v795
        %2356 = vmatpush.msra.mxu0 %v786
        %2357 = vmatpush.msra.mxu0 %v777
        %2358 = vmatpush.msra.mxu0 %v768
        %2359 = vmatpush.msra.mxu0 %v759
        %2360 = vmatpush.msra.mxu0 %v750
        %2361 = vmatpush.msra.mxu0 %v741
        %2362 = vmatpush.msra.mxu0 %v732
        %2363 = vmatpush.msra.mxu0 %v723
        %2364 = vmatpush.msra.mxu0 %v714
        %2365 = vmatpush.msra.mxu0 %v705
        %2366 = vmatpush.msra.mxu0 %v696
        %2367 = vmatpush.msra.mxu0 %v687
        %2368 = vmatmul.f32.gmra.mxu0 %v1556
        %v2369 = vpop.f32.mrf.mxu0
        %v2370 = vadd.f32 %v2350, %v2369
        %2371 = vdwg.mxu0
        %2372 = vmatpush.msra.mxu0 %v966
        %2373 = vmatpush.msra.mxu0 %v957
        %2374 = vmatpush.msra.mxu0 %v948
        %2375 = vmatpush.msra.mxu0 %v939
        %2376 = vmatpush.msra.mxu0 %v930
        %2377 = vmatpush.msra.mxu0 %v921
        %2378 = vmatpush.msra.mxu0 %v912
        %2379 = vmatpush.msra.mxu0 %v903
        %2380 = vmatpush.msra.mxu0 %v894
        %2381 = vmatpush.msra.mxu0 %v885
        %2382 = vmatpush.msra.mxu0 %v876
        %2383 = vmatpush.msra.mxu0 %v867
        %2384 = vmatpush.msra.mxu0 %v858
        %2385 = vmatpush.msra.mxu0 %v849
        %2386 = vmatpush.msra.mxu0 %v840
        %2387 = vmatpush.msra.mxu0 %v831
        %2388 = vmatmul.f32.gmra.mxu0 %v1557
        %v2389 = vpop.f32.mrf.mxu0
        %v2390 = vadd.f32 %v2370, %v2389
        %2391 = vdwg.mxu0
        %2392 = vmatpush.msra.mxu0 %v1110
        %2393 = vmatpush.msra.mxu0 %v1101
        %2394 = vmatpush.msra.mxu0 %v1092
        %2395 = vmatpush.msra.mxu0 %v1083
        %2396 = vmatpush.msra.mxu0 %v1074
        %2397 = vmatpush.msra.mxu0 %v1065
        %2398 = vmatpush.msra.mxu0 %v1056
        %2399 = vmatpush.msra.mxu0 %v1047
        %2400 = vmatpush.msra.mxu0 %v1038
        %2401 = vmatpush.msra.mxu0 %v1029
        %2402 = vmatpush.msra.mxu0 %v1020
        %2403 = vmatpush.msra.mxu0 %v1011
        %2404 = vmatpush.msra.mxu0 %v1002
        %2405 = vmatpush.msra.mxu0 %v993
        %2406 = vmatpush.msra.mxu0 %v984
        %2407 = vmatpush.msra.mxu0 %v975
        %2408 = vmatmul.f32.gmra.mxu0 %v1558
        %v2409 = vpop.f32.mrf.mxu0
        %v2410 = vadd.f32 %v2390, %v2409
        %2411 = vdwg.mxu0
        %2412 = vmatpush.msra.mxu0 %v1254
        %2413 = vmatpush.msra.mxu0 %v1245
        %2414 = vmatpush.msra.mxu0 %v1236
        %2415 = vmatpush.msra.mxu0 %v1227
        %2416 = vmatpush.msra.mxu0 %v1218
        %2417 = vmatpush.msra.mxu0 %v1209
        %2418 = vmatpush.msra.mxu0 %v1200
        %2419 = vmatpush.msra.mxu0 %v1191
        %2420 = vmatpush.msra.mxu0 %v1182
        %2421 = vmatpush.msra.mxu0 %v1173
        %2422 = vmatpush.msra.mxu0 %v1164
        %2423 = vmatpush.msra.mxu0 %v1155
        %2424 = vmatpush.msra.mxu0 %v1146
        %2425 = vmatpush.msra.mxu0 %v1137
        %2426 = vmatpush.msra.mxu0 %v1128
        %2427 = vmatpush.msra.mxu0 %v1119
        %2428 = vmatmul.f32.gmra.mxu0 %v1559
        %v2429 = vpop.f32.mrf.mxu0
        %v2430 = vadd.f32 %v2410, %v2429
        %2431 = vdwg.mxu0
        %2432 = vmatpush.msra.mxu0 %v1398
        %2433 = vmatpush.msra.mxu0 %v1389
        %2434 = vmatpush.msra.mxu0 %v1380
        %2435 = vmatpush.msra.mxu0 %v1371
        %2436 = vmatpush.msra.mxu0 %v1362
        %2437 = vmatpush.msra.mxu0 %v1353
        %2438 = vmatpush.msra.mxu0 %v1344
        %2439 = vmatpush.msra.mxu0 %v1335
        %2440 = vmatpush.msra.mxu0 %v1326
        %2441 = vmatpush.msra.mxu0 %v1317
        %2442 = vmatpush.msra.mxu0 %v1308
        %2443 = vmatpush.msra.mxu0 %v1299
        %2444 = vmatpush.msra.mxu0 %v1290
        %2445 = vmatpush.msra.mxu0 %v1281
        %2446 = vmatpush.msra.mxu0 %v1272
        %2447 = vmatpush.msra.mxu0 %v1263
        %2448 = vmatmul.f32.gmra.mxu0 %v1560
        %v2449 = vpop.f32.mrf.mxu0
        %v2450 = vadd.f32 %v2430, %v2449
        %2451 = vdwg.mxu0
        %2452 = vmatpush.msra.mxu0 %v1542
        %2453 = vmatpush.msra.mxu0 %v1533
        %2454 = vmatpush.msra.mxu0 %v1524
        %2455 = vmatpush.msra.mxu0 %v1515
        %2456 = vmatpush.msra.mxu0 %v1506
        %2457 = vmatpush.msra.mxu0 %v1497
        %2458 = vmatpush.msra.mxu0 %v1488
        %2459 = vmatpush.msra.mxu0 %v1479
        %2460 = vmatpush.msra.mxu0 %v1470
        %2461 = vmatpush.msra.mxu0 %v1461
        %2462 = vmatpush.msra.mxu0 %v1452
        %2463 = vmatpush.msra.mxu0 %v1443
        %2464 = vmatpush.msra.mxu0 %v1434
        %2465 = vmatpush.msra.mxu0 %v1425
        %2466 = vmatpush.msra.mxu0 %v1416
        %2467 = vmatpush.msra.mxu0 %v1407
        %2468 = vmatmul.f32.gmra.mxu0 %v1562
        %v2469 = vpop.f32.mrf.mxu0
        %v2470 = vadd.f32 %v2450, %v2469
        %2471 = vdwg.mxu0
        %2472 = vmatpush.msra.mxu0 %v391
        %2473 = vmatpush.msra.mxu0 %v382
        %2474 = vmatpush.msra.mxu0 %v373
        %2475 = vmatpush.msra.mxu0 %v364
        %2476 = vmatpush.msra.mxu0 %v355
        %2477 = vmatpush.msra.mxu0 %v346
        %2478 = vmatpush.msra.mxu0 %v337
        %2479 = vmatpush.msra.mxu0 %v328
        %2480 = vmatpush.msra.mxu0 %v319
        %2481 = vmatpush.msra.mxu0 %v310
        %2482 = vmatpush.msra.mxu0 %v301
        %2483 = vmatpush.msra.mxu0 %v292
        %2484 = vmatpush.msra.mxu0 %v283
        %2485 = vmatpush.msra.mxu0 %v274
        %2486 = vmatpush.msra.mxu0 %v265
        %2487 = vmatpush.msra.mxu0 %v256
        %2488 = vmatmul.f32.gmra.mxu0 %v1553
        %v2489 = vpop.f32.mrf.mxu0
        %v2490 = vadd.f32 0.0, %v2489
        %2491 = vdwg.mxu0
        %2492 = vmatpush.msra.mxu0 %v535
        %2493 = vmatpush.msra.mxu0 %v526
        %2494 = vmatpush.msra.mxu0 %v517
        %2495 = vmatpush.msra.mxu0 %v508
        %2496 = vmatpush.msra.mxu0 %v499
        %2497 = vmatpush.msra.mxu0 %v490
        %2498 = vmatpush.msra.mxu0 %v481
        %2499 = vmatpush.msra.mxu0 %v472
        %2500 = vmatpush.msra.mxu0 %v463
        %2501 = vmatpush.msra.mxu0 %v454
        %2502 = vmatpush.msra.mxu0 %v445
        %2503 = vmatpush.msra.mxu0 %v436
        %2504 = vmatpush.msra.mxu0 %v427
        %2505 = vmatpush.msra.mxu0 %v418
        %2506 = vmatpush.msra.mxu0 %v409
        %2507 = vmatpush.msra.mxu0 %v400
        %2508 = vmatmul.f32.gmra.mxu0 %v1554
        %v2509 = vpop.f32.mrf.mxu0
        %v2510 = vadd.f32 %v2490, %v2509
        %2511 = vdwg.mxu0
        %2512 = vmatpush.msra.mxu0 %v679
        %2513 = vmatpush.msra.mxu0 %v670
        %2514 = vmatpush.msra.mxu0 %v661
        %2515 = vmatpush.msra.mxu0 %v652
        %2516 = vmatpush.msra.mxu0 %v643
        %2517 = vmatpush.msra.mxu0 %v634
        %2518 = vmatpush.msra.mxu0 %v625
        %2519 = vmatpush.msra.mxu0 %v616
        %2520 = vmatpush.msra.mxu0 %v607
        %2521 = vmatpush.msra.mxu0 %v598
        %2522 = vmatpush.msra.mxu0 %v589
        %2523 = vmatpush.msra.mxu0 %v580
        %2524 = vmatpush.msra.mxu0 %v571
        %2525 = vmatpush.msra.mxu0 %v562
        %2526 = vmatpush.msra.mxu0 %v553
        %2527 = vmatpush.msra.mxu0 %v544
        %2528 = vmatmul.f32.gmra.mxu0 %v1555
        %v2529 = vpop.f32.mrf.mxu0
        %v2530 = vadd.f32 %v2510, %v2529
        %2531 = vdwg.mxu0
        %2532 = vmatpush.msra.mxu0 %v823
        %2533 = vmatpush.msra.mxu0 %v814
        %2534 = vmatpush.msra.mxu0 %v805
        %2535 = vmatpush.msra.mxu0 %v796
        %2536 = vmatpush.msra.mxu0 %v787
        %2537 = vmatpush.msra.mxu0 %v778
        %2538 = vmatpush.msra.mxu0 %v769
        %2539 = vmatpush.msra.mxu0 %v760
        %2540 = vmatpush.msra.mxu0 %v751
        %2541 = vmatpush.msra.mxu0 %v742
        %2542 = vmatpush.msra.mxu0 %v733
        %2543 = vmatpush.msra.mxu0 %v724
        %2544 = vmatpush.msra.mxu0 %v715
        %2545 = vmatpush.msra.mxu0 %v706
        %2546 = vmatpush.msra.mxu0 %v697
        %2547 = vmatpush.msra.mxu0 %v688
        %2548 = vmatmul.f32.gmra.mxu0 %v1556
        %v2549 = vpop.f32.mrf.mxu0
        %v2550 = vadd.f32 %v2530, %v2549
        %2551 = vdwg.mxu0
        %2552 = vmatpush.msra.mxu0 %v967
        %2553 = vmatpush.msra.mxu0 %v958
        %2554 = vmatpush.msra.mxu0 %v949
        %2555 = vmatpush.msra.mxu0 %v940
        %2556 = vmatpush.msra.mxu0 %v931
        %2557 = vmatpush.msra.mxu0 %v922
        %2558 = vmatpush.msra.mxu0 %v913
        %2559 = vmatpush.msra.mxu0 %v904
        %2560 = vmatpush.msra.mxu0 %v895
        %2561 = vmatpush.msra.mxu0 %v886
        %2562 = vmatpush.msra.mxu0 %v877
        %2563 = vmatpush.msra.mxu0 %v868
        %2564 = vmatpush.msra.mxu0 %v859
        %2565 = vmatpush.msra.mxu0 %v850
        %2566 = vmatpush.msra.mxu0 %v841
        %2567 = vmatpush.msra.mxu0 %v832
        %2568 = vmatmul.f32.gmra.mxu0 %v1557
        %v2569 = vpop.f32.mrf.mxu0
        %v2570 = vadd.f32 %v2550, %v2569
        %2571 = vdwg.mxu0
        %2572 = vmatpush.msra.mxu0 %v1111
        %2573 = vmatpush.msra.mxu0 %v1102
        %2574 = vmatpush.msra.mxu0 %v1093
        %2575 = vmatpush.msra.mxu0 %v1084
        %2576 = vmatpush.msra.mxu0 %v1075
        %2577 = vmatpush.msra.mxu0 %v1066
        %2578 = vmatpush.msra.mxu0 %v1057
        %2579 = vmatpush.msra.mxu0 %v1048
        %2580 = vmatpush.msra.mxu0 %v1039
        %2581 = vmatpush.msra.mxu0 %v1030
        %2582 = vmatpush.msra.mxu0 %v1021
        %2583 = vmatpush.msra.mxu0 %v1012
        %2584 = vmatpush.msra.mxu0 %v1003
        %2585 = vmatpush.msra.mxu0 %v994
        %2586 = vmatpush.msra.mxu0 %v985
        %2587 = vmatpush.msra.mxu0 %v976
        %2588 = vmatmul.f32.gmra.mxu0 %v1558
        %v2589 = vpop.f32.mrf.mxu0
        %v2590 = vadd.f32 %v2570, %v2589
        %2591 = vdwg.mxu0
        %2592 = vmatpush.msra.mxu0 %v1255
        %2593 = vmatpush.msra.mxu0 %v1246
        %2594 = vmatpush.msra.mxu0 %v1237
        %2595 = vmatpush.msra.mxu0 %v1228
        %2596 = vmatpush.msra.mxu0 %v1219
        %2597 = vmatpush.msra.mxu0 %v1210
        %2598 = vmatpush.msra.mxu0 %v1201
        %2599 = vmatpush.msra.mxu0 %v1192
        %2600 = vmatpush.msra.mxu0 %v1183
        %2601 = vmatpush.msra.mxu0 %v1174
        %2602 = vmatpush.msra.mxu0 %v1165
        %2603 = vmatpush.msra.mxu0 %v1156
        %2604 = vmatpush.msra.mxu0 %v1147
        %2605 = vmatpush.msra.mxu0 %v1138
        %2606 = vmatpush.msra.mxu0 %v1129
        %2607 = vmatpush.msra.mxu0 %v1120
        %2608 = vmatmul.f32.gmra.mxu0 %v1559
        %v2609 = vpop.f32.mrf.mxu0
        %v2610 = vadd.f32 %v2590, %v2609
        %2611 = vdwg.mxu0
        %2612 = vmatpush.msra.mxu0 %v1399
        %2613 = vmatpush.msra.mxu0 %v1390
        %2614 = vmatpush.msra.mxu0 %v1381
        %2615 = vmatpush.msra.mxu0 %v1372
        %2616 = vmatpush.msra.mxu0 %v1363
        %2617 = vmatpush.msra.mxu0 %v1354
        %2618 = vmatpush.msra.mxu0 %v1345
        %2619 = vmatpush.msra.mxu0 %v1336
        %2620 = vmatpush.msra.mxu0 %v1327
        %2621 = vmatpush.msra.mxu0 %v1318
        %2622 = vmatpush.msra.mxu0 %v1309
        %2623 = vmatpush.msra.mxu0 %v1300
        %2624 = vmatpush.msra.mxu0 %v1291
        %2625 = vmatpush.msra.mxu0 %v1282
        %2626 = vmatpush.msra.mxu0 %v1273
        %2627 = vmatpush.msra.mxu0 %v1264
        %2628 = vmatmul.f32.gmra.mxu0 %v1560
        %v2629 = vpop.f32.mrf.mxu0
        %v2630 = vadd.f32 %v2610, %v2629
        %2631 = vdwg.mxu0
        %2632 = vmatpush.msra.mxu0 %v1543
        %2633 = vmatpush.msra.mxu0 %v1534
        %2634 = vmatpush.msra.mxu0 %v1525
        %2635 = vmatpush.msra.mxu0 %v1516
        %2636 = vmatpush.msra.mxu0 %v1507
        %2637 = vmatpush.msra.mxu0 %v1498
        %2638 = vmatpush.msra.mxu0 %v1489
        %2639 = vmatpush.msra.mxu0 %v1480
        %2640 = vmatpush.msra.mxu0 %v1471
        %2641 = vmatpush.msra.mxu0 %v1462
        %2642 = vmatpush.msra.mxu0 %v1453
        %2643 = vmatpush.msra.mxu0 %v1444
        %2644 = vmatpush.msra.mxu0 %v1435
        %2645 = vmatpush.msra.mxu0 %v1426
        %2646 = vmatpush.msra.mxu0 %v1417
        %2647 = vmatpush.msra.mxu0 %v1408
        %2648 = vmatmul.f32.gmra.mxu0 %v1562
        %v2649 = vpop.f32.mrf.mxu0
        %v2650 = vadd.f32 %v2630, %v2649
        %2651 = vdwg.mxu0
        %2652 = vmatpush.msra.mxu0 %v392
        %2653 = vmatpush.msra.mxu0 %v383
        %2654 = vmatpush.msra.mxu0 %v374
        %2655 = vmatpush.msra.mxu0 %v365
        %2656 = vmatpush.msra.mxu0 %v356
        %2657 = vmatpush.msra.mxu0 %v347
        %2658 = vmatpush.msra.mxu0 %v338
        %2659 = vmatpush.msra.mxu0 %v329
        %2660 = vmatpush.msra.mxu0 %v320
        %2661 = vmatpush.msra.mxu0 %v311
        %2662 = vmatpush.msra.mxu0 %v302
        %2663 = vmatpush.msra.mxu0 %v293
        %2664 = vmatpush.msra.mxu0 %v284
        %2665 = vmatpush.msra.mxu0 %v275
        %2666 = vmatpush.msra.mxu0 %v266
        %2667 = vmatpush.msra.mxu0 %v257
        %2668 = vmatmul.f32.gmra.mxu0 %v1553
        %v2669 = vpop.f32.mrf.mxu0
        %v2670 = vadd.f32 0.0, %v2669
        %2671 = vdwg.mxu0
        %2672 = vmatpush.msra.mxu0 %v536
        %2673 = vmatpush.msra.mxu0 %v527
        %2674 = vmatpush.msra.mxu0 %v518
        %2675 = vmatpush.msra.mxu0 %v509
        %2676 = vmatpush.msra.mxu0 %v500
        %2677 = vmatpush.msra.mxu0 %v491
        %2678 = vmatpush.msra.mxu0 %v482
        %2679 = vmatpush.msra.mxu0 %v473
        %2680 = vmatpush.msra.mxu0 %v464
        %2681 = vmatpush.msra.mxu0 %v455
        %2682 = vmatpush.msra.mxu0 %v446
        %2683 = vmatpush.msra.mxu0 %v437
        %2684 = vmatpush.msra.mxu0 %v428
        %2685 = vmatpush.msra.mxu0 %v419
        %2686 = vmatpush.msra.mxu0 %v410
        %2687 = vmatpush.msra.mxu0 %v401
        %2688 = vmatmul.f32.gmra.mxu0 %v1554
        %v2689 = vpop.f32.mrf.mxu0
        %v2690 = vadd.f32 %v2670, %v2689
        %2691 = vdwg.mxu0
        %2692 = vmatpush.msra.mxu0 %v680
        %2693 = vmatpush.msra.mxu0 %v671
        %2694 = vmatpush.msra.mxu0 %v662
        %2695 = vmatpush.msra.mxu0 %v653
        %2696 = vmatpush.msra.mxu0 %v644
        %2697 = vmatpush.msra.mxu0 %v635
        %2698 = vmatpush.msra.mxu0 %v626
        %2699 = vmatpush.msra.mxu0 %v617
        %2700 = vmatpush.msra.mxu0 %v608
        %2701 = vmatpush.msra.mxu0 %v599
        %2702 = vmatpush.msra.mxu0 %v590
        %2703 = vmatpush.msra.mxu0 %v581
        %2704 = vmatpush.msra.mxu0 %v572
        %2705 = vmatpush.msra.mxu0 %v563
        %2706 = vmatpush.msra.mxu0 %v554
        %2707 = vmatpush.msra.mxu0 %v545
        %2708 = vmatmul.f32.gmra.mxu0 %v1555
        %v2709 = vpop.f32.mrf.mxu0
        %v2710 = vadd.f32 %v2690, %v2709
        %2711 = vdwg.mxu0
        %2712 = vmatpush.msra.mxu0 %v824
        %2713 = vmatpush.msra.mxu0 %v815
        %2714 = vmatpush.msra.mxu0 %v806
        %2715 = vmatpush.msra.mxu0 %v797
        %2716 = vmatpush.msra.mxu0 %v788
        %2717 = vmatpush.msra.mxu0 %v779
        %2718 = vmatpush.msra.mxu0 %v770
        %2719 = vmatpush.msra.mxu0 %v761
        %2720 = vmatpush.msra.mxu0 %v752
        %2721 = vmatpush.msra.mxu0 %v743
        %2722 = vmatpush.msra.mxu0 %v734
        %2723 = vmatpush.msra.mxu0 %v725
        %2724 = vmatpush.msra.mxu0 %v716
        %2725 = vmatpush.msra.mxu0 %v707
        %2726 = vmatpush.msra.mxu0 %v698
        %2727 = vmatpush.msra.mxu0 %v689
        %2728 = vmatmul.f32.gmra.mxu0 %v1556
        %v2729 = vpop.f32.mrf.mxu0
        %v2730 = vadd.f32 %v2710, %v2729
        %2731 = vdwg.mxu0
        %2732 = vmatpush.msra.mxu0 %v968
        %2733 = vmatpush.msra.mxu0 %v959
        %2734 = vmatpush.msra.mxu0 %v950
        %2735 = vmatpush.msra.mxu0 %v941
        %2736 = vmatpush.msra.mxu0 %v932
        %2737 = vmatpush.msra.mxu0 %v923
        %2738 = vmatpush.msra.mxu0 %v914
        %2739 = vmatpush.msra.mxu0 %v905
        %2740 = vmatpush.msra.mxu0 %v896
        %2741 = vmatpush.msra.mxu0 %v887
        %2742 = vmatpush.msra.mxu0 %v878
        %2743 = vmatpush.msra.mxu0 %v869
        %2744 = vmatpush.msra.mxu0 %v860
        %2745 = vmatpush.msra.mxu0 %v851
        %2746 = vmatpush.msra.mxu0 %v842
        %2747 = vmatpush.msra.mxu0 %v833
        %2748 = vmatmul.f32.gmra.mxu0 %v1557
        %v2749 = vpop.f32.mrf.mxu0
        %v2750 = vadd.f32 %v2730, %v2749
        %2751 = vdwg.mxu0
        %2752 = vmatpush.msra.mxu0 %v1112
        %2753 = vmatpush.msra.mxu0 %v1103
        %2754 = vmatpush.msra.mxu0 %v1094
        %2755 = vmatpush.msra.mxu0 %v1085
        %2756 = vmatpush.msra.mxu0 %v1076
        %2757 = vmatpush.msra.mxu0 %v1067
        %2758 = vmatpush.msra.mxu0 %v1058
        %2759 = vmatpush.msra.mxu0 %v1049
        %2760 = vmatpush.msra.mxu0 %v1040
        %2761 = vmatpush.msra.mxu0 %v1031
        %2762 = vmatpush.msra.mxu0 %v1022
        %2763 = vmatpush.msra.mxu0 %v1013
        %2764 = vmatpush.msra.mxu0 %v1004
        %2765 = vmatpush.msra.mxu0 %v995
        %2766 = vmatpush.msra.mxu0 %v986
        %2767 = vmatpush.msra.mxu0 %v977
        %2768 = vmatmul.f32.gmra.mxu0 %v1558
        %v2769 = vpop.f32.mrf.mxu0
        %v2770 = vadd.f32 %v2750, %v2769
        %2771 = vdwg.mxu0
        %2772 = vmatpush.msra.mxu0 %v1256
        %2773 = vmatpush.msra.mxu0 %v1247
        %2774 = vmatpush.msra.mxu0 %v1238
        %2775 = vmatpush.msra.mxu0 %v1229
        %2776 = vmatpush.msra.mxu0 %v1220
        %2777 = vmatpush.msra.mxu0 %v1211
        %2778 = vmatpush.msra.mxu0 %v1202
        %2779 = vmatpush.msra.mxu0 %v1193
        %2780 = vmatpush.msra.mxu0 %v1184
        %2781 = vmatpush.msra.mxu0 %v1175
        %2782 = vmatpush.msra.mxu0 %v1166
        %2783 = vmatpush.msra.mxu0 %v1157
        %2784 = vmatpush.msra.mxu0 %v1148
        %2785 = vmatpush.msra.mxu0 %v1139
        %2786 = vmatpush.msra.mxu0 %v1130
        %2787 = vmatpush.msra.mxu0 %v1121
        %2788 = vmatmul.f32.gmra.mxu0 %v1559
        %v2789 = vpop.f32.mrf.mxu0
        %v2790 = vadd.f32 %v2770, %v2789
        %2791 = vdwg.mxu0
        %2792 = vmatpush.msra.mxu0 %v1400
        %2793 = vmatpush.msra.mxu0 %v1391
        %2794 = vmatpush.msra.mxu0 %v1382
        %2795 = vmatpush.msra.mxu0 %v1373
        %2796 = vmatpush.msra.mxu0 %v1364
        %2797 = vmatpush.msra.mxu0 %v1355
        %2798 = vmatpush.msra.mxu0 %v1346
        %2799 = vmatpush.msra.mxu0 %v1337
        %2800 = vmatpush.msra.mxu0 %v1328
        %2801 = vmatpush.msra.mxu0 %v1319
        %2802 = vmatpush.msra.mxu0 %v1310
        %2803 = vmatpush.msra.mxu0 %v1301
        %2804 = vmatpush.msra.mxu0 %v1292
        %2805 = vmatpush.msra.mxu0 %v1283
        %2806 = vmatpush.msra.mxu0 %v1274
        %2807 = vmatpush.msra.mxu0 %v1265
        %2808 = vmatmul.f32.gmra.mxu0 %v1560
        %v2809 = vpop.f32.mrf.mxu0
        %v2810 = vadd.f32 %v2790, %v2809
        %2811 = vdwg.mxu0
        %2812 = vmatpush.msra.mxu0 %v1544
        %2813 = vmatpush.msra.mxu0 %v1535
        %2814 = vmatpush.msra.mxu0 %v1526
        %2815 = vmatpush.msra.mxu0 %v1517
        %2816 = vmatpush.msra.mxu0 %v1508
        %2817 = vmatpush.msra.mxu0 %v1499
        %2818 = vmatpush.msra.mxu0 %v1490
        %2819 = vmatpush.msra.mxu0 %v1481
        %2820 = vmatpush.msra.mxu0 %v1472
        %2821 = vmatpush.msra.mxu0 %v1463
        %2822 = vmatpush.msra.mxu0 %v1454
        %2823 = vmatpush.msra.mxu0 %v1445
        %2824 = vmatpush.msra.mxu0 %v1436
        %2825 = vmatpush.msra.mxu0 %v1427
        %2826 = vmatpush.msra.mxu0 %v1418
        %2827 = vmatpush.msra.mxu0 %v1409
        %2828 = vmatmul.f32.gmra.mxu0 %v1562
        %v2829 = vpop.f32.mrf.mxu0
        %v2830 = vadd.f32 %v2810, %v2829
        %2831 = vdwg.mxu0
        %2832 = vmatpush.msra.mxu0 %v393
        %2833 = vmatpush.msra.mxu0 %v384
        %2834 = vmatpush.msra.mxu0 %v375
        %2835 = vmatpush.msra.mxu0 %v366
        %2836 = vmatpush.msra.mxu0 %v357
        %2837 = vmatpush.msra.mxu0 %v348
        %2838 = vmatpush.msra.mxu0 %v339
        %2839 = vmatpush.msra.mxu0 %v330
        %2840 = vmatpush.msra.mxu0 %v321
        %2841 = vmatpush.msra.mxu0 %v312
        %2842 = vmatpush.msra.mxu0 %v303
        %2843 = vmatpush.msra.mxu0 %v294
        %2844 = vmatpush.msra.mxu0 %v285
        %2845 = vmatpush.msra.mxu0 %v276
        %2846 = vmatpush.msra.mxu0 %v267
        %2847 = vmatpush.msra.mxu0 %v258
        %2848 = vmatmul.f32.gmra.mxu0 %v1553
        %v2849 = vpop.f32.mrf.mxu0
        %v2850 = vadd.f32 0.0, %v2849
        %2851 = vdwg.mxu0
        %2852 = vmatpush.msra.mxu0 %v537
        %2853 = vmatpush.msra.mxu0 %v528
        %2854 = vmatpush.msra.mxu0 %v519
        %2855 = vmatpush.msra.mxu0 %v510
        %2856 = vmatpush.msra.mxu0 %v501
        %2857 = vmatpush.msra.mxu0 %v492
        %2858 = vmatpush.msra.mxu0 %v483
        %2859 = vmatpush.msra.mxu0 %v474
        %2860 = vmatpush.msra.mxu0 %v465
        %2861 = vmatpush.msra.mxu0 %v456
        %2862 = vmatpush.msra.mxu0 %v447
        %2863 = vmatpush.msra.mxu0 %v438
        %2864 = vmatpush.msra.mxu0 %v429
        %2865 = vmatpush.msra.mxu0 %v420
        %2866 = vmatpush.msra.mxu0 %v411
        %2867 = vmatpush.msra.mxu0 %v402
        %2868 = vmatmul.f32.gmra.mxu0 %v1554
        %v2869 = vpop.f32.mrf.mxu0
        %v2870 = vadd.f32 %v2850, %v2869
        %2871 = vdwg.mxu0
        %2872 = vmatpush.msra.mxu0 %v681
        %2873 = vmatpush.msra.mxu0 %v672
        %2874 = vmatpush.msra.mxu0 %v663
        %2875 = vmatpush.msra.mxu0 %v654
        %2876 = vmatpush.msra.mxu0 %v645
        %2877 = vmatpush.msra.mxu0 %v636
        %2878 = vmatpush.msra.mxu0 %v627
        %2879 = vmatpush.msra.mxu0 %v618
        %2880 = vmatpush.msra.mxu0 %v609
        %2881 = vmatpush.msra.mxu0 %v600
        %2882 = vmatpush.msra.mxu0 %v591
        %2883 = vmatpush.msra.mxu0 %v582
        %2884 = vmatpush.msra.mxu0 %v573
        %2885 = vmatpush.msra.mxu0 %v564
        %2886 = vmatpush.msra.mxu0 %v555
        %2887 = vmatpush.msra.mxu0 %v546
        %2888 = vmatmul.f32.gmra.mxu0 %v1555
        %v2889 = vpop.f32.mrf.mxu0
        %v2890 = vadd.f32 %v2870, %v2889
        %2891 = vdwg.mxu0
        %2892 = vmatpush.msra.mxu0 %v825
        %2893 = vmatpush.msra.mxu0 %v816
        %2894 = vmatpush.msra.mxu0 %v807
        %2895 = vmatpush.msra.mxu0 %v798
        %2896 = vmatpush.msra.mxu0 %v789
        %2897 = vmatpush.msra.mxu0 %v780
        %2898 = vmatpush.msra.mxu0 %v771
        %2899 = vmatpush.msra.mxu0 %v762
        %2900 = vmatpush.msra.mxu0 %v753
        %2901 = vmatpush.msra.mxu0 %v744
        %2902 = vmatpush.msra.mxu0 %v735
        %2903 = vmatpush.msra.mxu0 %v726
        %2904 = vmatpush.msra.mxu0 %v717
        %2905 = vmatpush.msra.mxu0 %v708
        %2906 = vmatpush.msra.mxu0 %v699
        %2907 = vmatpush.msra.mxu0 %v690
        %2908 = vmatmul.f32.gmra.mxu0 %v1556
        %v2909 = vpop.f32.mrf.mxu0
        %v2910 = vadd.f32 %v2890, %v2909
        %2911 = vdwg.mxu0
        %2912 = vmatpush.msra.mxu0 %v969
        %2913 = vmatpush.msra.mxu0 %v960
        %2914 = vmatpush.msra.mxu0 %v951
        %2915 = vmatpush.msra.mxu0 %v942
        %2916 = vmatpush.msra.mxu0 %v933
        %2917 = vmatpush.msra.mxu0 %v924
        %2918 = vmatpush.msra.mxu0 %v915
        %2919 = vmatpush.msra.mxu0 %v906
        %2920 = vmatpush.msra.mxu0 %v897
        %2921 = vmatpush.msra.mxu0 %v888
        %2922 = vmatpush.msra.mxu0 %v879
        %2923 = vmatpush.msra.mxu0 %v870
        %2924 = vmatpush.msra.mxu0 %v861
        %2925 = vmatpush.msra.mxu0 %v852
        %2926 = vmatpush.msra.mxu0 %v843
        %2927 = vmatpush.msra.mxu0 %v834
        %2928 = vmatmul.f32.gmra.mxu0 %v1557
        %v2929 = vpop.f32.mrf.mxu0
        %v2930 = vadd.f32 %v2910, %v2929
        %2931 = vdwg.mxu0
        %2932 = vmatpush.msra.mxu0 %v1113
        %2933 = vmatpush.msra.mxu0 %v1104
        %2934 = vmatpush.msra.mxu0 %v1095
        %2935 = vmatpush.msra.mxu0 %v1086
        %2936 = vmatpush.msra.mxu0 %v1077
        %2937 = vmatpush.msra.mxu0 %v1068
        %2938 = vmatpush.msra.mxu0 %v1059
        %2939 = vmatpush.msra.mxu0 %v1050
        %2940 = vmatpush.msra.mxu0 %v1041
        %2941 = vmatpush.msra.mxu0 %v1032
        %2942 = vmatpush.msra.mxu0 %v1023
        %2943 = vmatpush.msra.mxu0 %v1014
        %2944 = vmatpush.msra.mxu0 %v1005
        %2945 = vmatpush.msra.mxu0 %v996
        %2946 = vmatpush.msra.mxu0 %v987
        %2947 = vmatpush.msra.mxu0 %v978
        %2948 = vmatmul.f32.gmra.mxu0 %v1558
        %v2949 = vpop.f32.mrf.mxu0
        %v2950 = vadd.f32 %v2930, %v2949
        %2951 = vdwg.mxu0
        %2952 = vmatpush.msra.mxu0 %v1257
        %2953 = vmatpush.msra.mxu0 %v1248
        %2954 = vmatpush.msra.mxu0 %v1239
        %2955 = vmatpush.msra.mxu0 %v1230
        %2956 = vmatpush.msra.mxu0 %v1221
        %2957 = vmatpush.msra.mxu0 %v1212
        %2958 = vmatpush.msra.mxu0 %v1203
        %2959 = vmatpush.msra.mxu0 %v1194
        %2960 = vmatpush.msra.mxu0 %v1185
        %2961 = vmatpush.msra.mxu0 %v1176
        %2962 = vmatpush.msra.mxu0 %v1167
        %2963 = vmatpush.msra.mxu0 %v1158
        %2964 = vmatpush.msra.mxu0 %v1149
        %2965 = vmatpush.msra.mxu0 %v1140
        %2966 = vmatpush.msra.mxu0 %v1131
        %2967 = vmatpush.msra.mxu0 %v1122
        %2968 = vmatmul.f32.gmra.mxu0 %v1559
        %v2969 = vpop.f32.mrf.mxu0
        %v2970 = vadd.f32 %v2950, %v2969
        %2971 = vdwg.mxu0
        %2972 = vmatpush.msra.mxu0 %v1401
        %2973 = vmatpush.msra.mxu0 %v1392
        %2974 = vmatpush.msra.mxu0 %v1383
        %2975 = vmatpush.msra.mxu0 %v1374
        %2976 = vmatpush.msra.mxu0 %v1365
        %2977 = vmatpush.msra.mxu0 %v1356
        %2978 = vmatpush.msra.mxu0 %v1347
        %2979 = vmatpush.msra.mxu0 %v1338
        %2980 = vmatpush.msra.mxu0 %v1329
        %2981 = vmatpush.msra.mxu0 %v1320
        %2982 = vmatpush.msra.mxu0 %v1311
        %2983 = vmatpush.msra.mxu0 %v1302
        %2984 = vmatpush.msra.mxu0 %v1293
        %2985 = vmatpush.msra.mxu0 %v1284
        %2986 = vmatpush.msra.mxu0 %v1275
        %2987 = vmatpush.msra.mxu0 %v1266
        %2988 = vmatmul.f32.gmra.mxu0 %v1560
        %v2989 = vpop.f32.mrf.mxu0
        %v2990 = vadd.f32 %v2970, %v2989
        %2991 = vdwg.mxu0
        %2992 = vmatpush.msra.mxu0 %v1545
        %2993 = vmatpush.msra.mxu0 %v1536
        %2994 = vmatpush.msra.mxu0 %v1527
        %2995 = vmatpush.msra.mxu0 %v1518
        %2996 = vmatpush.msra.mxu0 %v1509
        %2997 = vmatpush.msra.mxu0 %v1500
        %2998 = vmatpush.msra.mxu0 %v1491
        %2999 = vmatpush.msra.mxu0 %v1482
        %3000 = vmatpush.msra.mxu0 %v1473
        %3001 = vmatpush.msra.mxu0 %v1464
        %3002 = vmatpush.msra.mxu0 %v1455
        %3003 = vmatpush.msra.mxu0 %v1446
        %3004 = vmatpush.msra.mxu0 %v1437
        %3005 = vmatpush.msra.mxu0 %v1428
        %3006 = vmatpush.msra.mxu0 %v1419
        %3007 = vmatpush.msra.mxu0 %v1410
        %3008 = vmatmul.f32.gmra.mxu0 %v1562
        %v3009 = vpop.f32.mrf.mxu0
        %v3010 = vadd.f32 %v2990, %v3009
        %3011 = vdwg.mxu0
        %3012 = vmatpush.msra.mxu0 %v394
        %3013 = vmatpush.msra.mxu0 %v385
        %3014 = vmatpush.msra.mxu0 %v376
        %3015 = vmatpush.msra.mxu0 %v367
        %3016 = vmatpush.msra.mxu0 %v358
        %3017 = vmatpush.msra.mxu0 %v349
        %3018 = vmatpush.msra.mxu0 %v340
        %3019 = vmatpush.msra.mxu0 %v331
        %3020 = vmatpush.msra.mxu0 %v322
        %3021 = vmatpush.msra.mxu0 %v313
        %3022 = vmatpush.msra.mxu0 %v304
        %3023 = vmatpush.msra.mxu0 %v295
        %3024 = vmatpush.msra.mxu0 %v286
        %3025 = vmatpush.msra.mxu0 %v277
        %3026 = vmatpush.msra.mxu0 %v268
        %3027 = vmatpush.msra.mxu0 %v259
        %3028 = vmatmul.f32.gmra.mxu0 %v1553
        %v3029 = vpop.f32.mrf.mxu0
        %v3030 = vadd.f32 0.0, %v3029
        %3031 = vdwg.mxu0
        %3032 = vmatpush.msra.mxu0 %v538
        %3033 = vmatpush.msra.mxu0 %v529
        %3034 = vmatpush.msra.mxu0 %v520
        %3035 = vmatpush.msra.mxu0 %v511
        %3036 = vmatpush.msra.mxu0 %v502
        %3037 = vmatpush.msra.mxu0 %v493
        %3038 = vmatpush.msra.mxu0 %v484
        %3039 = vmatpush.msra.mxu0 %v475
        %3040 = vmatpush.msra.mxu0 %v466
        %3041 = vmatpush.msra.mxu0 %v457
        %3042 = vmatpush.msra.mxu0 %v448
        %3043 = vmatpush.msra.mxu0 %v439
        %3044 = vmatpush.msra.mxu0 %v430
        %3045 = vmatpush.msra.mxu0 %v421
        %3046 = vmatpush.msra.mxu0 %v412
        %3047 = vmatpush.msra.mxu0 %v403
        %3048 = vmatmul.f32.gmra.mxu0 %v1554
        %v3049 = vpop.f32.mrf.mxu0
        %v3050 = vadd.f32 %v3030, %v3049
        %3051 = vdwg.mxu0
        %3052 = vmatpush.msra.mxu0 %v682
        %3053 = vmatpush.msra.mxu0 %v673
        %3054 = vmatpush.msra.mxu0 %v664
        %3055 = vmatpush.msra.mxu0 %v655
        %3056 = vmatpush.msra.mxu0 %v646
        %3057 = vmatpush.msra.mxu0 %v637
        %3058 = vmatpush.msra.mxu0 %v628
        %3059 = vmatpush.msra.mxu0 %v619
        %3060 = vmatpush.msra.mxu0 %v610
        %3061 = vmatpush.msra.mxu0 %v601
        %3062 = vmatpush.msra.mxu0 %v592
        %3063 = vmatpush.msra.mxu0 %v583
        %3064 = vmatpush.msra.mxu0 %v574
        %3065 = vmatpush.msra.mxu0 %v565
        %3066 = vmatpush.msra.mxu0 %v556
        %3067 = vmatpush.msra.mxu0 %v547
        %3068 = vmatmul.f32.gmra.mxu0 %v1555
        %v3069 = vpop.f32.mrf.mxu0
        %v3070 = vadd.f32 %v3050, %v3069
        %3071 = vdwg.mxu0
        %3072 = vmatpush.msra.mxu0 %v826
        %3073 = vmatpush.msra.mxu0 %v817
        %3074 = vmatpush.msra.mxu0 %v808
        %3075 = vmatpush.msra.mxu0 %v799
        %3076 = vmatpush.msra.mxu0 %v790
        %3077 = vmatpush.msra.mxu0 %v781
        %3078 = vmatpush.msra.mxu0 %v772
        %3079 = vmatpush.msra.mxu0 %v763
        %3080 = vmatpush.msra.mxu0 %v754
        %3081 = vmatpush.msra.mxu0 %v745
        %3082 = vmatpush.msra.mxu0 %v736
        %3083 = vmatpush.msra.mxu0 %v727
        %3084 = vmatpush.msra.mxu0 %v718
        %3085 = vmatpush.msra.mxu0 %v709
        %3086 = vmatpush.msra.mxu0 %v700
        %3087 = vmatpush.msra.mxu0 %v691
        %3088 = vmatmul.f32.gmra.mxu0 %v1556
        %v3089 = vpop.f32.mrf.mxu0
        %v3090 = vadd.f32 %v3070, %v3089
        %3091 = vdwg.mxu0
        %3092 = vmatpush.msra.mxu0 %v970
        %3093 = vmatpush.msra.mxu0 %v961
        %3094 = vmatpush.msra.mxu0 %v952
        %3095 = vmatpush.msra.mxu0 %v943
        %3096 = vmatpush.msra.mxu0 %v934
        %3097 = vmatpush.msra.mxu0 %v925
        %3098 = vmatpush.msra.mxu0 %v916
        %3099 = vmatpush.msra.mxu0 %v907
        %3100 = vmatpush.msra.mxu0 %v898
        %3101 = vmatpush.msra.mxu0 %v889
        %3102 = vmatpush.msra.mxu0 %v880
        %3103 = vmatpush.msra.mxu0 %v871
        %3104 = vmatpush.msra.mxu0 %v862
        %3105 = vmatpush.msra.mxu0 %v853
        %3106 = vmatpush.msra.mxu0 %v844
        %3107 = vmatpush.msra.mxu0 %v835
        %3108 = vmatmul.f32.gmra.mxu0 %v1557
        %v3109 = vpop.f32.mrf.mxu0
        %v3110 = vadd.f32 %v3090, %v3109
        %3111 = vdwg.mxu0
        %3112 = vmatpush.msra.mxu0 %v1114
        %3113 = vmatpush.msra.mxu0 %v1105
        %3114 = vmatpush.msra.mxu0 %v1096
        %3115 = vmatpush.msra.mxu0 %v1087
        %3116 = vmatpush.msra.mxu0 %v1078
        %3117 = vmatpush.msra.mxu0 %v1069
        %3118 = vmatpush.msra.mxu0 %v1060
        %3119 = vmatpush.msra.mxu0 %v1051
        %3120 = vmatpush.msra.mxu0 %v1042
        %3121 = vmatpush.msra.mxu0 %v1033
        %3122 = vmatpush.msra.mxu0 %v1024
        %3123 = vmatpush.msra.mxu0 %v1015
        %3124 = vmatpush.msra.mxu0 %v1006
        %3125 = vmatpush.msra.mxu0 %v997
        %3126 = vmatpush.msra.mxu0 %v988
        %3127 = vmatpush.msra.mxu0 %v979
        %3128 = vmatmul.f32.gmra.mxu0 %v1558
        %v3129 = vpop.f32.mrf.mxu0
        %v3130 = vadd.f32 %v3110, %v3129
        %3131 = vdwg.mxu0
        %3132 = vmatpush.msra.mxu0 %v1258
        %3133 = vmatpush.msra.mxu0 %v1249
        %3134 = vmatpush.msra.mxu0 %v1240
        %3135 = vmatpush.msra.mxu0 %v1231
        %3136 = vmatpush.msra.mxu0 %v1222
        %3137 = vmatpush.msra.mxu0 %v1213
        %3138 = vmatpush.msra.mxu0 %v1204
        %3139 = vmatpush.msra.mxu0 %v1195
        %3140 = vmatpush.msra.mxu0 %v1186
        %3141 = vmatpush.msra.mxu0 %v1177
        %3142 = vmatpush.msra.mxu0 %v1168
        %3143 = vmatpush.msra.mxu0 %v1159
        %3144 = vmatpush.msra.mxu0 %v1150
        %3145 = vmatpush.msra.mxu0 %v1141
        %3146 = vmatpush.msra.mxu0 %v1132
        %3147 = vmatpush.msra.mxu0 %v1123
        %3148 = vmatmul.f32.gmra.mxu0 %v1559
        %v3149 = vpop.f32.mrf.mxu0
        %v3150 = vadd.f32 %v3130, %v3149
        %3151 = vdwg.mxu0
        %3152 = vmatpush.msra.mxu0 %v1402
        %3153 = vmatpush.msra.mxu0 %v1393
        %3154 = vmatpush.msra.mxu0 %v1384
        %3155 = vmatpush.msra.mxu0 %v1375
        %3156 = vmatpush.msra.mxu0 %v1366
        %3157 = vmatpush.msra.mxu0 %v1357
        %3158 = vmatpush.msra.mxu0 %v1348
        %3159 = vmatpush.msra.mxu0 %v1339
        %3160 = vmatpush.msra.mxu0 %v1330
        %3161 = vmatpush.msra.mxu0 %v1321
        %3162 = vmatpush.msra.mxu0 %v1312
        %3163 = vmatpush.msra.mxu0 %v1303
        %3164 = vmatpush.msra.mxu0 %v1294
        %3165 = vmatpush.msra.mxu0 %v1285
        %3166 = vmatpush.msra.mxu0 %v1276
        %3167 = vmatpush.msra.mxu0 %v1267
        %3168 = vmatmul.f32.gmra.mxu0 %v1560
        %v3169 = vpop.f32.mrf.mxu0
        %v3170 = vadd.f32 %v3150, %v3169
        %3171 = vdwg.mxu0
        %3172 = vmatpush.msra.mxu0 %v1546
        %3173 = vmatpush.msra.mxu0 %v1537
        %3174 = vmatpush.msra.mxu0 %v1528
        %3175 = vmatpush.msra.mxu0 %v1519
        %3176 = vmatpush.msra.mxu0 %v1510
        %3177 = vmatpush.msra.mxu0 %v1501
        %3178 = vmatpush.msra.mxu0 %v1492
        %3179 = vmatpush.msra.mxu0 %v1483
        %3180 = vmatpush.msra.mxu0 %v1474
        %3181 = vmatpush.msra.mxu0 %v1465
        %3182 = vmatpush.msra.mxu0 %v1456
        %3183 = vmatpush.msra.mxu0 %v1447
        %3184 = vmatpush.msra.mxu0 %v1438
        %3185 = vmatpush.msra.mxu0 %v1429
        %3186 = vmatpush.msra.mxu0 %v1420
        %3187 = vmatpush.msra.mxu0 %v1411
        %3188 = vmatmul.f32.gmra.mxu0 %v1562
        %v3189 = vpop.f32.mrf.mxu0
        %v3190 = vadd.f32 %v3170, %v3189
        %3191 = vdwg.mxu0
        %v3200 = vrot.slane %v1930, 6
        %v3201 = vrot.slane %v2110, 4
        %v3202 = vrot.slane %v2290, 2
        %v3203 = vrot.slane %v2650, 6
        %v3204 = vrot.slane %v2830, 4
        %v3205 = vrot.slane %v3010, 2
        %vm3206 = vcmask 1041408
        %v3207 = vsel %vm3206, %v1750, %v3200
        %vm3208 = vcmask 1045508
        %v3209 = vsel %vm3208, %v3201, %v3202
        %vm3210 = vcmask 1043456
        %v3211 = vsel %vm3210, %v3207, %v3209
        %v3212 = vsel %vm3206, %v2470, %v3203
        %v3213 = vsel %vm3208, %v3204, %v3205
        %v3214 = vsel %vm3210, %v3212, %v3213
        %v3217 = vadd.f32 %v245, %v3211
        %v3218 = vadd.f32 %v246, %v3214
        %v3219 = vadd.f32 %v247, %v3190
        %3220 = vst [vmem:[#allocation2] sm:$0xff] %v3217
        %3221 = vst [vmem:[#allocation2 + $0x8] sm:$0xff] %v3218
        %3222 = vst [vmem:[#allocation2 + $0x10] sm:$0x3] %v3219
        %p3223 = scmp.eq.s32.totalorder %s17, 1
        // Predicated region
        $region45: #{forward.9} parent=39 // pred_check
          %p3224 = pneg %p3223
        $region46: #{forward.9} parent=39 // pred_check_branch
          %3226 = sbr.rel (%p3224) target = $region48
        $region47: #{forward.9} parent=39 // pred_region
          %v3227 = vld [vmem:[#allocation2] sm:$0xff]
          %v3228 = vld [vmem:[#allocation2 + $0x8] sm:$0xff]
          %v3229 = vld [vmem:[#allocation2 + $0x10] sm:$0x3]
          %v3230 = vld [vmem:[%s2] sm:$0xff]
          %v3231 = vld [vmem:[%s2 + $0x8] sm:$0x1]
          %v3234 = vperm.slane %v3230, 0
          %v3235 = vperm.slane %v3230, 1
          %v3236 = vperm.slane %v3230, 2
          %v3237 = vperm.slane %v3230, 3
          %v3238 = vperm.slane %v3230, 4
          %v3239 = vperm.slane %v3230, 5
          %v3240 = vperm.slane %v3230, 6
          %v3241 = vperm.slane %v3230, 7
          %v3242 = vperm.slane %v3231, 0
          %v3244 = vrot.slane %v3235, 6
          %v3245 = vrot.slane %v3236, 4
          %v3246 = vrot.slane %v3237, 2
          %v3247 = vrot.slane %v3239, 6
          %v3248 = vrot.slane %v3240, 4
          %v3249 = vrot.slane %v3241, 2
          %v3250 = vsel %vm3206, %v3234, %v3244
          %v3251 = vsel %vm3208, %v3245, %v3246
          %v3252 = vsel %vm3210, %v3250, %v3251
          %v3253 = vsel %vm3206, %v3238, %v3247
          %v3254 = vsel %vm3208, %v3248, %v3249
          %v3255 = vsel %vm3210, %v3253, %v3254
          %v3258 = vadd.f32 %v3227, %v3252
          %v3259 = vadd.f32 %v3228, %v3255
          %v3260 = vadd.f32 %v3229, %v3242
          %v3261 = vmax.f32 %v3258, 0.0
          %v3262 = vmax.f32 %v3259, 0.0
          %v3263 = vmax.f32 %v3260, 0.0
          %v3264 = vld [vmem:[%s3] sm:$0xff]
          %v3265 = vld [vmem:[%s3 + $0x8] sm:$0xff]
          %v3266 = vld [vmem:[%s3 + $0x10] sm:$0xff]
          %v3267 = vld [vmem:[%s3 + $0x18] sm:$0xff]
          %v3268 = vld [vmem:[%s3 + $0x20] sm:$0xff]
          %v3269 = vld [vmem:[%s3 + $0x28] sm:$0xff]
          %v3270 = vld [vmem:[%s3 + $0x30] sm:$0xff]
          %v3271 = vld [vmem:[%s3 + $0x38] sm:$0xff]
          %v3272 = vld [vmem:[%s3 + $0x40] sm:$0xff]
          %v3273 = vld [vmem:[%s3 + $0x48] sm:$0xff]
          %v3274 = vld [vmem:[%s3 + $0x50] sm:$0xff]
          %v3275 = vld [vmem:[%s3 + $0x58] sm:$0xff]
          %v3276 = vld [vmem:[%s3 + $0x60] sm:$0xff]
          %v3277 = vld [vmem:[%s3 + $0x68] sm:$0xff]
          %v3278 = vld [vmem:[%s3 + $0x70] sm:$0xff]
          %v3279 = vld [vmem:[%s3 + $0x78] sm:$0xff]
          %v3280 = vld [vmem:[%s3 + $0x80] sm:$0xff]
          %v3281 = vld [vmem:[%s3 + $0x88] sm:$0xff]
          %v3282 = vld [vmem:[%s3 + $0x90] sm:$0xff]
          %v3283 = vld [vmem:[%s3 + $0x98] sm:$0xff]
          %v3284 = vld [vmem:[%s3 + $0xa0] sm:$0xff]
          %v3285 = vld [vmem:[%s3 + $0xa8] sm:$0xff]
          %v3286 = vld [vmem:[%s3 + $0xb0] sm:$0xff]
          %v3287 = vld [vmem:[%s3 + $0xb8] sm:$0xff]
          %v3288 = vld [vmem:[%s3 + $0xc0] sm:$0xff]
          %v3289 = vld [vmem:[%s3 + $0xc8] sm:$0xff]
          %v3290 = vld [vmem:[%s3 + $0xd0] sm:$0xff]
          %v3291 = vld [vmem:[%s3 + $0xd8] sm:$0xff]
          %v3292 = vld [vmem:[%s3 + $0xe0] sm:$0xff]
          %v3293 = vld [vmem:[%s3 + $0xe8] sm:$0xff]
          %v3294 = vld [vmem:[%s3 + $0xf0] sm:$0xff]
          %v3295 = vld [vmem:[%s3 + $0xf8] sm:$0xff]
          %v3296 = vld [vmem:[%s3 + $0x100] sm:$0xff]
          %v3297 = vld [vmem:[%s3 + $0x108] sm:$0xff]
          %v3298 = vld [vmem:[%s3 + $0x110] sm:$0xff]
          %v3299 = vld [vmem:[%s3 + $0x118] sm:$0xff]
          %v3300 = vld [vmem:[%s3 + $0x120] sm:$0xff]
          %v3301 = vld [vmem:[%s3 + $0x128] sm:$0xff]
          %v3302 = vld [vmem:[%s3 + $0x130] sm:$0xff]
          %v3303 = vld [vmem:[%s3 + $0x138] sm:$0xff]
          %v3304 = vld [vmem:[%s3 + $0x140] sm:$0xff]
          %v3305 = vld [vmem:[%s3 + $0x148] sm:$0xff]
          %v3306 = vld [vmem:[%s3 + $0x150] sm:$0xff]
          %v3307 = vld [vmem:[%s3 + $0x158] sm:$0xff]
          %v3308 = vld [vmem:[%s3 + $0x160] sm:$0xff]
          %v3309 = vld [vmem:[%s3 + $0x168] sm:$0xff]
          %v3310 = vld [vmem:[%s3 + $0x170] sm:$0xff]
          %v3311 = vld [vmem:[%s3 + $0x178] sm:$0xff]
          %v3312 = vld [vmem:[%s3 + $0x180] sm:$0xff]
          %v3313 = vld [vmem:[%s3 + $0x188] sm:$0xff]
          %v3314 = vld [vmem:[%s3 + $0x190] sm:$0xff]
          %v3315 = vld [vmem:[%s3 + $0x198] sm:$0xff]
          %v3316 = vld [vmem:[%s3 + $0x1a0] sm:$0xff]
          %v3317 = vld [vmem:[%s3 + $0x1a8] sm:$0xff]
          %v3318 = vld [vmem:[%s3 + $0x1b0] sm:$0xff]
          %v3319 = vld [vmem:[%s3 + $0x1b8] sm:$0xff]
          %v3320 = vld [vmem:[%s3 + $0x1c0] sm:$0xff]
          %v3321 = vld [vmem:[%s3 + $0x1c8] sm:$0xff]
          %v3322 = vld [vmem:[%s3 + $0x1d0] sm:$0xff]
          %v3323 = vld [vmem:[%s3 + $0x1d8] sm:$0xff]
          %v3324 = vld [vmem:[%s3 + $0x1e0] sm:$0xff]
          %v3325 = vld [vmem:[%s3 + $0x1e8] sm:$0xff]
          %v3326 = vld [vmem:[%s3 + $0x1f0] sm:$0xff]
          %v3327 = vld [vmem:[%s3 + $0x1f8] sm:$0xff]
          %v3328 = vld [vmem:[%s3 + $0x200] sm:$0xff]
          %v3329 = vld [vmem:[%s3 + $0x208] sm:$0xff]
          %v3330 = vld [vmem:[%s3 + $0x210] sm:$0xff]
          %v3331 = vld [vmem:[%s3 + $0x218] sm:$0xff]
          %v3332 = vld [vmem:[%s3 + $0x220] sm:$0xff]
          %v3333 = vld [vmem:[%s3 + $0x228] sm:$0xff]
          %v3334 = vld [vmem:[%s3 + $0x230] sm:$0xff]
          %v3335 = vld [vmem:[%s3 + $0x238] sm:$0xff]
          %v3336 = vld [vmem:[%s3 + $0x240] sm:$0xff]
          %v3337 = vld [vmem:[%s3 + $0x248] sm:$0xff]
          %v3338 = vld [vmem:[%s3 + $0x250] sm:$0xff]
          %v3339 = vld [vmem:[%s3 + $0x258] sm:$0xff]
          %v3340 = vld [vmem:[%s3 + $0x260] sm:$0xff]
          %v3341 = vld [vmem:[%s3 + $0x268] sm:$0xff]
          %v3342 = vld [vmem:[%s3 + $0x270] sm:$0xff]
          %v3343 = vld [vmem:[%s3 + $0x278] sm:$0xff]
          %v3344 = vld [vmem:[%s3 + $0x280] sm:$0xff]
          %v3345 = vld [vmem:[%s3 + $0x288] sm:$0xff]
          %v3346 = vld [vmem:[%s3 + $0x290] sm:$0xff]
          %v3347 = vld [vmem:[%s3 + $0x298] sm:$0xff]
          %v3348 = vld [vmem:[%s3 + $0x2a0] sm:$0xff]
          %v3349 = vld [vmem:[%s3 + $0x2a8] sm:$0xff]
          %v3350 = vld [vmem:[%s3 + $0x2b0] sm:$0xff]
          %v3351 = vld [vmem:[%s3 + $0x2b8] sm:$0xff]
          %v3352 = vld [vmem:[%s3 + $0x2c0] sm:$0xff]
          %v3353 = vld [vmem:[%s3 + $0x2c8] sm:$0xff]
          %v3354 = vld [vmem:[%s3 + $0x2d0] sm:$0xff]
          %v3355 = vld [vmem:[%s3 + $0x2d8] sm:$0xff]
          %v3356 = vld [vmem:[%s3 + $0x2e0] sm:$0xff]
          %v3357 = vld [vmem:[%s3 + $0x2e8] sm:$0xff]
          %v3358 = vld [vmem:[%s3 + $0x2f0] sm:$0xff]
          %v3359 = vld [vmem:[%s3 + $0x2f8] sm:$0xff]
          %v3360 = vld [vmem:[%s3 + $0x300] sm:$0xff]
          %v3361 = vld [vmem:[%s3 + $0x308] sm:$0xff]
          %v3362 = vld [vmem:[%s3 + $0x310] sm:$0xff]
          %v3363 = vld [vmem:[%s3 + $0x318] sm:$0xff]
          %v3364 = vld [vmem:[%s3 + $0x320] sm:$0xff]
          %v3365 = vld [vmem:[%s3 + $0x328] sm:$0xff]
          %v3366 = vld [vmem:[%s3 + $0x330] sm:$0xff]
          %v3367 = vld [vmem:[%s3 + $0x338] sm:$0xff]
          %v3368 = vld [vmem:[%s3 + $0x340] sm:$0xff]
          %v3369 = vld [vmem:[%s3 + $0x348] sm:$0xff]
          %v3370 = vld [vmem:[%s3 + $0x350] sm:$0xff]
          %v3371 = vld [vmem:[%s3 + $0x358] sm:$0xff]
          %v3372 = vld [vmem:[%s3 + $0x360] sm:$0xff]
          %v3373 = vld [vmem:[%s3 + $0x368] sm:$0xff]
          %v3374 = vld [vmem:[%s3 + $0x370] sm:$0xff]
          %v3375 = vld [vmem:[%s3 + $0x378] sm:$0xff]
          %v3376 = vld [vmem:[%s3 + $0x380] sm:$0xff]
          %v3377 = vld [vmem:[%s3 + $0x388] sm:$0xff]
          %v3378 = vld [vmem:[%s3 + $0x390] sm:$0xff]
          %v3379 = vld [vmem:[%s3 + $0x398] sm:$0xff]
          %v3380 = vld [vmem:[%s3 + $0x3a0] sm:$0xff]
          %v3381 = vld [vmem:[%s3 + $0x3a8] sm:$0xff]
          %v3382 = vld [vmem:[%s3 + $0x3b0] sm:$0xff]
          %v3383 = vld [vmem:[%s3 + $0x3b8] sm:$0xff]
          %v3384 = vld [vmem:[%s3 + $0x3c0] sm:$0xff]
          %v3385 = vld [vmem:[%s3 + $0x3c8] sm:$0xff]
          %v3386 = vld [vmem:[%s3 + $0x3d0] sm:$0xff]
          %v3387 = vld [vmem:[%s3 + $0x3d8] sm:$0xff]
          %v3388 = vld [vmem:[%s3 + $0x3e0] sm:$0xff]
          %v3389 = vld [vmem:[%s3 + $0x3e8] sm:$0xff]
          %v3390 = vld [vmem:[%s3 + $0x3f0] sm:$0xff]
          %v3391 = vld [vmem:[%s3 + $0x3f8] sm:$0xff]
          %v3392 = vld [vmem:[%s3 + $0x400] sm:$0xff]
          %v3393 = vld [vmem:[%s3 + $0x408] sm:$0xff]
          %v3394 = vld [vmem:[%s3 + $0x410] sm:$0xff]
          %v3395 = vld [vmem:[%s3 + $0x418] sm:$0xff]
          %v3396 = vld [vmem:[%s3 + $0x420] sm:$0xff]
          %v3397 = vld [vmem:[%s3 + $0x428] sm:$0xff]
          %v3398 = vld [vmem:[%s3 + $0x430] sm:$0xff]
          %v3399 = vld [vmem:[%s3 + $0x438] sm:$0xff]
          %v3400 = vld [vmem:[%s3 + $0x440] sm:$0xff]
          %v3401 = vld [vmem:[%s3 + $0x448] sm:$0xff]
          %v3402 = vld [vmem:[%s3 + $0x450] sm:$0xff]
          %v3403 = vld [vmem:[%s3 + $0x458] sm:$0xff]
          %v3404 = vld [vmem:[%s3 + $0x460] sm:$0xff]
          %v3405 = vld [vmem:[%s3 + $0x468] sm:$0xff]
          %v3406 = vld [vmem:[%s3 + $0x470] sm:$0xff]
          %v3407 = vld [vmem:[%s3 + $0x478] sm:$0xff]
          %v3408 = vld [vmem:[%s4] sm:$0x1]
          %v3410 = vperm.slane %v3408, 0
          %3415 = vst [vmem:[#allocation1] ss:$4 sm:$0xff] %v3261
          %s3416 = scalar_lea.vmem [#allocation1], 32
          %3417 = vst [vmem:[%s3416] ss:$4 sm:$0xff] %v3262
          %v3418 = vld.sshfl [vmem:[#allocation1] sm:$0xff pattern:$0x73625140]
          %v3419 = vld.sshfl [vmem:[#allocation1 + $0x8] sm:$0xff pattern:$0x73625140]
          %v3420 = vld.sshfl [vmem:[#allocation1 + $0x10] sm:$0xff pattern:$0x73625140]
          %v3421 = vld.sshfl [vmem:[#allocation1 + $0x18] sm:$0xff pattern:$0x73625140]
          %v3422 = vld.sshfl [vmem:[#allocation1 + $0x20] sm:$0xff pattern:$0x73625140]
          %v3423 = vld.sshfl [vmem:[#allocation1 + $0x28] sm:$0xff pattern:$0x73625140]
          %v3424 = vld.sshfl [vmem:[#allocation1 + $0x30] sm:$0xff pattern:$0x73625140]
          %v3425 = vld.sshfl [vmem:[#allocation1 + $0x38] sm:$0xff pattern:$0x73625140]
          %3426 = vst [vmem:[#allocation1] ss:$4 sm:$0xff] %v3263
          %v3427 = vld.sshfl [vmem:[#allocation1] sm:$0xff pattern:$0x73625140]
          %3437 = vmatpush.msra.mxu0 %v3279
          %3438 = vmatpush.msra.mxu0 %v3278
          %3439 = vmatpush.msra.mxu0 %v3277
          %3440 = vmatpush.msra.mxu0 %v3276
          %3441 = vmatpush.msra.mxu0 %v3275
          %3442 = vmatpush.msra.mxu0 %v3274
          %3443 = vmatpush.msra.mxu0 %v3273
          %3444 = vmatpush.msra.mxu0 %v3272
          %3445 = vmatpush.msra.mxu0 %v3271
          %3446 = vmatpush.msra.mxu0 %v3270
          %3447 = vmatpush.msra.mxu0 %v3269
          %3448 = vmatpush.msra.mxu0 %v3268
          %3449 = vmatpush.msra.mxu0 %v3267
          %3450 = vmatpush.msra.mxu0 %v3266
          %3451 = vmatpush.msra.mxu0 %v3265
          %3452 = vmatpush.msra.mxu0 %v3264
          %3453 = vmatmul.f32.gmra.mxu0 %v3418
          %v3454 = vpop.f32.mrf.mxu0
          %v3455 = vadd.f32 %v3410, %v3454
          %3456 = vdwg.mxu0
          %3457 = vmatpush.msra.mxu0 %v3295
          %3458 = vmatpush.msra.mxu0 %v3294
          %3459 = vmatpush.msra.mxu0 %v3293
          %3460 = vmatpush.msra.mxu0 %v3292
          %3461 = vmatpush.msra.mxu0 %v3291
          %3462 = vmatpush.msra.mxu0 %v3290
          %3463 = vmatpush.msra.mxu0 %v3289
          %3464 = vmatpush.msra.mxu0 %v3288
          %3465 = vmatpush.msra.mxu0 %v3287
          %3466 = vmatpush.msra.mxu0 %v3286
          %3467 = vmatpush.msra.mxu0 %v3285
          %3468 = vmatpush.msra.mxu0 %v3284
          %3469 = vmatpush.msra.mxu0 %v3283
          %3470 = vmatpush.msra.mxu0 %v3282
          %3471 = vmatpush.msra.mxu0 %v3281
          %3472 = vmatpush.msra.mxu0 %v3280
          %3473 = vmatmul.f32.gmra.mxu0 %v3419
          %v3474 = vpop.f32.mrf.mxu0
          %v3475 = vadd.f32 %v3455, %v3474
          %3476 = vdwg.mxu0
          %3477 = vmatpush.msra.mxu0 %v3311
          %3478 = vmatpush.msra.mxu0 %v3310
          %3479 = vmatpush.msra.mxu0 %v3309
          %3480 = vmatpush.msra.mxu0 %v3308
          %3481 = vmatpush.msra.mxu0 %v3307
          %3482 = vmatpush.msra.mxu0 %v3306
          %3483 = vmatpush.msra.mxu0 %v3305
          %3484 = vmatpush.msra.mxu0 %v3304
          %3485 = vmatpush.msra.mxu0 %v3303
          %3486 = vmatpush.msra.mxu0 %v3302
          %3487 = vmatpush.msra.mxu0 %v3301
          %3488 = vmatpush.msra.mxu0 %v3300
          %3489 = vmatpush.msra.mxu0 %v3299
          %3490 = vmatpush.msra.mxu0 %v3298
          %3491 = vmatpush.msra.mxu0 %v3297
          %3492 = vmatpush.msra.mxu0 %v3296
          %3493 = vmatmul.f32.gmra.mxu0 %v3420
          %v3494 = vpop.f32.mrf.mxu0
          %v3495 = vadd.f32 %v3475, %v3494
          %3496 = vdwg.mxu0
          %3497 = vmatpush.msra.mxu0 %v3327
          %3498 = vmatpush.msra.mxu0 %v3326
          %3499 = vmatpush.msra.mxu0 %v3325
          %3500 = vmatpush.msra.mxu0 %v3324
          %3501 = vmatpush.msra.mxu0 %v3323
          %3502 = vmatpush.msra.mxu0 %v3322
          %3503 = vmatpush.msra.mxu0 %v3321
          %3504 = vmatpush.msra.mxu0 %v3320
          %3505 = vmatpush.msra.mxu0 %v3319
          %3506 = vmatpush.msra.mxu0 %v3318
          %3507 = vmatpush.msra.mxu0 %v3317
          %3508 = vmatpush.msra.mxu0 %v3316
          %3509 = vmatpush.msra.mxu0 %v3315
          %3510 = vmatpush.msra.mxu0 %v3314
          %3511 = vmatpush.msra.mxu0 %v3313
          %3512 = vmatpush.msra.mxu0 %v3312
          %3513 = vmatmul.f32.gmra.mxu0 %v3421
          %v3514 = vpop.f32.mrf.mxu0
          %v3515 = vadd.f32 %v3495, %v3514
          %3516 = vdwg.mxu0
          %3517 = vmatpush.msra.mxu0 %v3343
          %3518 = vmatpush.msra.mxu0 %v3342
          %3519 = vmatpush.msra.mxu0 %v3341
          %3520 = vmatpush.msra.mxu0 %v3340
          %3521 = vmatpush.msra.mxu0 %v3339
          %3522 = vmatpush.msra.mxu0 %v3338
          %3523 = vmatpush.msra.mxu0 %v3337
          %3524 = vmatpush.msra.mxu0 %v3336
          %3525 = vmatpush.msra.mxu0 %v3335
          %3526 = vmatpush.msra.mxu0 %v3334
          %3527 = vmatpush.msra.mxu0 %v3333
          %3528 = vmatpush.msra.mxu0 %v3332
          %3529 = vmatpush.msra.mxu0 %v3331
          %3530 = vmatpush.msra.mxu0 %v3330
          %3531 = vmatpush.msra.mxu0 %v3329
          %3532 = vmatpush.msra.mxu0 %v3328
          %3533 = vmatmul.f32.gmra.mxu0 %v3422
          %v3534 = vpop.f32.mrf.mxu0
          %v3535 = vadd.f32 %v3515, %v3534
          %3536 = vdwg.mxu0
          %3537 = vmatpush.msra.mxu0 %v3359
          %3538 = vmatpush.msra.mxu0 %v3358
          %3539 = vmatpush.msra.mxu0 %v3357
          %3540 = vmatpush.msra.mxu0 %v3356
          %3541 = vmatpush.msra.mxu0 %v3355
          %3542 = vmatpush.msra.mxu0 %v3354
          %3543 = vmatpush.msra.mxu0 %v3353
          %3544 = vmatpush.msra.mxu0 %v3352
          %3545 = vmatpush.msra.mxu0 %v3351
          %3546 = vmatpush.msra.mxu0 %v3350
          %3547 = vmatpush.msra.mxu0 %v3349
          %3548 = vmatpush.msra.mxu0 %v3348
          %3549 = vmatpush.msra.mxu0 %v3347
          %3550 = vmatpush.msra.mxu0 %v3346
          %3551 = vmatpush.msra.mxu0 %v3345
          %3552 = vmatpush.msra.mxu0 %v3344
          %3553 = vmatmul.f32.gmra.mxu0 %v3423
          %v3554 = vpop.f32.mrf.mxu0
          %v3555 = vadd.f32 %v3535, %v3554
          %3556 = vdwg.mxu0
          %3557 = vmatpush.msra.mxu0 %v3375
          %3558 = vmatpush.msra.mxu0 %v3374
          %3559 = vmatpush.msra.mxu0 %v3373
          %3560 = vmatpush.msra.mxu0 %v3372
          %3561 = vmatpush.msra.mxu0 %v3371
          %3562 = vmatpush.msra.mxu0 %v3370
          %3563 = vmatpush.msra.mxu0 %v3369
          %3564 = vmatpush.msra.mxu0 %v3368
          %3565 = vmatpush.msra.mxu0 %v3367
          %3566 = vmatpush.msra.mxu0 %v3366
          %3567 = vmatpush.msra.mxu0 %v3365
          %3568 = vmatpush.msra.mxu0 %v3364
          %3569 = vmatpush.msra.mxu0 %v3363
          %3570 = vmatpush.msra.mxu0 %v3362
          %3571 = vmatpush.msra.mxu0 %v3361
          %3572 = vmatpush.msra.mxu0 %v3360
          %3573 = vmatmul.f32.gmra.mxu0 %v3424
          %v3574 = vpop.f32.mrf.mxu0
          %v3575 = vadd.f32 %v3555, %v3574
          %3576 = vdwg.mxu0
          %3577 = vmatpush.msra.mxu0 %v3391
          %3578 = vmatpush.msra.mxu0 %v3390
          %3579 = vmatpush.msra.mxu0 %v3389
          %3580 = vmatpush.msra.mxu0 %v3388
          %3581 = vmatpush.msra.mxu0 %v3387
          %3582 = vmatpush.msra.mxu0 %v3386
          %3583 = vmatpush.msra.mxu0 %v3385
          %3584 = vmatpush.msra.mxu0 %v3384
          %3585 = vmatpush.msra.mxu0 %v3383
          %3586 = vmatpush.msra.mxu0 %v3382
          %3587 = vmatpush.msra.mxu0 %v3381
          %3588 = vmatpush.msra.mxu0 %v3380
          %3589 = vmatpush.msra.mxu0 %v3379
          %3590 = vmatpush.msra.mxu0 %v3378
          %3591 = vmatpush.msra.mxu0 %v3377
          %3592 = vmatpush.msra.mxu0 %v3376
          %3593 = vmatmul.f32.gmra.mxu0 %v3425
          %v3594 = vpop.f32.mrf.mxu0
          %v3595 = vadd.f32 %v3575, %v3594
          %3596 = vdwg.mxu0
          %3597 = vmatpush.msra.mxu0 %v3407
          %3598 = vmatpush.msra.mxu0 %v3406
          %3599 = vmatpush.msra.mxu0 %v3405
          %3600 = vmatpush.msra.mxu0 %v3404
          %3601 = vmatpush.msra.mxu0 %v3403
          %3602 = vmatpush.msra.mxu0 %v3402
          %3603 = vmatpush.msra.mxu0 %v3401
          %3604 = vmatpush.msra.mxu0 %v3400
          %3605 = vmatpush.msra.mxu0 %v3399
          %3606 = vmatpush.msra.mxu0 %v3398
          %3607 = vmatpush.msra.mxu0 %v3397
          %3608 = vmatpush.msra.mxu0 %v3396
          %3609 = vmatpush.msra.mxu0 %v3395
          %3610 = vmatpush.msra.mxu0 %v3394
          %3611 = vmatpush.msra.mxu0 %v3393
          %3612 = vmatpush.msra.mxu0 %v3392
          %3613 = vmatmul.f32.gmra.mxu0 %v3427
          %v3614 = vpop.f32.mrf.mxu0
          %v3615 = vadd.f32 %v3595, %v3614
          %3616 = vdwg.mxu0
          %vm3617 = vcmask 58368
          %3618 = vst.msk [vmem:[#allocation3] sm:$0x3] %vm3617, %v3615
        $region48: #{forward.9} parent=39 // pred_fallthru
          _
        // Predicated region
        $region49: #{forward.9} parent=39 // pred_check
          %p3619 = pneg %p145
        $region50: #{forward.9} parent=39 // pred_check_branch
          %3621 = sbr.rel (%p3619) target = $region52
        $region51: #{forward.9} parent=39 // pred_region
          %3623 = vsyncadd [#allocation4], 0
          %s3625 = sshll.u32 [#allocation3], 4
          %s3626 = int_to_ptr.vmem [resolvable:$true] %s3625
          %s3627 = sshll.u32 %s5, 4
          %s3628 = int_to_ptr.hbm [resolvable:$true] %s3627
          %3630 = dma.vmem_to_hbm [thread:$0]  %s3626, 32, %s3628, [#allocation4]
        $region52: #{forward.9} parent=39 // pred_fallthru
          _
        // Predicated region
        $region53: #{forward.9} parent=39 // pred_check
          %p3631 = pneg %p145
        $region54: #{forward.9} parent=39 // pred_check_branch
          %3633 = sbr.rel (%p3631) target = $region56
        $region55: #{forward.9} parent=39 // pred_region
          %3635 = dma.done [#allocation4], 32
        $region56: #{forward.9} parent=39 // pred_fallthru
          _
      $region40: #{forward.9} parent=5 // pred_fallthru
        _
      %p3636 = scmp.le.s32.totalorder 2, %s12
      // Predicated region
      $region57: #{forward.9} parent=5 // pred_check
        %p3637 = pneg %p3636
      $region58: #{forward.9} parent=5 // pred_check_branch
        %3639 = sbr.rel (%p3637) target = $region60
      $region59: #{forward.9} parent=5 // pred_region
        %s3640 = ssub.s32 %s12, 2
      $region60: #{forward.9} parent=5 // pred_fallthru
        _
    $region6: #{forward.9} parent=1 // loop_footer
      %s16 = sadd.s32 1, %s12
    $region7: #{forward.9} parent=1 // loop_footer_branch
      %11 = sbr.rel target = $region3
    $region8: #{forward.9} parent=1 // loop_exit
      _
    %3641 = vsyncpa [#allocation4], 1
    %s3642 = scalar_lea.sflag [#allocation4], 1
    %3643 = vsyncpa %s3642, 1

// kernel: forward.8
$region0: #{forward.8}
  #allocation0 [shape = 'u32[]', space=smem, size = 0x4, offset = 0x4, fixed_abs, tag = 'smem constant byte address 0x4 - core index']
  #allocation1 [shape = 'u32[72,128]{1,0:T(1,128)}', space=vmem, size = 0x9000, scoped, tag = 'internal scratch']
  %s0 = inlined_call_operand.vmem [shape: f32[2,9600], index: 0, kind: input, shape index: {}]
  %s1 = inlined_call_operand.hbm [shape: f32[9600,2304], index: 1, kind: input, shape index: {}]
  %s2 = inlined_call_operand.vmem [shape: f32[1,2304], index: 2, kind: input, shape index: {}]
  %s3 = inlined_call_operand.vmem [shape: f32[2,2304], index: 3, kind: output, shape index: {}]
  %s4 = sld [smem:[#allocation0]]
  $region57: #{forward.8} parent=0
    _
  %s6 = ssub.s32 1, %s4
  %s7 = scalar_select 0, %s6, %s4
  $region1: #{forward.8} parent=0
    #allocation2 [shape = 'u8[17694720]{0}', space=vmem, size = 0x10e0000, scoped, tag = 'input window, operand 1']
    #allocation3 [shape = 's32[2]{0}', space=sflag, size = 0x8, scoped, tag = 'scoped memory for forward.8']
    %8 = vsyncpa [#allocation3], 0
    %s9 = scalar_lea.sflag [#allocation3], 1
    %10 = vsyncpa %s9, 0
    loop: start=0, step=1, limit=12
    $region2: #{forward.8} parent=1 // loop_pre_header
      _
    $region3: #{forward.8} parent=1 // loop_header
      %s12 = sphi 0, %s16
      %p13 = scmp.ge.s32.totalorder %s12, 12
      %s19 = sphi 0, %s31
      %s20 = sphi 0, %s27
      %s21 = sphi 0, %s19
      %s22 = sphi 0, %s20
      %s23 = sphi 0, %s21
      %s24 = sphi 0, %s22
      %s34 = sphi 0, %s36
      %s37 = sphi 0, %s34
      %s38 = sphi 0, %s37
      %s54 = sphi 0, %s38
      %s62 = sphi 0, %s64
      %s65 = sphi 0, %s62
      %s66 = sphi 0, %s65
      %s82 = sphi 0, %s66
      %s88 = sphi 0, %s90
      %s91 = sphi 0, %s88
      %s92 = sphi 0, %s91
      %s108 = sphi 0, %s92
      %s114 = sphi 0, %s116
      %s117 = sphi 0, %s114
      %s118 = sphi 0, %s117
      %s134 = sphi 0, %s118
    $region4: #{forward.8} parent=1 // loop_header_branch
      %15 = sbr.rel (%p13) target = $region8
    $region5: #{forward.8} parent=1 // loop_body
      %s17 = ssub.s32 %s12, 1
      %s18 = ssub.s32 %s12, 2
      %s25 = sadd.s32 1, %s20
      %p26 = scmp.ge.s32.totalorder %s25, 5
      %s27 = scalar_select %p26, 0, %s25
      %s28 = sadd.s32 1, %s19
      %s29 = scalar_select %p26, %s28, %s19
      %p30 = scmp.ge.s32.totalorder %s29, 2
      %s31 = scalar_select %p30, 0, %s29
      %s32 = ssub.s32 %s20, %s27
      %p33 = scmp.eq.s32.totalorder %s32, 0
      %s35 = sadd.s32 %s34, 1
      %s36 = scalar_select %p33, %s34, %s35
      %p39 = pneg %p33
      %p40 = scmp.eq.s32.totalorder %s12, 9
      %p41 = por %p39, %p40
      %p42 = scmp.ne.s32.totalorder %s34, %s37
      %p43 = scmp.eq.s32.totalorder %s12, 0
      %p44 = por %p42, %p43
      %p45 = scmp.ne.s32.totalorder %s34, %s37
      %p46 = scmp.eq.s32.totalorder %s17, 9
      %p47 = por %p45, %p46
      %p48 = scmp.ne.s32.totalorder %s37, %s38
      %p49 = scmp.eq.s32.totalorder %s17, 0
      %p50 = por %p48, %p49
      %p51 = scmp.ne.s32.totalorder %s37, %s38
      %p52 = scmp.eq.s32.totalorder %s18, 9
      %p53 = por %p51, %p52
      %p55 = scmp.ne.s32.totalorder %s38, %s54
      %p56 = scmp.eq.s32.totalorder %s18, 0
      %p57 = por %p55, %p56
      %s58 = ssub.s32 %s20, %s27
      %s59 = ssub.s32 %s19, %s31
      %s60 = sor.u32 %s58, %s59
      %p61 = scmp.eq.s32.totalorder %s60, 0
      %s63 = sadd.s32 %s62, 1
      %s64 = scalar_select %p61, %s62, %s63
      %p67 = pneg %p61
      %p68 = scmp.eq.s32.totalorder %s12, 9
      %p69 = por %p67, %p68
      %p70 = scmp.ne.s32.totalorder %s62, %s65
      %p71 = scmp.eq.s32.totalorder %s12, 0
      %p72 = por %p70, %p71
      %p73 = scmp.ne.s32.totalorder %s62, %s65
      %p74 = scmp.eq.s32.totalorder %s17, 9
      %p75 = por %p73, %p74
      %p76 = scmp.ne.s32.totalorder %s65, %s66
      %p77 = scmp.eq.s32.totalorder %s17, 0
      %p78 = por %p76, %p77
      %p79 = scmp.ne.s32.totalorder %s65, %s66
      %p80 = scmp.eq.s32.totalorder %s18, 9
      %p81 = por %p79, %p80
      %p83 = scmp.ne.s32.totalorder %s66, %s82
      %p84 = scmp.eq.s32.totalorder %s18, 0
      %p85 = por %p83, %p84
      %s86 = ssub.s32 %s19, %s31
      %p87 = scmp.eq.s32.totalorder %s86, 0
      %s89 = sadd.s32 %s88, 1
      %s90 = scalar_select %p87, %s88, %s89
      %p93 = pneg %p87
      %p94 = scmp.eq.s32.totalorder %s12, 9
      %p95 = por %p93, %p94
      %p96 = scmp.ne.s32.totalorder %s88, %s91
      %p97 = scmp.eq.s32.totalorder %s12, 0
      %p98 = por %p96, %p97
      %p99 = scmp.ne.s32.totalorder %s88, %s91
      %p100 = scmp.eq.s32.totalorder %s17, 9
      %p101 = por %p99, %p100
      %p102 = scmp.ne.s32.totalorder %s91, %s92
      %p103 = scmp.eq.s32.totalorder %s17, 0
      %p104 = por %p102, %p103
      %p105 = scmp.ne.s32.totalorder %s91, %s92
      %p106 = scmp.eq.s32.totalorder %s18, 9
      %p107 = por %p105, %p106
      %p109 = scmp.ne.s32.totalorder %s92, %s108
      %p110 = scmp.eq.s32.totalorder %s18, 0
      %p111 = por %p109, %p110
      %s112 = ssub.s32 %s19, %s31
      %p113 = scmp.eq.s32.totalorder %s112, 0
      %s115 = sadd.s32 %s114, 1
      %s116 = scalar_select %p113, %s114, %s115
      %p119 = pneg %p113
      %p120 = scmp.eq.s32.totalorder %s12, 9
      %p121 = por %p119, %p120
      %p122 = scmp.ne.s32.totalorder %s114, %s117
      %p123 = scmp.eq.s32.totalorder %s12, 0
      %p124 = por %p122, %p123
      %p125 = scmp.ne.s32.totalorder %s114, %s117
      %p126 = scmp.eq.s32.totalorder %s17, 9
      %p127 = por %p125, %p126
      %p128 = scmp.ne.s32.totalorder %s117, %s118
      %p129 = scmp.eq.s32.totalorder %s17, 0
      %p130 = por %p128, %p129
      %p131 = scmp.ne.s32.totalorder %s117, %s118
      %p132 = scmp.eq.s32.totalorder %s18, 9
      %p133 = por %p131, %p132
      %p135 = scmp.ne.s32.totalorder %s118, %s134
      %p136 = scmp.eq.s32.totalorder %s18, 0
      %p137 = por %p135, %p136
      %p138 = scmp.le.s32.totalorder 1, %s12
      %p139 = scmp.lt.s32.totalorder %s12, 11
      %p140 = pnand %p138, %p139
      %p141 = pneg %p140
      // Predicated region
      $region9: #{forward.8} parent=5 // pred_check
        _
      $region10: #{forward.8} parent=5 // pred_check_branch
        %143 = sbr.rel (%p140) target = $region12
      $region11: #{forward.8} parent=5 // pred_region
        %s144 = ssub.s32 %s12, 1
      $region12: #{forward.8} parent=5 // pred_fallthru
        _
      %p145 = scmp.lt.s32.totalorder %s12, 10
      // Predicated region
      $region13: #{forward.8} parent=5 // pred_check
        %p146 = pneg %p145
      $region14: #{forward.8} parent=5 // pred_check_branch
        %148 = sbr.rel (%p146) target = $region16
      $region15: #{forward.8} parent=5 // pred_region
        // Predicated region
        $region17: #{forward.8} parent=15 // pred_check
          %p149 = pneg %p44
        $region18: #{forward.8} parent=15 // pred_check_branch
          %151 = sbr.rel (%p149) target = $region20
        $region19: #{forward.8} parent=15 // pred_region
          %s152 = smul.u32 15, %s20
          %p153 = scmp.lt.s32.totalorder %s152, 74
          %s154 = scalar_select %p153, %s152, 74
          %s155 = smul.addr %s154, 2
          %s156 = scalar_lea.vmem %s0, %s155
          %s157 = smul.u32 15, %s20
        $region20: #{forward.8} parent=15 // pred_fallthru
          _
        // Predicated region
        $region21: #{forward.8} parent=15 // pred_check
          %p158 = pneg %p72
        $region22: #{forward.8} parent=15 // pred_check_branch
          %160 = sbr.rel (%p158) target = $region24
        $region23: #{forward.8} parent=15 // pred_region
          %s161 = sand.u32 %s62, 1
          %s162 = scalar_lea.sflag [#allocation3], %s161
          %s163 = sand.u32 %s62, 1
          %s164 = smul.addr %s163, 17280
          %s165 = scalar_lea.vmem [#allocation2], %s164
          %s166 = smul.u32 240, %s20
          %s167 = smul.u32 9, %s19
          %169 = vsyncadd %s162, 0
          %s170 = smul.addr %s166, 18
          %s171 = sadd.s32 %s167, %s170
          %s172 = smul.addr %s171, 8
          %s173 = scalar_lea.hbm %s1, %s172
          %s174 = sshll.u32 %s173, 4
          %s175 = int_to_ptr.hbm [resolvable:$true] %s174
          %s176 = sshll.u32 %s165, 4
          %s177 = int_to_ptr.vmem [resolvable:$true] %s176
          %182 = dma.hbm_to_vmem [thread:$0]  %s175, 276480, %s177, %s162, 2304, 1152, 72
        $region24: #{forward.8} parent=15 // pred_fallthru
          _
        // Predicated region
        $region25: #{forward.8} parent=15 // pred_check
          %p183 = pneg %p98
        $region26: #{forward.8} parent=15 // pred_check_branch
          %185 = sbr.rel (%p183) target = $region28
        $region27: #{forward.8} parent=15 // pred_region
          %s186 = smul.u32 9, %s19
          %p187 = scmp.lt.s32.totalorder %s186, 17
          %s188 = scalar_select %p187, %s186, 17
          %s189 = scalar_lea.vmem %s2, %s188
          %s190 = smul.u32 9, %s19
        $region28: #{forward.8} parent=15 // pred_fallthru
          _
      $region16: #{forward.8} parent=5 // pred_fallthru
        _
      %p191 = scmp.le.s32.totalorder 1, %s12
      %p192 = scmp.lt.s32.totalorder %s12, 11
      %p193 = pnand %p191, %p192
      %p194 = pneg %p193
      // Predicated region
      $region29: #{forward.8} parent=5 // pred_check
        _
      $region30: #{forward.8} parent=5 // pred_check_branch
        %196 = sbr.rel (%p193) target = $region32
      $region31: #{forward.8} parent=5 // pred_region
        %s197 = ssub.s32 %s12, 1
        %s198 = sand.u32 %s65, 1
        %s199 = scalar_lea.sflag [#allocation3], %s198
        %s200 = sand.u32 %s65, 1
        %s201 = smul.addr %s200, 17280
        %s202 = scalar_lea.vmem [#allocation2], %s201
        // Predicated region
        $region33: #{forward.8} parent=31 // pred_check
          %p203 = pneg %p78
        $region34: #{forward.8} parent=31 // pred_check_branch
          %205 = sbr.rel (%p203) target = $region36
        $region35: #{forward.8} parent=31 // pred_region
          %207 = dma.done %s199, 276480
        $region36: #{forward.8} parent=31 // pred_fallthru
          _
        %s208 = smul.u32 15, %s22
        %p209 = scmp.lt.s32.totalorder %s208, 74
        %s210 = scalar_select %p209, %s208, 74
        %s211 = smul.addr %s210, 2
        %s212 = scalar_lea.vmem %s0, %s211
        %p213 = pneg %p50
        %p214 = pneg %p47
        %s215 = sand.u32 %s65, 1
        %s216 = scalar_lea.sflag [#allocation3], %s215
        %s217 = sand.u32 %s65, 1
        %s218 = smul.addr %s217, 17280
        %s219 = scalar_lea.vmem [#allocation2], %s218
        %p220 = pneg %p78
        %p221 = pneg %p75
        %s222 = smul.u32 9, %s21
        %p223 = scmp.lt.s32.totalorder %s222, 17
        %s224 = scalar_select %p223, %s222, 17
        %s225 = scalar_lea.vmem %s2, %s224
        %p226 = pneg %p104
        %p227 = pneg %p101
        %p228 = pneg %p130
        %p229 = pneg %p127
        %s230 = smul.u32 9, %s21
        %p231 = scmp.lt.s32.totalorder %s230, 17
        %s232 = scalar_select %p231, %s230, 17
        %s233 = smul.addr %s232, 2
        %s234 = scalar_lea.vmem %s3, %s233
        %s235 = smul.u32 15, %s22
        %p236 = scmp.lt.s32.totalorder %s235, 74
        %s237 = scalar_select %p236, %s235, 74
        %s238 = smul.addr %s237, 2
        %s239 = scalar_lea.vmem %s0, %s238
        %s240 = smul.u32 15, %s22
        %s241 = smul.u32 240, %s22
        %s242 = smul.u32 9, %s21
        %s243 = smul.u32 9, %s21
        %p244 = scmp.lt.s32.totalorder %s243, 17
        %s245 = scalar_select %p244, %s243, 17
        %s246 = scalar_lea.vmem %s2, %s245
        %s247 = smul.u32 9, %s21
        %s248 = smul.u32 9, %s21
        %p249 = scmp.lt.s32.totalorder %s248, 17
        %s250 = scalar_select %p249, %s248, 17
        %s251 = smul.addr %s250, 2
        %s252 = scalar_lea.vmem %s3, %s251
        %s253 = smul.u32 9, %s21
        %p254 = scmp.eq.s32.totalorder %s22, 0
        // Predicated region
        $region37: #{forward.8} parent=31 // pred_check
          %p255 = pneg %p254
        $region38: #{forward.8} parent=31 // pred_check_branch
          %257 = sbr.rel (%p255) target = $region40
        $region39: #{forward.8} parent=31 // pred_region
          %258 = vst [vmem:[%s252] sm:$0xff] 0.0
          %259 = vst [vmem:[%s252 + $0x8] sm:$0xff] 0.0
          %260 = vst [vmem:[%s252 + $0x10] sm:$0x3] 0.0
        $region40: #{forward.8} parent=31 // pred_fallthru
          _
        %v261 = vld [vmem:[%s252] sm:$0xff]
        %v262 = vld [vmem:[%s252 + $0x8] sm:$0xff]
        %v263 = vld [vmem:[%s252 + $0x10] sm:$0x3]
        %v264 = vld [vmem:[%s239] sm:$0xff]
        %v265 = vld [vmem:[%s239 + $0x8] sm:$0xff]
        %v266 = vld [vmem:[%s239 + $0x10] sm:$0xff]
        %v267 = vld [vmem:[%s239 + $0x18] sm:$0x3f]
        %v268 = vld [vmem:[%s202] sm:$0xff]
        %v269 = vld [vmem:[%s202 + $0x8] sm:$0xff]
        %v270 = vld [vmem:[%s202 + $0x10] sm:$0xff]
        %v271 = vld [vmem:[%s202 + $0x18] sm:$0xff]
        %v272 = vld [vmem:[%s202 + $0x20] sm:$0xff]
        %v273 = vld [vmem:[%s202 + $0x28] sm:$0xff]
        %v274 = vld [vmem:[%s202 + $0x30] sm:$0xff]
        %v275 = vld [vmem:[%s202 + $0x38] sm:$0xff]
        %v276 = vld [vmem:[%s202 + $0x40] sm:$0xff]
        %v277 = vld [vmem:[%s202 + $0x48] sm:$0xff]
        %v278 = vld [vmem:[%s202 + $0x50] sm:$0xff]
        %v279 = vld [vmem:[%s202 + $0x58] sm:$0xff]
        %v280 = vld [vmem:[%s202 + $0x60] sm:$0xff]
        %v281 = vld [vmem:[%s202 + $0x68] sm:$0xff]
        %v282 = vld [vmem:[%s202 + $0x70] sm:$0xff]
        %v283 = vld [vmem:[%s202 + $0x78] sm:$0xff]
        %v284 = vld [vmem:[%s202 + $0x80] sm:$0xff]
        %v285 = vld [vmem:[%s202 + $0x88] sm:$0xff]
        %v286 = vld [vmem:[%s202 + $0x90] sm:$0xff]
        %v287 = vld [vmem:[%s202 + $0x98] sm:$0xff]
        %v288 = vld [vmem:[%s202 + $0xa0] sm:$0xff]
        %v289 = vld [vmem:[%s202 + $0xa8] sm:$0xff]
        %v290 = vld [vmem:[%s202 + $0xb0] sm:$0xff]
        %v291 = vld [vmem:[%s202 + $0xb8] sm:$0xff]
        %v292 = vld [vmem:[%s202 + $0xc0] sm:$0xff]
        %v293 = vld [vmem:[%s202 + $0xc8] sm:$0xff]
        %v294 = vld [vmem:[%s202 + $0xd0] sm:$0xff]
        %v295 = vld [vmem:[%s202 + $0xd8] sm:$0xff]
        %v296 = vld [vmem:[%s202 + $0xe0] sm:$0xff]
        %v297 = vld [vmem:[%s202 + $0xe8] sm:$0xff]
        %v298 = vld [vmem:[%s202 + $0xf0] sm:$0xff]
        %v299 = vld [vmem:[%s202 + $0xf8] sm:$0xff]
        %v300 = vld [vmem:[%s202 + $0x100] sm:$0xff]
        %v301 = vld [vmem:[%s202 + $0x108] sm:$0xff]
        %v302 = vld [vmem:[%s202 + $0x110] sm:$0xff]
        %v303 = vld [vmem:[%s202 + $0x118] sm:$0xff]
        %v304 = vld [vmem:[%s202 + $0x120] sm:$0xff]
        %v305 = vld [vmem:[%s202 + $0x128] sm:$0xff]
        %v306 = vld [vmem:[%s202 + $0x130] sm:$0xff]
        %v307 = vld [vmem:[%s202 + $0x138] sm:$0xff]
        %v308 = vld [vmem:[%s202 + $0x140] sm:$0xff]
        %v309 = vld [vmem:[%s202 + $0x148] sm:$0xff]
        %v310 = vld [vmem:[%s202 + $0x150] sm:$0xff]
        %v311 = vld [vmem:[%s202 + $0x158] sm:$0xff]
        %v312 = vld [vmem:[%s202 + $0x160] sm:$0xff]
        %v313 = vld [vmem:[%s202 + $0x168] sm:$0xff]
        %v314 = vld [vmem:[%s202 + $0x170] sm:$0xff]
        %v315 = vld [vmem:[%s202 + $0x178] sm:$0xff]
        %v316 = vld [vmem:[%s202 + $0x180] sm:$0xff]
        %v317 = vld [vmem:[%s202 + $0x188] sm:$0xff]
        %v318 = vld [vmem:[%s202 + $0x190] sm:$0xff]
        %v319 = vld [vmem:[%s202 + $0x198] sm:$0xff]
        %v320 = vld [vmem:[%s202 + $0x1a0] sm:$0xff]
        %v321 = vld [vmem:[%s202 + $0x1a8] sm:$0xff]
        %v322 = vld [vmem:[%s202 + $0x1b0] sm:$0xff]
        %v323 = vld [vmem:[%s202 + $0x1b8] sm:$0xff]
        %v324 = vld [vmem:[%s202 + $0x1c0] sm:$0xff]
        %v325 = vld [vmem:[%s202 + $0x1c8] sm:$0xff]
        %v326 = vld [vmem:[%s202 + $0x1d0] sm:$0xff]
        %v327 = vld [vmem:[%s202 + $0x1d8] sm:$0xff]
        %v328 = vld [vmem:[%s202 + $0x1e0] sm:$0xff]
        %v329 = vld [vmem:[%s202 + $0x1e8] sm:$0xff]
        %v330 = vld [vmem:[%s202 + $0x1f0] sm:$0xff]
        %v331 = vld [vmem:[%s202 + $0x1f8] sm:$0xff]
        %v332 = vld [vmem:[%s202 + $0x200] sm:$0xff]
        %v333 = vld [vmem:[%s202 + $0x208] sm:$0xff]
        %v334 = vld [vmem:[%s202 + $0x210] sm:$0xff]
        %v335 = vld [vmem:[%s202 + $0x218] sm:$0xff]
        %v336 = vld [vmem:[%s202 + $0x220] sm:$0xff]
        %v337 = vld [vmem:[%s202 + $0x228] sm:$0xff]
        %v338 = vld [vmem:[%s202 + $0x230] sm:$0xff]
        %v339 = vld [vmem:[%s202 + $0x238] sm:$0xff]
        %v340 = vld [vmem:[%s202 + $0x240] sm:$0xff]
        %v341 = vld [vmem:[%s202 + $0x248] sm:$0xff]
        %v342 = vld [vmem:[%s202 + $0x250] sm:$0xff]
        %v343 = vld [vmem:[%s202 + $0x258] sm:$0xff]
        %v344 = vld [vmem:[%s202 + $0x260] sm:$0xff]
        %v345 = vld [vmem:[%s202 + $0x268] sm:$0xff]
        %v346 = vld [vmem:[%s202 + $0x270] sm:$0xff]
        %v347 = vld [vmem:[%s202 + $0x278] sm:$0xff]
        %v348 = vld [vmem:[%s202 + $0x280] sm:$0xff]
        %v349 = vld [vmem:[%s202 + $0x288] sm:$0xff]
        %v350 = vld [vmem:[%s202 + $0x290] sm:$0xff]
        %v351 = vld [vmem:[%s202 + $0x298] sm:$0xff]
        %v352 = vld [vmem:[%s202 + $0x2a0] sm:$0xff]
        %v353 = vld [vmem:[%s202 + $0x2a8] sm:$0xff]
        %v354 = vld [vmem:[%s202 + $0x2b0] sm:$0xff]
        %v355 = vld [vmem:[%s202 + $0x2b8] sm:$0xff]
        %v356 = vld [vmem:[%s202 + $0x2c0] sm:$0xff]
        %v357 = vld [vmem:[%s202 + $0x2c8] sm:$0xff]
        %v358 = vld [vmem:[%s202 + $0x2d0] sm:$0xff]
        %v359 = vld [vmem:[%s202 + $0x2d8] sm:$0xff]
        %v360 = vld [vmem:[%s202 + $0x2e0] sm:$0xff]
        %v361 = vld [vmem:[%s202 + $0x2e8] sm:$0xff]
        %v362 = vld [vmem:[%s202 + $0x2f0] sm:$0xff]
        %v363 = vld [vmem:[%s202 + $0x2f8] sm:$0xff]
        %v364 = vld [vmem:[%s202 + $0x300] sm:$0xff]
        %v365 = vld [vmem:[%s202 + $0x308] sm:$0xff]
        %v366 = vld [vmem:[%s202 + $0x310] sm:$0xff]
        %v367 = vld [vmem:[%s202 + $0x318] sm:$0xff]
        %v368 = vld [vmem:[%s202 + $0x320] sm:$0xff]
        %v369 = vld [vmem:[%s202 + $0x328] sm:$0xff]
        %v370 = vld [vmem:[%s202 + $0x330] sm:$0xff]
        %v371 = vld [vmem:[%s202 + $0x338] sm:$0xff]
        %v372 = vld [vmem:[%s202 + $0x340] sm:$0xff]
        %v373 = vld [vmem:[%s202 + $0x348] sm:$0xff]
        %v374 = vld [vmem:[%s202 + $0x350] sm:$0xff]
        %v375 = vld [vmem:[%s202 + $0x358] sm:$0xff]
        %v376 = vld [vmem:[%s202 + $0x360] sm:$0xff]
        %v377 = vld [vmem:[%s202 + $0x368] sm:$0xff]
        %v378 = vld [vmem:[%s202 + $0x370] sm:$0xff]
        %v379 = vld [vmem:[%s202 + $0x378] sm:$0xff]
        %v380 = vld [vmem:[%s202 + $0x380] sm:$0xff]
        %v381 = vld [vmem:[%s202 + $0x388] sm:$0xff]
        %v382 = vld [vmem:[%s202 + $0x390] sm:$0xff]
        %v383 = vld [vmem:[%s202 + $0x398] sm:$0xff]
        %v384 = vld [vmem:[%s202 + $0x3a0] sm:$0xff]
        %v385 = vld [vmem:[%s202 + $0x3a8] sm:$0xff]
        %v386 = vld [vmem:[%s202 + $0x3b0] sm:$0xff]
        %v387 = vld [vmem:[%s202 + $0x3b8] sm:$0xff]
        %v388 = vld [vmem:[%s202 + $0x3c0] sm:$0xff]
        %v389 = vld [vmem:[%s202 + $0x3c8] sm:$0xff]
        %v390 = vld [vmem:[%s202 + $0x3d0] sm:$0xff]
        %v391 = vld [vmem:[%s202 + $0x3d8] sm:$0xff]
        %v392 = vld [vmem:[%s202 + $0x3e0] sm:$0xff]
        %v393 = vld [vmem:[%s202 + $0x3e8] sm:$0xff]
        %v394 = vld [vmem:[%s202 + $0x3f0] sm:$0xff]
        %v395 = vld [vmem:[%s202 + $0x3f8] sm:$0xff]
        %v396 = vld [vmem:[%s202 + $0x400] sm:$0xff]
        %v397 = vld [vmem:[%s202 + $0x408] sm:$0xff]
        %v398 = vld [vmem:[%s202 + $0x410] sm:$0xff]
        %v399 = vld [vmem:[%s202 + $0x418] sm:$0xff]
        %v400 = vld [vmem:[%s202 + $0x420] sm:$0xff]
        %v401 = vld [vmem:[%s202 + $0x428] sm:$0xff]
        %v402 = vld [vmem:[%s202 + $0x430] sm:$0xff]
        %v403 = vld [vmem:[%s202 + $0x438] sm:$0xff]
        %v404 = vld [vmem:[%s202 + $0x440] sm:$0xff]
        %v405 = vld [vmem:[%s202 + $0x448] sm:$0xff]
        %v406 = vld [vmem:[%s202 + $0x450] sm:$0xff]
        %v407 = vld [vmem:[%s202 + $0x458] sm:$0xff]
        %v408 = vld [vmem:[%s202 + $0x460] sm:$0xff]
        %v409 = vld [vmem:[%s202 + $0x468] sm:$0xff]
        %v410 = vld [vmem:[%s202 + $0x470] sm:$0xff]
        %v411 = vld [vmem:[%s202 + $0x478] sm:$0xff]
        %v412 = vld [vmem:[%s202 + $0x480] sm:$0xff]
        %v413 = vld [vmem:[%s202 + $0x488] sm:$0xff]
        %v414 = vld [vmem:[%s202 + $0x490] sm:$0xff]
        %v415 = vld [vmem:[%s202 + $0x498] sm:$0xff]
        %v416 = vld [vmem:[%s202 + $0x4a0] sm:$0xff]
        %v417 = vld [vmem:[%s202 + $0x4a8] sm:$0xff]
        %v418 = vld [vmem:[%s202 + $0x4b0] sm:$0xff]
        %v419 = vld [vmem:[%s202 + $0x4b8] sm:$0xff]
        %v420 = vld [vmem:[%s202 + $0x4c0] sm:$0xff]
        %v421 = vld [vmem:[%s202 + $0x4c8] sm:$0xff]
        %v422 = vld [vmem:[%s202 + $0x4d0] sm:$0xff]
        %v423 = vld [vmem:[%s202 + $0x4d8] sm:$0xff]
        %v424 = vld [vmem:[%s202 + $0x4e0] sm:$0xff]
        %v425 = vld [vmem:[%s202 + $0x4e8] sm:$0xff]
        %v426 = vld [vmem:[%s202 + $0x4f0] sm:$0xff]
        %v427 = vld [vmem:[%s202 + $0x4f8] sm:$0xff]
        %v428 = vld [vmem:[%s202 + $0x500] sm:$0xff]
        %v429 = vld [vmem:[%s202 + $0x508] sm:$0xff]
        %v430 = vld [vmem:[%s202 + $0x510] sm:$0xff]
        %v431 = vld [vmem:[%s202 + $0x518] sm:$0xff]
        %v432 = vld [vmem:[%s202 + $0x520] sm:$0xff]
        %v433 = vld [vmem:[%s202 + $0x528] sm:$0xff]
        %v434 = vld [vmem:[%s202 + $0x530] sm:$0xff]
        %v435 = vld [vmem:[%s202 + $0x538] sm:$0xff]
        %v436 = vld [vmem:[%s202 + $0x540] sm:$0xff]
        %v437 = vld [vmem:[%s202 + $0x548] sm:$0xff]
        %v438 = vld [vmem:[%s202 + $0x550] sm:$0xff]
        %v439 = vld [vmem:[%s202 + $0x558] sm:$0xff]
        %v440 = vld [vmem:[%s202 + $0x560] sm:$0xff]
        %v441 = vld [vmem:[%s202 + $0x568] sm:$0xff]
        %v442 = vld [vmem:[%s202 + $0x570] sm:$0xff]
        %v443 = vld [vmem:[%s202 + $0x578] sm:$0xff]
        %v444 = vld [vmem:[%s202 + $0x580] sm:$0xff]
        %v445 = vld [vmem:[%s202 + $0x588] sm:$0xff]
        %v446 = vld [vmem:[%s202 + $0x590] sm:$0xff]
        %v447 = vld [vmem:[%s202 + $0x598] sm:$0xff]
        %v448 = vld [vmem:[%s202 + $0x5a0] sm:$0xff]
        %v449 = vld [vmem:[%s202 + $0x5a8] sm:$0xff]
        %v450 = vld [vmem:[%s202 + $0x5b0] sm:$0xff]
        %v451 = vld [vmem:[%s202 + $0x5b8] sm:$0xff]
        %v452 = vld [vmem:[%s202 + $0x5c0] sm:$0xff]
        %v453 = vld [vmem:[%s202 + $0x5c8] sm:$0xff]
        %v454 = vld [vmem:[%s202 + $0x5d0] sm:$0xff]
        %v455 = vld [vmem:[%s202 + $0x5d8] sm:$0xff]
        %v456 = vld [vmem:[%s202 + $0x5e0] sm:$0xff]
        %v457 = vld [vmem:[%s202 + $0x5e8] sm:$0xff]
        %v458 = vld [vmem:[%s202 + $0x5f0] sm:$0xff]
        %v459 = vld [vmem:[%s202 + $0x5f8] sm:$0xff]
        %v460 = vld [vmem:[%s202 + $0x600] sm:$0xff]
        %v461 = vld [vmem:[%s202 + $0x608] sm:$0xff]
        %v462 = vld [vmem:[%s202 + $0x610] sm:$0xff]
        %v463 = vld [vmem:[%s202 + $0x618] sm:$0xff]
        %v464 = vld [vmem:[%s202 + $0x620] sm:$0xff]
        %v465 = vld [vmem:[%s202 + $0x628] sm:$0xff]
        %v466 = vld [vmem:[%s202 + $0x630] sm:$0xff]
        %v467 = vld [vmem:[%s202 + $0x638] sm:$0xff]
        %v468 = vld [vmem:[%s202 + $0x640] sm:$0xff]
        %v469 = vld [vmem:[%s202 + $0x648] sm:$0xff]
        %v470 = vld [vmem:[%s202 + $0x650] sm:$0xff]
        %v471 = vld [vmem:[%s202 + $0x658] sm:$0xff]
        %v472 = vld [vmem:[%s202 + $0x660] sm:$0xff]
        %v473 = vld [vmem:[%s202 + $0x668] sm:$0xff]
        %v474 = vld [vmem:[%s202 + $0x670] sm:$0xff]
        %v475 = vld [vmem:[%s202 + $0x678] sm:$0xff]
        %v476 = vld [vmem:[%s202 + $0x680] sm:$0xff]
        %v477 = vld [vmem:[%s202 + $0x688] sm:$0xff]
        %v478 = vld [vmem:[%s202 + $0x690] sm:$0xff]
        %v479 = vld [vmem:[%s202 + $0x698] sm:$0xff]
        %v480 = vld [vmem:[%s202 + $0x6a0] sm:$0xff]
        %v481 = vld [vmem:[%s202 + $0x6a8] sm:$0xff]
        %v482 = vld [vmem:[%s202 + $0x6b0] sm:$0xff]
        %v483 = vld [vmem:[%s202 + $0x6b8] sm:$0xff]
        %v484 = vld [vmem:[%s202 + $0x6c0] sm:$0xff]
        %v485 = vld [vmem:[%s202 + $0x6c8] sm:$0xff]
        %v486 = vld [vmem:[%s202 + $0x6d0] sm:$0xff]
        %v487 = vld [vmem:[%s202 + $0x6d8] sm:$0xff]
        %v488 = vld [vmem:[%s202 + $0x6e0] sm:$0xff]
        %v489 = vld [vmem:[%s202 + $0x6e8] sm:$0xff]
        %v490 = vld [vmem:[%s202 + $0x6f0] sm:$0xff]
        %v491 = vld [vmem:[%s202 + $0x6f8] sm:$0xff]
        %v492 = vld [vmem:[%s202 + $0x700] sm:$0xff]
        %v493 = vld [vmem:[%s202 + $0x708] sm:$0xff]
        %v494 = vld [vmem:[%s202 + $0x710] sm:$0xff]
        %v495 = vld [vmem:[%s202 + $0x718] sm:$0xff]
        %v496 = vld [vmem:[%s202 + $0x720] sm:$0xff]
        %v497 = vld [vmem:[%s202 + $0x728] sm:$0xff]
        %v498 = vld [vmem:[%s202 + $0x730] sm:$0xff]
        %v499 = vld [vmem:[%s202 + $0x738] sm:$0xff]
        %v500 = vld [vmem:[%s202 + $0x740] sm:$0xff]
        %v501 = vld [vmem:[%s202 + $0x748] sm:$0xff]
        %v502 = vld [vmem:[%s202 + $0x750] sm:$0xff]
        %v503 = vld [vmem:[%s202 + $0x758] sm:$0xff]
        %v504 = vld [vmem:[%s202 + $0x760] sm:$0xff]
        %v505 = vld [vmem:[%s202 + $0x768] sm:$0xff]
        %v506 = vld [vmem:[%s202 + $0x770] sm:$0xff]
        %v507 = vld [vmem:[%s202 + $0x778] sm:$0xff]
        %v508 = vld [vmem:[%s202 + $0x780] sm:$0xff]
        %v509 = vld [vmem:[%s202 + $0x788] sm:$0xff]
        %v510 = vld [vmem:[%s202 + $0x790] sm:$0xff]
        %v511 = vld [vmem:[%s202 + $0x798] sm:$0xff]
        %v512 = vld [vmem:[%s202 + $0x7a0] sm:$0xff]
        %v513 = vld [vmem:[%s202 + $0x7a8] sm:$0xff]
        %v514 = vld [vmem:[%s202 + $0x7b0] sm:$0xff]
        %v515 = vld [vmem:[%s202 + $0x7b8] sm:$0xff]
        %v516 = vld [vmem:[%s202 + $0x7c0] sm:$0xff]
        %v517 = vld [vmem:[%s202 + $0x7c8] sm:$0xff]
        %v518 = vld [vmem:[%s202 + $0x7d0] sm:$0xff]
        %v519 = vld [vmem:[%s202 + $0x7d8] sm:$0xff]
        %v520 = vld [vmem:[%s202 + $0x7e0] sm:$0xff]
        %v521 = vld [vmem:[%s202 + $0x7e8] sm:$0xff]
        %v522 = vld [vmem:[%s202 + $0x7f0] sm:$0xff]
        %v523 = vld [vmem:[%s202 + $0x7f8] sm:$0xff]
        %v524 = vld [vmem:[%s202 + $0x800] sm:$0xff]
        %v525 = vld [vmem:[%s202 + $0x808] sm:$0xff]
        %v526 = vld [vmem:[%s202 + $0x810] sm:$0xff]
        %v527 = vld [vmem:[%s202 + $0x818] sm:$0xff]
        %v528 = vld [vmem:[%s202 + $0x820] sm:$0xff]
        %v529 = vld [vmem:[%s202 + $0x828] sm:$0xff]
        %v530 = vld [vmem:[%s202 + $0x830] sm:$0xff]
        %v531 = vld [vmem:[%s202 + $0x838] sm:$0xff]
        %v532 = vld [vmem:[%s202 + $0x840] sm:$0xff]
        %v533 = vld [vmem:[%s202 + $0x848] sm:$0xff]
        %v534 = vld [vmem:[%s202 + $0x850] sm:$0xff]
        %v535 = vld [vmem:[%s202 + $0x858] sm:$0xff]
        %v536 = vld [vmem:[%s202 + $0x860] sm:$0xff]
        %v537 = vld [vmem:[%s202 + $0x868] sm:$0xff]
        %v538 = vld [vmem:[%s202 + $0x870] sm:$0xff]
        %v539 = vld [vmem:[%s202 + $0x878] sm:$0xff]
        %v540 = vld [vmem:[%s202 + $0x880] sm:$0xff]
        %v541 = vld [vmem:[%s202 + $0x888] sm:$0xff]
        %v542 = vld [vmem:[%s202 + $0x890] sm:$0xff]
        %v543 = vld [vmem:[%s202 + $0x898] sm:$0xff]
        %v544 = vld [vmem:[%s202 + $0x8a0] sm:$0xff]
        %v545 = vld [vmem:[%s202 + $0x8a8] sm:$0xff]
        %v546 = vld [vmem:[%s202 + $0x8b0] sm:$0xff]
        %v547 = vld [vmem:[%s202 + $0x8b8] sm:$0xff]
        %v548 = vld [vmem:[%s202 + $0x8c0] sm:$0xff]
        %v549 = vld [vmem:[%s202 + $0x8c8] sm:$0xff]
        %v550 = vld [vmem:[%s202 + $0x8d0] sm:$0xff]
        %v551 = vld [vmem:[%s202 + $0x8d8] sm:$0xff]
        %v552 = vld [vmem:[%s202 + $0x8e0] sm:$0xff]
        %v553 = vld [vmem:[%s202 + $0x8e8] sm:$0xff]
        %v554 = vld [vmem:[%s202 + $0x8f0] sm:$0xff]
        %v555 = vld [vmem:[%s202 + $0x8f8] sm:$0xff]
        %v556 = vld [vmem:[%s202 + $0x900] sm:$0xff]
        %v557 = vld [vmem:[%s202 + $0x908] sm:$0xff]
        %v558 = vld [vmem:[%s202 + $0x910] sm:$0xff]
        %v559 = vld [vmem:[%s202 + $0x918] sm:$0xff]
        %v560 = vld [vmem:[%s202 + $0x920] sm:$0xff]
        %v561 = vld [vmem:[%s202 + $0x928] sm:$0xff]
        %v562 = vld [vmem:[%s202 + $0x930] sm:$0xff]
        %v563 = vld [vmem:[%s202 + $0x938] sm:$0xff]
        %v564 = vld [vmem:[%s202 + $0x940] sm:$0xff]
        %v565 = vld [vmem:[%s202 + $0x948] sm:$0xff]
        %v566 = vld [vmem:[%s202 + $0x950] sm:$0xff]
        %v567 = vld [vmem:[%s202 + $0x958] sm:$0xff]
        %v568 = vld [vmem:[%s202 + $0x960] sm:$0xff]
        %v569 = vld [vmem:[%s202 + $0x968] sm:$0xff]
        %v570 = vld [vmem:[%s202 + $0x970] sm:$0xff]
        %v571 = vld [vmem:[%s202 + $0x978] sm:$0xff]
        %v572 = vld [vmem:[%s202 + $0x980] sm:$0xff]
        %v573 = vld [vmem:[%s202 + $0x988] sm:$0xff]
        %v574 = vld [vmem:[%s202 + $0x990] sm:$0xff]
        %v575 = vld [vmem:[%s202 + $0x998] sm:$0xff]
        %v576 = vld [vmem:[%s202 + $0x9a0] sm:$0xff]
        %v577 = vld [vmem:[%s202 + $0x9a8] sm:$0xff]
        %v578 = vld [vmem:[%s202 + $0x9b0] sm:$0xff]
        %v579 = vld [vmem:[%s202 + $0x9b8] sm:$0xff]
        %v580 = vld [vmem:[%s202 + $0x9c0] sm:$0xff]
        %v581 = vld [vmem:[%s202 + $0x9c8] sm:$0xff]
        %v582 = vld [vmem:[%s202 + $0x9d0] sm:$0xff]
        %v583 = vld [vmem:[%s202 + $0x9d8] sm:$0xff]
        %v584 = vld [vmem:[%s202 + $0x9e0] sm:$0xff]
        %v585 = vld [vmem:[%s202 + $0x9e8] sm:$0xff]
        %v586 = vld [vmem:[%s202 + $0x9f0] sm:$0xff]
        %v587 = vld [vmem:[%s202 + $0x9f8] sm:$0xff]
        %v588 = vld [vmem:[%s202 + $0xa00] sm:$0xff]
        %v589 = vld [vmem:[%s202 + $0xa08] sm:$0xff]
        %v590 = vld [vmem:[%s202 + $0xa10] sm:$0xff]
        %v591 = vld [vmem:[%s202 + $0xa18] sm:$0xff]
        %v592 = vld [vmem:[%s202 + $0xa20] sm:$0xff]
        %v593 = vld [vmem:[%s202 + $0xa28] sm:$0xff]
        %v594 = vld [vmem:[%s202 + $0xa30] sm:$0xff]
        %v595 = vld [vmem:[%s202 + $0xa38] sm:$0xff]
        %v596 = vld [vmem:[%s202 + $0xa40] sm:$0xff]
        %v597 = vld [vmem:[%s202 + $0xa48] sm:$0xff]
        %v598 = vld [vmem:[%s202 + $0xa50] sm:$0xff]
        %v599 = vld [vmem:[%s202 + $0xa58] sm:$0xff]
        %v600 = vld [vmem:[%s202 + $0xa60] sm:$0xff]
        %v601 = vld [vmem:[%s202 + $0xa68] sm:$0xff]
        %v602 = vld [vmem:[%s202 + $0xa70] sm:$0xff]
        %v603 = vld [vmem:[%s202 + $0xa78] sm:$0xff]
        %v604 = vld [vmem:[%s202 + $0xa80] sm:$0xff]
        %v605 = vld [vmem:[%s202 + $0xa88] sm:$0xff]
        %v606 = vld [vmem:[%s202 + $0xa90] sm:$0xff]
        %v607 = vld [vmem:[%s202 + $0xa98] sm:$0xff]
        %v608 = vld [vmem:[%s202 + $0xaa0] sm:$0xff]
        %v609 = vld [vmem:[%s202 + $0xaa8] sm:$0xff]
        %v610 = vld [vmem:[%s202 + $0xab0] sm:$0xff]
        %v611 = vld [vmem:[%s202 + $0xab8] sm:$0xff]
        %v612 = vld [vmem:[%s202 + $0xac0] sm:$0xff]
        %v613 = vld [vmem:[%s202 + $0xac8] sm:$0xff]
        %v614 = vld [vmem:[%s202 + $0xad0] sm:$0xff]
        %v615 = vld [vmem:[%s202 + $0xad8] sm:$0xff]
        %v616 = vld [vmem:[%s202 + $0xae0] sm:$0xff]
        %v617 = vld [vmem:[%s202 + $0xae8] sm:$0xff]
        %v618 = vld [vmem:[%s202 + $0xaf0] sm:$0xff]
        %v619 = vld [vmem:[%s202 + $0xaf8] sm:$0xff]
        %v620 = vld [vmem:[%s202 + $0xb00] sm:$0xff]
        %v621 = vld [vmem:[%s202 + $0xb08] sm:$0xff]
        %v622 = vld [vmem:[%s202 + $0xb10] sm:$0xff]
        %v623 = vld [vmem:[%s202 + $0xb18] sm:$0xff]
        %v624 = vld [vmem:[%s202 + $0xb20] sm:$0xff]
        %v625 = vld [vmem:[%s202 + $0xb28] sm:$0xff]
        %v626 = vld [vmem:[%s202 + $0xb30] sm:$0xff]
        %v627 = vld [vmem:[%s202 + $0xb38] sm:$0xff]
        %v628 = vld [vmem:[%s202 + $0xb40] sm:$0xff]
        %v629 = vld [vmem:[%s202 + $0xb48] sm:$0xff]
        %v630 = vld [vmem:[%s202 + $0xb50] sm:$0xff]
        %v631 = vld [vmem:[%s202 + $0xb58] sm:$0xff]
        %v632 = vld [vmem:[%s202 + $0xb60] sm:$0xff]
        %v633 = vld [vmem:[%s202 + $0xb68] sm:$0xff]
        %v634 = vld [vmem:[%s202 + $0xb70] sm:$0xff]
        %v635 = vld [vmem:[%s202 + $0xb78] sm:$0xff]
        %v636 = vld [vmem:[%s202 + $0xb80] sm:$0xff]
        %v637 = vld [vmem:[%s202 + $0xb88] sm:$0xff]
        %v638 = vld [vmem:[%s202 + $0xb90] sm:$0xff]
        %v639 = vld [vmem:[%s202 + $0xb98] sm:$0xff]
        %v640 = vld [vmem:[%s202 + $0xba0] sm:$0xff]
        %v641 = vld [vmem:[%s202 + $0xba8] sm:$0xff]
        %v642 = vld [vmem:[%s202 + $0xbb0] sm:$0xff]
        %v643 = vld [vmem:[%s202 + $0xbb8] sm:$0xff]
        %v644 = vld [vmem:[%s202 + $0xbc0] sm:$0xff]
        %v645 = vld [vmem:[%s202 + $0xbc8] sm:$0xff]
        %v646 = vld [vmem:[%s202 + $0xbd0] sm:$0xff]
        %v647 = vld [vmem:[%s202 + $0xbd8] sm:$0xff]
        %v648 = vld [vmem:[%s202 + $0xbe0] sm:$0xff]
        %v649 = vld [vmem:[%s202 + $0xbe8] sm:$0xff]
        %v650 = vld [vmem:[%s202 + $0xbf0] sm:$0xff]
        %v651 = vld [vmem:[%s202 + $0xbf8] sm:$0xff]
        %v652 = vld [vmem:[%s202 + $0xc00] sm:$0xff]
        %v653 = vld [vmem:[%s202 + $0xc08] sm:$0xff]
        %v654 = vld [vmem:[%s202 + $0xc10] sm:$0xff]
        %v655 = vld [vmem:[%s202 + $0xc18] sm:$0xff]
        %v656 = vld [vmem:[%s202 + $0xc20] sm:$0xff]
        %v657 = vld [vmem:[%s202 + $0xc28] sm:$0xff]
        %v658 = vld [vmem:[%s202 + $0xc30] sm:$0xff]
        %v659 = vld [vmem:[%s202 + $0xc38] sm:$0xff]
        %v660 = vld [vmem:[%s202 + $0xc40] sm:$0xff]
        %v661 = vld [vmem:[%s202 + $0xc48] sm:$0xff]
        %v662 = vld [vmem:[%s202 + $0xc50] sm:$0xff]
        %v663 = vld [vmem:[%s202 + $0xc58] sm:$0xff]
        %v664 = vld [vmem:[%s202 + $0xc60] sm:$0xff]
        %v665 = vld [vmem:[%s202 + $0xc68] sm:$0xff]
        %v666 = vld [vmem:[%s202 + $0xc70] sm:$0xff]
        %v667 = vld [vmem:[%s202 + $0xc78] sm:$0xff]
        %v668 = vld [vmem:[%s202 + $0xc80] sm:$0xff]
        %v669 = vld [vmem:[%s202 + $0xc88] sm:$0xff]
        %v670 = vld [vmem:[%s202 + $0xc90] sm:$0xff]
        %v671 = vld [vmem:[%s202 + $0xc98] sm:$0xff]
        %v672 = vld [vmem:[%s202 + $0xca0] sm:$0xff]
        %v673 = vld [vmem:[%s202 + $0xca8] sm:$0xff]
        %v674 = vld [vmem:[%s202 + $0xcb0] sm:$0xff]
        %v675 = vld [vmem:[%s202 + $0xcb8] sm:$0xff]
        %v676 = vld [vmem:[%s202 + $0xcc0] sm:$0xff]
        %v677 = vld [vmem:[%s202 + $0xcc8] sm:$0xff]
        %v678 = vld [vmem:[%s202 + $0xcd0] sm:$0xff]
        %v679 = vld [vmem:[%s202 + $0xcd8] sm:$0xff]
        %v680 = vld [vmem:[%s202 + $0xce0] sm:$0xff]
        %v681 = vld [vmem:[%s202 + $0xce8] sm:$0xff]
        %v682 = vld [vmem:[%s202 + $0xcf0] sm:$0xff]
        %v683 = vld [vmem:[%s202 + $0xcf8] sm:$0xff]
        %v684 = vld [vmem:[%s202 + $0xd00] sm:$0xff]
        %v685 = vld [vmem:[%s202 + $0xd08] sm:$0xff]
        %v686 = vld [vmem:[%s202 + $0xd10] sm:$0xff]
        %v687 = vld [vmem:[%s202 + $0xd18] sm:$0xff]
        %v688 = vld [vmem:[%s202 + $0xd20] sm:$0xff]
        %v689 = vld [vmem:[%s202 + $0xd28] sm:$0xff]
        %v690 = vld [vmem:[%s202 + $0xd30] sm:$0xff]
        %v691 = vld [vmem:[%s202 + $0xd38] sm:$0xff]
        %v692 = vld [vmem:[%s202 + $0xd40] sm:$0xff]
        %v693 = vld [vmem:[%s202 + $0xd48] sm:$0xff]
        %v694 = vld [vmem:[%s202 + $0xd50] sm:$0xff]
        %v695 = vld [vmem:[%s202 + $0xd58] sm:$0xff]
        %v696 = vld [vmem:[%s202 + $0xd60] sm:$0xff]
        %v697 = vld [vmem:[%s202 + $0xd68] sm:$0xff]
        %v698 = vld [vmem:[%s202 + $0xd70] sm:$0xff]
        %v699 = vld [vmem:[%s202 + $0xd78] sm:$0xff]
        %v700 = vld [vmem:[%s202 + $0xd80] sm:$0xff]
        %v701 = vld [vmem:[%s202 + $0xd88] sm:$0xff]
        %v702 = vld [vmem:[%s202 + $0xd90] sm:$0xff]
        %v703 = vld [vmem:[%s202 + $0xd98] sm:$0xff]
        %v704 = vld [vmem:[%s202 + $0xda0] sm:$0xff]
        %v705 = vld [vmem:[%s202 + $0xda8] sm:$0xff]
        %v706 = vld [vmem:[%s202 + $0xdb0] sm:$0xff]
        %v707 = vld [vmem:[%s202 + $0xdb8] sm:$0xff]
        %v708 = vld [vmem:[%s202 + $0xdc0] sm:$0xff]
        %v709 = vld [vmem:[%s202 + $0xdc8] sm:$0xff]
        %v710 = vld [vmem:[%s202 + $0xdd0] sm:$0xff]
        %v711 = vld [vmem:[%s202 + $0xdd8] sm:$0xff]
        %v712 = vld [vmem:[%s202 + $0xde0] sm:$0xff]
        %v713 = vld [vmem:[%s202 + $0xde8] sm:$0xff]
        %v714 = vld [vmem:[%s202 + $0xdf0] sm:$0xff]
        %v715 = vld [vmem:[%s202 + $0xdf8] sm:$0xff]
        %v716 = vld [vmem:[%s202 + $0xe00] sm:$0xff]
        %v717 = vld [vmem:[%s202 + $0xe08] sm:$0xff]
        %v718 = vld [vmem:[%s202 + $0xe10] sm:$0xff]
        %v719 = vld [vmem:[%s202 + $0xe18] sm:$0xff]
        %v720 = vld [vmem:[%s202 + $0xe20] sm:$0xff]
        %v721 = vld [vmem:[%s202 + $0xe28] sm:$0xff]
        %v722 = vld [vmem:[%s202 + $0xe30] sm:$0xff]
        %v723 = vld [vmem:[%s202 + $0xe38] sm:$0xff]
        %v724 = vld [vmem:[%s202 + $0xe40] sm:$0xff]
        %v725 = vld [vmem:[%s202 + $0xe48] sm:$0xff]
        %v726 = vld [vmem:[%s202 + $0xe50] sm:$0xff]
        %v727 = vld [vmem:[%s202 + $0xe58] sm:$0xff]
        %v728 = vld [vmem:[%s202 + $0xe60] sm:$0xff]
        %v729 = vld [vmem:[%s202 + $0xe68] sm:$0xff]
        %v730 = vld [vmem:[%s202 + $0xe70] sm:$0xff]
        %v731 = vld [vmem:[%s202 + $0xe78] sm:$0xff]
        %v732 = vld [vmem:[%s202 + $0xe80] sm:$0xff]
        %v733 = vld [vmem:[%s202 + $0xe88] sm:$0xff]
        %v734 = vld [vmem:[%s202 + $0xe90] sm:$0xff]
        %v735 = vld [vmem:[%s202 + $0xe98] sm:$0xff]
        %v736 = vld [vmem:[%s202 + $0xea0] sm:$0xff]
        %v737 = vld [vmem:[%s202 + $0xea8] sm:$0xff]
        %v738 = vld [vmem:[%s202 + $0xeb0] sm:$0xff]
        %v739 = vld [vmem:[%s202 + $0xeb8] sm:$0xff]
        %v740 = vld [vmem:[%s202 + $0xec0] sm:$0xff]
        %v741 = vld [vmem:[%s202 + $0xec8] sm:$0xff]
        %v742 = vld [vmem:[%s202 + $0xed0] sm:$0xff]
        %v743 = vld [vmem:[%s202 + $0xed8] sm:$0xff]
        %v744 = vld [vmem:[%s202 + $0xee0] sm:$0xff]
        %v745 = vld [vmem:[%s202 + $0xee8] sm:$0xff]
        %v746 = vld [vmem:[%s202 + $0xef0] sm:$0xff]
        %v747 = vld [vmem:[%s202 + $0xef8] sm:$0xff]
        %v748 = vld [vmem:[%s202 + $0xf00] sm:$0xff]
        %v749 = vld [vmem:[%s202 + $0xf08] sm:$0xff]
        %v750 = vld [vmem:[%s202 + $0xf10] sm:$0xff]
        %v751 = vld [vmem:[%s202 + $0xf18] sm:$0xff]
        %v752 = vld [vmem:[%s202 + $0xf20] sm:$0xff]
        %v753 = vld [vmem:[%s202 + $0xf28] sm:$0xff]
        %v754 = vld [vmem:[%s202 + $0xf30] sm:$0xff]
        %v755 = vld [vmem:[%s202 + $0xf38] sm:$0xff]
        %v756 = vld [vmem:[%s202 + $0xf40] sm:$0xff]
        %v757 = vld [vmem:[%s202 + $0xf48] sm:$0xff]
        %v758 = vld [vmem:[%s202 + $0xf50] sm:$0xff]
        %v759 = vld [vmem:[%s202 + $0xf58] sm:$0xff]
        %v760 = vld [vmem:[%s202 + $0xf60] sm:$0xff]
        %v761 = vld [vmem:[%s202 + $0xf68] sm:$0xff]
        %v762 = vld [vmem:[%s202 + $0xf70] sm:$0xff]
        %v763 = vld [vmem:[%s202 + $0xf78] sm:$0xff]
        %v764 = vld [vmem:[%s202 + $0xf80] sm:$0xff]
        %v765 = vld [vmem:[%s202 + $0xf88] sm:$0xff]
        %v766 = vld [vmem:[%s202 + $0xf90] sm:$0xff]
        %v767 = vld [vmem:[%s202 + $0xf98] sm:$0xff]
        %v768 = vld [vmem:[%s202 + $0xfa0] sm:$0xff]
        %v769 = vld [vmem:[%s202 + $0xfa8] sm:$0xff]
        %v770 = vld [vmem:[%s202 + $0xfb0] sm:$0xff]
        %v771 = vld [vmem:[%s202 + $0xfb8] sm:$0xff]
        %v772 = vld [vmem:[%s202 + $0xfc0] sm:$0xff]
        %v773 = vld [vmem:[%s202 + $0xfc8] sm:$0xff]
        %v774 = vld [vmem:[%s202 + $0xfd0] sm:$0xff]
        %v775 = vld [vmem:[%s202 + $0xfd8] sm:$0xff]
        %v776 = vld [vmem:[%s202 + $0xfe0] sm:$0xff]
        %v777 = vld [vmem:[%s202 + $0xfe8] sm:$0xff]
        %v778 = vld [vmem:[%s202 + $0xff0] sm:$0xff]
        %v779 = vld [vmem:[%s202 + $0xff8] sm:$0xff]
        %v780 = vld [vmem:[%s202 + $0x1000] sm:$0xff]
        %v781 = vld [vmem:[%s202 + $0x1008] sm:$0xff]
        %v782 = vld [vmem:[%s202 + $0x1010] sm:$0xff]
        %v783 = vld [vmem:[%s202 + $0x1018] sm:$0xff]
        %v784 = vld [vmem:[%s202 + $0x1020] sm:$0xff]
        %v785 = vld [vmem:[%s202 + $0x1028] sm:$0xff]
        %v786 = vld [vmem:[%s202 + $0x1030] sm:$0xff]
        %v787 = vld [vmem:[%s202 + $0x1038] sm:$0xff]
        %v788 = vld [vmem:[%s202 + $0x1040] sm:$0xff]
        %v789 = vld [vmem:[%s202 + $0x1048] sm:$0xff]
        %v790 = vld [vmem:[%s202 + $0x1050] sm:$0xff]
        %v791 = vld [vmem:[%s202 + $0x1058] sm:$0xff]
        %v792 = vld [vmem:[%s202 + $0x1060] sm:$0xff]
        %v793 = vld [vmem:[%s202 + $0x1068] sm:$0xff]
        %v794 = vld [vmem:[%s202 + $0x1070] sm:$0xff]
        %v795 = vld [vmem:[%s202 + $0x1078] sm:$0xff]
        %v796 = vld [vmem:[%s202 + $0x1080] sm:$0xff]
        %v797 = vld [vmem:[%s202 + $0x1088] sm:$0xff]
        %v798 = vld [vmem:[%s202 + $0x1090] sm:$0xff]
        %v799 = vld [vmem:[%s202 + $0x1098] sm:$0xff]
        %v800 = vld [vmem:[%s202 + $0x10a0] sm:$0xff]
        %v801 = vld [vmem:[%s202 + $0x10a8] sm:$0xff]
        %v802 = vld [vmem:[%s202 + $0x10b0] sm:$0xff]
        %v803 = vld [vmem:[%s202 + $0x10b8] sm:$0xff]
        %v804 = vld [vmem:[%s202 + $0x10c0] sm:$0xff]
        %v805 = vld [vmem:[%s202 + $0x10c8] sm:$0xff]
        %v806 = vld [vmem:[%s202 + $0x10d0] sm:$0xff]
        %v807 = vld [vmem:[%s202 + $0x10d8] sm:$0xff]
        %v808 = vld [vmem:[%s202 + $0x10e0] sm:$0xff]
        %v809 = vld [vmem:[%s202 + $0x10e8] sm:$0xff]
        %v810 = vld [vmem:[%s202 + $0x10f0] sm:$0xff]
        %v811 = vld [vmem:[%s202 + $0x10f8] sm:$0xff]
        %v812 = vld [vmem:[%s202 + $0x1100] sm:$0xff]
        %v813 = vld [vmem:[%s202 + $0x1108] sm:$0xff]
        %v814 = vld [vmem:[%s202 + $0x1110] sm:$0xff]
        %v815 = vld [vmem:[%s202 + $0x1118] sm:$0xff]
        %v816 = vld [vmem:[%s202 + $0x1120] sm:$0xff]
        %v817 = vld [vmem:[%s202 + $0x1128] sm:$0xff]
        %v818 = vld [vmem:[%s202 + $0x1130] sm:$0xff]
        %v819 = vld [vmem:[%s202 + $0x1138] sm:$0xff]
        %v820 = vld [vmem:[%s202 + $0x1140] sm:$0xff]
        %v821 = vld [vmem:[%s202 + $0x1148] sm:$0xff]
        %v822 = vld [vmem:[%s202 + $0x1150] sm:$0xff]
        %v823 = vld [vmem:[%s202 + $0x1158] sm:$0xff]
        %v824 = vld [vmem:[%s202 + $0x1160] sm:$0xff]
        %v825 = vld [vmem:[%s202 + $0x1168] sm:$0xff]
        %v826 = vld [vmem:[%s202 + $0x1170] sm:$0xff]
        %v827 = vld [vmem:[%s202 + $0x1178] sm:$0xff]
        %v828 = vld [vmem:[%s202 + $0x1180] sm:$0xff]
        %v829 = vld [vmem:[%s202 + $0x1188] sm:$0xff]
        %v830 = vld [vmem:[%s202 + $0x1190] sm:$0xff]
        %v831 = vld [vmem:[%s202 + $0x1198] sm:$0xff]
        %v832 = vld [vmem:[%s202 + $0x11a0] sm:$0xff]
        %v833 = vld [vmem:[%s202 + $0x11a8] sm:$0xff]
        %v834 = vld [vmem:[%s202 + $0x11b0] sm:$0xff]
        %v835 = vld [vmem:[%s202 + $0x11b8] sm:$0xff]
        %v836 = vld [vmem:[%s202 + $0x11c0] sm:$0xff]
        %v837 = vld [vmem:[%s202 + $0x11c8] sm:$0xff]
        %v838 = vld [vmem:[%s202 + $0x11d0] sm:$0xff]
        %v839 = vld [vmem:[%s202 + $0x11d8] sm:$0xff]
        %v840 = vld [vmem:[%s202 + $0x11e0] sm:$0xff]
        %v841 = vld [vmem:[%s202 + $0x11e8] sm:$0xff]
        %v842 = vld [vmem:[%s202 + $0x11f0] sm:$0xff]
        %v843 = vld [vmem:[%s202 + $0x11f8] sm:$0xff]
        %v844 = vld [vmem:[%s202 + $0x1200] sm:$0xff]
        %v845 = vld [vmem:[%s202 + $0x1208] sm:$0xff]
        %v846 = vld [vmem:[%s202 + $0x1210] sm:$0xff]
        %v847 = vld [vmem:[%s202 + $0x1218] sm:$0xff]
        %v848 = vld [vmem:[%s202 + $0x1220] sm:$0xff]
        %v849 = vld [vmem:[%s202 + $0x1228] sm:$0xff]
        %v850 = vld [vmem:[%s202 + $0x1230] sm:$0xff]
        %v851 = vld [vmem:[%s202 + $0x1238] sm:$0xff]
        %v852 = vld [vmem:[%s202 + $0x1240] sm:$0xff]
        %v853 = vld [vmem:[%s202 + $0x1248] sm:$0xff]
        %v854 = vld [vmem:[%s202 + $0x1250] sm:$0xff]
        %v855 = vld [vmem:[%s202 + $0x1258] sm:$0xff]
        %v856 = vld [vmem:[%s202 + $0x1260] sm:$0xff]
        %v857 = vld [vmem:[%s202 + $0x1268] sm:$0xff]
        %v858 = vld [vmem:[%s202 + $0x1270] sm:$0xff]
        %v859 = vld [vmem:[%s202 + $0x1278] sm:$0xff]
        %v860 = vld [vmem:[%s202 + $0x1280] sm:$0xff]
        %v861 = vld [vmem:[%s202 + $0x1288] sm:$0xff]
        %v862 = vld [vmem:[%s202 + $0x1290] sm:$0xff]
        %v863 = vld [vmem:[%s202 + $0x1298] sm:$0xff]
        %v864 = vld [vmem:[%s202 + $0x12a0] sm:$0xff]
        %v865 = vld [vmem:[%s202 + $0x12a8] sm:$0xff]
        %v866 = vld [vmem:[%s202 + $0x12b0] sm:$0xff]
        %v867 = vld [vmem:[%s202 + $0x12b8] sm:$0xff]
        %v868 = vld [vmem:[%s202 + $0x12c0] sm:$0xff]
        %v869 = vld [vmem:[%s202 + $0x12c8] sm:$0xff]
        %v870 = vld [vmem:[%s202 + $0x12d0] sm:$0xff]
        %v871 = vld [vmem:[%s202 + $0x12d8] sm:$0xff]
        %v872 = vld [vmem:[%s202 + $0x12e0] sm:$0xff]
        %v873 = vld [vmem:[%s202 + $0x12e8] sm:$0xff]
        %v874 = vld [vmem:[%s202 + $0x12f0] sm:$0xff]
        %v875 = vld [vmem:[%s202 + $0x12f8] sm:$0xff]
        %v876 = vld [vmem:[%s202 + $0x1300] sm:$0xff]
        %v877 = vld [vmem:[%s202 + $0x1308] sm:$0xff]
        %v878 = vld [vmem:[%s202 + $0x1310] sm:$0xff]
        %v879 = vld [vmem:[%s202 + $0x1318] sm:$0xff]
        %v880 = vld [vmem:[%s202 + $0x1320] sm:$0xff]
        %v881 = vld [vmem:[%s202 + $0x1328] sm:$0xff]
        %v882 = vld [vmem:[%s202 + $0x1330] sm:$0xff]
        %v883 = vld [vmem:[%s202 + $0x1338] sm:$0xff]
        %v884 = vld [vmem:[%s202 + $0x1340] sm:$0xff]
        %v885 = vld [vmem:[%s202 + $0x1348] sm:$0xff]
        %v886 = vld [vmem:[%s202 + $0x1350] sm:$0xff]
        %v887 = vld [vmem:[%s202 + $0x1358] sm:$0xff]
        %v888 = vld [vmem:[%s202 + $0x1360] sm:$0xff]
        %v889 = vld [vmem:[%s202 + $0x1368] sm:$0xff]
        %v890 = vld [vmem:[%s202 + $0x1370] sm:$0xff]
        %v891 = vld [vmem:[%s202 + $0x1378] sm:$0xff]
        %v892 = vld [vmem:[%s202 + $0x1380] sm:$0xff]
        %v893 = vld [vmem:[%s202 + $0x1388] sm:$0xff]
        %v894 = vld [vmem:[%s202 + $0x1390] sm:$0xff]
        %v895 = vld [vmem:[%s202 + $0x1398] sm:$0xff]
        %v896 = vld [vmem:[%s202 + $0x13a0] sm:$0xff]
        %v897 = vld [vmem:[%s202 + $0x13a8] sm:$0xff]
        %v898 = vld [vmem:[%s202 + $0x13b0] sm:$0xff]
        %v899 = vld [vmem:[%s202 + $0x13b8] sm:$0xff]
        %v900 = vld [vmem:[%s202 + $0x13c0] sm:$0xff]
        %v901 = vld [vmem:[%s202 + $0x13c8] sm:$0xff]
        %v902 = vld [vmem:[%s202 + $0x13d0] sm:$0xff]
        %v903 = vld [vmem:[%s202 + $0x13d8] sm:$0xff]
        %v904 = vld [vmem:[%s202 + $0x13e0] sm:$0xff]
        %v905 = vld [vmem:[%s202 + $0x13e8] sm:$0xff]
        %v906 = vld [vmem:[%s202 + $0x13f0] sm:$0xff]
        %v907 = vld [vmem:[%s202 + $0x13f8] sm:$0xff]
        %v908 = vld [vmem:[%s202 + $0x1400] sm:$0xff]
        %v909 = vld [vmem:[%s202 + $0x1408] sm:$0xff]
        %v910 = vld [vmem:[%s202 + $0x1410] sm:$0xff]
        %v911 = vld [vmem:[%s202 + $0x1418] sm:$0xff]
        %v912 = vld [vmem:[%s202 + $0x1420] sm:$0xff]
        %v913 = vld [vmem:[%s202 + $0x1428] sm:$0xff]
        %v914 = vld [vmem:[%s202 + $0x1430] sm:$0xff]
        %v915 = vld [vmem:[%s202 + $0x1438] sm:$0xff]
        %v916 = vld [vmem:[%s202 + $0x1440] sm:$0xff]
        %v917 = vld [vmem:[%s202 + $0x1448] sm:$0xff]
        %v918 = vld [vmem:[%s202 + $0x1450] sm:$0xff]
        %v919 = vld [vmem:[%s202 + $0x1458] sm:$0xff]
        %v920 = vld [vmem:[%s202 + $0x1460] sm:$0xff]
        %v921 = vld [vmem:[%s202 + $0x1468] sm:$0xff]
        %v922 = vld [vmem:[%s202 + $0x1470] sm:$0xff]
        %v923 = vld [vmem:[%s202 + $0x1478] sm:$0xff]
        %v924 = vld [vmem:[%s202 + $0x1480] sm:$0xff]
        %v925 = vld [vmem:[%s202 + $0x1488] sm:$0xff]
        %v926 = vld [vmem:[%s202 + $0x1490] sm:$0xff]
        %v927 = vld [vmem:[%s202 + $0x1498] sm:$0xff]
        %v928 = vld [vmem:[%s202 + $0x14a0] sm:$0xff]
        %v929 = vld [vmem:[%s202 + $0x14a8] sm:$0xff]
        %v930 = vld [vmem:[%s202 + $0x14b0] sm:$0xff]
        %v931 = vld [vmem:[%s202 + $0x14b8] sm:$0xff]
        %v932 = vld [vmem:[%s202 + $0x14c0] sm:$0xff]
        %v933 = vld [vmem:[%s202 + $0x14c8] sm:$0xff]
        %v934 = vld [vmem:[%s202 + $0x14d0] sm:$0xff]
        %v935 = vld [vmem:[%s202 + $0x14d8] sm:$0xff]
        %v936 = vld [vmem:[%s202 + $0x14e0] sm:$0xff]
        %v937 = vld [vmem:[%s202 + $0x14e8] sm:$0xff]
        %v938 = vld [vmem:[%s202 + $0x14f0] sm:$0xff]
        %v939 = vld [vmem:[%s202 + $0x14f8] sm:$0xff]
        %v940 = vld [vmem:[%s202 + $0x1500] sm:$0xff]
        %v941 = vld [vmem:[%s202 + $0x1508] sm:$0xff]
        %v942 = vld [vmem:[%s202 + $0x1510] sm:$0xff]
        %v943 = vld [vmem:[%s202 + $0x1518] sm:$0xff]
        %v944 = vld [vmem:[%s202 + $0x1520] sm:$0xff]
        %v945 = vld [vmem:[%s202 + $0x1528] sm:$0xff]
        %v946 = vld [vmem:[%s202 + $0x1530] sm:$0xff]
        %v947 = vld [vmem:[%s202 + $0x1538] sm:$0xff]
        %v948 = vld [vmem:[%s202 + $0x1540] sm:$0xff]
        %v949 = vld [vmem:[%s202 + $0x1548] sm:$0xff]
        %v950 = vld [vmem:[%s202 + $0x1550] sm:$0xff]
        %v951 = vld [vmem:[%s202 + $0x1558] sm:$0xff]
        %v952 = vld [vmem:[%s202 + $0x1560] sm:$0xff]
        %v953 = vld [vmem:[%s202 + $0x1568] sm:$0xff]
        %v954 = vld [vmem:[%s202 + $0x1570] sm:$0xff]
        %v955 = vld [vmem:[%s202 + $0x1578] sm:$0xff]
        %v956 = vld [vmem:[%s202 + $0x1580] sm:$0xff]
        %v957 = vld [vmem:[%s202 + $0x1588] sm:$0xff]
        %v958 = vld [vmem:[%s202 + $0x1590] sm:$0xff]
        %v959 = vld [vmem:[%s202 + $0x1598] sm:$0xff]
        %v960 = vld [vmem:[%s202 + $0x15a0] sm:$0xff]
        %v961 = vld [vmem:[%s202 + $0x15a8] sm:$0xff]
        %v962 = vld [vmem:[%s202 + $0x15b0] sm:$0xff]
        %v963 = vld [vmem:[%s202 + $0x15b8] sm:$0xff]
        %v964 = vld [vmem:[%s202 + $0x15c0] sm:$0xff]
        %v965 = vld [vmem:[%s202 + $0x15c8] sm:$0xff]
        %v966 = vld [vmem:[%s202 + $0x15d0] sm:$0xff]
        %v967 = vld [vmem:[%s202 + $0x15d8] sm:$0xff]
        %v968 = vld [vmem:[%s202 + $0x15e0] sm:$0xff]
        %v969 = vld [vmem:[%s202 + $0x15e8] sm:$0xff]
        %v970 = vld [vmem:[%s202 + $0x15f0] sm:$0xff]
        %v971 = vld [vmem:[%s202 + $0x15f8] sm:$0xff]
        %v972 = vld [vmem:[%s202 + $0x1600] sm:$0xff]
        %v973 = vld [vmem:[%s202 + $0x1608] sm:$0xff]
        %v974 = vld [vmem:[%s202 + $0x1610] sm:$0xff]
        %v975 = vld [vmem:[%s202 + $0x1618] sm:$0xff]
        %v976 = vld [vmem:[%s202 + $0x1620] sm:$0xff]
        %v977 = vld [vmem:[%s202 + $0x1628] sm:$0xff]
        %v978 = vld [vmem:[%s202 + $0x1630] sm:$0xff]
        %v979 = vld [vmem:[%s202 + $0x1638] sm:$0xff]
        %v980 = vld [vmem:[%s202 + $0x1640] sm:$0xff]
        %v981 = vld [vmem:[%s202 + $0x1648] sm:$0xff]
        %v982 = vld [vmem:[%s202 + $0x1650] sm:$0xff]
        %v983 = vld [vmem:[%s202 + $0x1658] sm:$0xff]
        %v984 = vld [vmem:[%s202 + $0x1660] sm:$0xff]
        %v985 = vld [vmem:[%s202 + $0x1668] sm:$0xff]
        %v986 = vld [vmem:[%s202 + $0x1670] sm:$0xff]
        %v987 = vld [vmem:[%s202 + $0x1678] sm:$0xff]
        %v988 = vld [vmem:[%s202 + $0x1680] sm:$0xff]
        %v989 = vld [vmem:[%s202 + $0x1688] sm:$0xff]
        %v990 = vld [vmem:[%s202 + $0x1690] sm:$0xff]
        %v991 = vld [vmem:[%s202 + $0x1698] sm:$0xff]
        %v992 = vld [vmem:[%s202 + $0x16a0] sm:$0xff]
        %v993 = vld [vmem:[%s202 + $0x16a8] sm:$0xff]
        %v994 = vld [vmem:[%s202 + $0x16b0] sm:$0xff]
        %v995 = vld [vmem:[%s202 + $0x16b8] sm:$0xff]
        %v996 = vld [vmem:[%s202 + $0x16c0] sm:$0xff]
        %v997 = vld [vmem:[%s202 + $0x16c8] sm:$0xff]
        %v998 = vld [vmem:[%s202 + $0x16d0] sm:$0xff]
        %v999 = vld [vmem:[%s202 + $0x16d8] sm:$0xff]
        %v1000 = vld [vmem:[%s202 + $0x16e0] sm:$0xff]
        %v1001 = vld [vmem:[%s202 + $0x16e8] sm:$0xff]
        %v1002 = vld [vmem:[%s202 + $0x16f0] sm:$0xff]
        %v1003 = vld [vmem:[%s202 + $0x16f8] sm:$0xff]
        %v1004 = vld [vmem:[%s202 + $0x1700] sm:$0xff]
        %v1005 = vld [vmem:[%s202 + $0x1708] sm:$0xff]
        %v1006 = vld [vmem:[%s202 + $0x1710] sm:$0xff]
        %v1007 = vld [vmem:[%s202 + $0x1718] sm:$0xff]
        %v1008 = vld [vmem:[%s202 + $0x1720] sm:$0xff]
        %v1009 = vld [vmem:[%s202 + $0x1728] sm:$0xff]
        %v1010 = vld [vmem:[%s202 + $0x1730] sm:$0xff]
        %v1011 = vld [vmem:[%s202 + $0x1738] sm:$0xff]
        %v1012 = vld [vmem:[%s202 + $0x1740] sm:$0xff]
        %v1013 = vld [vmem:[%s202 + $0x1748] sm:$0xff]
        %v1014 = vld [vmem:[%s202 + $0x1750] sm:$0xff]
        %v1015 = vld [vmem:[%s202 + $0x1758] sm:$0xff]
        %v1016 = vld [vmem:[%s202 + $0x1760] sm:$0xff]
        %v1017 = vld [vmem:[%s202 + $0x1768] sm:$0xff]
        %v1018 = vld [vmem:[%s202 + $0x1770] sm:$0xff]
        %v1019 = vld [vmem:[%s202 + $0x1778] sm:$0xff]
        %v1020 = vld [vmem:[%s202 + $0x1780] sm:$0xff]
        %v1021 = vld [vmem:[%s202 + $0x1788] sm:$0xff]
        %v1022 = vld [vmem:[%s202 + $0x1790] sm:$0xff]
        %v1023 = vld [vmem:[%s202 + $0x1798] sm:$0xff]
        %v1024 = vld [vmem:[%s202 + $0x17a0] sm:$0xff]
        %v1025 = vld [vmem:[%s202 + $0x17a8] sm:$0xff]
        %v1026 = vld [vmem:[%s202 + $0x17b0] sm:$0xff]
        %v1027 = vld [vmem:[%s202 + $0x17b8] sm:$0xff]
        %v1028 = vld [vmem:[%s202 + $0x17c0] sm:$0xff]
        %v1029 = vld [vmem:[%s202 + $0x17c8] sm:$0xff]
        %v1030 = vld [vmem:[%s202 + $0x17d0] sm:$0xff]
        %v1031 = vld [vmem:[%s202 + $0x17d8] sm:$0xff]
        %v1032 = vld [vmem:[%s202 + $0x17e0] sm:$0xff]
        %v1033 = vld [vmem:[%s202 + $0x17e8] sm:$0xff]
        %v1034 = vld [vmem:[%s202 + $0x17f0] sm:$0xff]
        %v1035 = vld [vmem:[%s202 + $0x17f8] sm:$0xff]
        %v1036 = vld [vmem:[%s202 + $0x1800] sm:$0xff]
        %v1037 = vld [vmem:[%s202 + $0x1808] sm:$0xff]
        %v1038 = vld [vmem:[%s202 + $0x1810] sm:$0xff]
        %v1039 = vld [vmem:[%s202 + $0x1818] sm:$0xff]
        %v1040 = vld [vmem:[%s202 + $0x1820] sm:$0xff]
        %v1041 = vld [vmem:[%s202 + $0x1828] sm:$0xff]
        %v1042 = vld [vmem:[%s202 + $0x1830] sm:$0xff]
        %v1043 = vld [vmem:[%s202 + $0x1838] sm:$0xff]
        %v1044 = vld [vmem:[%s202 + $0x1840] sm:$0xff]
        %v1045 = vld [vmem:[%s202 + $0x1848] sm:$0xff]
        %v1046 = vld [vmem:[%s202 + $0x1850] sm:$0xff]
        %v1047 = vld [vmem:[%s202 + $0x1858] sm:$0xff]
        %v1048 = vld [vmem:[%s202 + $0x1860] sm:$0xff]
        %v1049 = vld [vmem:[%s202 + $0x1868] sm:$0xff]
        %v1050 = vld [vmem:[%s202 + $0x1870] sm:$0xff]
        %v1051 = vld [vmem:[%s202 + $0x1878] sm:$0xff]
        %v1052 = vld [vmem:[%s202 + $0x1880] sm:$0xff]
        %v1053 = vld [vmem:[%s202 + $0x1888] sm:$0xff]
        %v1054 = vld [vmem:[%s202 + $0x1890] sm:$0xff]
        %v1055 = vld [vmem:[%s202 + $0x1898] sm:$0xff]
        %v1056 = vld [vmem:[%s202 + $0x18a0] sm:$0xff]
        %v1057 = vld [vmem:[%s202 + $0x18a8] sm:$0xff]
        %v1058 = vld [vmem:[%s202 + $0x18b0] sm:$0xff]
        %v1059 = vld [vmem:[%s202 + $0x18b8] sm:$0xff]
        %v1060 = vld [vmem:[%s202 + $0x18c0] sm:$0xff]
        %v1061 = vld [vmem:[%s202 + $0x18c8] sm:$0xff]
        %v1062 = vld [vmem:[%s202 + $0x18d0] sm:$0xff]
        %v1063 = vld [vmem:[%s202 + $0x18d8] sm:$0xff]
        %v1064 = vld [vmem:[%s202 + $0x18e0] sm:$0xff]
        %v1065 = vld [vmem:[%s202 + $0x18e8] sm:$0xff]
        %v1066 = vld [vmem:[%s202 + $0x18f0] sm:$0xff]
        %v1067 = vld [vmem:[%s202 + $0x18f8] sm:$0xff]
        %v1068 = vld [vmem:[%s202 + $0x1900] sm:$0xff]
        %v1069 = vld [vmem:[%s202 + $0x1908] sm:$0xff]
        %v1070 = vld [vmem:[%s202 + $0x1910] sm:$0xff]
        %v1071 = vld [vmem:[%s202 + $0x1918] sm:$0xff]
        %v1072 = vld [vmem:[%s202 + $0x1920] sm:$0xff]
        %v1073 = vld [vmem:[%s202 + $0x1928] sm:$0xff]
        %v1074 = vld [vmem:[%s202 + $0x1930] sm:$0xff]
        %v1075 = vld [vmem:[%s202 + $0x1938] sm:$0xff]
        %v1076 = vld [vmem:[%s202 + $0x1940] sm:$0xff]
        %v1077 = vld [vmem:[%s202 + $0x1948] sm:$0xff]
        %v1078 = vld [vmem:[%s202 + $0x1950] sm:$0xff]
        %v1079 = vld [vmem:[%s202 + $0x1958] sm:$0xff]
        %v1080 = vld [vmem:[%s202 + $0x1960] sm:$0xff]
        %v1081 = vld [vmem:[%s202 + $0x1968] sm:$0xff]
        %v1082 = vld [vmem:[%s202 + $0x1970] sm:$0xff]
        %v1083 = vld [vmem:[%s202 + $0x1978] sm:$0xff]
        %v1084 = vld [vmem:[%s202 + $0x1980] sm:$0xff]
        %v1085 = vld [vmem:[%s202 + $0x1988] sm:$0xff]
        %v1086 = vld [vmem:[%s202 + $0x1990] sm:$0xff]
        %v1087 = vld [vmem:[%s202 + $0x1998] sm:$0xff]
        %v1088 = vld [vmem:[%s202 + $0x19a0] sm:$0xff]
        %v1089 = vld [vmem:[%s202 + $0x19a8] sm:$0xff]
        %v1090 = vld [vmem:[%s202 + $0x19b0] sm:$0xff]
        %v1091 = vld [vmem:[%s202 + $0x19b8] sm:$0xff]
        %v1092 = vld [vmem:[%s202 + $0x19c0] sm:$0xff]
        %v1093 = vld [vmem:[%s202 + $0x19c8] sm:$0xff]
        %v1094 = vld [vmem:[%s202 + $0x19d0] sm:$0xff]
        %v1095 = vld [vmem:[%s202 + $0x19d8] sm:$0xff]
        %v1096 = vld [vmem:[%s202 + $0x19e0] sm:$0xff]
        %v1097 = vld [vmem:[%s202 + $0x19e8] sm:$0xff]
        %v1098 = vld [vmem:[%s202 + $0x19f0] sm:$0xff]
        %v1099 = vld [vmem:[%s202 + $0x19f8] sm:$0xff]
        %v1100 = vld [vmem:[%s202 + $0x1a00] sm:$0xff]
        %v1101 = vld [vmem:[%s202 + $0x1a08] sm:$0xff]
        %v1102 = vld [vmem:[%s202 + $0x1a10] sm:$0xff]
        %v1103 = vld [vmem:[%s202 + $0x1a18] sm:$0xff]
        %v1104 = vld [vmem:[%s202 + $0x1a20] sm:$0xff]
        %v1105 = vld [vmem:[%s202 + $0x1a28] sm:$0xff]
        %v1106 = vld [vmem:[%s202 + $0x1a30] sm:$0xff]
        %v1107 = vld [vmem:[%s202 + $0x1a38] sm:$0xff]
        %v1108 = vld [vmem:[%s202 + $0x1a40] sm:$0xff]
        %v1109 = vld [vmem:[%s202 + $0x1a48] sm:$0xff]
        %v1110 = vld [vmem:[%s202 + $0x1a50] sm:$0xff]
        %v1111 = vld [vmem:[%s202 + $0x1a58] sm:$0xff]
        %v1112 = vld [vmem:[%s202 + $0x1a60] sm:$0xff]
        %v1113 = vld [vmem:[%s202 + $0x1a68] sm:$0xff]
        %v1114 = vld [vmem:[%s202 + $0x1a70] sm:$0xff]
        %v1115 = vld [vmem:[%s202 + $0x1a78] sm:$0xff]
        %v1116 = vld [vmem:[%s202 + $0x1a80] sm:$0xff]
        %v1117 = vld [vmem:[%s202 + $0x1a88] sm:$0xff]
        %v1118 = vld [vmem:[%s202 + $0x1a90] sm:$0xff]
        %v1119 = vld [vmem:[%s202 + $0x1a98] sm:$0xff]
        %v1120 = vld [vmem:[%s202 + $0x1aa0] sm:$0xff]
        %v1121 = vld [vmem:[%s202 + $0x1aa8] sm:$0xff]
        %v1122 = vld [vmem:[%s202 + $0x1ab0] sm:$0xff]
        %v1123 = vld [vmem:[%s202 + $0x1ab8] sm:$0xff]
        %v1124 = vld [vmem:[%s202 + $0x1ac0] sm:$0xff]
        %v1125 = vld [vmem:[%s202 + $0x1ac8] sm:$0xff]
        %v1126 = vld [vmem:[%s202 + $0x1ad0] sm:$0xff]
        %v1127 = vld [vmem:[%s202 + $0x1ad8] sm:$0xff]
        %v1128 = vld [vmem:[%s202 + $0x1ae0] sm:$0xff]
        %v1129 = vld [vmem:[%s202 + $0x1ae8] sm:$0xff]
        %v1130 = vld [vmem:[%s202 + $0x1af0] sm:$0xff]
        %v1131 = vld [vmem:[%s202 + $0x1af8] sm:$0xff]
        %v1132 = vld [vmem:[%s202 + $0x1b00] sm:$0xff]
        %v1133 = vld [vmem:[%s202 + $0x1b08] sm:$0xff]
        %v1134 = vld [vmem:[%s202 + $0x1b10] sm:$0xff]
        %v1135 = vld [vmem:[%s202 + $0x1b18] sm:$0xff]
        %v1136 = vld [vmem:[%s202 + $0x1b20] sm:$0xff]
        %v1137 = vld [vmem:[%s202 + $0x1b28] sm:$0xff]
        %v1138 = vld [vmem:[%s202 + $0x1b30] sm:$0xff]
        %v1139 = vld [vmem:[%s202 + $0x1b38] sm:$0xff]
        %v1140 = vld [vmem:[%s202 + $0x1b40] sm:$0xff]
        %v1141 = vld [vmem:[%s202 + $0x1b48] sm:$0xff]
        %v1142 = vld [vmem:[%s202 + $0x1b50] sm:$0xff]
        %v1143 = vld [vmem:[%s202 + $0x1b58] sm:$0xff]
        %v1144 = vld [vmem:[%s202 + $0x1b60] sm:$0xff]
        %v1145 = vld [vmem:[%s202 + $0x1b68] sm:$0xff]
        %v1146 = vld [vmem:[%s202 + $0x1b70] sm:$0xff]
        %v1147 = vld [vmem:[%s202 + $0x1b78] sm:$0xff]
        %v1148 = vld [vmem:[%s202 + $0x1b80] sm:$0xff]
        %v1149 = vld [vmem:[%s202 + $0x1b88] sm:$0xff]
        %v1150 = vld [vmem:[%s202 + $0x1b90] sm:$0xff]
        %v1151 = vld [vmem:[%s202 + $0x1b98] sm:$0xff]
        %v1152 = vld [vmem:[%s202 + $0x1ba0] sm:$0xff]
        %v1153 = vld [vmem:[%s202 + $0x1ba8] sm:$0xff]
        %v1154 = vld [vmem:[%s202 + $0x1bb0] sm:$0xff]
        %v1155 = vld [vmem:[%s202 + $0x1bb8] sm:$0xff]
        %v1156 = vld [vmem:[%s202 + $0x1bc0] sm:$0xff]
        %v1157 = vld [vmem:[%s202 + $0x1bc8] sm:$0xff]
        %v1158 = vld [vmem:[%s202 + $0x1bd0] sm:$0xff]
        %v1159 = vld [vmem:[%s202 + $0x1bd8] sm:$0xff]
        %v1160 = vld [vmem:[%s202 + $0x1be0] sm:$0xff]
        %v1161 = vld [vmem:[%s202 + $0x1be8] sm:$0xff]
        %v1162 = vld [vmem:[%s202 + $0x1bf0] sm:$0xff]
        %v1163 = vld [vmem:[%s202 + $0x1bf8] sm:$0xff]
        %v1164 = vld [vmem:[%s202 + $0x1c00] sm:$0xff]
        %v1165 = vld [vmem:[%s202 + $0x1c08] sm:$0xff]
        %v1166 = vld [vmem:[%s202 + $0x1c10] sm:$0xff]
        %v1167 = vld [vmem:[%s202 + $0x1c18] sm:$0xff]
        %v1168 = vld [vmem:[%s202 + $0x1c20] sm:$0xff]
        %v1169 = vld [vmem:[%s202 + $0x1c28] sm:$0xff]
        %v1170 = vld [vmem:[%s202 + $0x1c30] sm:$0xff]
        %v1171 = vld [vmem:[%s202 + $0x1c38] sm:$0xff]
        %v1172 = vld [vmem:[%s202 + $0x1c40] sm:$0xff]
        %v1173 = vld [vmem:[%s202 + $0x1c48] sm:$0xff]
        %v1174 = vld [vmem:[%s202 + $0x1c50] sm:$0xff]
        %v1175 = vld [vmem:[%s202 + $0x1c58] sm:$0xff]
        %v1176 = vld [vmem:[%s202 + $0x1c60] sm:$0xff]
        %v1177 = vld [vmem:[%s202 + $0x1c68] sm:$0xff]
        %v1178 = vld [vmem:[%s202 + $0x1c70] sm:$0xff]
        %v1179 = vld [vmem:[%s202 + $0x1c78] sm:$0xff]
        %v1180 = vld [vmem:[%s202 + $0x1c80] sm:$0xff]
        %v1181 = vld [vmem:[%s202 + $0x1c88] sm:$0xff]
        %v1182 = vld [vmem:[%s202 + $0x1c90] sm:$0xff]
        %v1183 = vld [vmem:[%s202 + $0x1c98] sm:$0xff]
        %v1184 = vld [vmem:[%s202 + $0x1ca0] sm:$0xff]
        %v1185 = vld [vmem:[%s202 + $0x1ca8] sm:$0xff]
        %v1186 = vld [vmem:[%s202 + $0x1cb0] sm:$0xff]
        %v1187 = vld [vmem:[%s202 + $0x1cb8] sm:$0xff]
        %v1188 = vld [vmem:[%s202 + $0x1cc0] sm:$0xff]
        %v1189 = vld [vmem:[%s202 + $0x1cc8] sm:$0xff]
        %v1190 = vld [vmem:[%s202 + $0x1cd0] sm:$0xff]
        %v1191 = vld [vmem:[%s202 + $0x1cd8] sm:$0xff]
        %v1192 = vld [vmem:[%s202 + $0x1ce0] sm:$0xff]
        %v1193 = vld [vmem:[%s202 + $0x1ce8] sm:$0xff]
        %v1194 = vld [vmem:[%s202 + $0x1cf0] sm:$0xff]
        %v1195 = vld [vmem:[%s202 + $0x1cf8] sm:$0xff]
        %v1196 = vld [vmem:[%s202 + $0x1d00] sm:$0xff]
        %v1197 = vld [vmem:[%s202 + $0x1d08] sm:$0xff]
        %v1198 = vld [vmem:[%s202 + $0x1d10] sm:$0xff]
        %v1199 = vld [vmem:[%s202 + $0x1d18] sm:$0xff]
        %v1200 = vld [vmem:[%s202 + $0x1d20] sm:$0xff]
        %v1201 = vld [vmem:[%s202 + $0x1d28] sm:$0xff]
        %v1202 = vld [vmem:[%s202 + $0x1d30] sm:$0xff]
        %v1203 = vld [vmem:[%s202 + $0x1d38] sm:$0xff]
        %v1204 = vld [vmem:[%s202 + $0x1d40] sm:$0xff]
        %v1205 = vld [vmem:[%s202 + $0x1d48] sm:$0xff]
        %v1206 = vld [vmem:[%s202 + $0x1d50] sm:$0xff]
        %v1207 = vld [vmem:[%s202 + $0x1d58] sm:$0xff]
        %v1208 = vld [vmem:[%s202 + $0x1d60] sm:$0xff]
        %v1209 = vld [vmem:[%s202 + $0x1d68] sm:$0xff]
        %v1210 = vld [vmem:[%s202 + $0x1d70] sm:$0xff]
        %v1211 = vld [vmem:[%s202 + $0x1d78] sm:$0xff]
        %v1212 = vld [vmem:[%s202 + $0x1d80] sm:$0xff]
        %v1213 = vld [vmem:[%s202 + $0x1d88] sm:$0xff]
        %v1214 = vld [vmem:[%s202 + $0x1d90] sm:$0xff]
        %v1215 = vld [vmem:[%s202 + $0x1d98] sm:$0xff]
        %v1216 = vld [vmem:[%s202 + $0x1da0] sm:$0xff]
        %v1217 = vld [vmem:[%s202 + $0x1da8] sm:$0xff]
        %v1218 = vld [vmem:[%s202 + $0x1db0] sm:$0xff]
        %v1219 = vld [vmem:[%s202 + $0x1db8] sm:$0xff]
        %v1220 = vld [vmem:[%s202 + $0x1dc0] sm:$0xff]
        %v1221 = vld [vmem:[%s202 + $0x1dc8] sm:$0xff]
        %v1222 = vld [vmem:[%s202 + $0x1dd0] sm:$0xff]
        %v1223 = vld [vmem:[%s202 + $0x1dd8] sm:$0xff]
        %v1224 = vld [vmem:[%s202 + $0x1de0] sm:$0xff]
        %v1225 = vld [vmem:[%s202 + $0x1de8] sm:$0xff]
        %v1226 = vld [vmem:[%s202 + $0x1df0] sm:$0xff]
        %v1227 = vld [vmem:[%s202 + $0x1df8] sm:$0xff]
        %v1228 = vld [vmem:[%s202 + $0x1e00] sm:$0xff]
        %v1229 = vld [vmem:[%s202 + $0x1e08] sm:$0xff]
        %v1230 = vld [vmem:[%s202 + $0x1e10] sm:$0xff]
        %v1231 = vld [vmem:[%s202 + $0x1e18] sm:$0xff]
        %v1232 = vld [vmem:[%s202 + $0x1e20] sm:$0xff]
        %v1233 = vld [vmem:[%s202 + $0x1e28] sm:$0xff]
        %v1234 = vld [vmem:[%s202 + $0x1e30] sm:$0xff]
        %v1235 = vld [vmem:[%s202 + $0x1e38] sm:$0xff]
        %v1236 = vld [vmem:[%s202 + $0x1e40] sm:$0xff]
        %v1237 = vld [vmem:[%s202 + $0x1e48] sm:$0xff]
        %v1238 = vld [vmem:[%s202 + $0x1e50] sm:$0xff]
        %v1239 = vld [vmem:[%s202 + $0x1e58] sm:$0xff]
        %v1240 = vld [vmem:[%s202 + $0x1e60] sm:$0xff]
        %v1241 = vld [vmem:[%s202 + $0x1e68] sm:$0xff]
        %v1242 = vld [vmem:[%s202 + $0x1e70] sm:$0xff]
        %v1243 = vld [vmem:[%s202 + $0x1e78] sm:$0xff]
        %v1244 = vld [vmem:[%s202 + $0x1e80] sm:$0xff]
        %v1245 = vld [vmem:[%s202 + $0x1e88] sm:$0xff]
        %v1246 = vld [vmem:[%s202 + $0x1e90] sm:$0xff]
        %v1247 = vld [vmem:[%s202 + $0x1e98] sm:$0xff]
        %v1248 = vld [vmem:[%s202 + $0x1ea0] sm:$0xff]
        %v1249 = vld [vmem:[%s202 + $0x1ea8] sm:$0xff]
        %v1250 = vld [vmem:[%s202 + $0x1eb0] sm:$0xff]
        %v1251 = vld [vmem:[%s202 + $0x1eb8] sm:$0xff]
        %v1252 = vld [vmem:[%s202 + $0x1ec0] sm:$0xff]
        %v1253 = vld [vmem:[%s202 + $0x1ec8] sm:$0xff]
        %v1254 = vld [vmem:[%s202 + $0x1ed0] sm:$0xff]
        %v1255 = vld [vmem:[%s202 + $0x1ed8] sm:$0xff]
        %v1256 = vld [vmem:[%s202 + $0x1ee0] sm:$0xff]
        %v1257 = vld [vmem:[%s202 + $0x1ee8] sm:$0xff]
        %v1258 = vld [vmem:[%s202 + $0x1ef0] sm:$0xff]
        %v1259 = vld [vmem:[%s202 + $0x1ef8] sm:$0xff]
        %v1260 = vld [vmem:[%s202 + $0x1f00] sm:$0xff]
        %v1261 = vld [vmem:[%s202 + $0x1f08] sm:$0xff]
        %v1262 = vld [vmem:[%s202 + $0x1f10] sm:$0xff]
        %v1263 = vld [vmem:[%s202 + $0x1f18] sm:$0xff]
        %v1264 = vld [vmem:[%s202 + $0x1f20] sm:$0xff]
        %v1265 = vld [vmem:[%s202 + $0x1f28] sm:$0xff]
        %v1266 = vld [vmem:[%s202 + $0x1f30] sm:$0xff]
        %v1267 = vld [vmem:[%s202 + $0x1f38] sm:$0xff]
        %v1268 = vld [vmem:[%s202 + $0x1f40] sm:$0xff]
        %v1269 = vld [vmem:[%s202 + $0x1f48] sm:$0xff]
        %v1270 = vld [vmem:[%s202 + $0x1f50] sm:$0xff]
        %v1271 = vld [vmem:[%s202 + $0x1f58] sm:$0xff]
        %v1272 = vld [vmem:[%s202 + $0x1f60] sm:$0xff]
        %v1273 = vld [vmem:[%s202 + $0x1f68] sm:$0xff]
        %v1274 = vld [vmem:[%s202 + $0x1f70] sm:$0xff]
        %v1275 = vld [vmem:[%s202 + $0x1f78] sm:$0xff]
        %v1276 = vld [vmem:[%s202 + $0x1f80] sm:$0xff]
        %v1277 = vld [vmem:[%s202 + $0x1f88] sm:$0xff]
        %v1278 = vld [vmem:[%s202 + $0x1f90] sm:$0xff]
        %v1279 = vld [vmem:[%s202 + $0x1f98] sm:$0xff]
        %v1280 = vld [vmem:[%s202 + $0x1fa0] sm:$0xff]
        %v1281 = vld [vmem:[%s202 + $0x1fa8] sm:$0xff]
        %v1282 = vld [vmem:[%s202 + $0x1fb0] sm:$0xff]
        %v1283 = vld [vmem:[%s202 + $0x1fb8] sm:$0xff]
        %v1284 = vld [vmem:[%s202 + $0x1fc0] sm:$0xff]
        %v1285 = vld [vmem:[%s202 + $0x1fc8] sm:$0xff]
        %v1286 = vld [vmem:[%s202 + $0x1fd0] sm:$0xff]
        %v1287 = vld [vmem:[%s202 + $0x1fd8] sm:$0xff]
        %v1288 = vld [vmem:[%s202 + $0x1fe0] sm:$0xff]
        %v1289 = vld [vmem:[%s202 + $0x1fe8] sm:$0xff]
        %v1290 = vld [vmem:[%s202 + $0x1ff0] sm:$0xff]
        %v1291 = vld [vmem:[%s202 + $0x1ff8] sm:$0xff]
        %v1292 = vld [vmem:[%s202 + $0x2000] sm:$0xff]
        %v1293 = vld [vmem:[%s202 + $0x2008] sm:$0xff]
        %v1294 = vld [vmem:[%s202 + $0x2010] sm:$0xff]
        %v1295 = vld [vmem:[%s202 + $0x2018] sm:$0xff]
        %v1296 = vld [vmem:[%s202 + $0x2020] sm:$0xff]
        %v1297 = vld [vmem:[%s202 + $0x2028] sm:$0xff]
        %v1298 = vld [vmem:[%s202 + $0x2030] sm:$0xff]
        %v1299 = vld [vmem:[%s202 + $0x2038] sm:$0xff]
        %v1300 = vld [vmem:[%s202 + $0x2040] sm:$0xff]
        %v1301 = vld [vmem:[%s202 + $0x2048] sm:$0xff]
        %v1302 = vld [vmem:[%s202 + $0x2050] sm:$0xff]
        %v1303 = vld [vmem:[%s202 + $0x2058] sm:$0xff]
        %v1304 = vld [vmem:[%s202 + $0x2060] sm:$0xff]
        %v1305 = vld [vmem:[%s202 + $0x2068] sm:$0xff]
        %v1306 = vld [vmem:[%s202 + $0x2070] sm:$0xff]
        %v1307 = vld [vmem:[%s202 + $0x2078] sm:$0xff]
        %v1308 = vld [vmem:[%s202 + $0x2080] sm:$0xff]
        %v1309 = vld [vmem:[%s202 + $0x2088] sm:$0xff]
        %v1310 = vld [vmem:[%s202 + $0x2090] sm:$0xff]
        %v1311 = vld [vmem:[%s202 + $0x2098] sm:$0xff]
        %v1312 = vld [vmem:[%s202 + $0x20a0] sm:$0xff]
        %v1313 = vld [vmem:[%s202 + $0x20a8] sm:$0xff]
        %v1314 = vld [vmem:[%s202 + $0x20b0] sm:$0xff]
        %v1315 = vld [vmem:[%s202 + $0x20b8] sm:$0xff]
        %v1316 = vld [vmem:[%s202 + $0x20c0] sm:$0xff]
        %v1317 = vld [vmem:[%s202 + $0x20c8] sm:$0xff]
        %v1318 = vld [vmem:[%s202 + $0x20d0] sm:$0xff]
        %v1319 = vld [vmem:[%s202 + $0x20d8] sm:$0xff]
        %v1320 = vld [vmem:[%s202 + $0x20e0] sm:$0xff]
        %v1321 = vld [vmem:[%s202 + $0x20e8] sm:$0xff]
        %v1322 = vld [vmem:[%s202 + $0x20f0] sm:$0xff]
        %v1323 = vld [vmem:[%s202 + $0x20f8] sm:$0xff]
        %v1324 = vld [vmem:[%s202 + $0x2100] sm:$0xff]
        %v1325 = vld [vmem:[%s202 + $0x2108] sm:$0xff]
        %v1326 = vld [vmem:[%s202 + $0x2110] sm:$0xff]
        %v1327 = vld [vmem:[%s202 + $0x2118] sm:$0xff]
        %v1328 = vld [vmem:[%s202 + $0x2120] sm:$0xff]
        %v1329 = vld [vmem:[%s202 + $0x2128] sm:$0xff]
        %v1330 = vld [vmem:[%s202 + $0x2130] sm:$0xff]
        %v1331 = vld [vmem:[%s202 + $0x2138] sm:$0xff]
        %v1332 = vld [vmem:[%s202 + $0x2140] sm:$0xff]
        %v1333 = vld [vmem:[%s202 + $0x2148] sm:$0xff]
        %v1334 = vld [vmem:[%s202 + $0x2150] sm:$0xff]
        %v1335 = vld [vmem:[%s202 + $0x2158] sm:$0xff]
        %v1336 = vld [vmem:[%s202 + $0x2160] sm:$0xff]
        %v1337 = vld [vmem:[%s202 + $0x2168] sm:$0xff]
        %v1338 = vld [vmem:[%s202 + $0x2170] sm:$0xff]
        %v1339 = vld [vmem:[%s202 + $0x2178] sm:$0xff]
        %v1340 = vld [vmem:[%s202 + $0x2180] sm:$0xff]
        %v1341 = vld [vmem:[%s202 + $0x2188] sm:$0xff]
        %v1342 = vld [vmem:[%s202 + $0x2190] sm:$0xff]
        %v1343 = vld [vmem:[%s202 + $0x2198] sm:$0xff]
        %v1344 = vld [vmem:[%s202 + $0x21a0] sm:$0xff]
        %v1345 = vld [vmem:[%s202 + $0x21a8] sm:$0xff]
        %v1346 = vld [vmem:[%s202 + $0x21b0] sm:$0xff]
        %v1347 = vld [vmem:[%s202 + $0x21b8] sm:$0xff]
        %v1348 = vld [vmem:[%s202 + $0x21c0] sm:$0xff]
        %v1349 = vld [vmem:[%s202 + $0x21c8] sm:$0xff]
        %v1350 = vld [vmem:[%s202 + $0x21d0] sm:$0xff]
        %v1351 = vld [vmem:[%s202 + $0x21d8] sm:$0xff]
        %v1352 = vld [vmem:[%s202 + $0x21e0] sm:$0xff]
        %v1353 = vld [vmem:[%s202 + $0x21e8] sm:$0xff]
        %v1354 = vld [vmem:[%s202 + $0x21f0] sm:$0xff]
        %v1355 = vld [vmem:[%s202 + $0x21f8] sm:$0xff]
        %v1356 = vld [vmem:[%s202 + $0x2200] sm:$0xff]
        %v1357 = vld [vmem:[%s202 + $0x2208] sm:$0xff]
        %v1358 = vld [vmem:[%s202 + $0x2210] sm:$0xff]
        %v1359 = vld [vmem:[%s202 + $0x2218] sm:$0xff]
        %v1360 = vld [vmem:[%s202 + $0x2220] sm:$0xff]
        %v1361 = vld [vmem:[%s202 + $0x2228] sm:$0xff]
        %v1362 = vld [vmem:[%s202 + $0x2230] sm:$0xff]
        %v1363 = vld [vmem:[%s202 + $0x2238] sm:$0xff]
        %v1364 = vld [vmem:[%s202 + $0x2240] sm:$0xff]
        %v1365 = vld [vmem:[%s202 + $0x2248] sm:$0xff]
        %v1366 = vld [vmem:[%s202 + $0x2250] sm:$0xff]
        %v1367 = vld [vmem:[%s202 + $0x2258] sm:$0xff]
        %v1368 = vld [vmem:[%s202 + $0x2260] sm:$0xff]
        %v1369 = vld [vmem:[%s202 + $0x2268] sm:$0xff]
        %v1370 = vld [vmem:[%s202 + $0x2270] sm:$0xff]
        %v1371 = vld [vmem:[%s202 + $0x2278] sm:$0xff]
        %v1372 = vld [vmem:[%s202 + $0x2280] sm:$0xff]
        %v1373 = vld [vmem:[%s202 + $0x2288] sm:$0xff]
        %v1374 = vld [vmem:[%s202 + $0x2290] sm:$0xff]
        %v1375 = vld [vmem:[%s202 + $0x2298] sm:$0xff]
        %v1376 = vld [vmem:[%s202 + $0x22a0] sm:$0xff]
        %v1377 = vld [vmem:[%s202 + $0x22a8] sm:$0xff]
        %v1378 = vld [vmem:[%s202 + $0x22b0] sm:$0xff]
        %v1379 = vld [vmem:[%s202 + $0x22b8] sm:$0xff]
        %v1380 = vld [vmem:[%s202 + $0x22c0] sm:$0xff]
        %v1381 = vld [vmem:[%s202 + $0x22c8] sm:$0xff]
        %v1382 = vld [vmem:[%s202 + $0x22d0] sm:$0xff]
        %v1383 = vld [vmem:[%s202 + $0x22d8] sm:$0xff]
        %v1384 = vld [vmem:[%s202 + $0x22e0] sm:$0xff]
        %v1385 = vld [vmem:[%s202 + $0x22e8] sm:$0xff]
        %v1386 = vld [vmem:[%s202 + $0x22f0] sm:$0xff]
        %v1387 = vld [vmem:[%s202 + $0x22f8] sm:$0xff]
        %v1388 = vld [vmem:[%s202 + $0x2300] sm:$0xff]
        %v1389 = vld [vmem:[%s202 + $0x2308] sm:$0xff]
        %v1390 = vld [vmem:[%s202 + $0x2310] sm:$0xff]
        %v1391 = vld [vmem:[%s202 + $0x2318] sm:$0xff]
        %v1392 = vld [vmem:[%s202 + $0x2320] sm:$0xff]
        %v1393 = vld [vmem:[%s202 + $0x2328] sm:$0xff]
        %v1394 = vld [vmem:[%s202 + $0x2330] sm:$0xff]
        %v1395 = vld [vmem:[%s202 + $0x2338] sm:$0xff]
        %v1396 = vld [vmem:[%s202 + $0x2340] sm:$0xff]
        %v1397 = vld [vmem:[%s202 + $0x2348] sm:$0xff]
        %v1398 = vld [vmem:[%s202 + $0x2350] sm:$0xff]
        %v1399 = vld [vmem:[%s202 + $0x2358] sm:$0xff]
        %v1400 = vld [vmem:[%s202 + $0x2360] sm:$0xff]
        %v1401 = vld [vmem:[%s202 + $0x2368] sm:$0xff]
        %v1402 = vld [vmem:[%s202 + $0x2370] sm:$0xff]
        %v1403 = vld [vmem:[%s202 + $0x2378] sm:$0xff]
        %v1404 = vld [vmem:[%s202 + $0x2380] sm:$0xff]
        %v1405 = vld [vmem:[%s202 + $0x2388] sm:$0xff]
        %v1406 = vld [vmem:[%s202 + $0x2390] sm:$0xff]
        %v1407 = vld [vmem:[%s202 + $0x2398] sm:$0xff]
        %v1408 = vld [vmem:[%s202 + $0x23a0] sm:$0xff]
        %v1409 = vld [vmem:[%s202 + $0x23a8] sm:$0xff]
        %v1410 = vld [vmem:[%s202 + $0x23b0] sm:$0xff]
        %v1411 = vld [vmem:[%s202 + $0x23b8] sm:$0xff]
        %v1412 = vld [vmem:[%s202 + $0x23c0] sm:$0xff]
        %v1413 = vld [vmem:[%s202 + $0x23c8] sm:$0xff]
        %v1414 = vld [vmem:[%s202 + $0x23d0] sm:$0xff]
        %v1415 = vld [vmem:[%s202 + $0x23d8] sm:$0xff]
        %v1416 = vld [vmem:[%s202 + $0x23e0] sm:$0xff]
        %v1417 = vld [vmem:[%s202 + $0x23e8] sm:$0xff]
        %v1418 = vld [vmem:[%s202 + $0x23f0] sm:$0xff]
        %v1419 = vld [vmem:[%s202 + $0x23f8] sm:$0xff]
        %v1420 = vld [vmem:[%s202 + $0x2400] sm:$0xff]
        %v1421 = vld [vmem:[%s202 + $0x2408] sm:$0xff]
        %v1422 = vld [vmem:[%s202 + $0x2410] sm:$0xff]
        %v1423 = vld [vmem:[%s202 + $0x2418] sm:$0xff]
        %v1424 = vld [vmem:[%s202 + $0x2420] sm:$0xff]
        %v1425 = vld [vmem:[%s202 + $0x2428] sm:$0xff]
        %v1426 = vld [vmem:[%s202 + $0x2430] sm:$0xff]
        %v1427 = vld [vmem:[%s202 + $0x2438] sm:$0xff]
        %v1428 = vld [vmem:[%s202 + $0x2440] sm:$0xff]
        %v1429 = vld [vmem:[%s202 + $0x2448] sm:$0xff]
        %v1430 = vld [vmem:[%s202 + $0x2450] sm:$0xff]
        %v1431 = vld [vmem:[%s202 + $0x2458] sm:$0xff]
        %v1432 = vld [vmem:[%s202 + $0x2460] sm:$0xff]
        %v1433 = vld [vmem:[%s202 + $0x2468] sm:$0xff]
        %v1434 = vld [vmem:[%s202 + $0x2470] sm:$0xff]
        %v1435 = vld [vmem:[%s202 + $0x2478] sm:$0xff]
        %v1436 = vld [vmem:[%s202 + $0x2480] sm:$0xff]
        %v1437 = vld [vmem:[%s202 + $0x2488] sm:$0xff]
        %v1438 = vld [vmem:[%s202 + $0x2490] sm:$0xff]
        %v1439 = vld [vmem:[%s202 + $0x2498] sm:$0xff]
        %v1440 = vld [vmem:[%s202 + $0x24a0] sm:$0xff]
        %v1441 = vld [vmem:[%s202 + $0x24a8] sm:$0xff]
        %v1442 = vld [vmem:[%s202 + $0x24b0] sm:$0xff]
        %v1443 = vld [vmem:[%s202 + $0x24b8] sm:$0xff]
        %v1444 = vld [vmem:[%s202 + $0x24c0] sm:$0xff]
        %v1445 = vld [vmem:[%s202 + $0x24c8] sm:$0xff]
        %v1446 = vld [vmem:[%s202 + $0x24d0] sm:$0xff]
        %v1447 = vld [vmem:[%s202 + $0x24d8] sm:$0xff]
        %v1448 = vld [vmem:[%s202 + $0x24e0] sm:$0xff]
        %v1449 = vld [vmem:[%s202 + $0x24e8] sm:$0xff]
        %v1450 = vld [vmem:[%s202 + $0x24f0] sm:$0xff]
        %v1451 = vld [vmem:[%s202 + $0x24f8] sm:$0xff]
        %v1452 = vld [vmem:[%s202 + $0x2500] sm:$0xff]
        %v1453 = vld [vmem:[%s202 + $0x2508] sm:$0xff]
        %v1454 = vld [vmem:[%s202 + $0x2510] sm:$0xff]
        %v1455 = vld [vmem:[%s202 + $0x2518] sm:$0xff]
        %v1456 = vld [vmem:[%s202 + $0x2520] sm:$0xff]
        %v1457 = vld [vmem:[%s202 + $0x2528] sm:$0xff]
        %v1458 = vld [vmem:[%s202 + $0x2530] sm:$0xff]
        %v1459 = vld [vmem:[%s202 + $0x2538] sm:$0xff]
        %v1460 = vld [vmem:[%s202 + $0x2540] sm:$0xff]
        %v1461 = vld [vmem:[%s202 + $0x2548] sm:$0xff]
        %v1462 = vld [vmem:[%s202 + $0x2550] sm:$0xff]
        %v1463 = vld [vmem:[%s202 + $0x2558] sm:$0xff]
        %v1464 = vld [vmem:[%s202 + $0x2560] sm:$0xff]
        %v1465 = vld [vmem:[%s202 + $0x2568] sm:$0xff]
        %v1466 = vld [vmem:[%s202 + $0x2570] sm:$0xff]
        %v1467 = vld [vmem:[%s202 + $0x2578] sm:$0xff]
        %v1468 = vld [vmem:[%s202 + $0x2580] sm:$0xff]
        %v1469 = vld [vmem:[%s202 + $0x2588] sm:$0xff]
        %v1470 = vld [vmem:[%s202 + $0x2590] sm:$0xff]
        %v1471 = vld [vmem:[%s202 + $0x2598] sm:$0xff]
        %v1472 = vld [vmem:[%s202 + $0x25a0] sm:$0xff]
        %v1473 = vld [vmem:[%s202 + $0x25a8] sm:$0xff]
        %v1474 = vld [vmem:[%s202 + $0x25b0] sm:$0xff]
        %v1475 = vld [vmem:[%s202 + $0x25b8] sm:$0xff]
        %v1476 = vld [vmem:[%s202 + $0x25c0] sm:$0xff]
        %v1477 = vld [vmem:[%s202 + $0x25c8] sm:$0xff]
        %v1478 = vld [vmem:[%s202 + $0x25d0] sm:$0xff]
        %v1479 = vld [vmem:[%s202 + $0x25d8] sm:$0xff]
        %v1480 = vld [vmem:[%s202 + $0x25e0] sm:$0xff]
        %v1481 = vld [vmem:[%s202 + $0x25e8] sm:$0xff]
        %v1482 = vld [vmem:[%s202 + $0x25f0] sm:$0xff]
        %v1483 = vld [vmem:[%s202 + $0x25f8] sm:$0xff]
        %v1484 = vld [vmem:[%s202 + $0x2600] sm:$0xff]
        %v1485 = vld [vmem:[%s202 + $0x2608] sm:$0xff]
        %v1486 = vld [vmem:[%s202 + $0x2610] sm:$0xff]
        %v1487 = vld [vmem:[%s202 + $0x2618] sm:$0xff]
        %v1488 = vld [vmem:[%s202 + $0x2620] sm:$0xff]
        %v1489 = vld [vmem:[%s202 + $0x2628] sm:$0xff]
        %v1490 = vld [vmem:[%s202 + $0x2630] sm:$0xff]
        %v1491 = vld [vmem:[%s202 + $0x2638] sm:$0xff]
        %v1492 = vld [vmem:[%s202 + $0x2640] sm:$0xff]
        %v1493 = vld [vmem:[%s202 + $0x2648] sm:$0xff]
        %v1494 = vld [vmem:[%s202 + $0x2650] sm:$0xff]
        %v1495 = vld [vmem:[%s202 + $0x2658] sm:$0xff]
        %v1496 = vld [vmem:[%s202 + $0x2660] sm:$0xff]
        %v1497 = vld [vmem:[%s202 + $0x2668] sm:$0xff]
        %v1498 = vld [vmem:[%s202 + $0x2670] sm:$0xff]
        %v1499 = vld [vmem:[%s202 + $0x2678] sm:$0xff]
        %v1500 = vld [vmem:[%s202 + $0x2680] sm:$0xff]
        %v1501 = vld [vmem:[%s202 + $0x2688] sm:$0xff]
        %v1502 = vld [vmem:[%s202 + $0x2690] sm:$0xff]
        %v1503 = vld [vmem:[%s202 + $0x2698] sm:$0xff]
        %v1504 = vld [vmem:[%s202 + $0x26a0] sm:$0xff]
        %v1505 = vld [vmem:[%s202 + $0x26a8] sm:$0xff]
        %v1506 = vld [vmem:[%s202 + $0x26b0] sm:$0xff]
        %v1507 = vld [vmem:[%s202 + $0x26b8] sm:$0xff]
        %v1508 = vld [vmem:[%s202 + $0x26c0] sm:$0xff]
        %v1509 = vld [vmem:[%s202 + $0x26c8] sm:$0xff]
        %v1510 = vld [vmem:[%s202 + $0x26d0] sm:$0xff]
        %v1511 = vld [vmem:[%s202 + $0x26d8] sm:$0xff]
        %v1512 = vld [vmem:[%s202 + $0x26e0] sm:$0xff]
        %v1513 = vld [vmem:[%s202 + $0x26e8] sm:$0xff]
        %v1514 = vld [vmem:[%s202 + $0x26f0] sm:$0xff]
        %v1515 = vld [vmem:[%s202 + $0x26f8] sm:$0xff]
        %v1516 = vld [vmem:[%s202 + $0x2700] sm:$0xff]
        %v1517 = vld [vmem:[%s202 + $0x2708] sm:$0xff]
        %v1518 = vld [vmem:[%s202 + $0x2710] sm:$0xff]
        %v1519 = vld [vmem:[%s202 + $0x2718] sm:$0xff]
        %v1520 = vld [vmem:[%s202 + $0x2720] sm:$0xff]
        %v1521 = vld [vmem:[%s202 + $0x2728] sm:$0xff]
        %v1522 = vld [vmem:[%s202 + $0x2730] sm:$0xff]
        %v1523 = vld [vmem:[%s202 + $0x2738] sm:$0xff]
        %v1524 = vld [vmem:[%s202 + $0x2740] sm:$0xff]
        %v1525 = vld [vmem:[%s202 + $0x2748] sm:$0xff]
        %v1526 = vld [vmem:[%s202 + $0x2750] sm:$0xff]
        %v1527 = vld [vmem:[%s202 + $0x2758] sm:$0xff]
        %v1528 = vld [vmem:[%s202 + $0x2760] sm:$0xff]
        %v1529 = vld [vmem:[%s202 + $0x2768] sm:$0xff]
        %v1530 = vld [vmem:[%s202 + $0x2770] sm:$0xff]
        %v1531 = vld [vmem:[%s202 + $0x2778] sm:$0xff]
        %v1532 = vld [vmem:[%s202 + $0x2780] sm:$0xff]
        %v1533 = vld [vmem:[%s202 + $0x2788] sm:$0xff]
        %v1534 = vld [vmem:[%s202 + $0x2790] sm:$0xff]
        %v1535 = vld [vmem:[%s202 + $0x2798] sm:$0xff]
        %v1536 = vld [vmem:[%s202 + $0x27a0] sm:$0xff]
        %v1537 = vld [vmem:[%s202 + $0x27a8] sm:$0xff]
        %v1538 = vld [vmem:[%s202 + $0x27b0] sm:$0xff]
        %v1539 = vld [vmem:[%s202 + $0x27b8] sm:$0xff]
        %v1540 = vld [vmem:[%s202 + $0x27c0] sm:$0xff]
        %v1541 = vld [vmem:[%s202 + $0x27c8] sm:$0xff]
        %v1542 = vld [vmem:[%s202 + $0x27d0] sm:$0xff]
        %v1543 = vld [vmem:[%s202 + $0x27d8] sm:$0xff]
        %v1544 = vld [vmem:[%s202 + $0x27e0] sm:$0xff]
        %v1545 = vld [vmem:[%s202 + $0x27e8] sm:$0xff]
        %v1546 = vld [vmem:[%s202 + $0x27f0] sm:$0xff]
        %v1547 = vld [vmem:[%s202 + $0x27f8] sm:$0xff]
        %v1548 = vld [vmem:[%s202 + $0x2800] sm:$0xff]
        %v1549 = vld [vmem:[%s202 + $0x2808] sm:$0xff]
        %v1550 = vld [vmem:[%s202 + $0x2810] sm:$0xff]
        %v1551 = vld [vmem:[%s202 + $0x2818] sm:$0xff]
        %v1552 = vld [vmem:[%s202 + $0x2820] sm:$0xff]
        %v1553 = vld [vmem:[%s202 + $0x2828] sm:$0xff]
        %v1554 = vld [vmem:[%s202 + $0x2830] sm:$0xff]
        %v1555 = vld [vmem:[%s202 + $0x2838] sm:$0xff]
        %v1556 = vld [vmem:[%s202 + $0x2840] sm:$0xff]
        %v1557 = vld [vmem:[%s202 + $0x2848] sm:$0xff]
        %v1558 = vld [vmem:[%s202 + $0x2850] sm:$0xff]
        %v1559 = vld [vmem:[%s202 + $0x2858] sm:$0xff]
        %v1560 = vld [vmem:[%s202 + $0x2860] sm:$0xff]
        %v1561 = vld [vmem:[%s202 + $0x2868] sm:$0xff]
        %v1562 = vld [vmem:[%s202 + $0x2870] sm:$0xff]
        %v1563 = vld [vmem:[%s202 + $0x2878] sm:$0xff]
        %v1564 = vld [vmem:[%s202 + $0x2880] sm:$0xff]
        %v1565 = vld [vmem:[%s202 + $0x2888] sm:$0xff]
        %v1566 = vld [vmem:[%s202 + $0x2890] sm:$0xff]
        %v1567 = vld [vmem:[%s202 + $0x2898] sm:$0xff]
        %v1568 = vld [vmem:[%s202 + $0x28a0] sm:$0xff]
        %v1569 = vld [vmem:[%s202 + $0x28a8] sm:$0xff]
        %v1570 = vld [vmem:[%s202 + $0x28b0] sm:$0xff]
        %v1571 = vld [vmem:[%s202 + $0x28b8] sm:$0xff]
        %v1572 = vld [vmem:[%s202 + $0x28c0] sm:$0xff]
        %v1573 = vld [vmem:[%s202 + $0x28c8] sm:$0xff]
        %v1574 = vld [vmem:[%s202 + $0x28d0] sm:$0xff]
        %v1575 = vld [vmem:[%s202 + $0x28d8] sm:$0xff]
        %v1576 = vld [vmem:[%s202 + $0x28e0] sm:$0xff]
        %v1577 = vld [vmem:[%s202 + $0x28e8] sm:$0xff]
        %v1578 = vld [vmem:[%s202 + $0x28f0] sm:$0xff]
        %v1579 = vld [vmem:[%s202 + $0x28f8] sm:$0xff]
        %v1580 = vld [vmem:[%s202 + $0x2900] sm:$0xff]
        %v1581 = vld [vmem:[%s202 + $0x2908] sm:$0xff]
        %v1582 = vld [vmem:[%s202 + $0x2910] sm:$0xff]
        %v1583 = vld [vmem:[%s202 + $0x2918] sm:$0xff]
        %v1584 = vld [vmem:[%s202 + $0x2920] sm:$0xff]
        %v1585 = vld [vmem:[%s202 + $0x2928] sm:$0xff]
        %v1586 = vld [vmem:[%s202 + $0x2930] sm:$0xff]
        %v1587 = vld [vmem:[%s202 + $0x2938] sm:$0xff]
        %v1588 = vld [vmem:[%s202 + $0x2940] sm:$0xff]
        %v1589 = vld [vmem:[%s202 + $0x2948] sm:$0xff]
        %v1590 = vld [vmem:[%s202 + $0x2950] sm:$0xff]
        %v1591 = vld [vmem:[%s202 + $0x2958] sm:$0xff]
        %v1592 = vld [vmem:[%s202 + $0x2960] sm:$0xff]
        %v1593 = vld [vmem:[%s202 + $0x2968] sm:$0xff]
        %v1594 = vld [vmem:[%s202 + $0x2970] sm:$0xff]
        %v1595 = vld [vmem:[%s202 + $0x2978] sm:$0xff]
        %v1596 = vld [vmem:[%s202 + $0x2980] sm:$0xff]
        %v1597 = vld [vmem:[%s202 + $0x2988] sm:$0xff]
        %v1598 = vld [vmem:[%s202 + $0x2990] sm:$0xff]
        %v1599 = vld [vmem:[%s202 + $0x2998] sm:$0xff]
        %v1600 = vld [vmem:[%s202 + $0x29a0] sm:$0xff]
        %v1601 = vld [vmem:[%s202 + $0x29a8] sm:$0xff]
        %v1602 = vld [vmem:[%s202 + $0x29b0] sm:$0xff]
        %v1603 = vld [vmem:[%s202 + $0x29b8] sm:$0xff]
        %v1604 = vld [vmem:[%s202 + $0x29c0] sm:$0xff]
        %v1605 = vld [vmem:[%s202 + $0x29c8] sm:$0xff]
        %v1606 = vld [vmem:[%s202 + $0x29d0] sm:$0xff]
        %v1607 = vld [vmem:[%s202 + $0x29d8] sm:$0xff]
        %v1608 = vld [vmem:[%s202 + $0x29e0] sm:$0xff]
        %v1609 = vld [vmem:[%s202 + $0x29e8] sm:$0xff]
        %v1610 = vld [vmem:[%s202 + $0x29f0] sm:$0xff]
        %v1611 = vld [vmem:[%s202 + $0x29f8] sm:$0xff]
        %v1612 = vld [vmem:[%s202 + $0x2a00] sm:$0xff]
        %v1613 = vld [vmem:[%s202 + $0x2a08] sm:$0xff]
        %v1614 = vld [vmem:[%s202 + $0x2a10] sm:$0xff]
        %v1615 = vld [vmem:[%s202 + $0x2a18] sm:$0xff]
        %v1616 = vld [vmem:[%s202 + $0x2a20] sm:$0xff]
        %v1617 = vld [vmem:[%s202 + $0x2a28] sm:$0xff]
        %v1618 = vld [vmem:[%s202 + $0x2a30] sm:$0xff]
        %v1619 = vld [vmem:[%s202 + $0x2a38] sm:$0xff]
        %v1620 = vld [vmem:[%s202 + $0x2a40] sm:$0xff]
        %v1621 = vld [vmem:[%s202 + $0x2a48] sm:$0xff]
        %v1622 = vld [vmem:[%s202 + $0x2a50] sm:$0xff]
        %v1623 = vld [vmem:[%s202 + $0x2a58] sm:$0xff]
        %v1624 = vld [vmem:[%s202 + $0x2a60] sm:$0xff]
        %v1625 = vld [vmem:[%s202 + $0x2a68] sm:$0xff]
        %v1626 = vld [vmem:[%s202 + $0x2a70] sm:$0xff]
        %v1627 = vld [vmem:[%s202 + $0x2a78] sm:$0xff]
        %v1628 = vld [vmem:[%s202 + $0x2a80] sm:$0xff]
        %v1629 = vld [vmem:[%s202 + $0x2a88] sm:$0xff]
        %v1630 = vld [vmem:[%s202 + $0x2a90] sm:$0xff]
        %v1631 = vld [vmem:[%s202 + $0x2a98] sm:$0xff]
        %v1632 = vld [vmem:[%s202 + $0x2aa0] sm:$0xff]
        %v1633 = vld [vmem:[%s202 + $0x2aa8] sm:$0xff]
        %v1634 = vld [vmem:[%s202 + $0x2ab0] sm:$0xff]
        %v1635 = vld [vmem:[%s202 + $0x2ab8] sm:$0xff]
        %v1636 = vld [vmem:[%s202 + $0x2ac0] sm:$0xff]
        %v1637 = vld [vmem:[%s202 + $0x2ac8] sm:$0xff]
        %v1638 = vld [vmem:[%s202 + $0x2ad0] sm:$0xff]
        %v1639 = vld [vmem:[%s202 + $0x2ad8] sm:$0xff]
        %v1640 = vld [vmem:[%s202 + $0x2ae0] sm:$0xff]
        %v1641 = vld [vmem:[%s202 + $0x2ae8] sm:$0xff]
        %v1642 = vld [vmem:[%s202 + $0x2af0] sm:$0xff]
        %v1643 = vld [vmem:[%s202 + $0x2af8] sm:$0xff]
        %v1644 = vld [vmem:[%s202 + $0x2b00] sm:$0xff]
        %v1645 = vld [vmem:[%s202 + $0x2b08] sm:$0xff]
        %v1646 = vld [vmem:[%s202 + $0x2b10] sm:$0xff]
        %v1647 = vld [vmem:[%s202 + $0x2b18] sm:$0xff]
        %v1648 = vld [vmem:[%s202 + $0x2b20] sm:$0xff]
        %v1649 = vld [vmem:[%s202 + $0x2b28] sm:$0xff]
        %v1650 = vld [vmem:[%s202 + $0x2b30] sm:$0xff]
        %v1651 = vld [vmem:[%s202 + $0x2b38] sm:$0xff]
        %v1652 = vld [vmem:[%s202 + $0x2b40] sm:$0xff]
        %v1653 = vld [vmem:[%s202 + $0x2b48] sm:$0xff]
        %v1654 = vld [vmem:[%s202 + $0x2b50] sm:$0xff]
        %v1655 = vld [vmem:[%s202 + $0x2b58] sm:$0xff]
        %v1656 = vld [vmem:[%s202 + $0x2b60] sm:$0xff]
        %v1657 = vld [vmem:[%s202 + $0x2b68] sm:$0xff]
        %v1658 = vld [vmem:[%s202 + $0x2b70] sm:$0xff]
        %v1659 = vld [vmem:[%s202 + $0x2b78] sm:$0xff]
        %v1660 = vld [vmem:[%s202 + $0x2b80] sm:$0xff]
        %v1661 = vld [vmem:[%s202 + $0x2b88] sm:$0xff]
        %v1662 = vld [vmem:[%s202 + $0x2b90] sm:$0xff]
        %v1663 = vld [vmem:[%s202 + $0x2b98] sm:$0xff]
        %v1664 = vld [vmem:[%s202 + $0x2ba0] sm:$0xff]
        %v1665 = vld [vmem:[%s202 + $0x2ba8] sm:$0xff]
        %v1666 = vld [vmem:[%s202 + $0x2bb0] sm:$0xff]
        %v1667 = vld [vmem:[%s202 + $0x2bb8] sm:$0xff]
        %v1668 = vld [vmem:[%s202 + $0x2bc0] sm:$0xff]
        %v1669 = vld [vmem:[%s202 + $0x2bc8] sm:$0xff]
        %v1670 = vld [vmem:[%s202 + $0x2bd0] sm:$0xff]
        %v1671 = vld [vmem:[%s202 + $0x2bd8] sm:$0xff]
        %v1672 = vld [vmem:[%s202 + $0x2be0] sm:$0xff]
        %v1673 = vld [vmem:[%s202 + $0x2be8] sm:$0xff]
        %v1674 = vld [vmem:[%s202 + $0x2bf0] sm:$0xff]
        %v1675 = vld [vmem:[%s202 + $0x2bf8] sm:$0xff]
        %v1676 = vld [vmem:[%s202 + $0x2c00] sm:$0xff]
        %v1677 = vld [vmem:[%s202 + $0x2c08] sm:$0xff]
        %v1678 = vld [vmem:[%s202 + $0x2c10] sm:$0xff]
        %v1679 = vld [vmem:[%s202 + $0x2c18] sm:$0xff]
        %v1680 = vld [vmem:[%s202 + $0x2c20] sm:$0xff]
        %v1681 = vld [vmem:[%s202 + $0x2c28] sm:$0xff]
        %v1682 = vld [vmem:[%s202 + $0x2c30] sm:$0xff]
        %v1683 = vld [vmem:[%s202 + $0x2c38] sm:$0xff]
        %v1684 = vld [vmem:[%s202 + $0x2c40] sm:$0xff]
        %v1685 = vld [vmem:[%s202 + $0x2c48] sm:$0xff]
        %v1686 = vld [vmem:[%s202 + $0x2c50] sm:$0xff]
        %v1687 = vld [vmem:[%s202 + $0x2c58] sm:$0xff]
        %v1688 = vld [vmem:[%s202 + $0x2c60] sm:$0xff]
        %v1689 = vld [vmem:[%s202 + $0x2c68] sm:$0xff]
        %v1690 = vld [vmem:[%s202 + $0x2c70] sm:$0xff]
        %v1691 = vld [vmem:[%s202 + $0x2c78] sm:$0xff]
        %v1692 = vld [vmem:[%s202 + $0x2c80] sm:$0xff]
        %v1693 = vld [vmem:[%s202 + $0x2c88] sm:$0xff]
        %v1694 = vld [vmem:[%s202 + $0x2c90] sm:$0xff]
        %v1695 = vld [vmem:[%s202 + $0x2c98] sm:$0xff]
        %v1696 = vld [vmem:[%s202 + $0x2ca0] sm:$0xff]
        %v1697 = vld [vmem:[%s202 + $0x2ca8] sm:$0xff]
        %v1698 = vld [vmem:[%s202 + $0x2cb0] sm:$0xff]
        %v1699 = vld [vmem:[%s202 + $0x2cb8] sm:$0xff]
        %v1700 = vld [vmem:[%s202 + $0x2cc0] sm:$0xff]
        %v1701 = vld [vmem:[%s202 + $0x2cc8] sm:$0xff]
        %v1702 = vld [vmem:[%s202 + $0x2cd0] sm:$0xff]
        %v1703 = vld [vmem:[%s202 + $0x2cd8] sm:$0xff]
        %v1704 = vld [vmem:[%s202 + $0x2ce0] sm:$0xff]
        %v1705 = vld [vmem:[%s202 + $0x2ce8] sm:$0xff]
        %v1706 = vld [vmem:[%s202 + $0x2cf0] sm:$0xff]
        %v1707 = vld [vmem:[%s202 + $0x2cf8] sm:$0xff]
        %v1708 = vld [vmem:[%s202 + $0x2d00] sm:$0xff]
        %v1709 = vld [vmem:[%s202 + $0x2d08] sm:$0xff]
        %v1710 = vld [vmem:[%s202 + $0x2d10] sm:$0xff]
        %v1711 = vld [vmem:[%s202 + $0x2d18] sm:$0xff]
        %v1712 = vld [vmem:[%s202 + $0x2d20] sm:$0xff]
        %v1713 = vld [vmem:[%s202 + $0x2d28] sm:$0xff]
        %v1714 = vld [vmem:[%s202 + $0x2d30] sm:$0xff]
        %v1715 = vld [vmem:[%s202 + $0x2d38] sm:$0xff]
        %v1716 = vld [vmem:[%s202 + $0x2d40] sm:$0xff]
        %v1717 = vld [vmem:[%s202 + $0x2d48] sm:$0xff]
        %v1718 = vld [vmem:[%s202 + $0x2d50] sm:$0xff]
        %v1719 = vld [vmem:[%s202 + $0x2d58] sm:$0xff]
        %v1720 = vld [vmem:[%s202 + $0x2d60] sm:$0xff]
        %v1721 = vld [vmem:[%s202 + $0x2d68] sm:$0xff]
        %v1722 = vld [vmem:[%s202 + $0x2d70] sm:$0xff]
        %v1723 = vld [vmem:[%s202 + $0x2d78] sm:$0xff]
        %v1724 = vld [vmem:[%s202 + $0x2d80] sm:$0xff]
        %v1725 = vld [vmem:[%s202 + $0x2d88] sm:$0xff]
        %v1726 = vld [vmem:[%s202 + $0x2d90] sm:$0xff]
        %v1727 = vld [vmem:[%s202 + $0x2d98] sm:$0xff]
        %v1728 = vld [vmem:[%s202 + $0x2da0] sm:$0xff]
        %v1729 = vld [vmem:[%s202 + $0x2da8] sm:$0xff]
        %v1730 = vld [vmem:[%s202 + $0x2db0] sm:$0xff]
        %v1731 = vld [vmem:[%s202 + $0x2db8] sm:$0xff]
        %v1732 = vld [vmem:[%s202 + $0x2dc0] sm:$0xff]
        %v1733 = vld [vmem:[%s202 + $0x2dc8] sm:$0xff]
        %v1734 = vld [vmem:[%s202 + $0x2dd0] sm:$0xff]
        %v1735 = vld [vmem:[%s202 + $0x2dd8] sm:$0xff]
        %v1736 = vld [vmem:[%s202 + $0x2de0] sm:$0xff]
        %v1737 = vld [vmem:[%s202 + $0x2de8] sm:$0xff]
        %v1738 = vld [vmem:[%s202 + $0x2df0] sm:$0xff]
        %v1739 = vld [vmem:[%s202 + $0x2df8] sm:$0xff]
        %v1740 = vld [vmem:[%s202 + $0x2e00] sm:$0xff]
        %v1741 = vld [vmem:[%s202 + $0x2e08] sm:$0xff]
        %v1742 = vld [vmem:[%s202 + $0x2e10] sm:$0xff]
        %v1743 = vld [vmem:[%s202 + $0x2e18] sm:$0xff]
        %v1744 = vld [vmem:[%s202 + $0x2e20] sm:$0xff]
        %v1745 = vld [vmem:[%s202 + $0x2e28] sm:$0xff]
        %v1746 = vld [vmem:[%s202 + $0x2e30] sm:$0xff]
        %v1747 = vld [vmem:[%s202 + $0x2e38] sm:$0xff]
        %v1748 = vld [vmem:[%s202 + $0x2e40] sm:$0xff]
        %v1749 = vld [vmem:[%s202 + $0x2e48] sm:$0xff]
        %v1750 = vld [vmem:[%s202 + $0x2e50] sm:$0xff]
        %v1751 = vld [vmem:[%s202 + $0x2e58] sm:$0xff]
        %v1752 = vld [vmem:[%s202 + $0x2e60] sm:$0xff]
        %v1753 = vld [vmem:[%s202 + $0x2e68] sm:$0xff]
        %v1754 = vld [vmem:[%s202 + $0x2e70] sm:$0xff]
        %v1755 = vld [vmem:[%s202 + $0x2e78] sm:$0xff]
        %v1756 = vld [vmem:[%s202 + $0x2e80] sm:$0xff]
        %v1757 = vld [vmem:[%s202 + $0x2e88] sm:$0xff]
        %v1758 = vld [vmem:[%s202 + $0x2e90] sm:$0xff]
        %v1759 = vld [vmem:[%s202 + $0x2e98] sm:$0xff]
        %v1760 = vld [vmem:[%s202 + $0x2ea0] sm:$0xff]
        %v1761 = vld [vmem:[%s202 + $0x2ea8] sm:$0xff]
        %v1762 = vld [vmem:[%s202 + $0x2eb0] sm:$0xff]
        %v1763 = vld [vmem:[%s202 + $0x2eb8] sm:$0xff]
        %v1764 = vld [vmem:[%s202 + $0x2ec0] sm:$0xff]
        %v1765 = vld [vmem:[%s202 + $0x2ec8] sm:$0xff]
        %v1766 = vld [vmem:[%s202 + $0x2ed0] sm:$0xff]
        %v1767 = vld [vmem:[%s202 + $0x2ed8] sm:$0xff]
        %v1768 = vld [vmem:[%s202 + $0x2ee0] sm:$0xff]
        %v1769 = vld [vmem:[%s202 + $0x2ee8] sm:$0xff]
        %v1770 = vld [vmem:[%s202 + $0x2ef0] sm:$0xff]
        %v1771 = vld [vmem:[%s202 + $0x2ef8] sm:$0xff]
        %v1772 = vld [vmem:[%s202 + $0x2f00] sm:$0xff]
        %v1773 = vld [vmem:[%s202 + $0x2f08] sm:$0xff]
        %v1774 = vld [vmem:[%s202 + $0x2f10] sm:$0xff]
        %v1775 = vld [vmem:[%s202 + $0x2f18] sm:$0xff]
        %v1776 = vld [vmem:[%s202 + $0x2f20] sm:$0xff]
        %v1777 = vld [vmem:[%s202 + $0x2f28] sm:$0xff]
        %v1778 = vld [vmem:[%s202 + $0x2f30] sm:$0xff]
        %v1779 = vld [vmem:[%s202 + $0x2f38] sm:$0xff]
        %v1780 = vld [vmem:[%s202 + $0x2f40] sm:$0xff]
        %v1781 = vld [vmem:[%s202 + $0x2f48] sm:$0xff]
        %v1782 = vld [vmem:[%s202 + $0x2f50] sm:$0xff]
        %v1783 = vld [vmem:[%s202 + $0x2f58] sm:$0xff]
        %v1784 = vld [vmem:[%s202 + $0x2f60] sm:$0xff]
        %v1785 = vld [vmem:[%s202 + $0x2f68] sm:$0xff]
        %v1786 = vld [vmem:[%s202 + $0x2f70] sm:$0xff]
        %v1787 = vld [vmem:[%s202 + $0x2f78] sm:$0xff]
        %v1788 = vld [vmem:[%s202 + $0x2f80] sm:$0xff]
        %v1789 = vld [vmem:[%s202 + $0x2f88] sm:$0xff]
        %v1790 = vld [vmem:[%s202 + $0x2f90] sm:$0xff]
        %v1791 = vld [vmem:[%s202 + $0x2f98] sm:$0xff]
        %v1792 = vld [vmem:[%s202 + $0x2fa0] sm:$0xff]
        %v1793 = vld [vmem:[%s202 + $0x2fa8] sm:$0xff]
        %v1794 = vld [vmem:[%s202 + $0x2fb0] sm:$0xff]
        %v1795 = vld [vmem:[%s202 + $0x2fb8] sm:$0xff]
        %v1796 = vld [vmem:[%s202 + $0x2fc0] sm:$0xff]
        %v1797 = vld [vmem:[%s202 + $0x2fc8] sm:$0xff]
        %v1798 = vld [vmem:[%s202 + $0x2fd0] sm:$0xff]
        %v1799 = vld [vmem:[%s202 + $0x2fd8] sm:$0xff]
        %v1800 = vld [vmem:[%s202 + $0x2fe0] sm:$0xff]
        %v1801 = vld [vmem:[%s202 + $0x2fe8] sm:$0xff]
        %v1802 = vld [vmem:[%s202 + $0x2ff0] sm:$0xff]
        %v1803 = vld [vmem:[%s202 + $0x2ff8] sm:$0xff]
        %v1804 = vld [vmem:[%s202 + $0x3000] sm:$0xff]
        %v1805 = vld [vmem:[%s202 + $0x3008] sm:$0xff]
        %v1806 = vld [vmem:[%s202 + $0x3010] sm:$0xff]
        %v1807 = vld [vmem:[%s202 + $0x3018] sm:$0xff]
        %v1808 = vld [vmem:[%s202 + $0x3020] sm:$0xff]
        %v1809 = vld [vmem:[%s202 + $0x3028] sm:$0xff]
        %v1810 = vld [vmem:[%s202 + $0x3030] sm:$0xff]
        %v1811 = vld [vmem:[%s202 + $0x3038] sm:$0xff]
        %v1812 = vld [vmem:[%s202 + $0x3040] sm:$0xff]
        %v1813 = vld [vmem:[%s202 + $0x3048] sm:$0xff]
        %v1814 = vld [vmem:[%s202 + $0x3050] sm:$0xff]
        %v1815 = vld [vmem:[%s202 + $0x3058] sm:$0xff]
        %v1816 = vld [vmem:[%s202 + $0x3060] sm:$0xff]
        %v1817 = vld [vmem:[%s202 + $0x3068] sm:$0xff]
        %v1818 = vld [vmem:[%s202 + $0x3070] sm:$0xff]
        %v1819 = vld [vmem:[%s202 + $0x3078] sm:$0xff]
        %v1820 = vld [vmem:[%s202 + $0x3080] sm:$0xff]
        %v1821 = vld [vmem:[%s202 + $0x3088] sm:$0xff]
        %v1822 = vld [vmem:[%s202 + $0x3090] sm:$0xff]
        %v1823 = vld [vmem:[%s202 + $0x3098] sm:$0xff]
        %v1824 = vld [vmem:[%s202 + $0x30a0] sm:$0xff]
        %v1825 = vld [vmem:[%s202 + $0x30a8] sm:$0xff]
        %v1826 = vld [vmem:[%s202 + $0x30b0] sm:$0xff]
        %v1827 = vld [vmem:[%s202 + $0x30b8] sm:$0xff]
        %v1828 = vld [vmem:[%s202 + $0x30c0] sm:$0xff]
        %v1829 = vld [vmem:[%s202 + $0x30c8] sm:$0xff]
        %v1830 = vld [vmem:[%s202 + $0x30d0] sm:$0xff]
        %v1831 = vld [vmem:[%s202 + $0x30d8] sm:$0xff]
        %v1832 = vld [vmem:[%s202 + $0x30e0] sm:$0xff]
        %v1833 = vld [vmem:[%s202 + $0x30e8] sm:$0xff]
        %v1834 = vld [vmem:[%s202 + $0x30f0] sm:$0xff]
        %v1835 = vld [vmem:[%s202 + $0x30f8] sm:$0xff]
        %v1836 = vld [vmem:[%s202 + $0x3100] sm:$0xff]
        %v1837 = vld [vmem:[%s202 + $0x3108] sm:$0xff]
        %v1838 = vld [vmem:[%s202 + $0x3110] sm:$0xff]
        %v1839 = vld [vmem:[%s202 + $0x3118] sm:$0xff]
        %v1840 = vld [vmem:[%s202 + $0x3120] sm:$0xff]
        %v1841 = vld [vmem:[%s202 + $0x3128] sm:$0xff]
        %v1842 = vld [vmem:[%s202 + $0x3130] sm:$0xff]
        %v1843 = vld [vmem:[%s202 + $0x3138] sm:$0xff]
        %v1844 = vld [vmem:[%s202 + $0x3140] sm:$0xff]
        %v1845 = vld [vmem:[%s202 + $0x3148] sm:$0xff]
        %v1846 = vld [vmem:[%s202 + $0x3150] sm:$0xff]
        %v1847 = vld [vmem:[%s202 + $0x3158] sm:$0xff]
        %v1848 = vld [vmem:[%s202 + $0x3160] sm:$0xff]
        %v1849 = vld [vmem:[%s202 + $0x3168] sm:$0xff]
        %v1850 = vld [vmem:[%s202 + $0x3170] sm:$0xff]
        %v1851 = vld [vmem:[%s202 + $0x3178] sm:$0xff]
        %v1852 = vld [vmem:[%s202 + $0x3180] sm:$0xff]
        %v1853 = vld [vmem:[%s202 + $0x3188] sm:$0xff]
        %v1854 = vld [vmem:[%s202 + $0x3190] sm:$0xff]
        %v1855 = vld [vmem:[%s202 + $0x3198] sm:$0xff]
        %v1856 = vld [vmem:[%s202 + $0x31a0] sm:$0xff]
        %v1857 = vld [vmem:[%s202 + $0x31a8] sm:$0xff]
        %v1858 = vld [vmem:[%s202 + $0x31b0] sm:$0xff]
        %v1859 = vld [vmem:[%s202 + $0x31b8] sm:$0xff]
        %v1860 = vld [vmem:[%s202 + $0x31c0] sm:$0xff]
        %v1861 = vld [vmem:[%s202 + $0x31c8] sm:$0xff]
        %v1862 = vld [vmem:[%s202 + $0x31d0] sm:$0xff]
        %v1863 = vld [vmem:[%s202 + $0x31d8] sm:$0xff]
        %v1864 = vld [vmem:[%s202 + $0x31e0] sm:$0xff]
        %v1865 = vld [vmem:[%s202 + $0x31e8] sm:$0xff]
        %v1866 = vld [vmem:[%s202 + $0x31f0] sm:$0xff]
        %v1867 = vld [vmem:[%s202 + $0x31f8] sm:$0xff]
        %v1868 = vld [vmem:[%s202 + $0x3200] sm:$0xff]
        %v1869 = vld [vmem:[%s202 + $0x3208] sm:$0xff]
        %v1870 = vld [vmem:[%s202 + $0x3210] sm:$0xff]
        %v1871 = vld [vmem:[%s202 + $0x3218] sm:$0xff]
        %v1872 = vld [vmem:[%s202 + $0x3220] sm:$0xff]
        %v1873 = vld [vmem:[%s202 + $0x3228] sm:$0xff]
        %v1874 = vld [vmem:[%s202 + $0x3230] sm:$0xff]
        %v1875 = vld [vmem:[%s202 + $0x3238] sm:$0xff]
        %v1876 = vld [vmem:[%s202 + $0x3240] sm:$0xff]
        %v1877 = vld [vmem:[%s202 + $0x3248] sm:$0xff]
        %v1878 = vld [vmem:[%s202 + $0x3250] sm:$0xff]
        %v1879 = vld [vmem:[%s202 + $0x3258] sm:$0xff]
        %v1880 = vld [vmem:[%s202 + $0x3260] sm:$0xff]
        %v1881 = vld [vmem:[%s202 + $0x3268] sm:$0xff]
        %v1882 = vld [vmem:[%s202 + $0x3270] sm:$0xff]
        %v1883 = vld [vmem:[%s202 + $0x3278] sm:$0xff]
        %v1884 = vld [vmem:[%s202 + $0x3280] sm:$0xff]
        %v1885 = vld [vmem:[%s202 + $0x3288] sm:$0xff]
        %v1886 = vld [vmem:[%s202 + $0x3290] sm:$0xff]
        %v1887 = vld [vmem:[%s202 + $0x3298] sm:$0xff]
        %v1888 = vld [vmem:[%s202 + $0x32a0] sm:$0xff]
        %v1889 = vld [vmem:[%s202 + $0x32a8] sm:$0xff]
        %v1890 = vld [vmem:[%s202 + $0x32b0] sm:$0xff]
        %v1891 = vld [vmem:[%s202 + $0x32b8] sm:$0xff]
        %v1892 = vld [vmem:[%s202 + $0x32c0] sm:$0xff]
        %v1893 = vld [vmem:[%s202 + $0x32c8] sm:$0xff]
        %v1894 = vld [vmem:[%s202 + $0x32d0] sm:$0xff]
        %v1895 = vld [vmem:[%s202 + $0x32d8] sm:$0xff]
        %v1896 = vld [vmem:[%s202 + $0x32e0] sm:$0xff]
        %v1897 = vld [vmem:[%s202 + $0x32e8] sm:$0xff]
        %v1898 = vld [vmem:[%s202 + $0x32f0] sm:$0xff]
        %v1899 = vld [vmem:[%s202 + $0x32f8] sm:$0xff]
        %v1900 = vld [vmem:[%s202 + $0x3300] sm:$0xff]
        %v1901 = vld [vmem:[%s202 + $0x3308] sm:$0xff]
        %v1902 = vld [vmem:[%s202 + $0x3310] sm:$0xff]
        %v1903 = vld [vmem:[%s202 + $0x3318] sm:$0xff]
        %v1904 = vld [vmem:[%s202 + $0x3320] sm:$0xff]
        %v1905 = vld [vmem:[%s202 + $0x3328] sm:$0xff]
        %v1906 = vld [vmem:[%s202 + $0x3330] sm:$0xff]
        %v1907 = vld [vmem:[%s202 + $0x3338] sm:$0xff]
        %v1908 = vld [vmem:[%s202 + $0x3340] sm:$0xff]
        %v1909 = vld [vmem:[%s202 + $0x3348] sm:$0xff]
        %v1910 = vld [vmem:[%s202 + $0x3350] sm:$0xff]
        %v1911 = vld [vmem:[%s202 + $0x3358] sm:$0xff]
        %v1912 = vld [vmem:[%s202 + $0x3360] sm:$0xff]
        %v1913 = vld [vmem:[%s202 + $0x3368] sm:$0xff]
        %v1914 = vld [vmem:[%s202 + $0x3370] sm:$0xff]
        %v1915 = vld [vmem:[%s202 + $0x3378] sm:$0xff]
        %v1916 = vld [vmem:[%s202 + $0x3380] sm:$0xff]
        %v1917 = vld [vmem:[%s202 + $0x3388] sm:$0xff]
        %v1918 = vld [vmem:[%s202 + $0x3390] sm:$0xff]
        %v1919 = vld [vmem:[%s202 + $0x3398] sm:$0xff]
        %v1920 = vld [vmem:[%s202 + $0x33a0] sm:$0xff]
        %v1921 = vld [vmem:[%s202 + $0x33a8] sm:$0xff]
        %v1922 = vld [vmem:[%s202 + $0x33b0] sm:$0xff]
        %v1923 = vld [vmem:[%s202 + $0x33b8] sm:$0xff]
        %v1924 = vld [vmem:[%s202 + $0x33c0] sm:$0xff]
        %v1925 = vld [vmem:[%s202 + $0x33c8] sm:$0xff]
        %v1926 = vld [vmem:[%s202 + $0x33d0] sm:$0xff]
        %v1927 = vld [vmem:[%s202 + $0x33d8] sm:$0xff]
        %v1928 = vld [vmem:[%s202 + $0x33e0] sm:$0xff]
        %v1929 = vld [vmem:[%s202 + $0x33e8] sm:$0xff]
        %v1930 = vld [vmem:[%s202 + $0x33f0] sm:$0xff]
        %v1931 = vld [vmem:[%s202 + $0x33f8] sm:$0xff]
        %v1932 = vld [vmem:[%s202 + $0x3400] sm:$0xff]
        %v1933 = vld [vmem:[%s202 + $0x3408] sm:$0xff]
        %v1934 = vld [vmem:[%s202 + $0x3410] sm:$0xff]
        %v1935 = vld [vmem:[%s202 + $0x3418] sm:$0xff]
        %v1936 = vld [vmem:[%s202 + $0x3420] sm:$0xff]
        %v1937 = vld [vmem:[%s202 + $0x3428] sm:$0xff]
        %v1938 = vld [vmem:[%s202 + $0x3430] sm:$0xff]
        %v1939 = vld [vmem:[%s202 + $0x3438] sm:$0xff]
        %v1940 = vld [vmem:[%s202 + $0x3440] sm:$0xff]
        %v1941 = vld [vmem:[%s202 + $0x3448] sm:$0xff]
        %v1942 = vld [vmem:[%s202 + $0x3450] sm:$0xff]
        %v1943 = vld [vmem:[%s202 + $0x3458] sm:$0xff]
        %v1944 = vld [vmem:[%s202 + $0x3460] sm:$0xff]
        %v1945 = vld [vmem:[%s202 + $0x3468] sm:$0xff]
        %v1946 = vld [vmem:[%s202 + $0x3470] sm:$0xff]
        %v1947 = vld [vmem:[%s202 + $0x3478] sm:$0xff]
        %v1948 = vld [vmem:[%s202 + $0x3480] sm:$0xff]
        %v1949 = vld [vmem:[%s202 + $0x3488] sm:$0xff]
        %v1950 = vld [vmem:[%s202 + $0x3490] sm:$0xff]
        %v1951 = vld [vmem:[%s202 + $0x3498] sm:$0xff]
        %v1952 = vld [vmem:[%s202 + $0x34a0] sm:$0xff]
        %v1953 = vld [vmem:[%s202 + $0x34a8] sm:$0xff]
        %v1954 = vld [vmem:[%s202 + $0x34b0] sm:$0xff]
        %v1955 = vld [vmem:[%s202 + $0x34b8] sm:$0xff]
        %v1956 = vld [vmem:[%s202 + $0x34c0] sm:$0xff]
        %v1957 = vld [vmem:[%s202 + $0x34c8] sm:$0xff]
        %v1958 = vld [vmem:[%s202 + $0x34d0] sm:$0xff]
        %v1959 = vld [vmem:[%s202 + $0x34d8] sm:$0xff]
        %v1960 = vld [vmem:[%s202 + $0x34e0] sm:$0xff]
        %v1961 = vld [vmem:[%s202 + $0x34e8] sm:$0xff]
        %v1962 = vld [vmem:[%s202 + $0x34f0] sm:$0xff]
        %v1963 = vld [vmem:[%s202 + $0x34f8] sm:$0xff]
        %v1964 = vld [vmem:[%s202 + $0x3500] sm:$0xff]
        %v1965 = vld [vmem:[%s202 + $0x3508] sm:$0xff]
        %v1966 = vld [vmem:[%s202 + $0x3510] sm:$0xff]
        %v1967 = vld [vmem:[%s202 + $0x3518] sm:$0xff]
        %v1968 = vld [vmem:[%s202 + $0x3520] sm:$0xff]
        %v1969 = vld [vmem:[%s202 + $0x3528] sm:$0xff]
        %v1970 = vld [vmem:[%s202 + $0x3530] sm:$0xff]
        %v1971 = vld [vmem:[%s202 + $0x3538] sm:$0xff]
        %v1972 = vld [vmem:[%s202 + $0x3540] sm:$0xff]
        %v1973 = vld [vmem:[%s202 + $0x3548] sm:$0xff]
        %v1974 = vld [vmem:[%s202 + $0x3550] sm:$0xff]
        %v1975 = vld [vmem:[%s202 + $0x3558] sm:$0xff]
        %v1976 = vld [vmem:[%s202 + $0x3560] sm:$0xff]
        %v1977 = vld [vmem:[%s202 + $0x3568] sm:$0xff]
        %v1978 = vld [vmem:[%s202 + $0x3570] sm:$0xff]
        %v1979 = vld [vmem:[%s202 + $0x3578] sm:$0xff]
        %v1980 = vld [vmem:[%s202 + $0x3580] sm:$0xff]
        %v1981 = vld [vmem:[%s202 + $0x3588] sm:$0xff]
        %v1982 = vld [vmem:[%s202 + $0x3590] sm:$0xff]
        %v1983 = vld [vmem:[%s202 + $0x3598] sm:$0xff]
        %v1984 = vld [vmem:[%s202 + $0x35a0] sm:$0xff]
        %v1985 = vld [vmem:[%s202 + $0x35a8] sm:$0xff]
        %v1986 = vld [vmem:[%s202 + $0x35b0] sm:$0xff]
        %v1987 = vld [vmem:[%s202 + $0x35b8] sm:$0xff]
        %v1988 = vld [vmem:[%s202 + $0x35c0] sm:$0xff]
        %v1989 = vld [vmem:[%s202 + $0x35c8] sm:$0xff]
        %v1990 = vld [vmem:[%s202 + $0x35d0] sm:$0xff]
        %v1991 = vld [vmem:[%s202 + $0x35d8] sm:$0xff]
        %v1992 = vld [vmem:[%s202 + $0x35e0] sm:$0xff]
        %v1993 = vld [vmem:[%s202 + $0x35e8] sm:$0xff]
        %v1994 = vld [vmem:[%s202 + $0x35f0] sm:$0xff]
        %v1995 = vld [vmem:[%s202 + $0x35f8] sm:$0xff]
        %v1996 = vld [vmem:[%s202 + $0x3600] sm:$0xff]
        %v1997 = vld [vmem:[%s202 + $0x3608] sm:$0xff]
        %v1998 = vld [vmem:[%s202 + $0x3610] sm:$0xff]
        %v1999 = vld [vmem:[%s202 + $0x3618] sm:$0xff]
        %v2000 = vld [vmem:[%s202 + $0x3620] sm:$0xff]
        %v2001 = vld [vmem:[%s202 + $0x3628] sm:$0xff]
        %v2002 = vld [vmem:[%s202 + $0x3630] sm:$0xff]
        %v2003 = vld [vmem:[%s202 + $0x3638] sm:$0xff]
        %v2004 = vld [vmem:[%s202 + $0x3640] sm:$0xff]
        %v2005 = vld [vmem:[%s202 + $0x3648] sm:$0xff]
        %v2006 = vld [vmem:[%s202 + $0x3650] sm:$0xff]
        %v2007 = vld [vmem:[%s202 + $0x3658] sm:$0xff]
        %v2008 = vld [vmem:[%s202 + $0x3660] sm:$0xff]
        %v2009 = vld [vmem:[%s202 + $0x3668] sm:$0xff]
        %v2010 = vld [vmem:[%s202 + $0x3670] sm:$0xff]
        %v2011 = vld [vmem:[%s202 + $0x3678] sm:$0xff]
        %v2012 = vld [vmem:[%s202 + $0x3680] sm:$0xff]
        %v2013 = vld [vmem:[%s202 + $0x3688] sm:$0xff]
        %v2014 = vld [vmem:[%s202 + $0x3690] sm:$0xff]
        %v2015 = vld [vmem:[%s202 + $0x3698] sm:$0xff]
        %v2016 = vld [vmem:[%s202 + $0x36a0] sm:$0xff]
        %v2017 = vld [vmem:[%s202 + $0x36a8] sm:$0xff]
        %v2018 = vld [vmem:[%s202 + $0x36b0] sm:$0xff]
        %v2019 = vld [vmem:[%s202 + $0x36b8] sm:$0xff]
        %v2020 = vld [vmem:[%s202 + $0x36c0] sm:$0xff]
        %v2021 = vld [vmem:[%s202 + $0x36c8] sm:$0xff]
        %v2022 = vld [vmem:[%s202 + $0x36d0] sm:$0xff]
        %v2023 = vld [vmem:[%s202 + $0x36d8] sm:$0xff]
        %v2024 = vld [vmem:[%s202 + $0x36e0] sm:$0xff]
        %v2025 = vld [vmem:[%s202 + $0x36e8] sm:$0xff]
        %v2026 = vld [vmem:[%s202 + $0x36f0] sm:$0xff]
        %v2027 = vld [vmem:[%s202 + $0x36f8] sm:$0xff]
        %v2028 = vld [vmem:[%s202 + $0x3700] sm:$0xff]
        %v2029 = vld [vmem:[%s202 + $0x3708] sm:$0xff]
        %v2030 = vld [vmem:[%s202 + $0x3710] sm:$0xff]
        %v2031 = vld [vmem:[%s202 + $0x3718] sm:$0xff]
        %v2032 = vld [vmem:[%s202 + $0x3720] sm:$0xff]
        %v2033 = vld [vmem:[%s202 + $0x3728] sm:$0xff]
        %v2034 = vld [vmem:[%s202 + $0x3730] sm:$0xff]
        %v2035 = vld [vmem:[%s202 + $0x3738] sm:$0xff]
        %v2036 = vld [vmem:[%s202 + $0x3740] sm:$0xff]
        %v2037 = vld [vmem:[%s202 + $0x3748] sm:$0xff]
        %v2038 = vld [vmem:[%s202 + $0x3750] sm:$0xff]
        %v2039 = vld [vmem:[%s202 + $0x3758] sm:$0xff]
        %v2040 = vld [vmem:[%s202 + $0x3760] sm:$0xff]
        %v2041 = vld [vmem:[%s202 + $0x3768] sm:$0xff]
        %v2042 = vld [vmem:[%s202 + $0x3770] sm:$0xff]
        %v2043 = vld [vmem:[%s202 + $0x3778] sm:$0xff]
        %v2044 = vld [vmem:[%s202 + $0x3780] sm:$0xff]
        %v2045 = vld [vmem:[%s202 + $0x3788] sm:$0xff]
        %v2046 = vld [vmem:[%s202 + $0x3790] sm:$0xff]
        %v2047 = vld [vmem:[%s202 + $0x3798] sm:$0xff]
        %v2048 = vld [vmem:[%s202 + $0x37a0] sm:$0xff]
        %v2049 = vld [vmem:[%s202 + $0x37a8] sm:$0xff]
        %v2050 = vld [vmem:[%s202 + $0x37b0] sm:$0xff]
        %v2051 = vld [vmem:[%s202 + $0x37b8] sm:$0xff]
        %v2052 = vld [vmem:[%s202 + $0x37c0] sm:$0xff]
        %v2053 = vld [vmem:[%s202 + $0x37c8] sm:$0xff]
        %v2054 = vld [vmem:[%s202 + $0x37d0] sm:$0xff]
        %v2055 = vld [vmem:[%s202 + $0x37d8] sm:$0xff]
        %v2056 = vld [vmem:[%s202 + $0x37e0] sm:$0xff]
        %v2057 = vld [vmem:[%s202 + $0x37e8] sm:$0xff]
        %v2058 = vld [vmem:[%s202 + $0x37f0] sm:$0xff]
        %v2059 = vld [vmem:[%s202 + $0x37f8] sm:$0xff]
        %v2060 = vld [vmem:[%s202 + $0x3800] sm:$0xff]
        %v2061 = vld [vmem:[%s202 + $0x3808] sm:$0xff]
        %v2062 = vld [vmem:[%s202 + $0x3810] sm:$0xff]
        %v2063 = vld [vmem:[%s202 + $0x3818] sm:$0xff]
        %v2064 = vld [vmem:[%s202 + $0x3820] sm:$0xff]
        %v2065 = vld [vmem:[%s202 + $0x3828] sm:$0xff]
        %v2066 = vld [vmem:[%s202 + $0x3830] sm:$0xff]
        %v2067 = vld [vmem:[%s202 + $0x3838] sm:$0xff]
        %v2068 = vld [vmem:[%s202 + $0x3840] sm:$0xff]
        %v2069 = vld [vmem:[%s202 + $0x3848] sm:$0xff]
        %v2070 = vld [vmem:[%s202 + $0x3850] sm:$0xff]
        %v2071 = vld [vmem:[%s202 + $0x3858] sm:$0xff]
        %v2072 = vld [vmem:[%s202 + $0x3860] sm:$0xff]
        %v2073 = vld [vmem:[%s202 + $0x3868] sm:$0xff]
        %v2074 = vld [vmem:[%s202 + $0x3870] sm:$0xff]
        %v2075 = vld [vmem:[%s202 + $0x3878] sm:$0xff]
        %v2076 = vld [vmem:[%s202 + $0x3880] sm:$0xff]
        %v2077 = vld [vmem:[%s202 + $0x3888] sm:$0xff]
        %v2078 = vld [vmem:[%s202 + $0x3890] sm:$0xff]
        %v2079 = vld [vmem:[%s202 + $0x3898] sm:$0xff]
        %v2080 = vld [vmem:[%s202 + $0x38a0] sm:$0xff]
        %v2081 = vld [vmem:[%s202 + $0x38a8] sm:$0xff]
        %v2082 = vld [vmem:[%s202 + $0x38b0] sm:$0xff]
        %v2083 = vld [vmem:[%s202 + $0x38b8] sm:$0xff]
        %v2084 = vld [vmem:[%s202 + $0x38c0] sm:$0xff]
        %v2085 = vld [vmem:[%s202 + $0x38c8] sm:$0xff]
        %v2086 = vld [vmem:[%s202 + $0x38d0] sm:$0xff]
        %v2087 = vld [vmem:[%s202 + $0x38d8] sm:$0xff]
        %v2088 = vld [vmem:[%s202 + $0x38e0] sm:$0xff]
        %v2089 = vld [vmem:[%s202 + $0x38e8] sm:$0xff]
        %v2090 = vld [vmem:[%s202 + $0x38f0] sm:$0xff]
        %v2091 = vld [vmem:[%s202 + $0x38f8] sm:$0xff]
        %v2092 = vld [vmem:[%s202 + $0x3900] sm:$0xff]
        %v2093 = vld [vmem:[%s202 + $0x3908] sm:$0xff]
        %v2094 = vld [vmem:[%s202 + $0x3910] sm:$0xff]
        %v2095 = vld [vmem:[%s202 + $0x3918] sm:$0xff]
        %v2096 = vld [vmem:[%s202 + $0x3920] sm:$0xff]
        %v2097 = vld [vmem:[%s202 + $0x3928] sm:$0xff]
        %v2098 = vld [vmem:[%s202 + $0x3930] sm:$0xff]
        %v2099 = vld [vmem:[%s202 + $0x3938] sm:$0xff]
        %v2100 = vld [vmem:[%s202 + $0x3940] sm:$0xff]
        %v2101 = vld [vmem:[%s202 + $0x3948] sm:$0xff]
        %v2102 = vld [vmem:[%s202 + $0x3950] sm:$0xff]
        %v2103 = vld [vmem:[%s202 + $0x3958] sm:$0xff]
        %v2104 = vld [vmem:[%s202 + $0x3960] sm:$0xff]
        %v2105 = vld [vmem:[%s202 + $0x3968] sm:$0xff]
        %v2106 = vld [vmem:[%s202 + $0x3970] sm:$0xff]
        %v2107 = vld [vmem:[%s202 + $0x3978] sm:$0xff]
        %v2108 = vld [vmem:[%s202 + $0x3980] sm:$0xff]
        %v2109 = vld [vmem:[%s202 + $0x3988] sm:$0xff]
        %v2110 = vld [vmem:[%s202 + $0x3990] sm:$0xff]
        %v2111 = vld [vmem:[%s202 + $0x3998] sm:$0xff]
        %v2112 = vld [vmem:[%s202 + $0x39a0] sm:$0xff]
        %v2113 = vld [vmem:[%s202 + $0x39a8] sm:$0xff]
        %v2114 = vld [vmem:[%s202 + $0x39b0] sm:$0xff]
        %v2115 = vld [vmem:[%s202 + $0x39b8] sm:$0xff]
        %v2116 = vld [vmem:[%s202 + $0x39c0] sm:$0xff]
        %v2117 = vld [vmem:[%s202 + $0x39c8] sm:$0xff]
        %v2118 = vld [vmem:[%s202 + $0x39d0] sm:$0xff]
        %v2119 = vld [vmem:[%s202 + $0x39d8] sm:$0xff]
        %v2120 = vld [vmem:[%s202 + $0x39e0] sm:$0xff]
        %v2121 = vld [vmem:[%s202 + $0x39e8] sm:$0xff]
        %v2122 = vld [vmem:[%s202 + $0x39f0] sm:$0xff]
        %v2123 = vld [vmem:[%s202 + $0x39f8] sm:$0xff]
        %v2124 = vld [vmem:[%s202 + $0x3a00] sm:$0xff]
        %v2125 = vld [vmem:[%s202 + $0x3a08] sm:$0xff]
        %v2126 = vld [vmem:[%s202 + $0x3a10] sm:$0xff]
        %v2127 = vld [vmem:[%s202 + $0x3a18] sm:$0xff]
        %v2128 = vld [vmem:[%s202 + $0x3a20] sm:$0xff]
        %v2129 = vld [vmem:[%s202 + $0x3a28] sm:$0xff]
        %v2130 = vld [vmem:[%s202 + $0x3a30] sm:$0xff]
        %v2131 = vld [vmem:[%s202 + $0x3a38] sm:$0xff]
        %v2132 = vld [vmem:[%s202 + $0x3a40] sm:$0xff]
        %v2133 = vld [vmem:[%s202 + $0x3a48] sm:$0xff]
        %v2134 = vld [vmem:[%s202 + $0x3a50] sm:$0xff]
        %v2135 = vld [vmem:[%s202 + $0x3a58] sm:$0xff]
        %v2136 = vld [vmem:[%s202 + $0x3a60] sm:$0xff]
        %v2137 = vld [vmem:[%s202 + $0x3a68] sm:$0xff]
        %v2138 = vld [vmem:[%s202 + $0x3a70] sm:$0xff]
        %v2139 = vld [vmem:[%s202 + $0x3a78] sm:$0xff]
        %v2140 = vld [vmem:[%s202 + $0x3a80] sm:$0xff]
        %v2141 = vld [vmem:[%s202 + $0x3a88] sm:$0xff]
        %v2142 = vld [vmem:[%s202 + $0x3a90] sm:$0xff]
        %v2143 = vld [vmem:[%s202 + $0x3a98] sm:$0xff]
        %v2144 = vld [vmem:[%s202 + $0x3aa0] sm:$0xff]
        %v2145 = vld [vmem:[%s202 + $0x3aa8] sm:$0xff]
        %v2146 = vld [vmem:[%s202 + $0x3ab0] sm:$0xff]
        %v2147 = vld [vmem:[%s202 + $0x3ab8] sm:$0xff]
        %v2148 = vld [vmem:[%s202 + $0x3ac0] sm:$0xff]
        %v2149 = vld [vmem:[%s202 + $0x3ac8] sm:$0xff]
        %v2150 = vld [vmem:[%s202 + $0x3ad0] sm:$0xff]
        %v2151 = vld [vmem:[%s202 + $0x3ad8] sm:$0xff]
        %v2152 = vld [vmem:[%s202 + $0x3ae0] sm:$0xff]
        %v2153 = vld [vmem:[%s202 + $0x3ae8] sm:$0xff]
        %v2154 = vld [vmem:[%s202 + $0x3af0] sm:$0xff]
        %v2155 = vld [vmem:[%s202 + $0x3af8] sm:$0xff]
        %v2156 = vld [vmem:[%s202 + $0x3b00] sm:$0xff]
        %v2157 = vld [vmem:[%s202 + $0x3b08] sm:$0xff]
        %v2158 = vld [vmem:[%s202 + $0x3b10] sm:$0xff]
        %v2159 = vld [vmem:[%s202 + $0x3b18] sm:$0xff]
        %v2160 = vld [vmem:[%s202 + $0x3b20] sm:$0xff]
        %v2161 = vld [vmem:[%s202 + $0x3b28] sm:$0xff]
        %v2162 = vld [vmem:[%s202 + $0x3b30] sm:$0xff]
        %v2163 = vld [vmem:[%s202 + $0x3b38] sm:$0xff]
        %v2164 = vld [vmem:[%s202 + $0x3b40] sm:$0xff]
        %v2165 = vld [vmem:[%s202 + $0x3b48] sm:$0xff]
        %v2166 = vld [vmem:[%s202 + $0x3b50] sm:$0xff]
        %v2167 = vld [vmem:[%s202 + $0x3b58] sm:$0xff]
        %v2168 = vld [vmem:[%s202 + $0x3b60] sm:$0xff]
        %v2169 = vld [vmem:[%s202 + $0x3b68] sm:$0xff]
        %v2170 = vld [vmem:[%s202 + $0x3b70] sm:$0xff]
        %v2171 = vld [vmem:[%s202 + $0x3b78] sm:$0xff]
        %v2172 = vld [vmem:[%s202 + $0x3b80] sm:$0xff]
        %v2173 = vld [vmem:[%s202 + $0x3b88] sm:$0xff]
        %v2174 = vld [vmem:[%s202 + $0x3b90] sm:$0xff]
        %v2175 = vld [vmem:[%s202 + $0x3b98] sm:$0xff]
        %v2176 = vld [vmem:[%s202 + $0x3ba0] sm:$0xff]
        %v2177 = vld [vmem:[%s202 + $0x3ba8] sm:$0xff]
        %v2178 = vld [vmem:[%s202 + $0x3bb0] sm:$0xff]
        %v2179 = vld [vmem:[%s202 + $0x3bb8] sm:$0xff]
        %v2180 = vld [vmem:[%s202 + $0x3bc0] sm:$0xff]
        %v2181 = vld [vmem:[%s202 + $0x3bc8] sm:$0xff]
        %v2182 = vld [vmem:[%s202 + $0x3bd0] sm:$0xff]
        %v2183 = vld [vmem:[%s202 + $0x3bd8] sm:$0xff]
        %v2184 = vld [vmem:[%s202 + $0x3be0] sm:$0xff]
        %v2185 = vld [vmem:[%s202 + $0x3be8] sm:$0xff]
        %v2186 = vld [vmem:[%s202 + $0x3bf0] sm:$0xff]
        %v2187 = vld [vmem:[%s202 + $0x3bf8] sm:$0xff]
        %v2188 = vld [vmem:[%s202 + $0x3c00] sm:$0xff]
        %v2189 = vld [vmem:[%s202 + $0x3c08] sm:$0xff]
        %v2190 = vld [vmem:[%s202 + $0x3c10] sm:$0xff]
        %v2191 = vld [vmem:[%s202 + $0x3c18] sm:$0xff]
        %v2192 = vld [vmem:[%s202 + $0x3c20] sm:$0xff]
        %v2193 = vld [vmem:[%s202 + $0x3c28] sm:$0xff]
        %v2194 = vld [vmem:[%s202 + $0x3c30] sm:$0xff]
        %v2195 = vld [vmem:[%s202 + $0x3c38] sm:$0xff]
        %v2196 = vld [vmem:[%s202 + $0x3c40] sm:$0xff]
        %v2197 = vld [vmem:[%s202 + $0x3c48] sm:$0xff]
        %v2198 = vld [vmem:[%s202 + $0x3c50] sm:$0xff]
        %v2199 = vld [vmem:[%s202 + $0x3c58] sm:$0xff]
        %v2200 = vld [vmem:[%s202 + $0x3c60] sm:$0xff]
        %v2201 = vld [vmem:[%s202 + $0x3c68] sm:$0xff]
        %v2202 = vld [vmem:[%s202 + $0x3c70] sm:$0xff]
        %v2203 = vld [vmem:[%s202 + $0x3c78] sm:$0xff]
        %v2204 = vld [vmem:[%s202 + $0x3c80] sm:$0xff]
        %v2205 = vld [vmem:[%s202 + $0x3c88] sm:$0xff]
        %v2206 = vld [vmem:[%s202 + $0x3c90] sm:$0xff]
        %v2207 = vld [vmem:[%s202 + $0x3c98] sm:$0xff]
        %v2208 = vld [vmem:[%s202 + $0x3ca0] sm:$0xff]
        %v2209 = vld [vmem:[%s202 + $0x3ca8] sm:$0xff]
        %v2210 = vld [vmem:[%s202 + $0x3cb0] sm:$0xff]
        %v2211 = vld [vmem:[%s202 + $0x3cb8] sm:$0xff]
        %v2212 = vld [vmem:[%s202 + $0x3cc0] sm:$0xff]
        %v2213 = vld [vmem:[%s202 + $0x3cc8] sm:$0xff]
        %v2214 = vld [vmem:[%s202 + $0x3cd0] sm:$0xff]
        %v2215 = vld [vmem:[%s202 + $0x3cd8] sm:$0xff]
        %v2216 = vld [vmem:[%s202 + $0x3ce0] sm:$0xff]
        %v2217 = vld [vmem:[%s202 + $0x3ce8] sm:$0xff]
        %v2218 = vld [vmem:[%s202 + $0x3cf0] sm:$0xff]
        %v2219 = vld [vmem:[%s202 + $0x3cf8] sm:$0xff]
        %v2220 = vld [vmem:[%s202 + $0x3d00] sm:$0xff]
        %v2221 = vld [vmem:[%s202 + $0x3d08] sm:$0xff]
        %v2222 = vld [vmem:[%s202 + $0x3d10] sm:$0xff]
        %v2223 = vld [vmem:[%s202 + $0x3d18] sm:$0xff]
        %v2224 = vld [vmem:[%s202 + $0x3d20] sm:$0xff]
        %v2225 = vld [vmem:[%s202 + $0x3d28] sm:$0xff]
        %v2226 = vld [vmem:[%s202 + $0x3d30] sm:$0xff]
        %v2227 = vld [vmem:[%s202 + $0x3d38] sm:$0xff]
        %v2228 = vld [vmem:[%s202 + $0x3d40] sm:$0xff]
        %v2229 = vld [vmem:[%s202 + $0x3d48] sm:$0xff]
        %v2230 = vld [vmem:[%s202 + $0x3d50] sm:$0xff]
        %v2231 = vld [vmem:[%s202 + $0x3d58] sm:$0xff]
        %v2232 = vld [vmem:[%s202 + $0x3d60] sm:$0xff]
        %v2233 = vld [vmem:[%s202 + $0x3d68] sm:$0xff]
        %v2234 = vld [vmem:[%s202 + $0x3d70] sm:$0xff]
        %v2235 = vld [vmem:[%s202 + $0x3d78] sm:$0xff]
        %v2236 = vld [vmem:[%s202 + $0x3d80] sm:$0xff]
        %v2237 = vld [vmem:[%s202 + $0x3d88] sm:$0xff]
        %v2238 = vld [vmem:[%s202 + $0x3d90] sm:$0xff]
        %v2239 = vld [vmem:[%s202 + $0x3d98] sm:$0xff]
        %v2240 = vld [vmem:[%s202 + $0x3da0] sm:$0xff]
        %v2241 = vld [vmem:[%s202 + $0x3da8] sm:$0xff]
        %v2242 = vld [vmem:[%s202 + $0x3db0] sm:$0xff]
        %v2243 = vld [vmem:[%s202 + $0x3db8] sm:$0xff]
        %v2244 = vld [vmem:[%s202 + $0x3dc0] sm:$0xff]
        %v2245 = vld [vmem:[%s202 + $0x3dc8] sm:$0xff]
        %v2246 = vld [vmem:[%s202 + $0x3dd0] sm:$0xff]
        %v2247 = vld [vmem:[%s202 + $0x3dd8] sm:$0xff]
        %v2248 = vld [vmem:[%s202 + $0x3de0] sm:$0xff]
        %v2249 = vld [vmem:[%s202 + $0x3de8] sm:$0xff]
        %v2250 = vld [vmem:[%s202 + $0x3df0] sm:$0xff]
        %v2251 = vld [vmem:[%s202 + $0x3df8] sm:$0xff]
        %v2252 = vld [vmem:[%s202 + $0x3e00] sm:$0xff]
        %v2253 = vld [vmem:[%s202 + $0x3e08] sm:$0xff]
        %v2254 = vld [vmem:[%s202 + $0x3e10] sm:$0xff]
        %v2255 = vld [vmem:[%s202 + $0x3e18] sm:$0xff]
        %v2256 = vld [vmem:[%s202 + $0x3e20] sm:$0xff]
        %v2257 = vld [vmem:[%s202 + $0x3e28] sm:$0xff]
        %v2258 = vld [vmem:[%s202 + $0x3e30] sm:$0xff]
        %v2259 = vld [vmem:[%s202 + $0x3e38] sm:$0xff]
        %v2260 = vld [vmem:[%s202 + $0x3e40] sm:$0xff]
        %v2261 = vld [vmem:[%s202 + $0x3e48] sm:$0xff]
        %v2262 = vld [vmem:[%s202 + $0x3e50] sm:$0xff]
        %v2263 = vld [vmem:[%s202 + $0x3e58] sm:$0xff]
        %v2264 = vld [vmem:[%s202 + $0x3e60] sm:$0xff]
        %v2265 = vld [vmem:[%s202 + $0x3e68] sm:$0xff]
        %v2266 = vld [vmem:[%s202 + $0x3e70] sm:$0xff]
        %v2267 = vld [vmem:[%s202 + $0x3e78] sm:$0xff]
        %v2268 = vld [vmem:[%s202 + $0x3e80] sm:$0xff]
        %v2269 = vld [vmem:[%s202 + $0x3e88] sm:$0xff]
        %v2270 = vld [vmem:[%s202 + $0x3e90] sm:$0xff]
        %v2271 = vld [vmem:[%s202 + $0x3e98] sm:$0xff]
        %v2272 = vld [vmem:[%s202 + $0x3ea0] sm:$0xff]
        %v2273 = vld [vmem:[%s202 + $0x3ea8] sm:$0xff]
        %v2274 = vld [vmem:[%s202 + $0x3eb0] sm:$0xff]
        %v2275 = vld [vmem:[%s202 + $0x3eb8] sm:$0xff]
        %v2276 = vld [vmem:[%s202 + $0x3ec0] sm:$0xff]
        %v2277 = vld [vmem:[%s202 + $0x3ec8] sm:$0xff]
        %v2278 = vld [vmem:[%s202 + $0x3ed0] sm:$0xff]
        %v2279 = vld [vmem:[%s202 + $0x3ed8] sm:$0xff]
        %v2280 = vld [vmem:[%s202 + $0x3ee0] sm:$0xff]
        %v2281 = vld [vmem:[%s202 + $0x3ee8] sm:$0xff]
        %v2282 = vld [vmem:[%s202 + $0x3ef0] sm:$0xff]
        %v2283 = vld [vmem:[%s202 + $0x3ef8] sm:$0xff]
        %v2284 = vld [vmem:[%s202 + $0x3f00] sm:$0xff]
        %v2285 = vld [vmem:[%s202 + $0x3f08] sm:$0xff]
        %v2286 = vld [vmem:[%s202 + $0x3f10] sm:$0xff]
        %v2287 = vld [vmem:[%s202 + $0x3f18] sm:$0xff]
        %v2288 = vld [vmem:[%s202 + $0x3f20] sm:$0xff]
        %v2289 = vld [vmem:[%s202 + $0x3f28] sm:$0xff]
        %v2290 = vld [vmem:[%s202 + $0x3f30] sm:$0xff]
        %v2291 = vld [vmem:[%s202 + $0x3f38] sm:$0xff]
        %v2292 = vld [vmem:[%s202 + $0x3f40] sm:$0xff]
        %v2293 = vld [vmem:[%s202 + $0x3f48] sm:$0xff]
        %v2294 = vld [vmem:[%s202 + $0x3f50] sm:$0xff]
        %v2295 = vld [vmem:[%s202 + $0x3f58] sm:$0xff]
        %v2296 = vld [vmem:[%s202 + $0x3f60] sm:$0xff]
        %v2297 = vld [vmem:[%s202 + $0x3f68] sm:$0xff]
        %v2298 = vld [vmem:[%s202 + $0x3f70] sm:$0xff]
        %v2299 = vld [vmem:[%s202 + $0x3f78] sm:$0xff]
        %v2300 = vld [vmem:[%s202 + $0x3f80] sm:$0xff]
        %v2301 = vld [vmem:[%s202 + $0x3f88] sm:$0xff]
        %v2302 = vld [vmem:[%s202 + $0x3f90] sm:$0xff]
        %v2303 = vld [vmem:[%s202 + $0x3f98] sm:$0xff]
        %v2304 = vld [vmem:[%s202 + $0x3fa0] sm:$0xff]
        %v2305 = vld [vmem:[%s202 + $0x3fa8] sm:$0xff]
        %v2306 = vld [vmem:[%s202 + $0x3fb0] sm:$0xff]
        %v2307 = vld [vmem:[%s202 + $0x3fb8] sm:$0xff]
        %v2308 = vld [vmem:[%s202 + $0x3fc0] sm:$0xff]
        %v2309 = vld [vmem:[%s202 + $0x3fc8] sm:$0xff]
        %v2310 = vld [vmem:[%s202 + $0x3fd0] sm:$0xff]
        %v2311 = vld [vmem:[%s202 + $0x3fd8] sm:$0xff]
        %v2312 = vld [vmem:[%s202 + $0x3fe0] sm:$0xff]
        %v2313 = vld [vmem:[%s202 + $0x3fe8] sm:$0xff]
        %v2314 = vld [vmem:[%s202 + $0x3ff0] sm:$0xff]
        %v2315 = vld [vmem:[%s202 + $0x3ff8] sm:$0xff]
        %v2316 = vld [vmem:[%s202 + $0x4000] sm:$0xff]
        %v2317 = vld [vmem:[%s202 + $0x4008] sm:$0xff]
        %v2318 = vld [vmem:[%s202 + $0x4010] sm:$0xff]
        %v2319 = vld [vmem:[%s202 + $0x4018] sm:$0xff]
        %v2320 = vld [vmem:[%s202 + $0x4020] sm:$0xff]
        %v2321 = vld [vmem:[%s202 + $0x4028] sm:$0xff]
        %v2322 = vld [vmem:[%s202 + $0x4030] sm:$0xff]
        %v2323 = vld [vmem:[%s202 + $0x4038] sm:$0xff]
        %v2324 = vld [vmem:[%s202 + $0x4040] sm:$0xff]
        %v2325 = vld [vmem:[%s202 + $0x4048] sm:$0xff]
        %v2326 = vld [vmem:[%s202 + $0x4050] sm:$0xff]
        %v2327 = vld [vmem:[%s202 + $0x4058] sm:$0xff]
        %v2328 = vld [vmem:[%s202 + $0x4060] sm:$0xff]
        %v2329 = vld [vmem:[%s202 + $0x4068] sm:$0xff]
        %v2330 = vld [vmem:[%s202 + $0x4070] sm:$0xff]
        %v2331 = vld [vmem:[%s202 + $0x4078] sm:$0xff]
        %v2332 = vld [vmem:[%s202 + $0x4080] sm:$0xff]
        %v2333 = vld [vmem:[%s202 + $0x4088] sm:$0xff]
        %v2334 = vld [vmem:[%s202 + $0x4090] sm:$0xff]
        %v2335 = vld [vmem:[%s202 + $0x4098] sm:$0xff]
        %v2336 = vld [vmem:[%s202 + $0x40a0] sm:$0xff]
        %v2337 = vld [vmem:[%s202 + $0x40a8] sm:$0xff]
        %v2338 = vld [vmem:[%s202 + $0x40b0] sm:$0xff]
        %v2339 = vld [vmem:[%s202 + $0x40b8] sm:$0xff]
        %v2340 = vld [vmem:[%s202 + $0x40c0] sm:$0xff]
        %v2341 = vld [vmem:[%s202 + $0x40c8] sm:$0xff]
        %v2342 = vld [vmem:[%s202 + $0x40d0] sm:$0xff]
        %v2343 = vld [vmem:[%s202 + $0x40d8] sm:$0xff]
        %v2344 = vld [vmem:[%s202 + $0x40e0] sm:$0xff]
        %v2345 = vld [vmem:[%s202 + $0x40e8] sm:$0xff]
        %v2346 = vld [vmem:[%s202 + $0x40f0] sm:$0xff]
        %v2347 = vld [vmem:[%s202 + $0x40f8] sm:$0xff]
        %v2348 = vld [vmem:[%s202 + $0x4100] sm:$0xff]
        %v2349 = vld [vmem:[%s202 + $0x4108] sm:$0xff]
        %v2350 = vld [vmem:[%s202 + $0x4110] sm:$0xff]
        %v2351 = vld [vmem:[%s202 + $0x4118] sm:$0xff]
        %v2352 = vld [vmem:[%s202 + $0x4120] sm:$0xff]
        %v2353 = vld [vmem:[%s202 + $0x4128] sm:$0xff]
        %v2354 = vld [vmem:[%s202 + $0x4130] sm:$0xff]
        %v2355 = vld [vmem:[%s202 + $0x4138] sm:$0xff]
        %v2356 = vld [vmem:[%s202 + $0x4140] sm:$0xff]
        %v2357 = vld [vmem:[%s202 + $0x4148] sm:$0xff]
        %v2358 = vld [vmem:[%s202 + $0x4150] sm:$0xff]
        %v2359 = vld [vmem:[%s202 + $0x4158] sm:$0xff]
        %v2360 = vld [vmem:[%s202 + $0x4160] sm:$0xff]
        %v2361 = vld [vmem:[%s202 + $0x4168] sm:$0xff]
        %v2362 = vld [vmem:[%s202 + $0x4170] sm:$0xff]
        %v2363 = vld [vmem:[%s202 + $0x4178] sm:$0xff]
        %v2364 = vld [vmem:[%s202 + $0x4180] sm:$0xff]
        %v2365 = vld [vmem:[%s202 + $0x4188] sm:$0xff]
        %v2366 = vld [vmem:[%s202 + $0x4190] sm:$0xff]
        %v2367 = vld [vmem:[%s202 + $0x4198] sm:$0xff]
        %v2368 = vld [vmem:[%s202 + $0x41a0] sm:$0xff]
        %v2369 = vld [vmem:[%s202 + $0x41a8] sm:$0xff]
        %v2370 = vld [vmem:[%s202 + $0x41b0] sm:$0xff]
        %v2371 = vld [vmem:[%s202 + $0x41b8] sm:$0xff]
        %v2372 = vld [vmem:[%s202 + $0x41c0] sm:$0xff]
        %v2373 = vld [vmem:[%s202 + $0x41c8] sm:$0xff]
        %v2374 = vld [vmem:[%s202 + $0x41d0] sm:$0xff]
        %v2375 = vld [vmem:[%s202 + $0x41d8] sm:$0xff]
        %v2376 = vld [vmem:[%s202 + $0x41e0] sm:$0xff]
        %v2377 = vld [vmem:[%s202 + $0x41e8] sm:$0xff]
        %v2378 = vld [vmem:[%s202 + $0x41f0] sm:$0xff]
        %v2379 = vld [vmem:[%s202 + $0x41f8] sm:$0xff]
        %v2380 = vld [vmem:[%s202 + $0x4200] sm:$0xff]
        %v2381 = vld [vmem:[%s202 + $0x4208] sm:$0xff]
        %v2382 = vld [vmem:[%s202 + $0x4210] sm:$0xff]
        %v2383 = vld [vmem:[%s202 + $0x4218] sm:$0xff]
        %v2384 = vld [vmem:[%s202 + $0x4220] sm:$0xff]
        %v2385 = vld [vmem:[%s202 + $0x4228] sm:$0xff]
        %v2386 = vld [vmem:[%s202 + $0x4230] sm:$0xff]
        %v2387 = vld [vmem:[%s202 + $0x4238] sm:$0xff]
        %v2388 = vld [vmem:[%s202 + $0x4240] sm:$0xff]
        %v2389 = vld [vmem:[%s202 + $0x4248] sm:$0xff]
        %v2390 = vld [vmem:[%s202 + $0x4250] sm:$0xff]
        %v2391 = vld [vmem:[%s202 + $0x4258] sm:$0xff]
        %v2392 = vld [vmem:[%s202 + $0x4260] sm:$0xff]
        %v2393 = vld [vmem:[%s202 + $0x4268] sm:$0xff]
        %v2394 = vld [vmem:[%s202 + $0x4270] sm:$0xff]
        %v2395 = vld [vmem:[%s202 + $0x4278] sm:$0xff]
        %v2396 = vld [vmem:[%s202 + $0x4280] sm:$0xff]
        %v2397 = vld [vmem:[%s202 + $0x4288] sm:$0xff]
        %v2398 = vld [vmem:[%s202 + $0x4290] sm:$0xff]
        %v2399 = vld [vmem:[%s202 + $0x4298] sm:$0xff]
        %v2400 = vld [vmem:[%s202 + $0x42a0] sm:$0xff]
        %v2401 = vld [vmem:[%s202 + $0x42a8] sm:$0xff]
        %v2402 = vld [vmem:[%s202 + $0x42b0] sm:$0xff]
        %v2403 = vld [vmem:[%s202 + $0x42b8] sm:$0xff]
        %v2404 = vld [vmem:[%s202 + $0x42c0] sm:$0xff]
        %v2405 = vld [vmem:[%s202 + $0x42c8] sm:$0xff]
        %v2406 = vld [vmem:[%s202 + $0x42d0] sm:$0xff]
        %v2407 = vld [vmem:[%s202 + $0x42d8] sm:$0xff]
        %v2408 = vld [vmem:[%s202 + $0x42e0] sm:$0xff]
        %v2409 = vld [vmem:[%s202 + $0x42e8] sm:$0xff]
        %v2410 = vld [vmem:[%s202 + $0x42f0] sm:$0xff]
        %v2411 = vld [vmem:[%s202 + $0x42f8] sm:$0xff]
        %v2412 = vld [vmem:[%s202 + $0x4300] sm:$0xff]
        %v2413 = vld [vmem:[%s202 + $0x4308] sm:$0xff]
        %v2414 = vld [vmem:[%s202 + $0x4310] sm:$0xff]
        %v2415 = vld [vmem:[%s202 + $0x4318] sm:$0xff]
        %v2416 = vld [vmem:[%s202 + $0x4320] sm:$0xff]
        %v2417 = vld [vmem:[%s202 + $0x4328] sm:$0xff]
        %v2418 = vld [vmem:[%s202 + $0x4330] sm:$0xff]
        %v2419 = vld [vmem:[%s202 + $0x4338] sm:$0xff]
        %v2420 = vld [vmem:[%s202 + $0x4340] sm:$0xff]
        %v2421 = vld [vmem:[%s202 + $0x4348] sm:$0xff]
        %v2422 = vld [vmem:[%s202 + $0x4350] sm:$0xff]
        %v2423 = vld [vmem:[%s202 + $0x4358] sm:$0xff]
        %v2424 = vld [vmem:[%s202 + $0x4360] sm:$0xff]
        %v2425 = vld [vmem:[%s202 + $0x4368] sm:$0xff]
        %v2426 = vld [vmem:[%s202 + $0x4370] sm:$0xff]
        %v2427 = vld [vmem:[%s202 + $0x4378] sm:$0xff]
        %2432 = vst [vmem:[#allocation1] ss:$4 sm:$0xff] %v264
        %s2433 = scalar_lea.vmem [#allocation1], 32
        %2434 = vst [vmem:[%s2433] ss:$4 sm:$0xff] %v265
        %v2435 = vld.sshfl [vmem:[#allocation1] sm:$0xff pattern:$0x73625140]
        %v2436 = vld.sshfl [vmem:[#allocation1 + $0x8] sm:$0xff pattern:$0x73625140]
        %v2437 = vld.sshfl [vmem:[#allocation1 + $0x10] sm:$0xff pattern:$0x73625140]
        %v2438 = vld.sshfl [vmem:[#allocation1 + $0x18] sm:$0xff pattern:$0x73625140]
        %v2439 = vld.sshfl [vmem:[#allocation1 + $0x20] sm:$0xff pattern:$0x73625140]
        %v2440 = vld.sshfl [vmem:[#allocation1 + $0x28] sm:$0xff pattern:$0x73625140]
        %v2441 = vld.sshfl [vmem:[#allocation1 + $0x30] sm:$0xff pattern:$0x73625140]
        %v2442 = vld.sshfl [vmem:[#allocation1 + $0x38] sm:$0xff pattern:$0x73625140]
        %2443 = vst [vmem:[#allocation1] ss:$4 sm:$0xff] %v266
        %2444 = vst [vmem:[%s2433] ss:$4 sm:$0xff] %v267
        %v2445 = vld.sshfl [vmem:[#allocation1] sm:$0xff pattern:$0x73625140]
        %v2446 = vld.sshfl [vmem:[#allocation1 + $0x8] sm:$0xff pattern:$0x73625140]
        %v2447 = vld.sshfl [vmem:[#allocation1 + $0x10] sm:$0xff pattern:$0x73625140]
        %v2448 = vld.sshfl [vmem:[#allocation1 + $0x18] sm:$0xff pattern:$0x73625140]
        %v2449 = vld.sshfl [vmem:[#allocation1 + $0x20] sm:$0xff pattern:$0x73625140]
        %v2450 = vld.sshfl [vmem:[#allocation1 + $0x28] sm:$0xff pattern:$0x73625140]
        %v2451 = vld.sshfl [vmem:[#allocation1 + $0x30] sm:$0xff pattern:$0x73625140]
        %2467 = vmatpush.msra.mxu0 %v403
        %2468 = vmatpush.msra.mxu0 %v394
        %2469 = vmatpush.msra.mxu0 %v385
        %2470 = vmatpush.msra.mxu0 %v376
        %2471 = vmatpush.msra.mxu0 %v367
        %2472 = vmatpush.msra.mxu0 %v358
        %2473 = vmatpush.msra.mxu0 %v349
        %2474 = vmatpush.msra.mxu0 %v340
        %2475 = vmatpush.msra.mxu0 %v331
        %2476 = vmatpush.msra.mxu0 %v322
        %2477 = vmatpush.msra.mxu0 %v313
        %2478 = vmatpush.msra.mxu0 %v304
        %2479 = vmatpush.msra.mxu0 %v295
        %2480 = vmatpush.msra.mxu0 %v286
        %2481 = vmatpush.msra.mxu0 %v277
        %2482 = vmatpush.msra.mxu0 %v268
        %2483 = vmatmul.f32.gmra.mxu0 %v2435
        %v2484 = vpop.f32.mrf.mxu0
        %v2485 = vadd.f32 0.0, %v2484
        %2486 = vdwg.mxu0
        %2487 = vmatpush.msra.mxu0 %v547
        %2488 = vmatpush.msra.mxu0 %v538
        %2489 = vmatpush.msra.mxu0 %v529
        %2490 = vmatpush.msra.mxu0 %v520
        %2491 = vmatpush.msra.mxu0 %v511
        %2492 = vmatpush.msra.mxu0 %v502
        %2493 = vmatpush.msra.mxu0 %v493
        %2494 = vmatpush.msra.mxu0 %v484
        %2495 = vmatpush.msra.mxu0 %v475
        %2496 = vmatpush.msra.mxu0 %v466
        %2497 = vmatpush.msra.mxu0 %v457
        %2498 = vmatpush.msra.mxu0 %v448
        %2499 = vmatpush.msra.mxu0 %v439
        %2500 = vmatpush.msra.mxu0 %v430
        %2501 = vmatpush.msra.mxu0 %v421
        %2502 = vmatpush.msra.mxu0 %v412
        %2503 = vmatmul.f32.gmra.mxu0 %v2436
        %v2504 = vpop.f32.mrf.mxu0
        %v2505 = vadd.f32 %v2485, %v2504
        %2506 = vdwg.mxu0
        %2507 = vmatpush.msra.mxu0 %v691
        %2508 = vmatpush.msra.mxu0 %v682
        %2509 = vmatpush.msra.mxu0 %v673
        %2510 = vmatpush.msra.mxu0 %v664
        %2511 = vmatpush.msra.mxu0 %v655
        %2512 = vmatpush.msra.mxu0 %v646
        %2513 = vmatpush.msra.mxu0 %v637
        %2514 = vmatpush.msra.mxu0 %v628
        %2515 = vmatpush.msra.mxu0 %v619
        %2516 = vmatpush.msra.mxu0 %v610
        %2517 = vmatpush.msra.mxu0 %v601
        %2518 = vmatpush.msra.mxu0 %v592
        %2519 = vmatpush.msra.mxu0 %v583
        %2520 = vmatpush.msra.mxu0 %v574
        %2521 = vmatpush.msra.mxu0 %v565
        %2522 = vmatpush.msra.mxu0 %v556
        %2523 = vmatmul.f32.gmra.mxu0 %v2437
        %v2524 = vpop.f32.mrf.mxu0
        %v2525 = vadd.f32 %v2505, %v2524
        %2526 = vdwg.mxu0
        %2527 = vmatpush.msra.mxu0 %v835
        %2528 = vmatpush.msra.mxu0 %v826
        %2529 = vmatpush.msra.mxu0 %v817
        %2530 = vmatpush.msra.mxu0 %v808
        %2531 = vmatpush.msra.mxu0 %v799
        %2532 = vmatpush.msra.mxu0 %v790
        %2533 = vmatpush.msra.mxu0 %v781
        %2534 = vmatpush.msra.mxu0 %v772
        %2535 = vmatpush.msra.mxu0 %v763
        %2536 = vmatpush.msra.mxu0 %v754
        %2537 = vmatpush.msra.mxu0 %v745
        %2538 = vmatpush.msra.mxu0 %v736
        %2539 = vmatpush.msra.mxu0 %v727
        %2540 = vmatpush.msra.mxu0 %v718
        %2541 = vmatpush.msra.mxu0 %v709
        %2542 = vmatpush.msra.mxu0 %v700
        %2543 = vmatmul.f32.gmra.mxu0 %v2438
        %v2544 = vpop.f32.mrf.mxu0
        %v2545 = vadd.f32 %v2525, %v2544
        %2546 = vdwg.mxu0
        %2547 = vmatpush.msra.mxu0 %v979
        %2548 = vmatpush.msra.mxu0 %v970
        %2549 = vmatpush.msra.mxu0 %v961
        %2550 = vmatpush.msra.mxu0 %v952
        %2551 = vmatpush.msra.mxu0 %v943
        %2552 = vmatpush.msra.mxu0 %v934
        %2553 = vmatpush.msra.mxu0 %v925
        %2554 = vmatpush.msra.mxu0 %v916
        %2555 = vmatpush.msra.mxu0 %v907
        %2556 = vmatpush.msra.mxu0 %v898
        %2557 = vmatpush.msra.mxu0 %v889
        %2558 = vmatpush.msra.mxu0 %v880
        %2559 = vmatpush.msra.mxu0 %v871
        %2560 = vmatpush.msra.mxu0 %v862
        %2561 = vmatpush.msra.mxu0 %v853
        %2562 = vmatpush.msra.mxu0 %v844
        %2563 = vmatmul.f32.gmra.mxu0 %v2439
        %v2564 = vpop.f32.mrf.mxu0
        %v2565 = vadd.f32 %v2545, %v2564
        %2566 = vdwg.mxu0
        %2567 = vmatpush.msra.mxu0 %v1123
        %2568 = vmatpush.msra.mxu0 %v1114
        %2569 = vmatpush.msra.mxu0 %v1105
        %2570 = vmatpush.msra.mxu0 %v1096
        %2571 = vmatpush.msra.mxu0 %v1087
        %2572 = vmatpush.msra.mxu0 %v1078
        %2573 = vmatpush.msra.mxu0 %v1069
        %2574 = vmatpush.msra.mxu0 %v1060
        %2575 = vmatpush.msra.mxu0 %v1051
        %2576 = vmatpush.msra.mxu0 %v1042
        %2577 = vmatpush.msra.mxu0 %v1033
        %2578 = vmatpush.msra.mxu0 %v1024
        %2579 = vmatpush.msra.mxu0 %v1015
        %2580 = vmatpush.msra.mxu0 %v1006
        %2581 = vmatpush.msra.mxu0 %v997
        %2582 = vmatpush.msra.mxu0 %v988
        %2583 = vmatmul.f32.gmra.mxu0 %v2440
        %v2584 = vpop.f32.mrf.mxu0
        %v2585 = vadd.f32 %v2565, %v2584
        %2586 = vdwg.mxu0
        %2587 = vmatpush.msra.mxu0 %v1267
        %2588 = vmatpush.msra.mxu0 %v1258
        %2589 = vmatpush.msra.mxu0 %v1249
        %2590 = vmatpush.msra.mxu0 %v1240
        %2591 = vmatpush.msra.mxu0 %v1231
        %2592 = vmatpush.msra.mxu0 %v1222
        %2593 = vmatpush.msra.mxu0 %v1213
        %2594 = vmatpush.msra.mxu0 %v1204
        %2595 = vmatpush.msra.mxu0 %v1195
        %2596 = vmatpush.msra.mxu0 %v1186
        %2597 = vmatpush.msra.mxu0 %v1177
        %2598 = vmatpush.msra.mxu0 %v1168
        %2599 = vmatpush.msra.mxu0 %v1159
        %2600 = vmatpush.msra.mxu0 %v1150
        %2601 = vmatpush.msra.mxu0 %v1141
        %2602 = vmatpush.msra.mxu0 %v1132
        %2603 = vmatmul.f32.gmra.mxu0 %v2441
        %v2604 = vpop.f32.mrf.mxu0
        %v2605 = vadd.f32 %v2585, %v2604
        %2606 = vdwg.mxu0
        %2607 = vmatpush.msra.mxu0 %v1411
        %2608 = vmatpush.msra.mxu0 %v1402
        %2609 = vmatpush.msra.mxu0 %v1393
        %2610 = vmatpush.msra.mxu0 %v1384
        %2611 = vmatpush.msra.mxu0 %v1375
        %2612 = vmatpush.msra.mxu0 %v1366
        %2613 = vmatpush.msra.mxu0 %v1357
        %2614 = vmatpush.msra.mxu0 %v1348
        %2615 = vmatpush.msra.mxu0 %v1339
        %2616 = vmatpush.msra.mxu0 %v1330
        %2617 = vmatpush.msra.mxu0 %v1321
        %2618 = vmatpush.msra.mxu0 %v1312
        %2619 = vmatpush.msra.mxu0 %v1303
        %2620 = vmatpush.msra.mxu0 %v1294
        %2621 = vmatpush.msra.mxu0 %v1285
        %2622 = vmatpush.msra.mxu0 %v1276
        %2623 = vmatmul.f32.gmra.mxu0 %v2442
        %v2624 = vpop.f32.mrf.mxu0
        %v2625 = vadd.f32 %v2605, %v2624
        %2626 = vdwg.mxu0
        %2627 = vmatpush.msra.mxu0 %v1555
        %2628 = vmatpush.msra.mxu0 %v1546
        %2629 = vmatpush.msra.mxu0 %v1537
        %2630 = vmatpush.msra.mxu0 %v1528
        %2631 = vmatpush.msra.mxu0 %v1519
        %2632 = vmatpush.msra.mxu0 %v1510
        %2633 = vmatpush.msra.mxu0 %v1501
        %2634 = vmatpush.msra.mxu0 %v1492
        %2635 = vmatpush.msra.mxu0 %v1483
        %2636 = vmatpush.msra.mxu0 %v1474
        %2637 = vmatpush.msra.mxu0 %v1465
        %2638 = vmatpush.msra.mxu0 %v1456
        %2639 = vmatpush.msra.mxu0 %v1447
        %2640 = vmatpush.msra.mxu0 %v1438
        %2641 = vmatpush.msra.mxu0 %v1429
        %2642 = vmatpush.msra.mxu0 %v1420
        %2643 = vmatmul.f32.gmra.mxu0 %v2445
        %v2644 = vpop.f32.mrf.mxu0
        %v2645 = vadd.f32 %v2625, %v2644
        %2646 = vdwg.mxu0
        %2647 = vmatpush.msra.mxu0 %v1699
        %2648 = vmatpush.msra.mxu0 %v1690
        %2649 = vmatpush.msra.mxu0 %v1681
        %2650 = vmatpush.msra.mxu0 %v1672
        %2651 = vmatpush.msra.mxu0 %v1663
        %2652 = vmatpush.msra.mxu0 %v1654
        %2653 = vmatpush.msra.mxu0 %v1645
        %2654 = vmatpush.msra.mxu0 %v1636
        %2655 = vmatpush.msra.mxu0 %v1627
        %2656 = vmatpush.msra.mxu0 %v1618
        %2657 = vmatpush.msra.mxu0 %v1609
        %2658 = vmatpush.msra.mxu0 %v1600
        %2659 = vmatpush.msra.mxu0 %v1591
        %2660 = vmatpush.msra.mxu0 %v1582
        %2661 = vmatpush.msra.mxu0 %v1573
        %2662 = vmatpush.msra.mxu0 %v1564
        %2663 = vmatmul.f32.gmra.mxu0 %v2446
        %v2664 = vpop.f32.mrf.mxu0
        %v2665 = vadd.f32 %v2645, %v2664
        %2666 = vdwg.mxu0
        %2667 = vmatpush.msra.mxu0 %v1843
        %2668 = vmatpush.msra.mxu0 %v1834
        %2669 = vmatpush.msra.mxu0 %v1825
        %2670 = vmatpush.msra.mxu0 %v1816
        %2671 = vmatpush.msra.mxu0 %v1807
        %2672 = vmatpush.msra.mxu0 %v1798
        %2673 = vmatpush.msra.mxu0 %v1789
        %2674 = vmatpush.msra.mxu0 %v1780
        %2675 = vmatpush.msra.mxu0 %v1771
        %2676 = vmatpush.msra.mxu0 %v1762
        %2677 = vmatpush.msra.mxu0 %v1753
        %2678 = vmatpush.msra.mxu0 %v1744
        %2679 = vmatpush.msra.mxu0 %v1735
        %2680 = vmatpush.msra.mxu0 %v1726
        %2681 = vmatpush.msra.mxu0 %v1717
        %2682 = vmatpush.msra.mxu0 %v1708
        %2683 = vmatmul.f32.gmra.mxu0 %v2447
        %v2684 = vpop.f32.mrf.mxu0
        %v2685 = vadd.f32 %v2665, %v2684
        %2686 = vdwg.mxu0
        %2687 = vmatpush.msra.mxu0 %v1987
        %2688 = vmatpush.msra.mxu0 %v1978
        %2689 = vmatpush.msra.mxu0 %v1969
        %2690 = vmatpush.msra.mxu0 %v1960
        %2691 = vmatpush.msra.mxu0 %v1951
        %2692 = vmatpush.msra.mxu0 %v1942
        %2693 = vmatpush.msra.mxu0 %v1933
        %2694 = vmatpush.msra.mxu0 %v1924
        %2695 = vmatpush.msra.mxu0 %v1915
        %2696 = vmatpush.msra.mxu0 %v1906
        %2697 = vmatpush.msra.mxu0 %v1897
        %2698 = vmatpush.msra.mxu0 %v1888
        %2699 = vmatpush.msra.mxu0 %v1879
        %2700 = vmatpush.msra.mxu0 %v1870
        %2701 = vmatpush.msra.mxu0 %v1861
        %2702 = vmatpush.msra.mxu0 %v1852
        %2703 = vmatmul.f32.gmra.mxu0 %v2448
        %v2704 = vpop.f32.mrf.mxu0
        %v2705 = vadd.f32 %v2685, %v2704
        %2706 = vdwg.mxu0
        %2707 = vmatpush.msra.mxu0 %v2131
        %2708 = vmatpush.msra.mxu0 %v2122
        %2709 = vmatpush.msra.mxu0 %v2113
        %2710 = vmatpush.msra.mxu0 %v2104
        %2711 = vmatpush.msra.mxu0 %v2095
        %2712 = vmatpush.msra.mxu0 %v2086
        %2713 = vmatpush.msra.mxu0 %v2077
        %2714 = vmatpush.msra.mxu0 %v2068
        %2715 = vmatpush.msra.mxu0 %v2059
        %2716 = vmatpush.msra.mxu0 %v2050
        %2717 = vmatpush.msra.mxu0 %v2041
        %2718 = vmatpush.msra.mxu0 %v2032
        %2719 = vmatpush.msra.mxu0 %v2023
        %2720 = vmatpush.msra.mxu0 %v2014
        %2721 = vmatpush.msra.mxu0 %v2005
        %2722 = vmatpush.msra.mxu0 %v1996
        %2723 = vmatmul.f32.gmra.mxu0 %v2449
        %v2724 = vpop.f32.mrf.mxu0
        %v2725 = vadd.f32 %v2705, %v2724
        %2726 = vdwg.mxu0
        %2727 = vmatpush.msra.mxu0 %v2275
        %2728 = vmatpush.msra.mxu0 %v2266
        %2729 = vmatpush.msra.mxu0 %v2257
        %2730 = vmatpush.msra.mxu0 %v2248
        %2731 = vmatpush.msra.mxu0 %v2239
        %2732 = vmatpush.msra.mxu0 %v2230
        %2733 = vmatpush.msra.mxu0 %v2221
        %2734 = vmatpush.msra.mxu0 %v2212
        %2735 = vmatpush.msra.mxu0 %v2203
        %2736 = vmatpush.msra.mxu0 %v2194
        %2737 = vmatpush.msra.mxu0 %v2185
        %2738 = vmatpush.msra.mxu0 %v2176
        %2739 = vmatpush.msra.mxu0 %v2167
        %2740 = vmatpush.msra.mxu0 %v2158
        %2741 = vmatpush.msra.mxu0 %v2149
        %2742 = vmatpush.msra.mxu0 %v2140
        %2743 = vmatmul.f32.gmra.mxu0 %v2450
        %v2744 = vpop.f32.mrf.mxu0
        %v2745 = vadd.f32 %v2725, %v2744
        %2746 = vdwg.mxu0
        %2747 = vmatpush.msra.mxu0 %v2419
        %2748 = vmatpush.msra.mxu0 %v2410
        %2749 = vmatpush.msra.mxu0 %v2401
        %2750 = vmatpush.msra.mxu0 %v2392
        %2751 = vmatpush.msra.mxu0 %v2383
        %2752 = vmatpush.msra.mxu0 %v2374
        %2753 = vmatpush.msra.mxu0 %v2365
        %2754 = vmatpush.msra.mxu0 %v2356
        %2755 = vmatpush.msra.mxu0 %v2347
        %2756 = vmatpush.msra.mxu0 %v2338
        %2757 = vmatpush.msra.mxu0 %v2329
        %2758 = vmatpush.msra.mxu0 %v2320
        %2759 = vmatpush.msra.mxu0 %v2311
        %2760 = vmatpush.msra.mxu0 %v2302
        %2761 = vmatpush.msra.mxu0 %v2293
        %2762 = vmatpush.msra.mxu0 %v2284
        %2763 = vmatmul.f32.gmra.mxu0 %v2451
        %v2764 = vpop.f32.mrf.mxu0
        %v2765 = vadd.f32 %v2745, %v2764
        %2766 = vdwg.mxu0
        %2767 = vmatpush.msra.mxu0 %v404
        %2768 = vmatpush.msra.mxu0 %v395
        %2769 = vmatpush.msra.mxu0 %v386
        %2770 = vmatpush.msra.mxu0 %v377
        %2771 = vmatpush.msra.mxu0 %v368
        %2772 = vmatpush.msra.mxu0 %v359
        %2773 = vmatpush.msra.mxu0 %v350
        %2774 = vmatpush.msra.mxu0 %v341
        %2775 = vmatpush.msra.mxu0 %v332
        %2776 = vmatpush.msra.mxu0 %v323
        %2777 = vmatpush.msra.mxu0 %v314
        %2778 = vmatpush.msra.mxu0 %v305
        %2779 = vmatpush.msra.mxu0 %v296
        %2780 = vmatpush.msra.mxu0 %v287
        %2781 = vmatpush.msra.mxu0 %v278
        %2782 = vmatpush.msra.mxu0 %v269
        %2783 = vmatmul.f32.gmra.mxu0 %v2435
        %v2784 = vpop.f32.mrf.mxu0
        %v2785 = vadd.f32 0.0, %v2784
        %2786 = vdwg.mxu0
        %2787 = vmatpush.msra.mxu0 %v548
        %2788 = vmatpush.msra.mxu0 %v539
        %2789 = vmatpush.msra.mxu0 %v530
        %2790 = vmatpush.msra.mxu0 %v521
        %2791 = vmatpush.msra.mxu0 %v512
        %2792 = vmatpush.msra.mxu0 %v503
        %2793 = vmatpush.msra.mxu0 %v494
        %2794 = vmatpush.msra.mxu0 %v485
        %2795 = vmatpush.msra.mxu0 %v476
        %2796 = vmatpush.msra.mxu0 %v467
        %2797 = vmatpush.msra.mxu0 %v458
        %2798 = vmatpush.msra.mxu0 %v449
        %2799 = vmatpush.msra.mxu0 %v440
        %2800 = vmatpush.msra.mxu0 %v431
        %2801 = vmatpush.msra.mxu0 %v422
        %2802 = vmatpush.msra.mxu0 %v413
        %2803 = vmatmul.f32.gmra.mxu0 %v2436
        %v2804 = vpop.f32.mrf.mxu0
        %v2805 = vadd.f32 %v2785, %v2804
        %2806 = vdwg.mxu0
        %2807 = vmatpush.msra.mxu0 %v692
        %2808 = vmatpush.msra.mxu0 %v683
        %2809 = vmatpush.msra.mxu0 %v674
        %2810 = vmatpush.msra.mxu0 %v665
        %2811 = vmatpush.msra.mxu0 %v656
        %2812 = vmatpush.msra.mxu0 %v647
        %2813 = vmatpush.msra.mxu0 %v638
        %2814 = vmatpush.msra.mxu0 %v629
        %2815 = vmatpush.msra.mxu0 %v620
        %2816 = vmatpush.msra.mxu0 %v611
        %2817 = vmatpush.msra.mxu0 %v602
        %2818 = vmatpush.msra.mxu0 %v593
        %2819 = vmatpush.msra.mxu0 %v584
        %2820 = vmatpush.msra.mxu0 %v575
        %2821 = vmatpush.msra.mxu0 %v566
        %2822 = vmatpush.msra.mxu0 %v557
        %2823 = vmatmul.f32.gmra.mxu0 %v2437
        %v2824 = vpop.f32.mrf.mxu0
        %v2825 = vadd.f32 %v2805, %v2824
        %2826 = vdwg.mxu0
        %2827 = vmatpush.msra.mxu0 %v836
        %2828 = vmatpush.msra.mxu0 %v827
        %2829 = vmatpush.msra.mxu0 %v818
        %2830 = vmatpush.msra.mxu0 %v809
        %2831 = vmatpush.msra.mxu0 %v800
        %2832 = vmatpush.msra.mxu0 %v791
        %2833 = vmatpush.msra.mxu0 %v782
        %2834 = vmatpush.msra.mxu0 %v773
        %2835 = vmatpush.msra.mxu0 %v764
        %2836 = vmatpush.msra.mxu0 %v755
        %2837 = vmatpush.msra.mxu0 %v746
        %2838 = vmatpush.msra.mxu0 %v737
        %2839 = vmatpush.msra.mxu0 %v728
        %2840 = vmatpush.msra.mxu0 %v719
        %2841 = vmatpush.msra.mxu0 %v710
        %2842 = vmatpush.msra.mxu0 %v701
        %2843 = vmatmul.f32.gmra.mxu0 %v2438
        %v2844 = vpop.f32.mrf.mxu0
        %v2845 = vadd.f32 %v2825, %v2844
        %2846 = vdwg.mxu0
        %2847 = vmatpush.msra.mxu0 %v980
        %2848 = vmatpush.msra.mxu0 %v971
        %2849 = vmatpush.msra.mxu0 %v962
        %2850 = vmatpush.msra.mxu0 %v953
        %2851 = vmatpush.msra.mxu0 %v944
        %2852 = vmatpush.msra.mxu0 %v935
        %2853 = vmatpush.msra.mxu0 %v926
        %2854 = vmatpush.msra.mxu0 %v917
        %2855 = vmatpush.msra.mxu0 %v908
        %2856 = vmatpush.msra.mxu0 %v899
        %2857 = vmatpush.msra.mxu0 %v890
        %2858 = vmatpush.msra.mxu0 %v881
        %2859 = vmatpush.msra.mxu0 %v872
        %2860 = vmatpush.msra.mxu0 %v863
        %2861 = vmatpush.msra.mxu0 %v854
        %2862 = vmatpush.msra.mxu0 %v845
        %2863 = vmatmul.f32.gmra.mxu0 %v2439
        %v2864 = vpop.f32.mrf.mxu0
        %v2865 = vadd.f32 %v2845, %v2864
        %2866 = vdwg.mxu0
        %2867 = vmatpush.msra.mxu0 %v1124
        %2868 = vmatpush.msra.mxu0 %v1115
        %2869 = vmatpush.msra.mxu0 %v1106
        %2870 = vmatpush.msra.mxu0 %v1097
        %2871 = vmatpush.msra.mxu0 %v1088
        %2872 = vmatpush.msra.mxu0 %v1079
        %2873 = vmatpush.msra.mxu0 %v1070
        %2874 = vmatpush.msra.mxu0 %v1061
        %2875 = vmatpush.msra.mxu0 %v1052
        %2876 = vmatpush.msra.mxu0 %v1043
        %2877 = vmatpush.msra.mxu0 %v1034
        %2878 = vmatpush.msra.mxu0 %v1025
        %2879 = vmatpush.msra.mxu0 %v1016
        %2880 = vmatpush.msra.mxu0 %v1007
        %2881 = vmatpush.msra.mxu0 %v998
        %2882 = vmatpush.msra.mxu0 %v989
        %2883 = vmatmul.f32.gmra.mxu0 %v2440
        %v2884 = vpop.f32.mrf.mxu0
        %v2885 = vadd.f32 %v2865, %v2884
        %2886 = vdwg.mxu0
        %2887 = vmatpush.msra.mxu0 %v1268
        %2888 = vmatpush.msra.mxu0 %v1259
        %2889 = vmatpush.msra.mxu0 %v1250
        %2890 = vmatpush.msra.mxu0 %v1241
        %2891 = vmatpush.msra.mxu0 %v1232
        %2892 = vmatpush.msra.mxu0 %v1223
        %2893 = vmatpush.msra.mxu0 %v1214
        %2894 = vmatpush.msra.mxu0 %v1205
        %2895 = vmatpush.msra.mxu0 %v1196
        %2896 = vmatpush.msra.mxu0 %v1187
        %2897 = vmatpush.msra.mxu0 %v1178
        %2898 = vmatpush.msra.mxu0 %v1169
        %2899 = vmatpush.msra.mxu0 %v1160
        %2900 = vmatpush.msra.mxu0 %v1151
        %2901 = vmatpush.msra.mxu0 %v1142
        %2902 = vmatpush.msra.mxu0 %v1133
        %2903 = vmatmul.f32.gmra.mxu0 %v2441
        %v2904 = vpop.f32.mrf.mxu0
        %v2905 = vadd.f32 %v2885, %v2904
        %2906 = vdwg.mxu0
        %2907 = vmatpush.msra.mxu0 %v1412
        %2908 = vmatpush.msra.mxu0 %v1403
        %2909 = vmatpush.msra.mxu0 %v1394
        %2910 = vmatpush.msra.mxu0 %v1385
        %2911 = vmatpush.msra.mxu0 %v1376
        %2912 = vmatpush.msra.mxu0 %v1367
        %2913 = vmatpush.msra.mxu0 %v1358
        %2914 = vmatpush.msra.mxu0 %v1349
        %2915 = vmatpush.msra.mxu0 %v1340
        %2916 = vmatpush.msra.mxu0 %v1331
        %2917 = vmatpush.msra.mxu0 %v1322
        %2918 = vmatpush.msra.mxu0 %v1313
        %2919 = vmatpush.msra.mxu0 %v1304
        %2920 = vmatpush.msra.mxu0 %v1295
        %2921 = vmatpush.msra.mxu0 %v1286
        %2922 = vmatpush.msra.mxu0 %v1277
        %2923 = vmatmul.f32.gmra.mxu0 %v2442
        %v2924 = vpop.f32.mrf.mxu0
        %v2925 = vadd.f32 %v2905, %v2924
        %2926 = vdwg.mxu0
        %2927 = vmatpush.msra.mxu0 %v1556
        %2928 = vmatpush.msra.mxu0 %v1547
        %2929 = vmatpush.msra.mxu0 %v1538
        %2930 = vmatpush.msra.mxu0 %v1529
        %2931 = vmatpush.msra.mxu0 %v1520
        %2932 = vmatpush.msra.mxu0 %v1511
        %2933 = vmatpush.msra.mxu0 %v1502
        %2934 = vmatpush.msra.mxu0 %v1493
        %2935 = vmatpush.msra.mxu0 %v1484
        %2936 = vmatpush.msra.mxu0 %v1475
        %2937 = vmatpush.msra.mxu0 %v1466
        %2938 = vmatpush.msra.mxu0 %v1457
        %2939 = vmatpush.msra.mxu0 %v1448
        %2940 = vmatpush.msra.mxu0 %v1439
        %2941 = vmatpush.msra.mxu0 %v1430
        %2942 = vmatpush.msra.mxu0 %v1421
        %2943 = vmatmul.f32.gmra.mxu0 %v2445
        %v2944 = vpop.f32.mrf.mxu0
        %v2945 = vadd.f32 %v2925, %v2944
        %2946 = vdwg.mxu0
        %2947 = vmatpush.msra.mxu0 %v1700
        %2948 = vmatpush.msra.mxu0 %v1691
        %2949 = vmatpush.msra.mxu0 %v1682
        %2950 = vmatpush.msra.mxu0 %v1673
        %2951 = vmatpush.msra.mxu0 %v1664
        %2952 = vmatpush.msra.mxu0 %v1655
        %2953 = vmatpush.msra.mxu0 %v1646
        %2954 = vmatpush.msra.mxu0 %v1637
        %2955 = vmatpush.msra.mxu0 %v1628
        %2956 = vmatpush.msra.mxu0 %v1619
        %2957 = vmatpush.msra.mxu0 %v1610
        %2958 = vmatpush.msra.mxu0 %v1601
        %2959 = vmatpush.msra.mxu0 %v1592
        %2960 = vmatpush.msra.mxu0 %v1583
        %2961 = vmatpush.msra.mxu0 %v1574
        %2962 = vmatpush.msra.mxu0 %v1565
        %2963 = vmatmul.f32.gmra.mxu0 %v2446
        %v2964 = vpop.f32.mrf.mxu0
        %v2965 = vadd.f32 %v2945, %v2964
        %2966 = vdwg.mxu0
        %2967 = vmatpush.msra.mxu0 %v1844
        %2968 = vmatpush.msra.mxu0 %v1835
        %2969 = vmatpush.msra.mxu0 %v1826
        %2970 = vmatpush.msra.mxu0 %v1817
        %2971 = vmatpush.msra.mxu0 %v1808
        %2972 = vmatpush.msra.mxu0 %v1799
        %2973 = vmatpush.msra.mxu0 %v1790
        %2974 = vmatpush.msra.mxu0 %v1781
        %2975 = vmatpush.msra.mxu0 %v1772
        %2976 = vmatpush.msra.mxu0 %v1763
        %2977 = vmatpush.msra.mxu0 %v1754
        %2978 = vmatpush.msra.mxu0 %v1745
        %2979 = vmatpush.msra.mxu0 %v1736
        %2980 = vmatpush.msra.mxu0 %v1727
        %2981 = vmatpush.msra.mxu0 %v1718
        %2982 = vmatpush.msra.mxu0 %v1709
        %2983 = vmatmul.f32.gmra.mxu0 %v2447
        %v2984 = vpop.f32.mrf.mxu0
        %v2985 = vadd.f32 %v2965, %v2984
        %2986 = vdwg.mxu0
        %2987 = vmatpush.msra.mxu0 %v1988
        %2988 = vmatpush.msra.mxu0 %v1979
        %2989 = vmatpush.msra.mxu0 %v1970
        %2990 = vmatpush.msra.mxu0 %v1961
        %2991 = vmatpush.msra.mxu0 %v1952
        %2992 = vmatpush.msra.mxu0 %v1943
        %2993 = vmatpush.msra.mxu0 %v1934
        %2994 = vmatpush.msra.mxu0 %v1925
        %2995 = vmatpush.msra.mxu0 %v1916
        %2996 = vmatpush.msra.mxu0 %v1907
        %2997 = vmatpush.msra.mxu0 %v1898
        %2998 = vmatpush.msra.mxu0 %v1889
        %2999 = vmatpush.msra.mxu0 %v1880
        %3000 = vmatpush.msra.mxu0 %v1871
        %3001 = vmatpush.msra.mxu0 %v1862
        %3002 = vmatpush.msra.mxu0 %v1853
        %3003 = vmatmul.f32.gmra.mxu0 %v2448
        %v3004 = vpop.f32.mrf.mxu0
        %v3005 = vadd.f32 %v2985, %v3004
        %3006 = vdwg.mxu0
        %3007 = vmatpush.msra.mxu0 %v2132
        %3008 = vmatpush.msra.mxu0 %v2123
        %3009 = vmatpush.msra.mxu0 %v2114
        %3010 = vmatpush.msra.mxu0 %v2105
        %3011 = vmatpush.msra.mxu0 %v2096
        %3012 = vmatpush.msra.mxu0 %v2087
        %3013 = vmatpush.msra.mxu0 %v2078
        %3014 = vmatpush.msra.mxu0 %v2069
        %3015 = vmatpush.msra.mxu0 %v2060
        %3016 = vmatpush.msra.mxu0 %v2051
        %3017 = vmatpush.msra.mxu0 %v2042
        %3018 = vmatpush.msra.mxu0 %v2033
        %3019 = vmatpush.msra.mxu0 %v2024
        %3020 = vmatpush.msra.mxu0 %v2015
        %3021 = vmatpush.msra.mxu0 %v2006
        %3022 = vmatpush.msra.mxu0 %v1997
        %3023 = vmatmul.f32.gmra.mxu0 %v2449
        %v3024 = vpop.f32.mrf.mxu0
        %v3025 = vadd.f32 %v3005, %v3024
        %3026 = vdwg.mxu0
        %3027 = vmatpush.msra.mxu0 %v2276
        %3028 = vmatpush.msra.mxu0 %v2267
        %3029 = vmatpush.msra.mxu0 %v2258
        %3030 = vmatpush.msra.mxu0 %v2249
        %3031 = vmatpush.msra.mxu0 %v2240
        %3032 = vmatpush.msra.mxu0 %v2231
        %3033 = vmatpush.msra.mxu0 %v2222
        %3034 = vmatpush.msra.mxu0 %v2213
        %3035 = vmatpush.msra.mxu0 %v2204
        %3036 = vmatpush.msra.mxu0 %v2195
        %3037 = vmatpush.msra.mxu0 %v2186
        %3038 = vmatpush.msra.mxu0 %v2177
        %3039 = vmatpush.msra.mxu0 %v2168
        %3040 = vmatpush.msra.mxu0 %v2159
        %3041 = vmatpush.msra.mxu0 %v2150
        %3042 = vmatpush.msra.mxu0 %v2141
        %3043 = vmatmul.f32.gmra.mxu0 %v2450
        %v3044 = vpop.f32.mrf.mxu0
        %v3045 = vadd.f32 %v3025, %v3044
        %3046 = vdwg.mxu0
        %3047 = vmatpush.msra.mxu0 %v2420
        %3048 = vmatpush.msra.mxu0 %v2411
        %3049 = vmatpush.msra.mxu0 %v2402
        %3050 = vmatpush.msra.mxu0 %v2393
        %3051 = vmatpush.msra.mxu0 %v2384
        %3052 = vmatpush.msra.mxu0 %v2375
        %3053 = vmatpush.msra.mxu0 %v2366
        %3054 = vmatpush.msra.mxu0 %v2357
        %3055 = vmatpush.msra.mxu0 %v2348
        %3056 = vmatpush.msra.mxu0 %v2339
        %3057 = vmatpush.msra.mxu0 %v2330
        %3058 = vmatpush.msra.mxu0 %v2321
        %3059 = vmatpush.msra.mxu0 %v2312
        %3060 = vmatpush.msra.mxu0 %v2303
        %3061 = vmatpush.msra.mxu0 %v2294
        %3062 = vmatpush.msra.mxu0 %v2285
        %3063 = vmatmul.f32.gmra.mxu0 %v2451
        %v3064 = vpop.f32.mrf.mxu0
        %v3065 = vadd.f32 %v3045, %v3064
        %3066 = vdwg.mxu0
        %3067 = vmatpush.msra.mxu0 %v405
        %3068 = vmatpush.msra.mxu0 %v396
        %3069 = vmatpush.msra.mxu0 %v387
        %3070 = vmatpush.msra.mxu0 %v378
        %3071 = vmatpush.msra.mxu0 %v369
        %3072 = vmatpush.msra.mxu0 %v360
        %3073 = vmatpush.msra.mxu0 %v351
        %3074 = vmatpush.msra.mxu0 %v342
        %3075 = vmatpush.msra.mxu0 %v333
        %3076 = vmatpush.msra.mxu0 %v324
        %3077 = vmatpush.msra.mxu0 %v315
        %3078 = vmatpush.msra.mxu0 %v306
        %3079 = vmatpush.msra.mxu0 %v297
        %3080 = vmatpush.msra.mxu0 %v288
        %3081 = vmatpush.msra.mxu0 %v279
        %3082 = vmatpush.msra.mxu0 %v270
        %3083 = vmatmul.f32.gmra.mxu0 %v2435
        %v3084 = vpop.f32.mrf.mxu0
        %v3085 = vadd.f32 0.0, %v3084
        %3086 = vdwg.mxu0
        %3087 = vmatpush.msra.mxu0 %v549
        %3088 = vmatpush.msra.mxu0 %v540
        %3089 = vmatpush.msra.mxu0 %v531
        %3090 = vmatpush.msra.mxu0 %v522
        %3091 = vmatpush.msra.mxu0 %v513
        %3092 = vmatpush.msra.mxu0 %v504
        %3093 = vmatpush.msra.mxu0 %v495
        %3094 = vmatpush.msra.mxu0 %v486
        %3095 = vmatpush.msra.mxu0 %v477
        %3096 = vmatpush.msra.mxu0 %v468
        %3097 = vmatpush.msra.mxu0 %v459
        %3098 = vmatpush.msra.mxu0 %v450
        %3099 = vmatpush.msra.mxu0 %v441
        %3100 = vmatpush.msra.mxu0 %v432
        %3101 = vmatpush.msra.mxu0 %v423
        %3102 = vmatpush.msra.mxu0 %v414
        %3103 = vmatmul.f32.gmra.mxu0 %v2436
        %v3104 = vpop.f32.mrf.mxu0
        %v3105 = vadd.f32 %v3085, %v3104
        %3106 = vdwg.mxu0
        %3107 = vmatpush.msra.mxu0 %v693
        %3108 = vmatpush.msra.mxu0 %v684
        %3109 = vmatpush.msra.mxu0 %v675
        %3110 = vmatpush.msra.mxu0 %v666
        %3111 = vmatpush.msra.mxu0 %v657
        %3112 = vmatpush.msra.mxu0 %v648
        %3113 = vmatpush.msra.mxu0 %v639
        %3114 = vmatpush.msra.mxu0 %v630
        %3115 = vmatpush.msra.mxu0 %v621
        %3116 = vmatpush.msra.mxu0 %v612
        %3117 = vmatpush.msra.mxu0 %v603
        %3118 = vmatpush.msra.mxu0 %v594
        %3119 = vmatpush.msra.mxu0 %v585
        %3120 = vmatpush.msra.mxu0 %v576
        %3121 = vmatpush.msra.mxu0 %v567
        %3122 = vmatpush.msra.mxu0 %v558
        %3123 = vmatmul.f32.gmra.mxu0 %v2437
        %v3124 = vpop.f32.mrf.mxu0
        %v3125 = vadd.f32 %v3105, %v3124
        %3126 = vdwg.mxu0
        %3127 = vmatpush.msra.mxu0 %v837
        %3128 = vmatpush.msra.mxu0 %v828
        %3129 = vmatpush.msra.mxu0 %v819
        %3130 = vmatpush.msra.mxu0 %v810
        %3131 = vmatpush.msra.mxu0 %v801
        %3132 = vmatpush.msra.mxu0 %v792
        %3133 = vmatpush.msra.mxu0 %v783
        %3134 = vmatpush.msra.mxu0 %v774
        %3135 = vmatpush.msra.mxu0 %v765
        %3136 = vmatpush.msra.mxu0 %v756
        %3137 = vmatpush.msra.mxu0 %v747
        %3138 = vmatpush.msra.mxu0 %v738
        %3139 = vmatpush.msra.mxu0 %v729
        %3140 = vmatpush.msra.mxu0 %v720
        %3141 = vmatpush.msra.mxu0 %v711
        %3142 = vmatpush.msra.mxu0 %v702
        %3143 = vmatmul.f32.gmra.mxu0 %v2438
        %v3144 = vpop.f32.mrf.mxu0
        %v3145 = vadd.f32 %v3125, %v3144
        %3146 = vdwg.mxu0
        %3147 = vmatpush.msra.mxu0 %v981
        %3148 = vmatpush.msra.mxu0 %v972
        %3149 = vmatpush.msra.mxu0 %v963
        %3150 = vmatpush.msra.mxu0 %v954
        %3151 = vmatpush.msra.mxu0 %v945
        %3152 = vmatpush.msra.mxu0 %v936
        %3153 = vmatpush.msra.mxu0 %v927
        %3154 = vmatpush.msra.mxu0 %v918
        %3155 = vmatpush.msra.mxu0 %v909
        %3156 = vmatpush.msra.mxu0 %v900
        %3157 = vmatpush.msra.mxu0 %v891
        %3158 = vmatpush.msra.mxu0 %v882
        %3159 = vmatpush.msra.mxu0 %v873
        %3160 = vmatpush.msra.mxu0 %v864
        %3161 = vmatpush.msra.mxu0 %v855
        %3162 = vmatpush.msra.mxu0 %v846
        %3163 = vmatmul.f32.gmra.mxu0 %v2439
        %v3164 = vpop.f32.mrf.mxu0
        %v3165 = vadd.f32 %v3145, %v3164
        %3166 = vdwg.mxu0
        %3167 = vmatpush.msra.mxu0 %v1125
        %3168 = vmatpush.msra.mxu0 %v1116
        %3169 = vmatpush.msra.mxu0 %v1107
        %3170 = vmatpush.msra.mxu0 %v1098
        %3171 = vmatpush.msra.mxu0 %v1089
        %3172 = vmatpush.msra.mxu0 %v1080
        %3173 = vmatpush.msra.mxu0 %v1071
        %3174 = vmatpush.msra.mxu0 %v1062
        %3175 = vmatpush.msra.mxu0 %v1053
        %3176 = vmatpush.msra.mxu0 %v1044
        %3177 = vmatpush.msra.mxu0 %v1035
        %3178 = vmatpush.msra.mxu0 %v1026
        %3179 = vmatpush.msra.mxu0 %v1017
        %3180 = vmatpush.msra.mxu0 %v1008
        %3181 = vmatpush.msra.mxu0 %v999
        %3182 = vmatpush.msra.mxu0 %v990
        %3183 = vmatmul.f32.gmra.mxu0 %v2440
        %v3184 = vpop.f32.mrf.mxu0
        %v3185 = vadd.f32 %v3165, %v3184
        %3186 = vdwg.mxu0
        %3187 = vmatpush.msra.mxu0 %v1269
        %3188 = vmatpush.msra.mxu0 %v1260
        %3189 = vmatpush.msra.mxu0 %v1251
        %3190 = vmatpush.msra.mxu0 %v1242
        %3191 = vmatpush.msra.mxu0 %v1233
        %3192 = vmatpush.msra.mxu0 %v1224
        %3193 = vmatpush.msra.mxu0 %v1215
        %3194 = vmatpush.msra.mxu0 %v1206
        %3195 = vmatpush.msra.mxu0 %v1197
        %3196 = vmatpush.msra.mxu0 %v1188
        %3197 = vmatpush.msra.mxu0 %v1179
        %3198 = vmatpush.msra.mxu0 %v1170
        %3199 = vmatpush.msra.mxu0 %v1161
        %3200 = vmatpush.msra.mxu0 %v1152
        %3201 = vmatpush.msra.mxu0 %v1143
        %3202 = vmatpush.msra.mxu0 %v1134
        %3203 = vmatmul.f32.gmra.mxu0 %v2441
        %v3204 = vpop.f32.mrf.mxu0
        %v3205 = vadd.f32 %v3185, %v3204
        %3206 = vdwg.mxu0
        %3207 = vmatpush.msra.mxu0 %v1413
        %3208 = vmatpush.msra.mxu0 %v1404
        %3209 = vmatpush.msra.mxu0 %v1395
        %3210 = vmatpush.msra.mxu0 %v1386
        %3211 = vmatpush.msra.mxu0 %v1377
        %3212 = vmatpush.msra.mxu0 %v1368
        %3213 = vmatpush.msra.mxu0 %v1359
        %3214 = vmatpush.msra.mxu0 %v1350
        %3215 = vmatpush.msra.mxu0 %v1341
        %3216 = vmatpush.msra.mxu0 %v1332
        %3217 = vmatpush.msra.mxu0 %v1323
        %3218 = vmatpush.msra.mxu0 %v1314
        %3219 = vmatpush.msra.mxu0 %v1305
        %3220 = vmatpush.msra.mxu0 %v1296
        %3221 = vmatpush.msra.mxu0 %v1287
        %3222 = vmatpush.msra.mxu0 %v1278
        %3223 = vmatmul.f32.gmra.mxu0 %v2442
        %v3224 = vpop.f32.mrf.mxu0
        %v3225 = vadd.f32 %v3205, %v3224
        %3226 = vdwg.mxu0
        %3227 = vmatpush.msra.mxu0 %v1557
        %3228 = vmatpush.msra.mxu0 %v1548
        %3229 = vmatpush.msra.mxu0 %v1539
        %3230 = vmatpush.msra.mxu0 %v1530
        %3231 = vmatpush.msra.mxu0 %v1521
        %3232 = vmatpush.msra.mxu0 %v1512
        %3233 = vmatpush.msra.mxu0 %v1503
        %3234 = vmatpush.msra.mxu0 %v1494
        %3235 = vmatpush.msra.mxu0 %v1485
        %3236 = vmatpush.msra.mxu0 %v1476
        %3237 = vmatpush.msra.mxu0 %v1467
        %3238 = vmatpush.msra.mxu0 %v1458
        %3239 = vmatpush.msra.mxu0 %v1449
        %3240 = vmatpush.msra.mxu0 %v1440
        %3241 = vmatpush.msra.mxu0 %v1431
        %3242 = vmatpush.msra.mxu0 %v1422
        %3243 = vmatmul.f32.gmra.mxu0 %v2445
        %v3244 = vpop.f32.mrf.mxu0
        %v3245 = vadd.f32 %v3225, %v3244
        %3246 = vdwg.mxu0
        %3247 = vmatpush.msra.mxu0 %v1701
        %3248 = vmatpush.msra.mxu0 %v1692
        %3249 = vmatpush.msra.mxu0 %v1683
        %3250 = vmatpush.msra.mxu0 %v1674
        %3251 = vmatpush.msra.mxu0 %v1665
        %3252 = vmatpush.msra.mxu0 %v1656
        %3253 = vmatpush.msra.mxu0 %v1647
        %3254 = vmatpush.msra.mxu0 %v1638
        %3255 = vmatpush.msra.mxu0 %v1629
        %3256 = vmatpush.msra.mxu0 %v1620
        %3257 = vmatpush.msra.mxu0 %v1611
        %3258 = vmatpush.msra.mxu0 %v1602
        %3259 = vmatpush.msra.mxu0 %v1593
        %3260 = vmatpush.msra.mxu0 %v1584
        %3261 = vmatpush.msra.mxu0 %v1575
        %3262 = vmatpush.msra.mxu0 %v1566
        %3263 = vmatmul.f32.gmra.mxu0 %v2446
        %v3264 = vpop.f32.mrf.mxu0
        %v3265 = vadd.f32 %v3245, %v3264
        %3266 = vdwg.mxu0
        %3267 = vmatpush.msra.mxu0 %v1845
        %3268 = vmatpush.msra.mxu0 %v1836
        %3269 = vmatpush.msra.mxu0 %v1827
        %3270 = vmatpush.msra.mxu0 %v1818
        %3271 = vmatpush.msra.mxu0 %v1809
        %3272 = vmatpush.msra.mxu0 %v1800
        %3273 = vmatpush.msra.mxu0 %v1791
        %3274 = vmatpush.msra.mxu0 %v1782
        %3275 = vmatpush.msra.mxu0 %v1773
        %3276 = vmatpush.msra.mxu0 %v1764
        %3277 = vmatpush.msra.mxu0 %v1755
        %3278 = vmatpush.msra.mxu0 %v1746
        %3279 = vmatpush.msra.mxu0 %v1737
        %3280 = vmatpush.msra.mxu0 %v1728
        %3281 = vmatpush.msra.mxu0 %v1719
        %3282 = vmatpush.msra.mxu0 %v1710
        %3283 = vmatmul.f32.gmra.mxu0 %v2447
        %v3284 = vpop.f32.mrf.mxu0
        %v3285 = vadd.f32 %v3265, %v3284
        %3286 = vdwg.mxu0
        %3287 = vmatpush.msra.mxu0 %v1989
        %3288 = vmatpush.msra.mxu0 %v1980
        %3289 = vmatpush.msra.mxu0 %v1971
        %3290 = vmatpush.msra.mxu0 %v1962
        %3291 = vmatpush.msra.mxu0 %v1953
        %3292 = vmatpush.msra.mxu0 %v1944
        %3293 = vmatpush.msra.mxu0 %v1935
        %3294 = vmatpush.msra.mxu0 %v1926
        %3295 = vmatpush.msra.mxu0 %v1917
        %3296 = vmatpush.msra.mxu0 %v1908
        %3297 = vmatpush.msra.mxu0 %v1899
        %3298 = vmatpush.msra.mxu0 %v1890
        %3299 = vmatpush.msra.mxu0 %v1881
        %3300 = vmatpush.msra.mxu0 %v1872
        %3301 = vmatpush.msra.mxu0 %v1863
        %3302 = vmatpush.msra.mxu0 %v1854
        %3303 = vmatmul.f32.gmra.mxu0 %v2448
        %v3304 = vpop.f32.mrf.mxu0
        %v3305 = vadd.f32 %v3285, %v3304
        %3306 = vdwg.mxu0
        %3307 = vmatpush.msra.mxu0 %v2133
        %3308 = vmatpush.msra.mxu0 %v2124
        %3309 = vmatpush.msra.mxu0 %v2115
        %3310 = vmatpush.msra.mxu0 %v2106
        %3311 = vmatpush.msra.mxu0 %v2097
        %3312 = vmatpush.msra.mxu0 %v2088
        %3313 = vmatpush.msra.mxu0 %v2079
        %3314 = vmatpush.msra.mxu0 %v2070
        %3315 = vmatpush.msra.mxu0 %v2061
        %3316 = vmatpush.msra.mxu0 %v2052
        %3317 = vmatpush.msra.mxu0 %v2043
        %3318 = vmatpush.msra.mxu0 %v2034
        %3319 = vmatpush.msra.mxu0 %v2025
        %3320 = vmatpush.msra.mxu0 %v2016
        %3321 = vmatpush.msra.mxu0 %v2007
        %3322 = vmatpush.msra.mxu0 %v1998
        %3323 = vmatmul.f32.gmra.mxu0 %v2449
        %v3324 = vpop.f32.mrf.mxu0
        %v3325 = vadd.f32 %v3305, %v3324
        %3326 = vdwg.mxu0
        %3327 = vmatpush.msra.mxu0 %v2277
        %3328 = vmatpush.msra.mxu0 %v2268
        %3329 = vmatpush.msra.mxu0 %v2259
        %3330 = vmatpush.msra.mxu0 %v2250
        %3331 = vmatpush.msra.mxu0 %v2241
        %3332 = vmatpush.msra.mxu0 %v2232
        %3333 = vmatpush.msra.mxu0 %v2223
        %3334 = vmatpush.msra.mxu0 %v2214
        %3335 = vmatpush.msra.mxu0 %v2205
        %3336 = vmatpush.msra.mxu0 %v2196
        %3337 = vmatpush.msra.mxu0 %v2187
        %3338 = vmatpush.msra.mxu0 %v2178
        %3339 = vmatpush.msra.mxu0 %v2169
        %3340 = vmatpush.msra.mxu0 %v2160
        %3341 = vmatpush.msra.mxu0 %v2151
        %3342 = vmatpush.msra.mxu0 %v2142
        %3343 = vmatmul.f32.gmra.mxu0 %v2450
        %v3344 = vpop.f32.mrf.mxu0
        %v3345 = vadd.f32 %v3325, %v3344
        %3346 = vdwg.mxu0
        %3347 = vmatpush.msra.mxu0 %v2421
        %3348 = vmatpush.msra.mxu0 %v2412
        %3349 = vmatpush.msra.mxu0 %v2403
        %3350 = vmatpush.msra.mxu0 %v2394
        %3351 = vmatpush.msra.mxu0 %v2385
        %3352 = vmatpush.msra.mxu0 %v2376
        %3353 = vmatpush.msra.mxu0 %v2367
        %3354 = vmatpush.msra.mxu0 %v2358
        %3355 = vmatpush.msra.mxu0 %v2349
        %3356 = vmatpush.msra.mxu0 %v2340
        %3357 = vmatpush.msra.mxu0 %v2331
        %3358 = vmatpush.msra.mxu0 %v2322
        %3359 = vmatpush.msra.mxu0 %v2313
        %3360 = vmatpush.msra.mxu0 %v2304
        %3361 = vmatpush.msra.mxu0 %v2295
        %3362 = vmatpush.msra.mxu0 %v2286
        %3363 = vmatmul.f32.gmra.mxu0 %v2451
        %v3364 = vpop.f32.mrf.mxu0
        %v3365 = vadd.f32 %v3345, %v3364
        %3366 = vdwg.mxu0
        %3367 = vmatpush.msra.mxu0 %v406
        %3368 = vmatpush.msra.mxu0 %v397
        %3369 = vmatpush.msra.mxu0 %v388
        %3370 = vmatpush.msra.mxu0 %v379
        %3371 = vmatpush.msra.mxu0 %v370
        %3372 = vmatpush.msra.mxu0 %v361
        %3373 = vmatpush.msra.mxu0 %v352
        %3374 = vmatpush.msra.mxu0 %v343
        %3375 = vmatpush.msra.mxu0 %v334
        %3376 = vmatpush.msra.mxu0 %v325
        %3377 = vmatpush.msra.mxu0 %v316
        %3378 = vmatpush.msra.mxu0 %v307
        %3379 = vmatpush.msra.mxu0 %v298
        %3380 = vmatpush.msra.mxu0 %v289
        %3381 = vmatpush.msra.mxu0 %v280
        %3382 = vmatpush.msra.mxu0 %v271
        %3383 = vmatmul.f32.gmra.mxu0 %v2435
        %v3384 = vpop.f32.mrf.mxu0
        %v3385 = vadd.f32 0.0, %v3384
        %3386 = vdwg.mxu0
        %3387 = vmatpush.msra.mxu0 %v550
        %3388 = vmatpush.msra.mxu0 %v541
        %3389 = vmatpush.msra.mxu0 %v532
        %3390 = vmatpush.msra.mxu0 %v523
        %3391 = vmatpush.msra.mxu0 %v514
        %3392 = vmatpush.msra.mxu0 %v505
        %3393 = vmatpush.msra.mxu0 %v496
        %3394 = vmatpush.msra.mxu0 %v487
        %3395 = vmatpush.msra.mxu0 %v478
        %3396 = vmatpush.msra.mxu0 %v469
        %3397 = vmatpush.msra.mxu0 %v460
        %3398 = vmatpush.msra.mxu0 %v451
        %3399 = vmatpush.msra.mxu0 %v442
        %3400 = vmatpush.msra.mxu0 %v433
        %3401 = vmatpush.msra.mxu0 %v424
        %3402 = vmatpush.msra.mxu0 %v415
        %3403 = vmatmul.f32.gmra.mxu0 %v2436
        %v3404 = vpop.f32.mrf.mxu0
        %v3405 = vadd.f32 %v3385, %v3404
        %3406 = vdwg.mxu0
        %3407 = vmatpush.msra.mxu0 %v694
        %3408 = vmatpush.msra.mxu0 %v685
        %3409 = vmatpush.msra.mxu0 %v676
        %3410 = vmatpush.msra.mxu0 %v667
        %3411 = vmatpush.msra.mxu0 %v658
        %3412 = vmatpush.msra.mxu0 %v649
        %3413 = vmatpush.msra.mxu0 %v640
        %3414 = vmatpush.msra.mxu0 %v631
        %3415 = vmatpush.msra.mxu0 %v622
        %3416 = vmatpush.msra.mxu0 %v613
        %3417 = vmatpush.msra.mxu0 %v604
        %3418 = vmatpush.msra.mxu0 %v595
        %3419 = vmatpush.msra.mxu0 %v586
        %3420 = vmatpush.msra.mxu0 %v577
        %3421 = vmatpush.msra.mxu0 %v568
        %3422 = vmatpush.msra.mxu0 %v559
        %3423 = vmatmul.f32.gmra.mxu0 %v2437
        %v3424 = vpop.f32.mrf.mxu0
        %v3425 = vadd.f32 %v3405, %v3424
        %3426 = vdwg.mxu0
        %3427 = vmatpush.msra.mxu0 %v838
        %3428 = vmatpush.msra.mxu0 %v829
        %3429 = vmatpush.msra.mxu0 %v820
        %3430 = vmatpush.msra.mxu0 %v811
        %3431 = vmatpush.msra.mxu0 %v802
        %3432 = vmatpush.msra.mxu0 %v793
        %3433 = vmatpush.msra.mxu0 %v784
        %3434 = vmatpush.msra.mxu0 %v775
        %3435 = vmatpush.msra.mxu0 %v766
        %3436 = vmatpush.msra.mxu0 %v757
        %3437 = vmatpush.msra.mxu0 %v748
        %3438 = vmatpush.msra.mxu0 %v739
        %3439 = vmatpush.msra.mxu0 %v730
        %3440 = vmatpush.msra.mxu0 %v721
        %3441 = vmatpush.msra.mxu0 %v712
        %3442 = vmatpush.msra.mxu0 %v703
        %3443 = vmatmul.f32.gmra.mxu0 %v2438
        %v3444 = vpop.f32.mrf.mxu0
        %v3445 = vadd.f32 %v3425, %v3444
        %3446 = vdwg.mxu0
        %3447 = vmatpush.msra.mxu0 %v982
        %3448 = vmatpush.msra.mxu0 %v973
        %3449 = vmatpush.msra.mxu0 %v964
        %3450 = vmatpush.msra.mxu0 %v955
        %3451 = vmatpush.msra.mxu0 %v946
        %3452 = vmatpush.msra.mxu0 %v937
        %3453 = vmatpush.msra.mxu0 %v928
        %3454 = vmatpush.msra.mxu0 %v919
        %3455 = vmatpush.msra.mxu0 %v910
        %3456 = vmatpush.msra.mxu0 %v901
        %3457 = vmatpush.msra.mxu0 %v892
        %3458 = vmatpush.msra.mxu0 %v883
        %3459 = vmatpush.msra.mxu0 %v874
        %3460 = vmatpush.msra.mxu0 %v865
        %3461 = vmatpush.msra.mxu0 %v856
        %3462 = vmatpush.msra.mxu0 %v847
        %3463 = vmatmul.f32.gmra.mxu0 %v2439
        %v3464 = vpop.f32.mrf.mxu0
        %v3465 = vadd.f32 %v3445, %v3464
        %3466 = vdwg.mxu0
        %3467 = vmatpush.msra.mxu0 %v1126
        %3468 = vmatpush.msra.mxu0 %v1117
        %3469 = vmatpush.msra.mxu0 %v1108
        %3470 = vmatpush.msra.mxu0 %v1099
        %3471 = vmatpush.msra.mxu0 %v1090
        %3472 = vmatpush.msra.mxu0 %v1081
        %3473 = vmatpush.msra.mxu0 %v1072
        %3474 = vmatpush.msra.mxu0 %v1063
        %3475 = vmatpush.msra.mxu0 %v1054
        %3476 = vmatpush.msra.mxu0 %v1045
        %3477 = vmatpush.msra.mxu0 %v1036
        %3478 = vmatpush.msra.mxu0 %v1027
        %3479 = vmatpush.msra.mxu0 %v1018
        %3480 = vmatpush.msra.mxu0 %v1009
        %3481 = vmatpush.msra.mxu0 %v1000
        %3482 = vmatpush.msra.mxu0 %v991
        %3483 = vmatmul.f32.gmra.mxu0 %v2440
        %v3484 = vpop.f32.mrf.mxu0
        %v3485 = vadd.f32 %v3465, %v3484
        %3486 = vdwg.mxu0
        %3487 = vmatpush.msra.mxu0 %v1270
        %3488 = vmatpush.msra.mxu0 %v1261
        %3489 = vmatpush.msra.mxu0 %v1252
        %3490 = vmatpush.msra.mxu0 %v1243
        %3491 = vmatpush.msra.mxu0 %v1234
        %3492 = vmatpush.msra.mxu0 %v1225
        %3493 = vmatpush.msra.mxu0 %v1216
        %3494 = vmatpush.msra.mxu0 %v1207
        %3495 = vmatpush.msra.mxu0 %v1198
        %3496 = vmatpush.msra.mxu0 %v1189
        %3497 = vmatpush.msra.mxu0 %v1180
        %3498 = vmatpush.msra.mxu0 %v1171
        %3499 = vmatpush.msra.mxu0 %v1162
        %3500 = vmatpush.msra.mxu0 %v1153
        %3501 = vmatpush.msra.mxu0 %v1144
        %3502 = vmatpush.msra.mxu0 %v1135
        %3503 = vmatmul.f32.gmra.mxu0 %v2441
        %v3504 = vpop.f32.mrf.mxu0
        %v3505 = vadd.f32 %v3485, %v3504
        %3506 = vdwg.mxu0
        %3507 = vmatpush.msra.mxu0 %v1414
        %3508 = vmatpush.msra.mxu0 %v1405
        %3509 = vmatpush.msra.mxu0 %v1396
        %3510 = vmatpush.msra.mxu0 %v1387
        %3511 = vmatpush.msra.mxu0 %v1378
        %3512 = vmatpush.msra.mxu0 %v1369
        %3513 = vmatpush.msra.mxu0 %v1360
        %3514 = vmatpush.msra.mxu0 %v1351
        %3515 = vmatpush.msra.mxu0 %v1342
        %3516 = vmatpush.msra.mxu0 %v1333
        %3517 = vmatpush.msra.mxu0 %v1324
        %3518 = vmatpush.msra.mxu0 %v1315
        %3519 = vmatpush.msra.mxu0 %v1306
        %3520 = vmatpush.msra.mxu0 %v1297
        %3521 = vmatpush.msra.mxu0 %v1288
        %3522 = vmatpush.msra.mxu0 %v1279
        %3523 = vmatmul.f32.gmra.mxu0 %v2442
        %v3524 = vpop.f32.mrf.mxu0
        %v3525 = vadd.f32 %v3505, %v3524
        %3526 = vdwg.mxu0
        %3527 = vmatpush.msra.mxu0 %v1558
        %3528 = vmatpush.msra.mxu0 %v1549
        %3529 = vmatpush.msra.mxu0 %v1540
        %3530 = vmatpush.msra.mxu0 %v1531
        %3531 = vmatpush.msra.mxu0 %v1522
        %3532 = vmatpush.msra.mxu0 %v1513
        %3533 = vmatpush.msra.mxu0 %v1504
        %3534 = vmatpush.msra.mxu0 %v1495
        %3535 = vmatpush.msra.mxu0 %v1486
        %3536 = vmatpush.msra.mxu0 %v1477
        %3537 = vmatpush.msra.mxu0 %v1468
        %3538 = vmatpush.msra.mxu0 %v1459
        %3539 = vmatpush.msra.mxu0 %v1450
        %3540 = vmatpush.msra.mxu0 %v1441
        %3541 = vmatpush.msra.mxu0 %v1432
        %3542 = vmatpush.msra.mxu0 %v1423
        %3543 = vmatmul.f32.gmra.mxu0 %v2445
        %v3544 = vpop.f32.mrf.mxu0
        %v3545 = vadd.f32 %v3525, %v3544
        %3546 = vdwg.mxu0
        %3547 = vmatpush.msra.mxu0 %v1702
        %3548 = vmatpush.msra.mxu0 %v1693
        %3549 = vmatpush.msra.mxu0 %v1684
        %3550 = vmatpush.msra.mxu0 %v1675
        %3551 = vmatpush.msra.mxu0 %v1666
        %3552 = vmatpush.msra.mxu0 %v1657
        %3553 = vmatpush.msra.mxu0 %v1648
        %3554 = vmatpush.msra.mxu0 %v1639
        %3555 = vmatpush.msra.mxu0 %v1630
        %3556 = vmatpush.msra.mxu0 %v1621
        %3557 = vmatpush.msra.mxu0 %v1612
        %3558 = vmatpush.msra.mxu0 %v1603
        %3559 = vmatpush.msra.mxu0 %v1594
        %3560 = vmatpush.msra.mxu0 %v1585
        %3561 = vmatpush.msra.mxu0 %v1576
        %3562 = vmatpush.msra.mxu0 %v1567
        %3563 = vmatmul.f32.gmra.mxu0 %v2446
        %v3564 = vpop.f32.mrf.mxu0
        %v3565 = vadd.f32 %v3545, %v3564
        %3566 = vdwg.mxu0
        %3567 = vmatpush.msra.mxu0 %v1846
        %3568 = vmatpush.msra.mxu0 %v1837
        %3569 = vmatpush.msra.mxu0 %v1828
        %3570 = vmatpush.msra.mxu0 %v1819
        %3571 = vmatpush.msra.mxu0 %v1810
        %3572 = vmatpush.msra.mxu0 %v1801
        %3573 = vmatpush.msra.mxu0 %v1792
        %3574 = vmatpush.msra.mxu0 %v1783
        %3575 = vmatpush.msra.mxu0 %v1774
        %3576 = vmatpush.msra.mxu0 %v1765
        %3577 = vmatpush.msra.mxu0 %v1756
        %3578 = vmatpush.msra.mxu0 %v1747
        %3579 = vmatpush.msra.mxu0 %v1738
        %3580 = vmatpush.msra.mxu0 %v1729
        %3581 = vmatpush.msra.mxu0 %v1720
        %3582 = vmatpush.msra.mxu0 %v1711
        %3583 = vmatmul.f32.gmra.mxu0 %v2447
        %v3584 = vpop.f32.mrf.mxu0
        %v3585 = vadd.f32 %v3565, %v3584
        %3586 = vdwg.mxu0
        %3587 = vmatpush.msra.mxu0 %v1990
        %3588 = vmatpush.msra.mxu0 %v1981
        %3589 = vmatpush.msra.mxu0 %v1972
        %3590 = vmatpush.msra.mxu0 %v1963
        %3591 = vmatpush.msra.mxu0 %v1954
        %3592 = vmatpush.msra.mxu0 %v1945
        %3593 = vmatpush.msra.mxu0 %v1936
        %3594 = vmatpush.msra.mxu0 %v1927
        %3595 = vmatpush.msra.mxu0 %v1918
        %3596 = vmatpush.msra.mxu0 %v1909
        %3597 = vmatpush.msra.mxu0 %v1900
        %3598 = vmatpush.msra.mxu0 %v1891
        %3599 = vmatpush.msra.mxu0 %v1882
        %3600 = vmatpush.msra.mxu0 %v1873
        %3601 = vmatpush.msra.mxu0 %v1864
        %3602 = vmatpush.msra.mxu0 %v1855
        %3603 = vmatmul.f32.gmra.mxu0 %v2448
        %v3604 = vpop.f32.mrf.mxu0
        %v3605 = vadd.f32 %v3585, %v3604
        %3606 = vdwg.mxu0
        %3607 = vmatpush.msra.mxu0 %v2134
        %3608 = vmatpush.msra.mxu0 %v2125
        %3609 = vmatpush.msra.mxu0 %v2116
        %3610 = vmatpush.msra.mxu0 %v2107
        %3611 = vmatpush.msra.mxu0 %v2098
        %3612 = vmatpush.msra.mxu0 %v2089
        %3613 = vmatpush.msra.mxu0 %v2080
        %3614 = vmatpush.msra.mxu0 %v2071
        %3615 = vmatpush.msra.mxu0 %v2062
        %3616 = vmatpush.msra.mxu0 %v2053
        %3617 = vmatpush.msra.mxu0 %v2044
        %3618 = vmatpush.msra.mxu0 %v2035
        %3619 = vmatpush.msra.mxu0 %v2026
        %3620 = vmatpush.msra.mxu0 %v2017
        %3621 = vmatpush.msra.mxu0 %v2008
        %3622 = vmatpush.msra.mxu0 %v1999
        %3623 = vmatmul.f32.gmra.mxu0 %v2449
        %v3624 = vpop.f32.mrf.mxu0
        %v3625 = vadd.f32 %v3605, %v3624
        %3626 = vdwg.mxu0
        %3627 = vmatpush.msra.mxu0 %v2278
        %3628 = vmatpush.msra.mxu0 %v2269
        %3629 = vmatpush.msra.mxu0 %v2260
        %3630 = vmatpush.msra.mxu0 %v2251
        %3631 = vmatpush.msra.mxu0 %v2242
        %3632 = vmatpush.msra.mxu0 %v2233
        %3633 = vmatpush.msra.mxu0 %v2224
        %3634 = vmatpush.msra.mxu0 %v2215
        %3635 = vmatpush.msra.mxu0 %v2206
        %3636 = vmatpush.msra.mxu0 %v2197
        %3637 = vmatpush.msra.mxu0 %v2188
        %3638 = vmatpush.msra.mxu0 %v2179
        %3639 = vmatpush.msra.mxu0 %v2170
        %3640 = vmatpush.msra.mxu0 %v2161
        %3641 = vmatpush.msra.mxu0 %v2152
        %3642 = vmatpush.msra.mxu0 %v2143
        %3643 = vmatmul.f32.gmra.mxu0 %v2450
        %v3644 = vpop.f32.mrf.mxu0
        %v3645 = vadd.f32 %v3625, %v3644
        %3646 = vdwg.mxu0
        %3647 = vmatpush.msra.mxu0 %v2422
        %3648 = vmatpush.msra.mxu0 %v2413
        %3649 = vmatpush.msra.mxu0 %v2404
        %3650 = vmatpush.msra.mxu0 %v2395
        %3651 = vmatpush.msra.mxu0 %v2386
        %3652 = vmatpush.msra.mxu0 %v2377
        %3653 = vmatpush.msra.mxu0 %v2368
        %3654 = vmatpush.msra.mxu0 %v2359
        %3655 = vmatpush.msra.mxu0 %v2350
        %3656 = vmatpush.msra.mxu0 %v2341
        %3657 = vmatpush.msra.mxu0 %v2332
        %3658 = vmatpush.msra.mxu0 %v2323
        %3659 = vmatpush.msra.mxu0 %v2314
        %3660 = vmatpush.msra.mxu0 %v2305
        %3661 = vmatpush.msra.mxu0 %v2296
        %3662 = vmatpush.msra.mxu0 %v2287
        %3663 = vmatmul.f32.gmra.mxu0 %v2451
        %v3664 = vpop.f32.mrf.mxu0
        %v3665 = vadd.f32 %v3645, %v3664
        %3666 = vdwg.mxu0
        %3667 = vmatpush.msra.mxu0 %v407
        %3668 = vmatpush.msra.mxu0 %v398
        %3669 = vmatpush.msra.mxu0 %v389
        %3670 = vmatpush.msra.mxu0 %v380
        %3671 = vmatpush.msra.mxu0 %v371
        %3672 = vmatpush.msra.mxu0 %v362
        %3673 = vmatpush.msra.mxu0 %v353
        %3674 = vmatpush.msra.mxu0 %v344
        %3675 = vmatpush.msra.mxu0 %v335
        %3676 = vmatpush.msra.mxu0 %v326
        %3677 = vmatpush.msra.mxu0 %v317
        %3678 = vmatpush.msra.mxu0 %v308
        %3679 = vmatpush.msra.mxu0 %v299
        %3680 = vmatpush.msra.mxu0 %v290
        %3681 = vmatpush.msra.mxu0 %v281
        %3682 = vmatpush.msra.mxu0 %v272
        %3683 = vmatmul.f32.gmra.mxu0 %v2435
        %v3684 = vpop.f32.mrf.mxu0
        %v3685 = vadd.f32 0.0, %v3684
        %3686 = vdwg.mxu0
        %3687 = vmatpush.msra.mxu0 %v551
        %3688 = vmatpush.msra.mxu0 %v542
        %3689 = vmatpush.msra.mxu0 %v533
        %3690 = vmatpush.msra.mxu0 %v524
        %3691 = vmatpush.msra.mxu0 %v515
        %3692 = vmatpush.msra.mxu0 %v506
        %3693 = vmatpush.msra.mxu0 %v497
        %3694 = vmatpush.msra.mxu0 %v488
        %3695 = vmatpush.msra.mxu0 %v479
        %3696 = vmatpush.msra.mxu0 %v470
        %3697 = vmatpush.msra.mxu0 %v461
        %3698 = vmatpush.msra.mxu0 %v452
        %3699 = vmatpush.msra.mxu0 %v443
        %3700 = vmatpush.msra.mxu0 %v434
        %3701 = vmatpush.msra.mxu0 %v425
        %3702 = vmatpush.msra.mxu0 %v416
        %3703 = vmatmul.f32.gmra.mxu0 %v2436
        %v3704 = vpop.f32.mrf.mxu0
        %v3705 = vadd.f32 %v3685, %v3704
        %3706 = vdwg.mxu0
        %3707 = vmatpush.msra.mxu0 %v695
        %3708 = vmatpush.msra.mxu0 %v686
        %3709 = vmatpush.msra.mxu0 %v677
        %3710 = vmatpush.msra.mxu0 %v668
        %3711 = vmatpush.msra.mxu0 %v659
        %3712 = vmatpush.msra.mxu0 %v650
        %3713 = vmatpush.msra.mxu0 %v641
        %3714 = vmatpush.msra.mxu0 %v632
        %3715 = vmatpush.msra.mxu0 %v623
        %3716 = vmatpush.msra.mxu0 %v614
        %3717 = vmatpush.msra.mxu0 %v605
        %3718 = vmatpush.msra.mxu0 %v596
        %3719 = vmatpush.msra.mxu0 %v587
        %3720 = vmatpush.msra.mxu0 %v578
        %3721 = vmatpush.msra.mxu0 %v569
        %3722 = vmatpush.msra.mxu0 %v560
        %3723 = vmatmul.f32.gmra.mxu0 %v2437
        %v3724 = vpop.f32.mrf.mxu0
        %v3725 = vadd.f32 %v3705, %v3724
        %3726 = vdwg.mxu0
        %3727 = vmatpush.msra.mxu0 %v839
        %3728 = vmatpush.msra.mxu0 %v830
        %3729 = vmatpush.msra.mxu0 %v821
        %3730 = vmatpush.msra.mxu0 %v812
        %3731 = vmatpush.msra.mxu0 %v803
        %3732 = vmatpush.msra.mxu0 %v794
        %3733 = vmatpush.msra.mxu0 %v785
        %3734 = vmatpush.msra.mxu0 %v776
        %3735 = vmatpush.msra.mxu0 %v767
        %3736 = vmatpush.msra.mxu0 %v758
        %3737 = vmatpush.msra.mxu0 %v749
        %3738 = vmatpush.msra.mxu0 %v740
        %3739 = vmatpush.msra.mxu0 %v731
        %3740 = vmatpush.msra.mxu0 %v722
        %3741 = vmatpush.msra.mxu0 %v713
        %3742 = vmatpush.msra.mxu0 %v704
        %3743 = vmatmul.f32.gmra.mxu0 %v2438
        %v3744 = vpop.f32.mrf.mxu0
        %v3745 = vadd.f32 %v3725, %v3744
        %3746 = vdwg.mxu0
        %3747 = vmatpush.msra.mxu0 %v983
        %3748 = vmatpush.msra.mxu0 %v974
        %3749 = vmatpush.msra.mxu0 %v965
        %3750 = vmatpush.msra.mxu0 %v956
        %3751 = vmatpush.msra.mxu0 %v947
        %3752 = vmatpush.msra.mxu0 %v938
        %3753 = vmatpush.msra.mxu0 %v929
        %3754 = vmatpush.msra.mxu0 %v920
        %3755 = vmatpush.msra.mxu0 %v911
        %3756 = vmatpush.msra.mxu0 %v902
        %3757 = vmatpush.msra.mxu0 %v893
        %3758 = vmatpush.msra.mxu0 %v884
        %3759 = vmatpush.msra.mxu0 %v875
        %3760 = vmatpush.msra.mxu0 %v866
        %3761 = vmatpush.msra.mxu0 %v857
        %3762 = vmatpush.msra.mxu0 %v848
        %3763 = vmatmul.f32.gmra.mxu0 %v2439
        %v3764 = vpop.f32.mrf.mxu0
        %v3765 = vadd.f32 %v3745, %v3764
        %3766 = vdwg.mxu0
        %3767 = vmatpush.msra.mxu0 %v1127
        %3768 = vmatpush.msra.mxu0 %v1118
        %3769 = vmatpush.msra.mxu0 %v1109
        %3770 = vmatpush.msra.mxu0 %v1100
        %3771 = vmatpush.msra.mxu0 %v1091
        %3772 = vmatpush.msra.mxu0 %v1082
        %3773 = vmatpush.msra.mxu0 %v1073
        %3774 = vmatpush.msra.mxu0 %v1064
        %3775 = vmatpush.msra.mxu0 %v1055
        %3776 = vmatpush.msra.mxu0 %v1046
        %3777 = vmatpush.msra.mxu0 %v1037
        %3778 = vmatpush.msra.mxu0 %v1028
        %3779 = vmatpush.msra.mxu0 %v1019
        %3780 = vmatpush.msra.mxu0 %v1010
        %3781 = vmatpush.msra.mxu0 %v1001
        %3782 = vmatpush.msra.mxu0 %v992
        %3783 = vmatmul.f32.gmra.mxu0 %v2440
        %v3784 = vpop.f32.mrf.mxu0
        %v3785 = vadd.f32 %v3765, %v3784
        %3786 = vdwg.mxu0
        %3787 = vmatpush.msra.mxu0 %v1271
        %3788 = vmatpush.msra.mxu0 %v1262
        %3789 = vmatpush.msra.mxu0 %v1253
        %3790 = vmatpush.msra.mxu0 %v1244
        %3791 = vmatpush.msra.mxu0 %v1235
        %3792 = vmatpush.msra.mxu0 %v1226
        %3793 = vmatpush.msra.mxu0 %v1217
        %3794 = vmatpush.msra.mxu0 %v1208
        %3795 = vmatpush.msra.mxu0 %v1199
        %3796 = vmatpush.msra.mxu0 %v1190
        %3797 = vmatpush.msra.mxu0 %v1181
        %3798 = vmatpush.msra.mxu0 %v1172
        %3799 = vmatpush.msra.mxu0 %v1163
        %3800 = vmatpush.msra.mxu0 %v1154
        %3801 = vmatpush.msra.mxu0 %v1145
        %3802 = vmatpush.msra.mxu0 %v1136
        %3803 = vmatmul.f32.gmra.mxu0 %v2441
        %v3804 = vpop.f32.mrf.mxu0
        %v3805 = vadd.f32 %v3785, %v3804
        %3806 = vdwg.mxu0
        %3807 = vmatpush.msra.mxu0 %v1415
        %3808 = vmatpush.msra.mxu0 %v1406
        %3809 = vmatpush.msra.mxu0 %v1397
        %3810 = vmatpush.msra.mxu0 %v1388
        %3811 = vmatpush.msra.mxu0 %v1379
        %3812 = vmatpush.msra.mxu0 %v1370
        %3813 = vmatpush.msra.mxu0 %v1361
        %3814 = vmatpush.msra.mxu0 %v1352
        %3815 = vmatpush.msra.mxu0 %v1343
        %3816 = vmatpush.msra.mxu0 %v1334
        %3817 = vmatpush.msra.mxu0 %v1325
        %3818 = vmatpush.msra.mxu0 %v1316
        %3819 = vmatpush.msra.mxu0 %v1307
        %3820 = vmatpush.msra.mxu0 %v1298
        %3821 = vmatpush.msra.mxu0 %v1289
        %3822 = vmatpush.msra.mxu0 %v1280
        %3823 = vmatmul.f32.gmra.mxu0 %v2442
        %v3824 = vpop.f32.mrf.mxu0
        %v3825 = vadd.f32 %v3805, %v3824
        %3826 = vdwg.mxu0
        %3827 = vmatpush.msra.mxu0 %v1559
        %3828 = vmatpush.msra.mxu0 %v1550
        %3829 = vmatpush.msra.mxu0 %v1541
        %3830 = vmatpush.msra.mxu0 %v1532
        %3831 = vmatpush.msra.mxu0 %v1523
        %3832 = vmatpush.msra.mxu0 %v1514
        %3833 = vmatpush.msra.mxu0 %v1505
        %3834 = vmatpush.msra.mxu0 %v1496
        %3835 = vmatpush.msra.mxu0 %v1487
        %3836 = vmatpush.msra.mxu0 %v1478
        %3837 = vmatpush.msra.mxu0 %v1469
        %3838 = vmatpush.msra.mxu0 %v1460
        %3839 = vmatpush.msra.mxu0 %v1451
        %3840 = vmatpush.msra.mxu0 %v1442
        %3841 = vmatpush.msra.mxu0 %v1433
        %3842 = vmatpush.msra.mxu0 %v1424
        %3843 = vmatmul.f32.gmra.mxu0 %v2445
        %v3844 = vpop.f32.mrf.mxu0
        %v3845 = vadd.f32 %v3825, %v3844
        %3846 = vdwg.mxu0
        %3847 = vmatpush.msra.mxu0 %v1703
        %3848 = vmatpush.msra.mxu0 %v1694
        %3849 = vmatpush.msra.mxu0 %v1685
        %3850 = vmatpush.msra.mxu0 %v1676
        %3851 = vmatpush.msra.mxu0 %v1667
        %3852 = vmatpush.msra.mxu0 %v1658
        %3853 = vmatpush.msra.mxu0 %v1649
        %3854 = vmatpush.msra.mxu0 %v1640
        %3855 = vmatpush.msra.mxu0 %v1631
        %3856 = vmatpush.msra.mxu0 %v1622
        %3857 = vmatpush.msra.mxu0 %v1613
        %3858 = vmatpush.msra.mxu0 %v1604
        %3859 = vmatpush.msra.mxu0 %v1595
        %3860 = vmatpush.msra.mxu0 %v1586
        %3861 = vmatpush.msra.mxu0 %v1577
        %3862 = vmatpush.msra.mxu0 %v1568
        %3863 = vmatmul.f32.gmra.mxu0 %v2446
        %v3864 = vpop.f32.mrf.mxu0
        %v3865 = vadd.f32 %v3845, %v3864
        %3866 = vdwg.mxu0
        %3867 = vmatpush.msra.mxu0 %v1847
        %3868 = vmatpush.msra.mxu0 %v1838
        %3869 = vmatpush.msra.mxu0 %v1829
        %3870 = vmatpush.msra.mxu0 %v1820
        %3871 = vmatpush.msra.mxu0 %v1811
        %3872 = vmatpush.msra.mxu0 %v1802
        %3873 = vmatpush.msra.mxu0 %v1793
        %3874 = vmatpush.msra.mxu0 %v1784
        %3875 = vmatpush.msra.mxu0 %v1775
        %3876 = vmatpush.msra.mxu0 %v1766
        %3877 = vmatpush.msra.mxu0 %v1757
        %3878 = vmatpush.msra.mxu0 %v1748
        %3879 = vmatpush.msra.mxu0 %v1739
        %3880 = vmatpush.msra.mxu0 %v1730
        %3881 = vmatpush.msra.mxu0 %v1721
        %3882 = vmatpush.msra.mxu0 %v1712
        %3883 = vmatmul.f32.gmra.mxu0 %v2447
        %v3884 = vpop.f32.mrf.mxu0
        %v3885 = vadd.f32 %v3865, %v3884
        %3886 = vdwg.mxu0
        %3887 = vmatpush.msra.mxu0 %v1991
        %3888 = vmatpush.msra.mxu0 %v1982
        %3889 = vmatpush.msra.mxu0 %v1973
        %3890 = vmatpush.msra.mxu0 %v1964
        %3891 = vmatpush.msra.mxu0 %v1955
        %3892 = vmatpush.msra.mxu0 %v1946
        %3893 = vmatpush.msra.mxu0 %v1937
        %3894 = vmatpush.msra.mxu0 %v1928
        %3895 = vmatpush.msra.mxu0 %v1919
        %3896 = vmatpush.msra.mxu0 %v1910
        %3897 = vmatpush.msra.mxu0 %v1901
        %3898 = vmatpush.msra.mxu0 %v1892
        %3899 = vmatpush.msra.mxu0 %v1883
        %3900 = vmatpush.msra.mxu0 %v1874
        %3901 = vmatpush.msra.mxu0 %v1865
        %3902 = vmatpush.msra.mxu0 %v1856
        %3903 = vmatmul.f32.gmra.mxu0 %v2448
        %v3904 = vpop.f32.mrf.mxu0
        %v3905 = vadd.f32 %v3885, %v3904
        %3906 = vdwg.mxu0
        %3907 = vmatpush.msra.mxu0 %v2135
        %3908 = vmatpush.msra.mxu0 %v2126
        %3909 = vmatpush.msra.mxu0 %v2117
        %3910 = vmatpush.msra.mxu0 %v2108
        %3911 = vmatpush.msra.mxu0 %v2099
        %3912 = vmatpush.msra.mxu0 %v2090
        %3913 = vmatpush.msra.mxu0 %v2081
        %3914 = vmatpush.msra.mxu0 %v2072
        %3915 = vmatpush.msra.mxu0 %v2063
        %3916 = vmatpush.msra.mxu0 %v2054
        %3917 = vmatpush.msra.mxu0 %v2045
        %3918 = vmatpush.msra.mxu0 %v2036
        %3919 = vmatpush.msra.mxu0 %v2027
        %3920 = vmatpush.msra.mxu0 %v2018
        %3921 = vmatpush.msra.mxu0 %v2009
        %3922 = vmatpush.msra.mxu0 %v2000
        %3923 = vmatmul.f32.gmra.mxu0 %v2449
        %v3924 = vpop.f32.mrf.mxu0
        %v3925 = vadd.f32 %v3905, %v3924
        %3926 = vdwg.mxu0
        %3927 = vmatpush.msra.mxu0 %v2279
        %3928 = vmatpush.msra.mxu0 %v2270
        %3929 = vmatpush.msra.mxu0 %v2261
        %3930 = vmatpush.msra.mxu0 %v2252
        %3931 = vmatpush.msra.mxu0 %v2243
        %3932 = vmatpush.msra.mxu0 %v2234
        %3933 = vmatpush.msra.mxu0 %v2225
        %3934 = vmatpush.msra.mxu0 %v2216
        %3935 = vmatpush.msra.mxu0 %v2207
        %3936 = vmatpush.msra.mxu0 %v2198
        %3937 = vmatpush.msra.mxu0 %v2189
        %3938 = vmatpush.msra.mxu0 %v2180
        %3939 = vmatpush.msra.mxu0 %v2171
        %3940 = vmatpush.msra.mxu0 %v2162
        %3941 = vmatpush.msra.mxu0 %v2153
        %3942 = vmatpush.msra.mxu0 %v2144
        %3943 = vmatmul.f32.gmra.mxu0 %v2450
        %v3944 = vpop.f32.mrf.mxu0
        %v3945 = vadd.f32 %v3925, %v3944
        %3946 = vdwg.mxu0
        %3947 = vmatpush.msra.mxu0 %v2423
        %3948 = vmatpush.msra.mxu0 %v2414
        %3949 = vmatpush.msra.mxu0 %v2405
        %3950 = vmatpush.msra.mxu0 %v2396
        %3951 = vmatpush.msra.mxu0 %v2387
        %3952 = vmatpush.msra.mxu0 %v2378
        %3953 = vmatpush.msra.mxu0 %v2369
        %3954 = vmatpush.msra.mxu0 %v2360
        %3955 = vmatpush.msra.mxu0 %v2351
        %3956 = vmatpush.msra.mxu0 %v2342
        %3957 = vmatpush.msra.mxu0 %v2333
        %3958 = vmatpush.msra.mxu0 %v2324
        %3959 = vmatpush.msra.mxu0 %v2315
        %3960 = vmatpush.msra.mxu0 %v2306
        %3961 = vmatpush.msra.mxu0 %v2297
        %3962 = vmatpush.msra.mxu0 %v2288
        %3963 = vmatmul.f32.gmra.mxu0 %v2451
        %v3964 = vpop.f32.mrf.mxu0
        %v3965 = vadd.f32 %v3945, %v3964
        %3966 = vdwg.mxu0
        %3967 = vmatpush.msra.mxu0 %v408
        %3968 = vmatpush.msra.mxu0 %v399
        %3969 = vmatpush.msra.mxu0 %v390
        %3970 = vmatpush.msra.mxu0 %v381
        %3971 = vmatpush.msra.mxu0 %v372
        %3972 = vmatpush.msra.mxu0 %v363
        %3973 = vmatpush.msra.mxu0 %v354
        %3974 = vmatpush.msra.mxu0 %v345
        %3975 = vmatpush.msra.mxu0 %v336
        %3976 = vmatpush.msra.mxu0 %v327
        %3977 = vmatpush.msra.mxu0 %v318
        %3978 = vmatpush.msra.mxu0 %v309
        %3979 = vmatpush.msra.mxu0 %v300
        %3980 = vmatpush.msra.mxu0 %v291
        %3981 = vmatpush.msra.mxu0 %v282
        %3982 = vmatpush.msra.mxu0 %v273
        %3983 = vmatmul.f32.gmra.mxu0 %v2435
        %v3984 = vpop.f32.mrf.mxu0
        %v3985 = vadd.f32 0.0, %v3984
        %3986 = vdwg.mxu0
        %3987 = vmatpush.msra.mxu0 %v552
        %3988 = vmatpush.msra.mxu0 %v543
        %3989 = vmatpush.msra.mxu0 %v534
        %3990 = vmatpush.msra.mxu0 %v525
        %3991 = vmatpush.msra.mxu0 %v516
        %3992 = vmatpush.msra.mxu0 %v507
        %3993 = vmatpush.msra.mxu0 %v498
        %3994 = vmatpush.msra.mxu0 %v489
        %3995 = vmatpush.msra.mxu0 %v480
        %3996 = vmatpush.msra.mxu0 %v471
        %3997 = vmatpush.msra.mxu0 %v462
        %3998 = vmatpush.msra.mxu0 %v453
        %3999 = vmatpush.msra.mxu0 %v444
        %4000 = vmatpush.msra.mxu0 %v435
        %4001 = vmatpush.msra.mxu0 %v426
        %4002 = vmatpush.msra.mxu0 %v417
        %4003 = vmatmul.f32.gmra.mxu0 %v2436
        %v4004 = vpop.f32.mrf.mxu0
        %v4005 = vadd.f32 %v3985, %v4004
        %4006 = vdwg.mxu0
        %4007 = vmatpush.msra.mxu0 %v696
        %4008 = vmatpush.msra.mxu0 %v687
        %4009 = vmatpush.msra.mxu0 %v678
        %4010 = vmatpush.msra.mxu0 %v669
        %4011 = vmatpush.msra.mxu0 %v660
        %4012 = vmatpush.msra.mxu0 %v651
        %4013 = vmatpush.msra.mxu0 %v642
        %4014 = vmatpush.msra.mxu0 %v633
        %4015 = vmatpush.msra.mxu0 %v624
        %4016 = vmatpush.msra.mxu0 %v615
        %4017 = vmatpush.msra.mxu0 %v606
        %4018 = vmatpush.msra.mxu0 %v597
        %4019 = vmatpush.msra.mxu0 %v588
        %4020 = vmatpush.msra.mxu0 %v579
        %4021 = vmatpush.msra.mxu0 %v570
        %4022 = vmatpush.msra.mxu0 %v561
        %4023 = vmatmul.f32.gmra.mxu0 %v2437
        %v4024 = vpop.f32.mrf.mxu0
        %v4025 = vadd.f32 %v4005, %v4024
        %4026 = vdwg.mxu0
        %4027 = vmatpush.msra.mxu0 %v840
        %4028 = vmatpush.msra.mxu0 %v831
        %4029 = vmatpush.msra.mxu0 %v822
        %4030 = vmatpush.msra.mxu0 %v813
        %4031 = vmatpush.msra.mxu0 %v804
        %4032 = vmatpush.msra.mxu0 %v795
        %4033 = vmatpush.msra.mxu0 %v786
        %4034 = vmatpush.msra.mxu0 %v777
        %4035 = vmatpush.msra.mxu0 %v768
        %4036 = vmatpush.msra.mxu0 %v759
        %4037 = vmatpush.msra.mxu0 %v750
        %4038 = vmatpush.msra.mxu0 %v741
        %4039 = vmatpush.msra.mxu0 %v732
        %4040 = vmatpush.msra.mxu0 %v723
        %4041 = vmatpush.msra.mxu0 %v714
        %4042 = vmatpush.msra.mxu0 %v705
        %4043 = vmatmul.f32.gmra.mxu0 %v2438
        %v4044 = vpop.f32.mrf.mxu0
        %v4045 = vadd.f32 %v4025, %v4044
        %4046 = vdwg.mxu0
        %4047 = vmatpush.msra.mxu0 %v984
        %4048 = vmatpush.msra.mxu0 %v975
        %4049 = vmatpush.msra.mxu0 %v966
        %4050 = vmatpush.msra.mxu0 %v957
        %4051 = vmatpush.msra.mxu0 %v948
        %4052 = vmatpush.msra.mxu0 %v939
        %4053 = vmatpush.msra.mxu0 %v930
        %4054 = vmatpush.msra.mxu0 %v921
        %4055 = vmatpush.msra.mxu0 %v912
        %4056 = vmatpush.msra.mxu0 %v903
        %4057 = vmatpush.msra.mxu0 %v894
        %4058 = vmatpush.msra.mxu0 %v885
        %4059 = vmatpush.msra.mxu0 %v876
        %4060 = vmatpush.msra.mxu0 %v867
        %4061 = vmatpush.msra.mxu0 %v858
        %4062 = vmatpush.msra.mxu0 %v849
        %4063 = vmatmul.f32.gmra.mxu0 %v2439
        %v4064 = vpop.f32.mrf.mxu0
        %v4065 = vadd.f32 %v4045, %v4064
        %4066 = vdwg.mxu0
        %4067 = vmatpush.msra.mxu0 %v1128
        %4068 = vmatpush.msra.mxu0 %v1119
        %4069 = vmatpush.msra.mxu0 %v1110
        %4070 = vmatpush.msra.mxu0 %v1101
        %4071 = vmatpush.msra.mxu0 %v1092
        %4072 = vmatpush.msra.mxu0 %v1083
        %4073 = vmatpush.msra.mxu0 %v1074
        %4074 = vmatpush.msra.mxu0 %v1065
        %4075 = vmatpush.msra.mxu0 %v1056
        %4076 = vmatpush.msra.mxu0 %v1047
        %4077 = vmatpush.msra.mxu0 %v1038
        %4078 = vmatpush.msra.mxu0 %v1029
        %4079 = vmatpush.msra.mxu0 %v1020
        %4080 = vmatpush.msra.mxu0 %v1011
        %4081 = vmatpush.msra.mxu0 %v1002
        %4082 = vmatpush.msra.mxu0 %v993
        %4083 = vmatmul.f32.gmra.mxu0 %v2440
        %v4084 = vpop.f32.mrf.mxu0
        %v4085 = vadd.f32 %v4065, %v4084
        %4086 = vdwg.mxu0
        %4087 = vmatpush.msra.mxu0 %v1272
        %4088 = vmatpush.msra.mxu0 %v1263
        %4089 = vmatpush.msra.mxu0 %v1254
        %4090 = vmatpush.msra.mxu0 %v1245
        %4091 = vmatpush.msra.mxu0 %v1236
        %4092 = vmatpush.msra.mxu0 %v1227
        %4093 = vmatpush.msra.mxu0 %v1218
        %4094 = vmatpush.msra.mxu0 %v1209
        %4095 = vmatpush.msra.mxu0 %v1200
        %4096 = vmatpush.msra.mxu0 %v1191
        %4097 = vmatpush.msra.mxu0 %v1182
        %4098 = vmatpush.msra.mxu0 %v1173
        %4099 = vmatpush.msra.mxu0 %v1164
        %4100 = vmatpush.msra.mxu0 %v1155
        %4101 = vmatpush.msra.mxu0 %v1146
        %4102 = vmatpush.msra.mxu0 %v1137
        %4103 = vmatmul.f32.gmra.mxu0 %v2441
        %v4104 = vpop.f32.mrf.mxu0
        %v4105 = vadd.f32 %v4085, %v4104
        %4106 = vdwg.mxu0
        %4107 = vmatpush.msra.mxu0 %v1416
        %4108 = vmatpush.msra.mxu0 %v1407
        %4109 = vmatpush.msra.mxu0 %v1398
        %4110 = vmatpush.msra.mxu0 %v1389
        %4111 = vmatpush.msra.mxu0 %v1380
        %4112 = vmatpush.msra.mxu0 %v1371
        %4113 = vmatpush.msra.mxu0 %v1362
        %4114 = vmatpush.msra.mxu0 %v1353
        %4115 = vmatpush.msra.mxu0 %v1344
        %4116 = vmatpush.msra.mxu0 %v1335
        %4117 = vmatpush.msra.mxu0 %v1326
        %4118 = vmatpush.msra.mxu0 %v1317
        %4119 = vmatpush.msra.mxu0 %v1308
        %4120 = vmatpush.msra.mxu0 %v1299
        %4121 = vmatpush.msra.mxu0 %v1290
        %4122 = vmatpush.msra.mxu0 %v1281
        %4123 = vmatmul.f32.gmra.mxu0 %v2442
        %v4124 = vpop.f32.mrf.mxu0
        %v4125 = vadd.f32 %v4105, %v4124
        %4126 = vdwg.mxu0
        %4127 = vmatpush.msra.mxu0 %v1560
        %4128 = vmatpush.msra.mxu0 %v1551
        %4129 = vmatpush.msra.mxu0 %v1542
        %4130 = vmatpush.msra.mxu0 %v1533
        %4131 = vmatpush.msra.mxu0 %v1524
        %4132 = vmatpush.msra.mxu0 %v1515
        %4133 = vmatpush.msra.mxu0 %v1506
        %4134 = vmatpush.msra.mxu0 %v1497
        %4135 = vmatpush.msra.mxu0 %v1488
        %4136 = vmatpush.msra.mxu0 %v1479
        %4137 = vmatpush.msra.mxu0 %v1470
        %4138 = vmatpush.msra.mxu0 %v1461
        %4139 = vmatpush.msra.mxu0 %v1452
        %4140 = vmatpush.msra.mxu0 %v1443
        %4141 = vmatpush.msra.mxu0 %v1434
        %4142 = vmatpush.msra.mxu0 %v1425
        %4143 = vmatmul.f32.gmra.mxu0 %v2445
        %v4144 = vpop.f32.mrf.mxu0
        %v4145 = vadd.f32 %v4125, %v4144
        %4146 = vdwg.mxu0
        %4147 = vmatpush.msra.mxu0 %v1704
        %4148 = vmatpush.msra.mxu0 %v1695
        %4149 = vmatpush.msra.mxu0 %v1686
        %4150 = vmatpush.msra.mxu0 %v1677
        %4151 = vmatpush.msra.mxu0 %v1668
        %4152 = vmatpush.msra.mxu0 %v1659
        %4153 = vmatpush.msra.mxu0 %v1650
        %4154 = vmatpush.msra.mxu0 %v1641
        %4155 = vmatpush.msra.mxu0 %v1632
        %4156 = vmatpush.msra.mxu0 %v1623
        %4157 = vmatpush.msra.mxu0 %v1614
        %4158 = vmatpush.msra.mxu0 %v1605
        %4159 = vmatpush.msra.mxu0 %v1596
        %4160 = vmatpush.msra.mxu0 %v1587
        %4161 = vmatpush.msra.mxu0 %v1578
        %4162 = vmatpush.msra.mxu0 %v1569
        %4163 = vmatmul.f32.gmra.mxu0 %v2446
        %v4164 = vpop.f32.mrf.mxu0
        %v4165 = vadd.f32 %v4145, %v4164
        %4166 = vdwg.mxu0
        %4167 = vmatpush.msra.mxu0 %v1848
        %4168 = vmatpush.msra.mxu0 %v1839
        %4169 = vmatpush.msra.mxu0 %v1830
        %4170 = vmatpush.msra.mxu0 %v1821
        %4171 = vmatpush.msra.mxu0 %v1812
        %4172 = vmatpush.msra.mxu0 %v1803
        %4173 = vmatpush.msra.mxu0 %v1794
        %4174 = vmatpush.msra.mxu0 %v1785
        %4175 = vmatpush.msra.mxu0 %v1776
        %4176 = vmatpush.msra.mxu0 %v1767
        %4177 = vmatpush.msra.mxu0 %v1758
        %4178 = vmatpush.msra.mxu0 %v1749
        %4179 = vmatpush.msra.mxu0 %v1740
        %4180 = vmatpush.msra.mxu0 %v1731
        %4181 = vmatpush.msra.mxu0 %v1722
        %4182 = vmatpush.msra.mxu0 %v1713
        %4183 = vmatmul.f32.gmra.mxu0 %v2447
        %v4184 = vpop.f32.mrf.mxu0
        %v4185 = vadd.f32 %v4165, %v4184
        %4186 = vdwg.mxu0
        %4187 = vmatpush.msra.mxu0 %v1992
        %4188 = vmatpush.msra.mxu0 %v1983
        %4189 = vmatpush.msra.mxu0 %v1974
        %4190 = vmatpush.msra.mxu0 %v1965
        %4191 = vmatpush.msra.mxu0 %v1956
        %4192 = vmatpush.msra.mxu0 %v1947
        %4193 = vmatpush.msra.mxu0 %v1938
        %4194 = vmatpush.msra.mxu0 %v1929
        %4195 = vmatpush.msra.mxu0 %v1920
        %4196 = vmatpush.msra.mxu0 %v1911
        %4197 = vmatpush.msra.mxu0 %v1902
        %4198 = vmatpush.msra.mxu0 %v1893
        %4199 = vmatpush.msra.mxu0 %v1884
        %4200 = vmatpush.msra.mxu0 %v1875
        %4201 = vmatpush.msra.mxu0 %v1866
        %4202 = vmatpush.msra.mxu0 %v1857
        %4203 = vmatmul.f32.gmra.mxu0 %v2448
        %v4204 = vpop.f32.mrf.mxu0
        %v4205 = vadd.f32 %v4185, %v4204
        %4206 = vdwg.mxu0
        %4207 = vmatpush.msra.mxu0 %v2136
        %4208 = vmatpush.msra.mxu0 %v2127
        %4209 = vmatpush.msra.mxu0 %v2118
        %4210 = vmatpush.msra.mxu0 %v2109
        %4211 = vmatpush.msra.mxu0 %v2100
        %4212 = vmatpush.msra.mxu0 %v2091
        %4213 = vmatpush.msra.mxu0 %v2082
        %4214 = vmatpush.msra.mxu0 %v2073
        %4215 = vmatpush.msra.mxu0 %v2064
        %4216 = vmatpush.msra.mxu0 %v2055
        %4217 = vmatpush.msra.mxu0 %v2046
        %4218 = vmatpush.msra.mxu0 %v2037
        %4219 = vmatpush.msra.mxu0 %v2028
        %4220 = vmatpush.msra.mxu0 %v2019
        %4221 = vmatpush.msra.mxu0 %v2010
        %4222 = vmatpush.msra.mxu0 %v2001
        %4223 = vmatmul.f32.gmra.mxu0 %v2449
        %v4224 = vpop.f32.mrf.mxu0
        %v4225 = vadd.f32 %v4205, %v4224
        %4226 = vdwg.mxu0
        %4227 = vmatpush.msra.mxu0 %v2280
        %4228 = vmatpush.msra.mxu0 %v2271
        %4229 = vmatpush.msra.mxu0 %v2262
        %4230 = vmatpush.msra.mxu0 %v2253
        %4231 = vmatpush.msra.mxu0 %v2244
        %4232 = vmatpush.msra.mxu0 %v2235
        %4233 = vmatpush.msra.mxu0 %v2226
        %4234 = vmatpush.msra.mxu0 %v2217
        %4235 = vmatpush.msra.mxu0 %v2208
        %4236 = vmatpush.msra.mxu0 %v2199
        %4237 = vmatpush.msra.mxu0 %v2190
        %4238 = vmatpush.msra.mxu0 %v2181
        %4239 = vmatpush.msra.mxu0 %v2172
        %4240 = vmatpush.msra.mxu0 %v2163
        %4241 = vmatpush.msra.mxu0 %v2154
        %4242 = vmatpush.msra.mxu0 %v2145
        %4243 = vmatmul.f32.gmra.mxu0 %v2450
        %v4244 = vpop.f32.mrf.mxu0
        %v4245 = vadd.f32 %v4225, %v4244
        %4246 = vdwg.mxu0
        %4247 = vmatpush.msra.mxu0 %v2424
        %4248 = vmatpush.msra.mxu0 %v2415
        %4249 = vmatpush.msra.mxu0 %v2406
        %4250 = vmatpush.msra.mxu0 %v2397
        %4251 = vmatpush.msra.mxu0 %v2388
        %4252 = vmatpush.msra.mxu0 %v2379
        %4253 = vmatpush.msra.mxu0 %v2370
        %4254 = vmatpush.msra.mxu0 %v2361
        %4255 = vmatpush.msra.mxu0 %v2352
        %4256 = vmatpush.msra.mxu0 %v2343
        %4257 = vmatpush.msra.mxu0 %v2334
        %4258 = vmatpush.msra.mxu0 %v2325
        %4259 = vmatpush.msra.mxu0 %v2316
        %4260 = vmatpush.msra.mxu0 %v2307
        %4261 = vmatpush.msra.mxu0 %v2298
        %4262 = vmatpush.msra.mxu0 %v2289
        %4263 = vmatmul.f32.gmra.mxu0 %v2451
        %v4264 = vpop.f32.mrf.mxu0
        %v4265 = vadd.f32 %v4245, %v4264
        %4266 = vdwg.mxu0
        %4267 = vmatpush.msra.mxu0 %v409
        %4268 = vmatpush.msra.mxu0 %v400
        %4269 = vmatpush.msra.mxu0 %v391
        %4270 = vmatpush.msra.mxu0 %v382
        %4271 = vmatpush.msra.mxu0 %v373
        %4272 = vmatpush.msra.mxu0 %v364
        %4273 = vmatpush.msra.mxu0 %v355
        %4274 = vmatpush.msra.mxu0 %v346
        %4275 = vmatpush.msra.mxu0 %v337
        %4276 = vmatpush.msra.mxu0 %v328
        %4277 = vmatpush.msra.mxu0 %v319
        %4278 = vmatpush.msra.mxu0 %v310
        %4279 = vmatpush.msra.mxu0 %v301
        %4280 = vmatpush.msra.mxu0 %v292
        %4281 = vmatpush.msra.mxu0 %v283
        %4282 = vmatpush.msra.mxu0 %v274
        %4283 = vmatmul.f32.gmra.mxu0 %v2435
        %v4284 = vpop.f32.mrf.mxu0
        %v4285 = vadd.f32 0.0, %v4284
        %4286 = vdwg.mxu0
        %4287 = vmatpush.msra.mxu0 %v553
        %4288 = vmatpush.msra.mxu0 %v544
        %4289 = vmatpush.msra.mxu0 %v535
        %4290 = vmatpush.msra.mxu0 %v526
        %4291 = vmatpush.msra.mxu0 %v517
        %4292 = vmatpush.msra.mxu0 %v508
        %4293 = vmatpush.msra.mxu0 %v499
        %4294 = vmatpush.msra.mxu0 %v490
        %4295 = vmatpush.msra.mxu0 %v481
        %4296 = vmatpush.msra.mxu0 %v472
        %4297 = vmatpush.msra.mxu0 %v463
        %4298 = vmatpush.msra.mxu0 %v454
        %4299 = vmatpush.msra.mxu0 %v445
        %4300 = vmatpush.msra.mxu0 %v436
        %4301 = vmatpush.msra.mxu0 %v427
        %4302 = vmatpush.msra.mxu0 %v418
        %4303 = vmatmul.f32.gmra.mxu0 %v2436
        %v4304 = vpop.f32.mrf.mxu0
        %v4305 = vadd.f32 %v4285, %v4304
        %4306 = vdwg.mxu0
        %4307 = vmatpush.msra.mxu0 %v697
        %4308 = vmatpush.msra.mxu0 %v688
        %4309 = vmatpush.msra.mxu0 %v679
        %4310 = vmatpush.msra.mxu0 %v670
        %4311 = vmatpush.msra.mxu0 %v661
        %4312 = vmatpush.msra.mxu0 %v652
        %4313 = vmatpush.msra.mxu0 %v643
        %4314 = vmatpush.msra.mxu0 %v634
        %4315 = vmatpush.msra.mxu0 %v625
        %4316 = vmatpush.msra.mxu0 %v616
        %4317 = vmatpush.msra.mxu0 %v607
        %4318 = vmatpush.msra.mxu0 %v598
        %4319 = vmatpush.msra.mxu0 %v589
        %4320 = vmatpush.msra.mxu0 %v580
        %4321 = vmatpush.msra.mxu0 %v571
        %4322 = vmatpush.msra.mxu0 %v562
        %4323 = vmatmul.f32.gmra.mxu0 %v2437
        %v4324 = vpop.f32.mrf.mxu0
        %v4325 = vadd.f32 %v4305, %v4324
        %4326 = vdwg.mxu0
        %4327 = vmatpush.msra.mxu0 %v841
        %4328 = vmatpush.msra.mxu0 %v832
        %4329 = vmatpush.msra.mxu0 %v823
        %4330 = vmatpush.msra.mxu0 %v814
        %4331 = vmatpush.msra.mxu0 %v805
        %4332 = vmatpush.msra.mxu0 %v796
        %4333 = vmatpush.msra.mxu0 %v787
        %4334 = vmatpush.msra.mxu0 %v778
        %4335 = vmatpush.msra.mxu0 %v769
        %4336 = vmatpush.msra.mxu0 %v760
        %4337 = vmatpush.msra.mxu0 %v751
        %4338 = vmatpush.msra.mxu0 %v742
        %4339 = vmatpush.msra.mxu0 %v733
        %4340 = vmatpush.msra.mxu0 %v724
        %4341 = vmatpush.msra.mxu0 %v715
        %4342 = vmatpush.msra.mxu0 %v706
        %4343 = vmatmul.f32.gmra.mxu0 %v2438
        %v4344 = vpop.f32.mrf.mxu0
        %v4345 = vadd.f32 %v4325, %v4344
        %4346 = vdwg.mxu0
        %4347 = vmatpush.msra.mxu0 %v985
        %4348 = vmatpush.msra.mxu0 %v976
        %4349 = vmatpush.msra.mxu0 %v967
        %4350 = vmatpush.msra.mxu0 %v958
        %4351 = vmatpush.msra.mxu0 %v949
        %4352 = vmatpush.msra.mxu0 %v940
        %4353 = vmatpush.msra.mxu0 %v931
        %4354 = vmatpush.msra.mxu0 %v922
        %4355 = vmatpush.msra.mxu0 %v913
        %4356 = vmatpush.msra.mxu0 %v904
        %4357 = vmatpush.msra.mxu0 %v895
        %4358 = vmatpush.msra.mxu0 %v886
        %4359 = vmatpush.msra.mxu0 %v877
        %4360 = vmatpush.msra.mxu0 %v868
        %4361 = vmatpush.msra.mxu0 %v859
        %4362 = vmatpush.msra.mxu0 %v850
        %4363 = vmatmul.f32.gmra.mxu0 %v2439
        %v4364 = vpop.f32.mrf.mxu0
        %v4365 = vadd.f32 %v4345, %v4364
        %4366 = vdwg.mxu0
        %4367 = vmatpush.msra.mxu0 %v1129
        %4368 = vmatpush.msra.mxu0 %v1120
        %4369 = vmatpush.msra.mxu0 %v1111
        %4370 = vmatpush.msra.mxu0 %v1102
        %4371 = vmatpush.msra.mxu0 %v1093
        %4372 = vmatpush.msra.mxu0 %v1084
        %4373 = vmatpush.msra.mxu0 %v1075
        %4374 = vmatpush.msra.mxu0 %v1066
        %4375 = vmatpush.msra.mxu0 %v1057
        %4376 = vmatpush.msra.mxu0 %v1048
        %4377 = vmatpush.msra.mxu0 %v1039
        %4378 = vmatpush.msra.mxu0 %v1030
        %4379 = vmatpush.msra.mxu0 %v1021
        %4380 = vmatpush.msra.mxu0 %v1012
        %4381 = vmatpush.msra.mxu0 %v1003
        %4382 = vmatpush.msra.mxu0 %v994
        %4383 = vmatmul.f32.gmra.mxu0 %v2440
        %v4384 = vpop.f32.mrf.mxu0
        %v4385 = vadd.f32 %v4365, %v4384
        %4386 = vdwg.mxu0
        %4387 = vmatpush.msra.mxu0 %v1273
        %4388 = vmatpush.msra.mxu0 %v1264
        %4389 = vmatpush.msra.mxu0 %v1255
        %4390 = vmatpush.msra.mxu0 %v1246
        %4391 = vmatpush.msra.mxu0 %v1237
        %4392 = vmatpush.msra.mxu0 %v1228
        %4393 = vmatpush.msra.mxu0 %v1219
        %4394 = vmatpush.msra.mxu0 %v1210
        %4395 = vmatpush.msra.mxu0 %v1201
        %4396 = vmatpush.msra.mxu0 %v1192
        %4397 = vmatpush.msra.mxu0 %v1183
        %4398 = vmatpush.msra.mxu0 %v1174
        %4399 = vmatpush.msra.mxu0 %v1165
        %4400 = vmatpush.msra.mxu0 %v1156
        %4401 = vmatpush.msra.mxu0 %v1147
        %4402 = vmatpush.msra.mxu0 %v1138
        %4403 = vmatmul.f32.gmra.mxu0 %v2441
        %v4404 = vpop.f32.mrf.mxu0
        %v4405 = vadd.f32 %v4385, %v4404
        %4406 = vdwg.mxu0
        %4407 = vmatpush.msra.mxu0 %v1417
        %4408 = vmatpush.msra.mxu0 %v1408
        %4409 = vmatpush.msra.mxu0 %v1399
        %4410 = vmatpush.msra.mxu0 %v1390
        %4411 = vmatpush.msra.mxu0 %v1381
        %4412 = vmatpush.msra.mxu0 %v1372
        %4413 = vmatpush.msra.mxu0 %v1363
        %4414 = vmatpush.msra.mxu0 %v1354
        %4415 = vmatpush.msra.mxu0 %v1345
        %4416 = vmatpush.msra.mxu0 %v1336
        %4417 = vmatpush.msra.mxu0 %v1327
        %4418 = vmatpush.msra.mxu0 %v1318
        %4419 = vmatpush.msra.mxu0 %v1309
        %4420 = vmatpush.msra.mxu0 %v1300
        %4421 = vmatpush.msra.mxu0 %v1291
        %4422 = vmatpush.msra.mxu0 %v1282
        %4423 = vmatmul.f32.gmra.mxu0 %v2442
        %v4424 = vpop.f32.mrf.mxu0
        %v4425 = vadd.f32 %v4405, %v4424
        %4426 = vdwg.mxu0
        %4427 = vmatpush.msra.mxu0 %v1561
        %4428 = vmatpush.msra.mxu0 %v1552
        %4429 = vmatpush.msra.mxu0 %v1543
        %4430 = vmatpush.msra.mxu0 %v1534
        %4431 = vmatpush.msra.mxu0 %v1525
        %4432 = vmatpush.msra.mxu0 %v1516
        %4433 = vmatpush.msra.mxu0 %v1507
        %4434 = vmatpush.msra.mxu0 %v1498
        %4435 = vmatpush.msra.mxu0 %v1489
        %4436 = vmatpush.msra.mxu0 %v1480
        %4437 = vmatpush.msra.mxu0 %v1471
        %4438 = vmatpush.msra.mxu0 %v1462
        %4439 = vmatpush.msra.mxu0 %v1453
        %4440 = vmatpush.msra.mxu0 %v1444
        %4441 = vmatpush.msra.mxu0 %v1435
        %4442 = vmatpush.msra.mxu0 %v1426
        %4443 = vmatmul.f32.gmra.mxu0 %v2445
        %v4444 = vpop.f32.mrf.mxu0
        %v4445 = vadd.f32 %v4425, %v4444
        %4446 = vdwg.mxu0
        %4447 = vmatpush.msra.mxu0 %v1705
        %4448 = vmatpush.msra.mxu0 %v1696
        %4449 = vmatpush.msra.mxu0 %v1687
        %4450 = vmatpush.msra.mxu0 %v1678
        %4451 = vmatpush.msra.mxu0 %v1669
        %4452 = vmatpush.msra.mxu0 %v1660
        %4453 = vmatpush.msra.mxu0 %v1651
        %4454 = vmatpush.msra.mxu0 %v1642
        %4455 = vmatpush.msra.mxu0 %v1633
        %4456 = vmatpush.msra.mxu0 %v1624
        %4457 = vmatpush.msra.mxu0 %v1615
        %4458 = vmatpush.msra.mxu0 %v1606
        %4459 = vmatpush.msra.mxu0 %v1597
        %4460 = vmatpush.msra.mxu0 %v1588
        %4461 = vmatpush.msra.mxu0 %v1579
        %4462 = vmatpush.msra.mxu0 %v1570
        %4463 = vmatmul.f32.gmra.mxu0 %v2446
        %v4464 = vpop.f32.mrf.mxu0
        %v4465 = vadd.f32 %v4445, %v4464
        %4466 = vdwg.mxu0
        %4467 = vmatpush.msra.mxu0 %v1849
        %4468 = vmatpush.msra.mxu0 %v1840
        %4469 = vmatpush.msra.mxu0 %v1831
        %4470 = vmatpush.msra.mxu0 %v1822
        %4471 = vmatpush.msra.mxu0 %v1813
        %4472 = vmatpush.msra.mxu0 %v1804
        %4473 = vmatpush.msra.mxu0 %v1795
        %4474 = vmatpush.msra.mxu0 %v1786
        %4475 = vmatpush.msra.mxu0 %v1777
        %4476 = vmatpush.msra.mxu0 %v1768
        %4477 = vmatpush.msra.mxu0 %v1759
        %4478 = vmatpush.msra.mxu0 %v1750
        %4479 = vmatpush.msra.mxu0 %v1741
        %4480 = vmatpush.msra.mxu0 %v1732
        %4481 = vmatpush.msra.mxu0 %v1723
        %4482 = vmatpush.msra.mxu0 %v1714
        %4483 = vmatmul.f32.gmra.mxu0 %v2447
        %v4484 = vpop.f32.mrf.mxu0
        %v4485 = vadd.f32 %v4465, %v4484
        %4486 = vdwg.mxu0
        %4487 = vmatpush.msra.mxu0 %v1993
        %4488 = vmatpush.msra.mxu0 %v1984
        %4489 = vmatpush.msra.mxu0 %v1975
        %4490 = vmatpush.msra.mxu0 %v1966
        %4491 = vmatpush.msra.mxu0 %v1957
        %4492 = vmatpush.msra.mxu0 %v1948
        %4493 = vmatpush.msra.mxu0 %v1939
        %4494 = vmatpush.msra.mxu0 %v1930
        %4495 = vmatpush.msra.mxu0 %v1921
        %4496 = vmatpush.msra.mxu0 %v1912
        %4497 = vmatpush.msra.mxu0 %v1903
        %4498 = vmatpush.msra.mxu0 %v1894
        %4499 = vmatpush.msra.mxu0 %v1885
        %4500 = vmatpush.msra.mxu0 %v1876
        %4501 = vmatpush.msra.mxu0 %v1867
        %4502 = vmatpush.msra.mxu0 %v1858
        %4503 = vmatmul.f32.gmra.mxu0 %v2448
        %v4504 = vpop.f32.mrf.mxu0
        %v4505 = vadd.f32 %v4485, %v4504
        %4506 = vdwg.mxu0
        %4507 = vmatpush.msra.mxu0 %v2137
        %4508 = vmatpush.msra.mxu0 %v2128
        %4509 = vmatpush.msra.mxu0 %v2119
        %4510 = vmatpush.msra.mxu0 %v2110
        %4511 = vmatpush.msra.mxu0 %v2101
        %4512 = vmatpush.msra.mxu0 %v2092
        %4513 = vmatpush.msra.mxu0 %v2083
        %4514 = vmatpush.msra.mxu0 %v2074
        %4515 = vmatpush.msra.mxu0 %v2065
        %4516 = vmatpush.msra.mxu0 %v2056
        %4517 = vmatpush.msra.mxu0 %v2047
        %4518 = vmatpush.msra.mxu0 %v2038
        %4519 = vmatpush.msra.mxu0 %v2029
        %4520 = vmatpush.msra.mxu0 %v2020
        %4521 = vmatpush.msra.mxu0 %v2011
        %4522 = vmatpush.msra.mxu0 %v2002
        %4523 = vmatmul.f32.gmra.mxu0 %v2449
        %v4524 = vpop.f32.mrf.mxu0
        %v4525 = vadd.f32 %v4505, %v4524
        %4526 = vdwg.mxu0
        %4527 = vmatpush.msra.mxu0 %v2281
        %4528 = vmatpush.msra.mxu0 %v2272
        %4529 = vmatpush.msra.mxu0 %v2263
        %4530 = vmatpush.msra.mxu0 %v2254
        %4531 = vmatpush.msra.mxu0 %v2245
        %4532 = vmatpush.msra.mxu0 %v2236
        %4533 = vmatpush.msra.mxu0 %v2227
        %4534 = vmatpush.msra.mxu0 %v2218
        %4535 = vmatpush.msra.mxu0 %v2209
        %4536 = vmatpush.msra.mxu0 %v2200
        %4537 = vmatpush.msra.mxu0 %v2191
        %4538 = vmatpush.msra.mxu0 %v2182
        %4539 = vmatpush.msra.mxu0 %v2173
        %4540 = vmatpush.msra.mxu0 %v2164
        %4541 = vmatpush.msra.mxu0 %v2155
        %4542 = vmatpush.msra.mxu0 %v2146
        %4543 = vmatmul.f32.gmra.mxu0 %v2450
        %v4544 = vpop.f32.mrf.mxu0
        %v4545 = vadd.f32 %v4525, %v4544
        %4546 = vdwg.mxu0
        %4547 = vmatpush.msra.mxu0 %v2425
        %4548 = vmatpush.msra.mxu0 %v2416
        %4549 = vmatpush.msra.mxu0 %v2407
        %4550 = vmatpush.msra.mxu0 %v2398
        %4551 = vmatpush.msra.mxu0 %v2389
        %4552 = vmatpush.msra.mxu0 %v2380
        %4553 = vmatpush.msra.mxu0 %v2371
        %4554 = vmatpush.msra.mxu0 %v2362
        %4555 = vmatpush.msra.mxu0 %v2353
        %4556 = vmatpush.msra.mxu0 %v2344
        %4557 = vmatpush.msra.mxu0 %v2335
        %4558 = vmatpush.msra.mxu0 %v2326
        %4559 = vmatpush.msra.mxu0 %v2317
        %4560 = vmatpush.msra.mxu0 %v2308
        %4561 = vmatpush.msra.mxu0 %v2299
        %4562 = vmatpush.msra.mxu0 %v2290
        %4563 = vmatmul.f32.gmra.mxu0 %v2451
        %v4564 = vpop.f32.mrf.mxu0
        %v4565 = vadd.f32 %v4545, %v4564
        %4566 = vdwg.mxu0
        %4567 = vmatpush.msra.mxu0 %v410
        %4568 = vmatpush.msra.mxu0 %v401
        %4569 = vmatpush.msra.mxu0 %v392
        %4570 = vmatpush.msra.mxu0 %v383
        %4571 = vmatpush.msra.mxu0 %v374
        %4572 = vmatpush.msra.mxu0 %v365
        %4573 = vmatpush.msra.mxu0 %v356
        %4574 = vmatpush.msra.mxu0 %v347
        %4575 = vmatpush.msra.mxu0 %v338
        %4576 = vmatpush.msra.mxu0 %v329
        %4577 = vmatpush.msra.mxu0 %v320
        %4578 = vmatpush.msra.mxu0 %v311
        %4579 = vmatpush.msra.mxu0 %v302
        %4580 = vmatpush.msra.mxu0 %v293
        %4581 = vmatpush.msra.mxu0 %v284
        %4582 = vmatpush.msra.mxu0 %v275
        %4583 = vmatmul.f32.gmra.mxu0 %v2435
        %v4584 = vpop.f32.mrf.mxu0
        %v4585 = vadd.f32 0.0, %v4584
        %4586 = vdwg.mxu0
        %4587 = vmatpush.msra.mxu0 %v554
        %4588 = vmatpush.msra.mxu0 %v545
        %4589 = vmatpush.msra.mxu0 %v536
        %4590 = vmatpush.msra.mxu0 %v527
        %4591 = vmatpush.msra.mxu0 %v518
        %4592 = vmatpush.msra.mxu0 %v509
        %4593 = vmatpush.msra.mxu0 %v500
        %4594 = vmatpush.msra.mxu0 %v491
        %4595 = vmatpush.msra.mxu0 %v482
        %4596 = vmatpush.msra.mxu0 %v473
        %4597 = vmatpush.msra.mxu0 %v464
        %4598 = vmatpush.msra.mxu0 %v455
        %4599 = vmatpush.msra.mxu0 %v446
        %4600 = vmatpush.msra.mxu0 %v437
        %4601 = vmatpush.msra.mxu0 %v428
        %4602 = vmatpush.msra.mxu0 %v419
        %4603 = vmatmul.f32.gmra.mxu0 %v2436
        %v4604 = vpop.f32.mrf.mxu0
        %v4605 = vadd.f32 %v4585, %v4604
        %4606 = vdwg.mxu0
        %4607 = vmatpush.msra.mxu0 %v698
        %4608 = vmatpush.msra.mxu0 %v689
        %4609 = vmatpush.msra.mxu0 %v680
        %4610 = vmatpush.msra.mxu0 %v671
        %4611 = vmatpush.msra.mxu0 %v662
        %4612 = vmatpush.msra.mxu0 %v653
        %4613 = vmatpush.msra.mxu0 %v644
        %4614 = vmatpush.msra.mxu0 %v635
        %4615 = vmatpush.msra.mxu0 %v626
        %4616 = vmatpush.msra.mxu0 %v617
        %4617 = vmatpush.msra.mxu0 %v608
        %4618 = vmatpush.msra.mxu0 %v599
        %4619 = vmatpush.msra.mxu0 %v590
        %4620 = vmatpush.msra.mxu0 %v581
        %4621 = vmatpush.msra.mxu0 %v572
        %4622 = vmatpush.msra.mxu0 %v563
        %4623 = vmatmul.f32.gmra.mxu0 %v2437
        %v4624 = vpop.f32.mrf.mxu0
        %v4625 = vadd.f32 %v4605, %v4624
        %4626 = vdwg.mxu0
        %4627 = vmatpush.msra.mxu0 %v842
        %4628 = vmatpush.msra.mxu0 %v833
        %4629 = vmatpush.msra.mxu0 %v824
        %4630 = vmatpush.msra.mxu0 %v815
        %4631 = vmatpush.msra.mxu0 %v806
        %4632 = vmatpush.msra.mxu0 %v797
        %4633 = vmatpush.msra.mxu0 %v788
        %4634 = vmatpush.msra.mxu0 %v779
        %4635 = vmatpush.msra.mxu0 %v770
        %4636 = vmatpush.msra.mxu0 %v761
        %4637 = vmatpush.msra.mxu0 %v752
        %4638 = vmatpush.msra.mxu0 %v743
        %4639 = vmatpush.msra.mxu0 %v734
        %4640 = vmatpush.msra.mxu0 %v725
        %4641 = vmatpush.msra.mxu0 %v716
        %4642 = vmatpush.msra.mxu0 %v707
        %4643 = vmatmul.f32.gmra.mxu0 %v2438
        %v4644 = vpop.f32.mrf.mxu0
        %v4645 = vadd.f32 %v4625, %v4644
        %4646 = vdwg.mxu0
        %4647 = vmatpush.msra.mxu0 %v986
        %4648 = vmatpush.msra.mxu0 %v977
        %4649 = vmatpush.msra.mxu0 %v968
        %4650 = vmatpush.msra.mxu0 %v959
        %4651 = vmatpush.msra.mxu0 %v950
        %4652 = vmatpush.msra.mxu0 %v941
        %4653 = vmatpush.msra.mxu0 %v932
        %4654 = vmatpush.msra.mxu0 %v923
        %4655 = vmatpush.msra.mxu0 %v914
        %4656 = vmatpush.msra.mxu0 %v905
        %4657 = vmatpush.msra.mxu0 %v896
        %4658 = vmatpush.msra.mxu0 %v887
        %4659 = vmatpush.msra.mxu0 %v878
        %4660 = vmatpush.msra.mxu0 %v869
        %4661 = vmatpush.msra.mxu0 %v860
        %4662 = vmatpush.msra.mxu0 %v851
        %4663 = vmatmul.f32.gmra.mxu0 %v2439
        %v4664 = vpop.f32.mrf.mxu0
        %v4665 = vadd.f32 %v4645, %v4664
        %4666 = vdwg.mxu0
        %4667 = vmatpush.msra.mxu0 %v1130
        %4668 = vmatpush.msra.mxu0 %v1121
        %4669 = vmatpush.msra.mxu0 %v1112
        %4670 = vmatpush.msra.mxu0 %v1103
        %4671 = vmatpush.msra.mxu0 %v1094
        %4672 = vmatpush.msra.mxu0 %v1085
        %4673 = vmatpush.msra.mxu0 %v1076
        %4674 = vmatpush.msra.mxu0 %v1067
        %4675 = vmatpush.msra.mxu0 %v1058
        %4676 = vmatpush.msra.mxu0 %v1049
        %4677 = vmatpush.msra.mxu0 %v1040
        %4678 = vmatpush.msra.mxu0 %v1031
        %4679 = vmatpush.msra.mxu0 %v1022
        %4680 = vmatpush.msra.mxu0 %v1013
        %4681 = vmatpush.msra.mxu0 %v1004
        %4682 = vmatpush.msra.mxu0 %v995
        %4683 = vmatmul.f32.gmra.mxu0 %v2440
        %v4684 = vpop.f32.mrf.mxu0
        %v4685 = vadd.f32 %v4665, %v4684
        %4686 = vdwg.mxu0
        %4687 = vmatpush.msra.mxu0 %v1274
        %4688 = vmatpush.msra.mxu0 %v1265
        %4689 = vmatpush.msra.mxu0 %v1256
        %4690 = vmatpush.msra.mxu0 %v1247
        %4691 = vmatpush.msra.mxu0 %v1238
        %4692 = vmatpush.msra.mxu0 %v1229
        %4693 = vmatpush.msra.mxu0 %v1220
        %4694 = vmatpush.msra.mxu0 %v1211
        %4695 = vmatpush.msra.mxu0 %v1202
        %4696 = vmatpush.msra.mxu0 %v1193
        %4697 = vmatpush.msra.mxu0 %v1184
        %4698 = vmatpush.msra.mxu0 %v1175
        %4699 = vmatpush.msra.mxu0 %v1166
        %4700 = vmatpush.msra.mxu0 %v1157
        %4701 = vmatpush.msra.mxu0 %v1148
        %4702 = vmatpush.msra.mxu0 %v1139
        %4703 = vmatmul.f32.gmra.mxu0 %v2441
        %v4704 = vpop.f32.mrf.mxu0
        %v4705 = vadd.f32 %v4685, %v4704
        %4706 = vdwg.mxu0
        %4707 = vmatpush.msra.mxu0 %v1418
        %4708 = vmatpush.msra.mxu0 %v1409
        %4709 = vmatpush.msra.mxu0 %v1400
        %4710 = vmatpush.msra.mxu0 %v1391
        %4711 = vmatpush.msra.mxu0 %v1382
        %4712 = vmatpush.msra.mxu0 %v1373
        %4713 = vmatpush.msra.mxu0 %v1364
        %4714 = vmatpush.msra.mxu0 %v1355
        %4715 = vmatpush.msra.mxu0 %v1346
        %4716 = vmatpush.msra.mxu0 %v1337
        %4717 = vmatpush.msra.mxu0 %v1328
        %4718 = vmatpush.msra.mxu0 %v1319
        %4719 = vmatpush.msra.mxu0 %v1310
        %4720 = vmatpush.msra.mxu0 %v1301
        %4721 = vmatpush.msra.mxu0 %v1292
        %4722 = vmatpush.msra.mxu0 %v1283
        %4723 = vmatmul.f32.gmra.mxu0 %v2442
        %v4724 = vpop.f32.mrf.mxu0
        %v4725 = vadd.f32 %v4705, %v4724
        %4726 = vdwg.mxu0
        %4727 = vmatpush.msra.mxu0 %v1562
        %4728 = vmatpush.msra.mxu0 %v1553
        %4729 = vmatpush.msra.mxu0 %v1544
        %4730 = vmatpush.msra.mxu0 %v1535
        %4731 = vmatpush.msra.mxu0 %v1526
        %4732 = vmatpush.msra.mxu0 %v1517
        %4733 = vmatpush.msra.mxu0 %v1508
        %4734 = vmatpush.msra.mxu0 %v1499
        %4735 = vmatpush.msra.mxu0 %v1490
        %4736 = vmatpush.msra.mxu0 %v1481
        %4737 = vmatpush.msra.mxu0 %v1472
        %4738 = vmatpush.msra.mxu0 %v1463
        %4739 = vmatpush.msra.mxu0 %v1454
        %4740 = vmatpush.msra.mxu0 %v1445
        %4741 = vmatpush.msra.mxu0 %v1436
        %4742 = vmatpush.msra.mxu0 %v1427
        %4743 = vmatmul.f32.gmra.mxu0 %v2445
        %v4744 = vpop.f32.mrf.mxu0
        %v4745 = vadd.f32 %v4725, %v4744
        %4746 = vdwg.mxu0
        %4747 = vmatpush.msra.mxu0 %v1706
        %4748 = vmatpush.msra.mxu0 %v1697
        %4749 = vmatpush.msra.mxu0 %v1688
        %4750 = vmatpush.msra.mxu0 %v1679
        %4751 = vmatpush.msra.mxu0 %v1670
        %4752 = vmatpush.msra.mxu0 %v1661
        %4753 = vmatpush.msra.mxu0 %v1652
        %4754 = vmatpush.msra.mxu0 %v1643
        %4755 = vmatpush.msra.mxu0 %v1634
        %4756 = vmatpush.msra.mxu0 %v1625
        %4757 = vmatpush.msra.mxu0 %v1616
        %4758 = vmatpush.msra.mxu0 %v1607
        %4759 = vmatpush.msra.mxu0 %v1598
        %4760 = vmatpush.msra.mxu0 %v1589
        %4761 = vmatpush.msra.mxu0 %v1580
        %4762 = vmatpush.msra.mxu0 %v1571
        %4763 = vmatmul.f32.gmra.mxu0 %v2446
        %v4764 = vpop.f32.mrf.mxu0
        %v4765 = vadd.f32 %v4745, %v4764
        %4766 = vdwg.mxu0
        %4767 = vmatpush.msra.mxu0 %v1850
        %4768 = vmatpush.msra.mxu0 %v1841
        %4769 = vmatpush.msra.mxu0 %v1832
        %4770 = vmatpush.msra.mxu0 %v1823
        %4771 = vmatpush.msra.mxu0 %v1814
        %4772 = vmatpush.msra.mxu0 %v1805
        %4773 = vmatpush.msra.mxu0 %v1796
        %4774 = vmatpush.msra.mxu0 %v1787
        %4775 = vmatpush.msra.mxu0 %v1778
        %4776 = vmatpush.msra.mxu0 %v1769
        %4777 = vmatpush.msra.mxu0 %v1760
        %4778 = vmatpush.msra.mxu0 %v1751
        %4779 = vmatpush.msra.mxu0 %v1742
        %4780 = vmatpush.msra.mxu0 %v1733
        %4781 = vmatpush.msra.mxu0 %v1724
        %4782 = vmatpush.msra.mxu0 %v1715
        %4783 = vmatmul.f32.gmra.mxu0 %v2447
        %v4784 = vpop.f32.mrf.mxu0
        %v4785 = vadd.f32 %v4765, %v4784
        %4786 = vdwg.mxu0
        %4787 = vmatpush.msra.mxu0 %v1994
        %4788 = vmatpush.msra.mxu0 %v1985
        %4789 = vmatpush.msra.mxu0 %v1976
        %4790 = vmatpush.msra.mxu0 %v1967
        %4791 = vmatpush.msra.mxu0 %v1958
        %4792 = vmatpush.msra.mxu0 %v1949
        %4793 = vmatpush.msra.mxu0 %v1940
        %4794 = vmatpush.msra.mxu0 %v1931
        %4795 = vmatpush.msra.mxu0 %v1922
        %4796 = vmatpush.msra.mxu0 %v1913
        %4797 = vmatpush.msra.mxu0 %v1904
        %4798 = vmatpush.msra.mxu0 %v1895
        %4799 = vmatpush.msra.mxu0 %v1886
        %4800 = vmatpush.msra.mxu0 %v1877
        %4801 = vmatpush.msra.mxu0 %v1868
        %4802 = vmatpush.msra.mxu0 %v1859
        %4803 = vmatmul.f32.gmra.mxu0 %v2448
        %v4804 = vpop.f32.mrf.mxu0
        %v4805 = vadd.f32 %v4785, %v4804
        %4806 = vdwg.mxu0
        %4807 = vmatpush.msra.mxu0 %v2138
        %4808 = vmatpush.msra.mxu0 %v2129
        %4809 = vmatpush.msra.mxu0 %v2120
        %4810 = vmatpush.msra.mxu0 %v2111
        %4811 = vmatpush.msra.mxu0 %v2102
        %4812 = vmatpush.msra.mxu0 %v2093
        %4813 = vmatpush.msra.mxu0 %v2084
        %4814 = vmatpush.msra.mxu0 %v2075
        %4815 = vmatpush.msra.mxu0 %v2066
        %4816 = vmatpush.msra.mxu0 %v2057
        %4817 = vmatpush.msra.mxu0 %v2048
        %4818 = vmatpush.msra.mxu0 %v2039
        %4819 = vmatpush.msra.mxu0 %v2030
        %4820 = vmatpush.msra.mxu0 %v2021
        %4821 = vmatpush.msra.mxu0 %v2012
        %4822 = vmatpush.msra.mxu0 %v2003
        %4823 = vmatmul.f32.gmra.mxu0 %v2449
        %v4824 = vpop.f32.mrf.mxu0
        %v4825 = vadd.f32 %v4805, %v4824
        %4826 = vdwg.mxu0
        %4827 = vmatpush.msra.mxu0 %v2282
        %4828 = vmatpush.msra.mxu0 %v2273
        %4829 = vmatpush.msra.mxu0 %v2264
        %4830 = vmatpush.msra.mxu0 %v2255
        %4831 = vmatpush.msra.mxu0 %v2246
        %4832 = vmatpush.msra.mxu0 %v2237
        %4833 = vmatpush.msra.mxu0 %v2228
        %4834 = vmatpush.msra.mxu0 %v2219
        %4835 = vmatpush.msra.mxu0 %v2210
        %4836 = vmatpush.msra.mxu0 %v2201
        %4837 = vmatpush.msra.mxu0 %v2192
        %4838 = vmatpush.msra.mxu0 %v2183
        %4839 = vmatpush.msra.mxu0 %v2174
        %4840 = vmatpush.msra.mxu0 %v2165
        %4841 = vmatpush.msra.mxu0 %v2156
        %4842 = vmatpush.msra.mxu0 %v2147
        %4843 = vmatmul.f32.gmra.mxu0 %v2450
        %v4844 = vpop.f32.mrf.mxu0
        %v4845 = vadd.f32 %v4825, %v4844
        %4846 = vdwg.mxu0
        %4847 = vmatpush.msra.mxu0 %v2426
        %4848 = vmatpush.msra.mxu0 %v2417
        %4849 = vmatpush.msra.mxu0 %v2408
        %4850 = vmatpush.msra.mxu0 %v2399
        %4851 = vmatpush.msra.mxu0 %v2390
        %4852 = vmatpush.msra.mxu0 %v2381
        %4853 = vmatpush.msra.mxu0 %v2372
        %4854 = vmatpush.msra.mxu0 %v2363
        %4855 = vmatpush.msra.mxu0 %v2354
        %4856 = vmatpush.msra.mxu0 %v2345
        %4857 = vmatpush.msra.mxu0 %v2336
        %4858 = vmatpush.msra.mxu0 %v2327
        %4859 = vmatpush.msra.mxu0 %v2318
        %4860 = vmatpush.msra.mxu0 %v2309
        %4861 = vmatpush.msra.mxu0 %v2300
        %4862 = vmatpush.msra.mxu0 %v2291
        %4863 = vmatmul.f32.gmra.mxu0 %v2451
        %v4864 = vpop.f32.mrf.mxu0
        %v4865 = vadd.f32 %v4845, %v4864
        %4866 = vdwg.mxu0
        %4867 = vmatpush.msra.mxu0 %v411
        %4868 = vmatpush.msra.mxu0 %v402
        %4869 = vmatpush.msra.mxu0 %v393
        %4870 = vmatpush.msra.mxu0 %v384
        %4871 = vmatpush.msra.mxu0 %v375
        %4872 = vmatpush.msra.mxu0 %v366
        %4873 = vmatpush.msra.mxu0 %v357
        %4874 = vmatpush.msra.mxu0 %v348
        %4875 = vmatpush.msra.mxu0 %v339
        %4876 = vmatpush.msra.mxu0 %v330
        %4877 = vmatpush.msra.mxu0 %v321
        %4878 = vmatpush.msra.mxu0 %v312
        %4879 = vmatpush.msra.mxu0 %v303
        %4880 = vmatpush.msra.mxu0 %v294
        %4881 = vmatpush.msra.mxu0 %v285
        %4882 = vmatpush.msra.mxu0 %v276
        %4883 = vmatmul.f32.gmra.mxu0 %v2435
        %v4884 = vpop.f32.mrf.mxu0
        %v4885 = vadd.f32 0.0, %v4884
        %4886 = vdwg.mxu0
        %4887 = vmatpush.msra.mxu0 %v555
        %4888 = vmatpush.msra.mxu0 %v546
        %4889 = vmatpush.msra.mxu0 %v537
        %4890 = vmatpush.msra.mxu0 %v528
        %4891 = vmatpush.msra.mxu0 %v519
        %4892 = vmatpush.msra.mxu0 %v510
        %4893 = vmatpush.msra.mxu0 %v501
        %4894 = vmatpush.msra.mxu0 %v492
        %4895 = vmatpush.msra.mxu0 %v483
        %4896 = vmatpush.msra.mxu0 %v474
        %4897 = vmatpush.msra.mxu0 %v465
        %4898 = vmatpush.msra.mxu0 %v456
        %4899 = vmatpush.msra.mxu0 %v447
        %4900 = vmatpush.msra.mxu0 %v438
        %4901 = vmatpush.msra.mxu0 %v429
        %4902 = vmatpush.msra.mxu0 %v420
        %4903 = vmatmul.f32.gmra.mxu0 %v2436
        %v4904 = vpop.f32.mrf.mxu0
        %v4905 = vadd.f32 %v4885, %v4904
        %4906 = vdwg.mxu0
        %4907 = vmatpush.msra.mxu0 %v699
        %4908 = vmatpush.msra.mxu0 %v690
        %4909 = vmatpush.msra.mxu0 %v681
        %4910 = vmatpush.msra.mxu0 %v672
        %4911 = vmatpush.msra.mxu0 %v663
        %4912 = vmatpush.msra.mxu0 %v654
        %4913 = vmatpush.msra.mxu0 %v645
        %4914 = vmatpush.msra.mxu0 %v636
        %4915 = vmatpush.msra.mxu0 %v627
        %4916 = vmatpush.msra.mxu0 %v618
        %4917 = vmatpush.msra.mxu0 %v609
        %4918 = vmatpush.msra.mxu0 %v600
        %4919 = vmatpush.msra.mxu0 %v591
        %4920 = vmatpush.msra.mxu0 %v582
        %4921 = vmatpush.msra.mxu0 %v573
        %4922 = vmatpush.msra.mxu0 %v564
        %4923 = vmatmul.f32.gmra.mxu0 %v2437
        %v4924 = vpop.f32.mrf.mxu0
        %v4925 = vadd.f32 %v4905, %v4924
        %4926 = vdwg.mxu0
        %4927 = vmatpush.msra.mxu0 %v843
        %4928 = vmatpush.msra.mxu0 %v834
        %4929 = vmatpush.msra.mxu0 %v825
        %4930 = vmatpush.msra.mxu0 %v816
        %4931 = vmatpush.msra.mxu0 %v807
        %4932 = vmatpush.msra.mxu0 %v798
        %4933 = vmatpush.msra.mxu0 %v789
        %4934 = vmatpush.msra.mxu0 %v780
        %4935 = vmatpush.msra.mxu0 %v771
        %4936 = vmatpush.msra.mxu0 %v762
        %4937 = vmatpush.msra.mxu0 %v753
        %4938 = vmatpush.msra.mxu0 %v744
        %4939 = vmatpush.msra.mxu0 %v735
        %4940 = vmatpush.msra.mxu0 %v726
        %4941 = vmatpush.msra.mxu0 %v717
        %4942 = vmatpush.msra.mxu0 %v708
        %4943 = vmatmul.f32.gmra.mxu0 %v2438
        %v4944 = vpop.f32.mrf.mxu0
        %v4945 = vadd.f32 %v4925, %v4944
        %4946 = vdwg.mxu0
        %4947 = vmatpush.msra.mxu0 %v987
        %4948 = vmatpush.msra.mxu0 %v978
        %4949 = vmatpush.msra.mxu0 %v969
        %4950 = vmatpush.msra.mxu0 %v960
        %4951 = vmatpush.msra.mxu0 %v951
        %4952 = vmatpush.msra.mxu0 %v942
        %4953 = vmatpush.msra.mxu0 %v933
        %4954 = vmatpush.msra.mxu0 %v924
        %4955 = vmatpush.msra.mxu0 %v915
        %4956 = vmatpush.msra.mxu0 %v906
        %4957 = vmatpush.msra.mxu0 %v897
        %4958 = vmatpush.msra.mxu0 %v888
        %4959 = vmatpush.msra.mxu0 %v879
        %4960 = vmatpush.msra.mxu0 %v870
        %4961 = vmatpush.msra.mxu0 %v861
        %4962 = vmatpush.msra.mxu0 %v852
        %4963 = vmatmul.f32.gmra.mxu0 %v2439
        %v4964 = vpop.f32.mrf.mxu0
        %v4965 = vadd.f32 %v4945, %v4964
        %4966 = vdwg.mxu0
        %4967 = vmatpush.msra.mxu0 %v1131
        %4968 = vmatpush.msra.mxu0 %v1122
        %4969 = vmatpush.msra.mxu0 %v1113
        %4970 = vmatpush.msra.mxu0 %v1104
        %4971 = vmatpush.msra.mxu0 %v1095
        %4972 = vmatpush.msra.mxu0 %v1086
        %4973 = vmatpush.msra.mxu0 %v1077
        %4974 = vmatpush.msra.mxu0 %v1068
        %4975 = vmatpush.msra.mxu0 %v1059
        %4976 = vmatpush.msra.mxu0 %v1050
        %4977 = vmatpush.msra.mxu0 %v1041
        %4978 = vmatpush.msra.mxu0 %v1032
        %4979 = vmatpush.msra.mxu0 %v1023
        %4980 = vmatpush.msra.mxu0 %v1014
        %4981 = vmatpush.msra.mxu0 %v1005
        %4982 = vmatpush.msra.mxu0 %v996
        %4983 = vmatmul.f32.gmra.mxu0 %v2440
        %v4984 = vpop.f32.mrf.mxu0
        %v4985 = vadd.f32 %v4965, %v4984
        %4986 = vdwg.mxu0
        %4987 = vmatpush.msra.mxu0 %v1275
        %4988 = vmatpush.msra.mxu0 %v1266
        %4989 = vmatpush.msra.mxu0 %v1257
        %4990 = vmatpush.msra.mxu0 %v1248
        %4991 = vmatpush.msra.mxu0 %v1239
        %4992 = vmatpush.msra.mxu0 %v1230
        %4993 = vmatpush.msra.mxu0 %v1221
        %4994 = vmatpush.msra.mxu0 %v1212
        %4995 = vmatpush.msra.mxu0 %v1203
        %4996 = vmatpush.msra.mxu0 %v1194
        %4997 = vmatpush.msra.mxu0 %v1185
        %4998 = vmatpush.msra.mxu0 %v1176
        %4999 = vmatpush.msra.mxu0 %v1167
        %5000 = vmatpush.msra.mxu0 %v1158
        %5001 = vmatpush.msra.mxu0 %v1149
        %5002 = vmatpush.msra.mxu0 %v1140
        %5003 = vmatmul.f32.gmra.mxu0 %v2441
        %v5004 = vpop.f32.mrf.mxu0
        %v5005 = vadd.f32 %v4985, %v5004
        %5006 = vdwg.mxu0
        %5007 = vmatpush.msra.mxu0 %v1419
        %5008 = vmatpush.msra.mxu0 %v1410
        %5009 = vmatpush.msra.mxu0 %v1401
        %5010 = vmatpush.msra.mxu0 %v1392
        %5011 = vmatpush.msra.mxu0 %v1383
        %5012 = vmatpush.msra.mxu0 %v1374
        %5013 = vmatpush.msra.mxu0 %v1365
        %5014 = vmatpush.msra.mxu0 %v1356
        %5015 = vmatpush.msra.mxu0 %v1347
        %5016 = vmatpush.msra.mxu0 %v1338
        %5017 = vmatpush.msra.mxu0 %v1329
        %5018 = vmatpush.msra.mxu0 %v1320
        %5019 = vmatpush.msra.mxu0 %v1311
        %5020 = vmatpush.msra.mxu0 %v1302
        %5021 = vmatpush.msra.mxu0 %v1293
        %5022 = vmatpush.msra.mxu0 %v1284
        %5023 = vmatmul.f32.gmra.mxu0 %v2442
        %v5024 = vpop.f32.mrf.mxu0
        %v5025 = vadd.f32 %v5005, %v5024
        %5026 = vdwg.mxu0
        %5027 = vmatpush.msra.mxu0 %v1563
        %5028 = vmatpush.msra.mxu0 %v1554
        %5029 = vmatpush.msra.mxu0 %v1545
        %5030 = vmatpush.msra.mxu0 %v1536
        %5031 = vmatpush.msra.mxu0 %v1527
        %5032 = vmatpush.msra.mxu0 %v1518
        %5033 = vmatpush.msra.mxu0 %v1509
        %5034 = vmatpush.msra.mxu0 %v1500
        %5035 = vmatpush.msra.mxu0 %v1491
        %5036 = vmatpush.msra.mxu0 %v1482
        %5037 = vmatpush.msra.mxu0 %v1473
        %5038 = vmatpush.msra.mxu0 %v1464
        %5039 = vmatpush.msra.mxu0 %v1455
        %5040 = vmatpush.msra.mxu0 %v1446
        %5041 = vmatpush.msra.mxu0 %v1437
        %5042 = vmatpush.msra.mxu0 %v1428
        %5043 = vmatmul.f32.gmra.mxu0 %v2445
        %v5044 = vpop.f32.mrf.mxu0
        %v5045 = vadd.f32 %v5025, %v5044
        %5046 = vdwg.mxu0
        %5047 = vmatpush.msra.mxu0 %v1707
        %5048 = vmatpush.msra.mxu0 %v1698
        %5049 = vmatpush.msra.mxu0 %v1689
        %5050 = vmatpush.msra.mxu0 %v1680
        %5051 = vmatpush.msra.mxu0 %v1671
        %5052 = vmatpush.msra.mxu0 %v1662
        %5053 = vmatpush.msra.mxu0 %v1653
        %5054 = vmatpush.msra.mxu0 %v1644
        %5055 = vmatpush.msra.mxu0 %v1635
        %5056 = vmatpush.msra.mxu0 %v1626
        %5057 = vmatpush.msra.mxu0 %v1617
        %5058 = vmatpush.msra.mxu0 %v1608
        %5059 = vmatpush.msra.mxu0 %v1599
        %5060 = vmatpush.msra.mxu0 %v1590
        %5061 = vmatpush.msra.mxu0 %v1581
        %5062 = vmatpush.msra.mxu0 %v1572
        %5063 = vmatmul.f32.gmra.mxu0 %v2446
        %v5064 = vpop.f32.mrf.mxu0
        %v5065 = vadd.f32 %v5045, %v5064
        %5066 = vdwg.mxu0
        %5067 = vmatpush.msra.mxu0 %v1851
        %5068 = vmatpush.msra.mxu0 %v1842
        %5069 = vmatpush.msra.mxu0 %v1833
        %5070 = vmatpush.msra.mxu0 %v1824
        %5071 = vmatpush.msra.mxu0 %v1815
        %5072 = vmatpush.msra.mxu0 %v1806
        %5073 = vmatpush.msra.mxu0 %v1797
        %5074 = vmatpush.msra.mxu0 %v1788
        %5075 = vmatpush.msra.mxu0 %v1779
        %5076 = vmatpush.msra.mxu0 %v1770
        %5077 = vmatpush.msra.mxu0 %v1761
        %5078 = vmatpush.msra.mxu0 %v1752
        %5079 = vmatpush.msra.mxu0 %v1743
        %5080 = vmatpush.msra.mxu0 %v1734
        %5081 = vmatpush.msra.mxu0 %v1725
        %5082 = vmatpush.msra.mxu0 %v1716
        %5083 = vmatmul.f32.gmra.mxu0 %v2447
        %v5084 = vpop.f32.mrf.mxu0
        %v5085 = vadd.f32 %v5065, %v5084
        %5086 = vdwg.mxu0
        %5087 = vmatpush.msra.mxu0 %v1995
        %5088 = vmatpush.msra.mxu0 %v1986
        %5089 = vmatpush.msra.mxu0 %v1977
        %5090 = vmatpush.msra.mxu0 %v1968
        %5091 = vmatpush.msra.mxu0 %v1959
        %5092 = vmatpush.msra.mxu0 %v1950
        %5093 = vmatpush.msra.mxu0 %v1941
        %5094 = vmatpush.msra.mxu0 %v1932
        %5095 = vmatpush.msra.mxu0 %v1923
        %5096 = vmatpush.msra.mxu0 %v1914
        %5097 = vmatpush.msra.mxu0 %v1905
        %5098 = vmatpush.msra.mxu0 %v1896
        %5099 = vmatpush.msra.mxu0 %v1887
        %5100 = vmatpush.msra.mxu0 %v1878
        %5101 = vmatpush.msra.mxu0 %v1869
        %5102 = vmatpush.msra.mxu0 %v1860
        %5103 = vmatmul.f32.gmra.mxu0 %v2448
        %v5104 = vpop.f32.mrf.mxu0
        %v5105 = vadd.f32 %v5085, %v5104
        %5106 = vdwg.mxu0
        %5107 = vmatpush.msra.mxu0 %v2139
        %5108 = vmatpush.msra.mxu0 %v2130
        %5109 = vmatpush.msra.mxu0 %v2121
        %5110 = vmatpush.msra.mxu0 %v2112
        %5111 = vmatpush.msra.mxu0 %v2103
        %5112 = vmatpush.msra.mxu0 %v2094
        %5113 = vmatpush.msra.mxu0 %v2085
        %5114 = vmatpush.msra.mxu0 %v2076
        %5115 = vmatpush.msra.mxu0 %v2067
        %5116 = vmatpush.msra.mxu0 %v2058
        %5117 = vmatpush.msra.mxu0 %v2049
        %5118 = vmatpush.msra.mxu0 %v2040
        %5119 = vmatpush.msra.mxu0 %v2031
        %5120 = vmatpush.msra.mxu0 %v2022
        %5121 = vmatpush.msra.mxu0 %v2013
        %5122 = vmatpush.msra.mxu0 %v2004
        %5123 = vmatmul.f32.gmra.mxu0 %v2449
        %v5124 = vpop.f32.mrf.mxu0
        %v5125 = vadd.f32 %v5105, %v5124
        %5126 = vdwg.mxu0
        %5127 = vmatpush.msra.mxu0 %v2283
        %5128 = vmatpush.msra.mxu0 %v2274
        %5129 = vmatpush.msra.mxu0 %v2265
        %5130 = vmatpush.msra.mxu0 %v2256
        %5131 = vmatpush.msra.mxu0 %v2247
        %5132 = vmatpush.msra.mxu0 %v2238
        %5133 = vmatpush.msra.mxu0 %v2229
        %5134 = vmatpush.msra.mxu0 %v2220
        %5135 = vmatpush.msra.mxu0 %v2211
        %5136 = vmatpush.msra.mxu0 %v2202
        %5137 = vmatpush.msra.mxu0 %v2193
        %5138 = vmatpush.msra.mxu0 %v2184
        %5139 = vmatpush.msra.mxu0 %v2175
        %5140 = vmatpush.msra.mxu0 %v2166
        %5141 = vmatpush.msra.mxu0 %v2157
        %5142 = vmatpush.msra.mxu0 %v2148
        %5143 = vmatmul.f32.gmra.mxu0 %v2450
        %v5144 = vpop.f32.mrf.mxu0
        %v5145 = vadd.f32 %v5125, %v5144
        %5146 = vdwg.mxu0
        %5147 = vmatpush.msra.mxu0 %v2427
        %5148 = vmatpush.msra.mxu0 %v2418
        %5149 = vmatpush.msra.mxu0 %v2409
        %5150 = vmatpush.msra.mxu0 %v2400
        %5151 = vmatpush.msra.mxu0 %v2391
        %5152 = vmatpush.msra.mxu0 %v2382
        %5153 = vmatpush.msra.mxu0 %v2373
        %5154 = vmatpush.msra.mxu0 %v2364
        %5155 = vmatpush.msra.mxu0 %v2355
        %5156 = vmatpush.msra.mxu0 %v2346
        %5157 = vmatpush.msra.mxu0 %v2337
        %5158 = vmatpush.msra.mxu0 %v2328
        %5159 = vmatpush.msra.mxu0 %v2319
        %5160 = vmatpush.msra.mxu0 %v2310
        %5161 = vmatpush.msra.mxu0 %v2301
        %5162 = vmatpush.msra.mxu0 %v2292
        %5163 = vmatmul.f32.gmra.mxu0 %v2451
        %v5164 = vpop.f32.mrf.mxu0
        %v5165 = vadd.f32 %v5145, %v5164
        %5166 = vdwg.mxu0
        %v5175 = vrot.slane %v3065, 6
        %v5176 = vrot.slane %v3365, 4
        %v5177 = vrot.slane %v3665, 2
        %v5178 = vrot.slane %v4265, 6
        %v5179 = vrot.slane %v4565, 4
        %v5180 = vrot.slane %v4865, 2
        %vm5181 = vcmask 1041408
        %v5182 = vsel %vm5181, %v2765, %v5175
        %vm5183 = vcmask 1045508
        %v5184 = vsel %vm5183, %v5176, %v5177
        %vm5185 = vcmask 1043456
        %v5186 = vsel %vm5185, %v5182, %v5184
        %v5187 = vsel %vm5181, %v3965, %v5178
        %v5188 = vsel %vm5183, %v5179, %v5180
        %v5189 = vsel %vm5185, %v5187, %v5188
        %v5192 = vadd.f32 %v261, %v5186
        %v5193 = vadd.f32 %v262, %v5189
        %v5194 = vadd.f32 %v263, %v5165
        %5195 = vst [vmem:[%s252] sm:$0xff] %v5192
        %5196 = vst [vmem:[%s252 + $0x8] sm:$0xff] %v5193
        %5197 = vst [vmem:[%s252 + $0x10] sm:$0x3] %v5194
        %p5198 = scmp.eq.s32.totalorder %s22, 4
        // Predicated region
        $region41: #{forward.8} parent=31 // pred_check
          %p5199 = pneg %p5198
        $region42: #{forward.8} parent=31 // pred_check_branch
          %5201 = sbr.rel (%p5199) target = $region44
        $region43: #{forward.8} parent=31 // pred_region
          %v5202 = vld [vmem:[%s252] sm:$0xff]
          %v5203 = vld [vmem:[%s252 + $0x8] sm:$0xff]
          %v5204 = vld [vmem:[%s252 + $0x10] sm:$0x3]
          %v5205 = vld [vmem:[%s246] sm:$0xff]
          %v5206 = vld [vmem:[%s246 + $0x8] sm:$0x1]
          %v5209 = vperm.slane %v5205, 0
          %v5210 = vperm.slane %v5205, 1
          %v5211 = vperm.slane %v5205, 2
          %v5212 = vperm.slane %v5205, 3
          %v5213 = vperm.slane %v5205, 4
          %v5214 = vperm.slane %v5205, 5
          %v5215 = vperm.slane %v5205, 6
          %v5216 = vperm.slane %v5205, 7
          %v5217 = vperm.slane %v5206, 0
          %v5219 = vrot.slane %v5210, 6
          %v5220 = vrot.slane %v5211, 4
          %v5221 = vrot.slane %v5212, 2
          %v5222 = vrot.slane %v5214, 6
          %v5223 = vrot.slane %v5215, 4
          %v5224 = vrot.slane %v5216, 2
          %v5225 = vsel %vm5181, %v5209, %v5219
          %v5226 = vsel %vm5183, %v5220, %v5221
          %v5227 = vsel %vm5185, %v5225, %v5226
          %v5228 = vsel %vm5181, %v5213, %v5222
          %v5229 = vsel %vm5183, %v5223, %v5224
          %v5230 = vsel %vm5185, %v5228, %v5229
          %v5233 = vadd.f32 %v5202, %v5227
          %v5234 = vadd.f32 %v5203, %v5230
          %v5235 = vadd.f32 %v5204, %v5217
          %v5236 = vmax.f32 %v5233, 0.0
          %v5237 = vmax.f32 %v5234, 0.0
          %v5238 = vmax.f32 %v5235, 0.0
          %5239 = vst [vmem:[%s252] sm:$0xff] %v5236
          %5240 = vst [vmem:[%s252 + $0x8] sm:$0xff] %v5237
          %5241 = vst [vmem:[%s252 + $0x10] sm:$0x3] %v5238
        $region44: #{forward.8} parent=31 // pred_fallthru
          _
        %s5242 = smul.u32 9, %s21
        %p5243 = scmp.lt.s32.totalorder %s5242, 17
        %s5244 = scalar_select %p5243, %s5242, 17
        %s5245 = smul.addr %s5244, 2
        %s5246 = scalar_lea.vmem %s3, %s5245
        // Predicated region
        $region45: #{forward.8} parent=31 // pred_check
          %p5247 = pneg %p127
        $region46: #{forward.8} parent=31 // pred_check_branch
          %5249 = sbr.rel (%p5247) target = $region48
        $region47: #{forward.8} parent=31 // pred_region
          %s5250 = smul.u32 9, %s21
        $region48: #{forward.8} parent=31 // pred_fallthru
          _
      $region32: #{forward.8} parent=5 // pred_fallthru
        _
      %p5251 = scmp.le.s32.totalorder 2, %s12
      // Predicated region
      $region49: #{forward.8} parent=5 // pred_check
        %p5252 = pneg %p5251
      $region50: #{forward.8} parent=5 // pred_check_branch
        %5254 = sbr.rel (%p5252) target = $region52
      $region51: #{forward.8} parent=5 // pred_region
        %s5255 = ssub.s32 %s12, 2
        // Predicated region
        $region53: #{forward.8} parent=51 // pred_check
          %p5256 = pneg %p133
        $region54: #{forward.8} parent=51 // pred_check_branch
          %5258 = sbr.rel (%p5256) target = $region56
        $region55: #{forward.8} parent=51 // pred_region
          %s5259 = smul.u32 9, %s23
          %p5260 = scmp.lt.s32.totalorder %s5259, 17
          %s5261 = scalar_select %p5260, %s5259, 17
          %s5262 = smul.addr %s5261, 2
          %s5263 = scalar_lea.vmem %s3, %s5262
        $region56: #{forward.8} parent=51 // pred_fallthru
          _
      $region52: #{forward.8} parent=5 // pred_fallthru
        _
    $region6: #{forward.8} parent=1 // loop_footer
      %s16 = sadd.s32 1, %s12
    $region7: #{forward.8} parent=1 // loop_footer_branch
      %11 = sbr.rel target = $region3
    $region8: #{forward.8} parent=1 // loop_exit
      _
    %5264 = vsyncpa [#allocation3], 1
    %s5265 = scalar_lea.sflag [#allocation3], 1
    %5266 = vsyncpa %s5265, 1

</llo_original>
